<compile_context>
chip_gen: v6e
topology: v6e:2x2x1
jax: 0.10.0
libtpu: 0.0.40
codegen_flags: <defaults>
</compile_context>

<pallas_src>
import functools

import numpy as np
import jax
import jax.numpy as jnp
from jax import lax
from jax.experimental import pallas as pl
from jax.experimental.pallas import tpu as pltpu

# ---------------- small, AnnoMAE-consistent configuration -------------------
IMG = 16          # img_size
PATCH = 4         # patch_size
CH_IN = 3         # ch_in
ENC_DIM = 128     # encoder_embed_dim
ENC_DEPTH = 2     # encoder_depth
ENC_HEADS = 4     # encoder_num_heads
DEC_DIM = 128     # decoder_embed_dim
DEC_DEPTH = 2     # decoder_depth
DEC_HEADS = 4     # decoder_num_heads
MLP_RATIO = 4.0
LN_EPS = 1e-5     # torch.nn.LayerNorm default eps
MASK_RATIO = 0.75

_SQRT1_2 = 0.7071067811865476
_PARALLEL = pltpu.CompilerParams(dimension_semantics=("parallel",))


# ============================ in-kernel helpers ==============================
def _bf16(x):
    return x.astype(jnp.bfloat16)


def _ln(x, g, b, eps):
    mu = jnp.mean(x, axis=-1, keepdims=True)
    xc = x - mu
    var = jnp.mean(xc * xc, axis=-1, keepdims=True)
    return xc * lax.rsqrt(var + eps) * g + b


def _masked_ln(t, m, inv_n, eps):
    # LayerNorm over the lanes selected by the 0/1 mask m (per-head qk_norm).
    # TODO(synk): qk_norm has no learnable affine here (== PyTorch module at init).
    mu = jnp.sum(t * m, axis=-1, keepdims=True) * inv_n
    tc = (t - mu) * m
    var = jnp.sum(tc * tc, axis=-1, keepdims=True) * inv_n
    return tc * lax.rsqrt(var + eps)


def _erf(z):
    # Abramowitz & Stegun 7.1.26 rational approximation (|err| < 1.5e-7),
    # built only from ops guaranteed to lower in Mosaic (exp / abs / where).
    a1, a2, a3, a4, a5 = 0.254829592, -0.284496736, 1.421413741, -1.453152027, 1.061405429
    pp = 0.3275911
    za = jnp.abs(z)
    t = 1.0 / (1.0 + pp * za)
    poly = ((((a5 * t + a4) * t + a3) * t + a2) * t + a1) * t
    y = 1.0 - poly * jnp.exp(-za * za)
    return jnp.where(z < 0.0, -y, y)


def _gelu(x):
    # TODO(synk): exact-erf GELU approximated to ~1e-7 abs error (A&S 7.1.26);
    #             avoids depending on a lax.erf Mosaic lowering.
    return 0.5 * x * (1.0 + _erf(x * _SQRT1_2))


# ================================ Pallas kernels =============================
def _patch_embed_kernel(x_ref, w_ref, b_ref, pos_ref, o_ref):
    # conv-as-matmul patch embedding + positional-embedding add, one batch elt.
    o_ref[...] = (jnp.dot(_bf16(x_ref[...]), w_ref[...],
                          preferred_element_type=jnp.float32)
                  + b_ref[...] + pos_ref[...])


def _block_kernel(x_ref, ln1g_ref, ln1b_ref, qkvw_ref, qkvb_ref,
                  projw_ref, projb_ref, ln2g_ref, ln2b_ref,
                  fc1w_ref, fc1b_ref, fc2w_ref, fc2b_ref, o_ref,
                  *, num_heads, eps, qk_norm):
    """Fused transformer Block for one batch element (all ops VMEM-resident)."""
    S, D = x_ref.shape
    dh = D // num_heads
    scale = float(dh) ** -0.5
    inv_dh = 1.0 / float(dh)

    x = x_ref[...]

    # ---- attention branch (LN1 fused as matmul prologue) -------------------
    h = _ln(x, ln1g_ref[...], ln1b_ref[...], eps)
    qkv = jnp.dot(_bf16(h), qkvw_ref[...],
                  preferred_element_type=jnp.float32) + qkvb_ref[...]   # (S, 3D)
    q = qkv[:, 0:D]            # 128-lane-aligned slices only
    k = qkv[:, D:2 * D]
    v = qkv[:, 2 * D:3 * D]

    lane = lax.broadcasted_iota(jnp.int32, (1, D), 1)
    attn = jnp.zeros((S, D), jnp.float32)
    for hd in range(num_heads):                       # static unroll over heads
        m = ((lane >= hd * dh) & (lane < (hd + 1) * dh)).astype(jnp.float32)
        if qk_norm:
            qh = _masked_ln(q, m, inv_dh, eps)
            kh = _masked_ln(k, m, inv_dh, eps)
        else:
            qh = q * m
            kh = k * m
        # masked lanes contribute 0, so the full-width contraction equals the
        # per-head (S, Dh) x (Dh, S) score matmul.
        s = lax.dot_general(qh, kh, (((1,), (1,)), ((), ())),
                            preferred_element_type=jnp.float32) * scale  # (S, S)
        s = s - jnp.max(s, axis=-1, keepdims=True)
        p = jnp.exp(s)
        p = p * pl.reciprocal(jnp.sum(p, axis=-1, keepdims=True), approx=True)
        # head output lands in its own lane range -> lane-dense (S, D) sum.
        attn = attn + jnp.dot(p, v * m, preferred_element_type=jnp.float32)

    o = jnp.dot(_bf16(attn), projw_ref[...],
                preferred_element_type=jnp.float32) + projb_ref[...]
    x = x + o

    # ---- MLP branch (LN2 -> FC1 -> GELU -> FC2 -> residual) ----------------
    h = _ln(x, ln2g_ref[...], ln2b_ref[...], eps)
    h = jnp.dot(_bf16(h), fc1w_ref[...],
                preferred_element_type=jnp.float32) + fc1b_ref[...]
    h = _gelu(h)
    h = jnp.dot(_bf16(h), fc2w_ref[...],
                preferred_element_type=jnp.float32) + fc2b_ref[...]
    o_ref[...] = x + h


def _norm_linear_kernel(x_ref, g_ref, b_ref, w_ref, wb_ref, o_ref, *, eps):
    # fused encoder_norm -> decoder_embed for one batch element.
    h = _ln(x_ref[...], g_ref[...], b_ref[...], eps)
    o_ref[...] = jnp.dot(_bf16(h), w_ref[...],
                         preferred_element_type=jnp.float32) + wb_ref[...]


def _dec_final_kernel(x_ref, g_ref, b_ref, w_ref, wb_ref, tgt_ref, mask_ref,
                      pred_ref, mse_ref, *, eps):
    # fused decoder_norm -> decoder_proj -> per-patch masked MSE.
    # tgt / mask are padded with a zero cls row so no in-kernel row offsets.
    h = _ln(x_ref[...], g_ref[...], b_ref[...], eps)
    p = jnp.dot(_bf16(h), w_ref[...],
                preferred_element_type=jnp.float32) + wb_ref[...]      # (S, P)
    pred_ref[...] = p
    diff = p - tgt_ref[...]
    per = jnp.mean(diff * diff, axis=-1, keepdims=True)                # (S, 1)
    mse_ref[...] = per * mask_ref[...]                                 # cls row * 0


# ================================ kernel wrappers ============================
def _vec_spec(n):
    return pl.BlockSpec((1, n), lambda b: (0, 0))


def _mat_spec(k, n):
    return pl.BlockSpec((k, n), lambda b: (0, 0))


def _tok_spec(s, d):
    return pl.BlockSpec((None, s, d), lambda b: (b, 0, 0))


def pallas_patch_embed(patches, w, b, pos):
    B, L, Cpp = patches.shape
    E = w.shape[1]
    return pl.pallas_call(
        _patch_embed_kernel,
        out_shape=jax.ShapeDtypeStruct((B, L, E), jnp.float32),
        grid=(B,),
        in_specs=[_tok_spec(L, Cpp), _mat_spec(Cpp, E), _vec_spec(E),
                  _mat_spec(L, E)],
        out_specs=_tok_spec(L, E),
        compiler_params=_PARALLEL,
    )(patches, w, b, pos)


def pallas_block(x, p, num_heads):
    B, S, D = x.shape
    mid = p['fc1_b'].shape[-1]
    kernel = functools.partial(_block_kernel, num_heads=num_heads,
                               eps=LN_EPS, qk_norm=True)
    return pl.pallas_call(
        kernel,
        out_shape=jax.ShapeDtypeStruct((B, S, D), jnp.float32),
        grid=(B,),
        in_specs=[_tok_spec(S, D),
                  _vec_spec(D), _vec_spec(D),              # ln1 gamma / beta
                  _mat_spec(D, 3 * D), _vec_spec(3 * D),   # qkv  w / b
                  _mat_spec(D, D), _vec_spec(D),           # proj w / b
                  _vec_spec(D), _vec_spec(D),              # ln2 gamma / beta
                  _mat_spec(D, mid), _vec_spec(mid),       # fc1  w / b
                  _mat_spec(mid, D), _vec_spec(D)],        # fc2  w / b
        out_specs=_tok_spec(S, D),
        compiler_params=_PARALLEL,
    )(x, p['ln1_g'], p['ln1_b'], p['qkv_w'], p['qkv_b'], p['proj_w'], p['proj_b'],
      p['ln2_g'], p['ln2_b'], p['fc1_w'], p['fc1_b'], p['fc2_w'], p['fc2_b'])


def pallas_norm_linear(x, g, b, w, wb):
    B, S, Din = x.shape
    Dout = w.shape[1]
    return pl.pallas_call(
        functools.partial(_norm_linear_kernel, eps=LN_EPS),
        out_shape=jax.ShapeDtypeStruct((B, S, Dout), jnp.float32),
        grid=(B,),
        in_specs=[_tok_spec(S, Din), _vec_spec(Din), _vec_spec(Din),
                  _mat_spec(Din, Dout), _vec_spec(Dout)],
        out_specs=_tok_spec(S, Dout),
        compiler_params=_PARALLEL,
    )(x, g, b, w, wb)


def pallas_dec_final(x, g, b, w, wb, target_pad, mask_pad):
    B, S, Din = x.shape
    P = w.shape[1]
    return pl.pallas_call(
        functools.partial(_dec_final_kernel, eps=LN_EPS),
        out_shape=(jax.ShapeDtypeStruct((B, S, P), jnp.float32),
                   jax.ShapeDtypeStruct((B, S, 1), jnp.float32)),
        grid=(B,),
        in_specs=[_tok_spec(S, Din), _vec_spec(Din), _vec_spec(Din),
                  _mat_spec(Din, P), _vec_spec(P),
                  _tok_spec(S, P), _tok_spec(S, 1)],
        out_specs=(_tok_spec(S, P), _tok_spec(S, 1)),
        compiler_params=_PARALLEL,
    )(x, g, b, w, wb, target_pad, mask_pad)


# ================================ JAX glue ===================================
def extract_patches_conv(imgs, p):
    """Patch vectors ordered (C, ph, pw) — matches Conv2d(k=p, stride=p)."""
    B, C, H, W = imgs.shape
    h, w = H // p, W // p
    x = imgs.reshape(B, C, h, p, w, p)
    x = jnp.transpose(x, (0, 2, 4, 1, 3, 5))     # B, h, w, C, p, p
    return x.reshape(B, h * w, C * p * p)


def patchify(imgs, p):
    """Matches AnnoMAE.patchify: 'nchpwq->nhwpqc' ordering (ph, pw, C)."""
    B, C, H, W = imgs.shape
    h, w = H // p, W // p
    x = imgs.reshape(B, C, h, p, w, p)
    x = jnp.transpose(x, (0, 2, 4, 3, 5, 1))     # n h w p q c
    return x.reshape(B, h * w, p * p * C)


def build_pos_embed(L, E):
    """Sinusoidal PE exactly as AnnoMAE.sinusoidal_pe; cls slot (index 0) = 0."""
    pe = np.zeros((L, E), dtype=np.float64)
    pos = np.arange(L, dtype=np.float64)[:, None]
    i = np.arange(0, E - 1, 2, dtype=np.float64)
    div = 10000.0 ** (i / E)
    pe[:, 0:E - 1:2] = np.sin(pos / div)
    pe[:, 1:E:2] = np.cos(pos / div)
    full = np.concatenate([np.zeros((1, E)), pe], axis=0)[None]   # (1, 1+L, E)
    return jnp.asarray(full, dtype=jnp.float32)


# ================================ parameter init =============================
def glorot(key, shape, dtype=jnp.float32):
    fan_in, fan_out = shape
    limit = float(np.sqrt(6.0 / (fan_in + fan_out)))
    return jax.random.uniform(key, shape, jnp.float32, -limit, limit).astype(dtype)


def init_block(key, dim, mlp_ratio=MLP_RATIO):
    ks = jax.random.split(key, 4)
    mid = int(dim * mlp_ratio)
    f32 = jnp.float32
    bf16 = jnp.bfloat16
    return dict(
        ln1_g=jnp.ones((1, dim), f32), ln1_b=jnp.zeros((1, dim), f32),
        qkv_w=glorot(ks[0], (dim, 3 * dim), bf16),
        qkv_b=jnp.zeros((1, 3 * dim), f32),            # qkv_bias=False -> zeros
        proj_w=glorot(ks[1], (dim, dim), bf16), proj_b=jnp.zeros((1, dim), f32),
        ln2_g=jnp.ones((1, dim), f32), ln2_b=jnp.zeros((1, dim), f32),
        fc1_w=glorot(ks[2], (dim, mid), bf16), fc1_b=jnp.zeros((1, mid), f32),
        fc2_w=glorot(ks[3], (mid, dim), bf16), fc2_b=jnp.zeros((1, dim), f32),
    )


def init_params(key):
    L = (IMG // PATCH) ** 2
    patch_vec = CH_IN * PATCH * PATCH
    keys = jax.random.split(key, 8)
    f32 = jnp.float32
    params = {}
    # TODO(synk): patch-embed conv uses xavier_uniform on the (E, C*p*p) view;
    #             the Glorot limit is symmetric so init statistics match.
    params['pe_w'] = glorot(keys[0], (ENC_DIM, patch_vec)).T.astype(jnp.bfloat16)
    params['pe_b'] = jnp.zeros((1, ENC_DIM), f32)
    params['cls_token'] = 0.02 * jax.random.normal(keys[1], (1, 1, ENC_DIM), f32)
    params['mask_token'] = 0.02 * jax.random.normal(keys[2], (1, 1, DEC_DIM), f32)
    enc_pos = build_pos_embed(L, ENC_DIM)
    params['enc_pos_cls'] = enc_pos[:, :1, :]           # (1, 1, E)
    params['enc_pos_grid'] = enc_pos[0, 1:, :]          # (L, E)
    params['dec_pos'] = build_pos_embed(L, DEC_DIM)     # (1, 1+L, Dd)
    params['encoder'] = [init_block(k, ENC_DIM) for k in jax.random.split(keys[3], ENC_DEPTH)]
    params['decoder'] = [init_block(k, DEC_DIM) for k in jax.random.split(keys[4], DEC_DEPTH)]
    params['enc_norm_g'] = jnp.ones((1, ENC_DIM), f32)
    params['enc_norm_b'] = jnp.zeros((1, ENC_DIM), f32)
    params['dec_norm_g'] = jnp.ones((1, DEC_DIM), f32)
    params['dec_norm_b'] = jnp.zeros((1, DEC_DIM), f32)
    params['dec_embed_w'] = glorot(keys[5], (ENC_DIM, DEC_DIM), jnp.bfloat16)
    params['dec_embed_b'] = jnp.zeros((1, DEC_DIM), f32)
    params['dec_proj_w'] = glorot(keys[6], (DEC_DIM, patch_vec), jnp.bfloat16)
    params['dec_proj_b'] = jnp.zeros((1, patch_vec), f32)
    return params


# ================================ forward pass ===============================
def anno_mae_forward(params, x, mask_key, mask_ratio=MASK_RATIO):
    B, C, H, W = x.shape
    p = PATCH
    L = (H // p) * (W // p)

    # ---------------- encoder ----------------
    patches = extract_patches_conv(x, p)                           # (B, L, C*p*p)
    z = pallas_patch_embed(patches, params['pe_w'], params['pe_b'],
                           params['enc_pos_grid'])                 # embed + pos

    # random masking (argsort + gathers: JAX glue, data-dependent indexing)
    len_keep = int(L * (1 - mask_ratio))
    noise = jax.random.uniform(mask_key, (B, L), jnp.float32)
    ids_shuffle = jnp.argsort(noise, axis=1)
    ids_restore = jnp.argsort(ids_shuffle, axis=1)
    ids_keep = ids_shuffle[:, :len_keep]
    z = jnp.take_along_axis(z, ids_keep[:, :, None], axis=1)       # (B, keep, E)
    mask = jnp.ones((B, L), jnp.float32).at[:, :len_keep].set(0.0)
    mask = jnp.take_along_axis(mask, ids_restore, axis=1)

    cls = params['cls_token'] + params['enc_pos_cls']
    z = jnp.concatenate([jnp.broadcast_to(cls, (B, 1, ENC_DIM)), z], axis=1)

    for blk in params['encoder']:
        z = pallas_block(z, blk, ENC_HEADS)

    # fused encoder_norm -> decoder_embed
    d = pallas_norm_linear(z, params['enc_norm_g'], params['enc_norm_b'],
                           params['dec_embed_w'], params['dec_embed_b'])

    # ---------------- decoder token assembly (JAX glue: gather/scatter) -----
    n_mask = L + 1 - d.shape[1]
    mask_tokens = jnp.broadcast_to(params['mask_token'], (B, n_mask, DEC_DIM))
    d_ = jnp.concatenate([d[:, 1:, :], mask_tokens], axis=1)        # (B, L, Dd)
    d_ = jnp.take_along_axis(d_, ids_restore[:, :, None], axis=1)   # un-shuffle
    d = jnp.concatenate([d[:, :1, :], d_], axis=1)                  # (B, 1+L, Dd)
    d = d + params['dec_pos']

    for blk in params['decoder']:
        d = pallas_block(d, blk, DEC_HEADS)

    # ------- fused decoder_norm -> decoder_proj -> per-patch masked MSE -----
    target = patchify(x, p)                                         # (B, L, p*p*C)
    P = target.shape[-1]
    tgt_pad = jnp.concatenate([jnp.zeros((B, 1, P), jnp.float32), target], axis=1)
    mask_pad = jnp.concatenate([jnp.zeros((B, 1), jnp.float32), mask],
                               axis=1)[:, :, None]                  # (B, 1+L, 1)
    pred_full, masked_mse = pallas_dec_final(
        d, params['dec_norm_g'], params['dec_norm_b'],
        params['dec_proj_w'], params['dec_proj_b'], tgt_pad, mask_pad)

    pred = pred_full[:, 1:, :]                                      # drop cls
    loss = masked_mse.sum() / mask.sum()
    return loss, pred, mask


# ==================================== main ===================================
if __name__ == "__main__":
    key = jax.random.PRNGKey(0)
    pkey, xkey, mkey = jax.random.split(key, 3)
    params = init_params(pkey)
    x = jax.random.normal(xkey, (2, CH_IN, IMG, IMG), jnp.float32)

    fwd = jax.jit(functools.partial(anno_mae_forward, mask_ratio=MASK_RATIO))
    loss, pred, mask = fwd(params, x, mkey)
    jax.block_until_ready((loss, pred, mask))

    L = (IMG // PATCH) ** 2
    assert pred.shape == (2, L, PATCH * PATCH * CH_IN), pred.shape
    assert mask.shape == (2, L), mask.shape
    assert bool(jnp.isfinite(loss)), loss
    print("KERNEL_OK")
</pallas_src>

<mosaic_0001>
module attributes {stable_mosaic.version = 11 : i64} {
  func.func @_patch_embed_kernel(%arg0: i32, %arg1: memref<1x16x48xf32, #tpu.memory_space<vmem>>, %arg2: memref<48x128xbf16, #tpu.memory_space<vmem>>, %arg3: memref<1x128xf32, #tpu.memory_space<vmem>>, %arg4: memref<16x128xf32, #tpu.memory_space<vmem>>, %arg5: memref<1x16x128xf32, #tpu.memory_space<vmem>>) attributes {dimension_semantics = [#tpu.dimension_semantics<parallel>], iteration_bounds = array<i64: 2>, scalar_prefetch = 0 : i64, scratch_operands = 0 : i64, tpu.core_type = #tpu.core_type<tc>, window_params = [{transform_indices = @transform_0, window_bounds = array<i64: 1, 16, 48>}, {pipeline_mode = #tpu.pipeline_mode<synchronous>, transform_indices = @transform_1, window_bounds = array<i64: 48, 128>}, {pipeline_mode = #tpu.pipeline_mode<synchronous>, transform_indices = @transform_2, window_bounds = array<i64: 1, 128>}, {pipeline_mode = #tpu.pipeline_mode<synchronous>, transform_indices = @transform_3, window_bounds = array<i64: 16, 128>}, {transform_indices = @transform_4, window_bounds = array<i64: 1, 16, 128>}]} {
    %c0 = arith.constant 0 : index
    %c0_0 = arith.constant 0 : index
    %c0_1 = arith.constant 0 : index
    %0 = vector.load %arg1[%c0, %c0_0, %c0_1] : memref<1x16x48xf32, #tpu.memory_space<vmem>>, vector<1x16x48xf32>
    %1 = vector.shape_cast %0 : vector<1x16x48xf32> to vector<16x48xf32>
    %2 = arith.truncf %1 : vector<16x48xf32> to vector<16x48xbf16>
    %c0_2 = arith.constant 0 : index
    %c0_3 = arith.constant 0 : index
    %3 = vector.load %arg2[%c0_2, %c0_3] : memref<48x128xbf16, #tpu.memory_space<vmem>>, vector<48x128xbf16>
    %cst = arith.constant dense<0.000000e+00> : vector<16x128xf32>
    %4 = tpu.matmul %2, %3, %cst {dimension_numbers = #tpu.dot_dimension_numbers<[1], [0], [0], [1], [0, 0, 1, 1], [], []>} : vector<16x48xbf16>, vector<48x128xbf16>, vector<16x128xf32> -> vector<16x128xf32>
    %c0_4 = arith.constant 0 : index
    %c0_5 = arith.constant 0 : index
    %5 = vector.load %arg3[%c0_4, %c0_5] : memref<1x128xf32, #tpu.memory_space<vmem>>, vector<1x128xf32>
    %6 = vector.broadcast %5 : vector<1x128xf32> to vector<16x128xf32>
    %7 = arith.addf %4, %6 : vector<16x128xf32>
    %c0_6 = arith.constant 0 : index
    %c0_7 = arith.constant 0 : index
    %8 = vector.load %arg4[%c0_6, %c0_7] : memref<16x128xf32, #tpu.memory_space<vmem>>, vector<16x128xf32>
    %9 = arith.addf %7, %8 : vector<16x128xf32>
    %c0_8 = arith.constant 0 : index
    %c0_9 = arith.constant 0 : index
    %c0_10 = arith.constant 0 : index
    %10 = vector.load %arg5[%c0_8, %c0_9, %c0_10] : memref<1x16x128xf32, #tpu.memory_space<vmem>>, vector<1x16x128xf32>
    %11 = vector.shape_cast %10 : vector<1x16x128xf32> to vector<16x128xf32>
    %12 = vector.shape_cast %9 : vector<16x128xf32> to vector<1x16x128xf32>
    tpu.vector_store %arg5[%c0_8, %c0_9, %c0_10], %12 {strides = array<i32>} : memref<1x16x128xf32, #tpu.memory_space<vmem>>, vector<1x16x128xf32>,
    return
  }
  func.func @transform_0(%arg0: i32) -> (i32, i32, i32) {
    %c0_i32 = arith.constant 0 : i32
    %c0_i32_0 = arith.constant 0 : i32
    %c0_i32_1 = arith.constant 0 : i32
    return %arg0, %c0_i32, %c0_i32_0 : i32, i32, i32
  }
  func.func @transform_1(%arg0: i32) -> (i32, i32) {
    %c0_i32 = arith.constant 0 : i32
    %c0_i32_0 = arith.constant 0 : i32
    %c0_i32_1 = arith.constant 0 : i32
    return %c0_i32, %c0_i32_0 : i32, i32
  }
  func.func @transform_2(%arg0: i32) -> (i32, i32) {
    %c0_i32 = arith.constant 0 : i32
    %c0_i32_0 = arith.constant 0 : i32
    %c0_i32_1 = arith.constant 0 : i32
    return %c0_i32, %c0_i32_0 : i32, i32
  }
  func.func @transform_3(%arg0: i32) -> (i32, i32) {
    %c0_i32 = arith.constant 0 : i32
    %c0_i32_0 = arith.constant 0 : i32
    %c0_i32_1 = arith.constant 0 : i32
    return %c0_i32, %c0_i32_0 : i32, i32
  }
  func.func @transform_4(%arg0: i32) -> (i32, i32, i32) {
    %c0_i32 = arith.constant 0 : i32
    %c0_i32_0 = arith.constant 0 : i32
    %c0_i32_1 = arith.constant 0 : i32
    return %arg0, %c0_i32, %c0_i32_0 : i32, i32, i32
  }
}

module attributes {stable_mosaic.version = 11 : i64} {
  func.func @_norm_linear_kernel(%arg0: i32, %arg1: memref<1x5x128xf32, #tpu.memory_space<vmem>>, %arg2: memref<1x128xf32, #tpu.memory_space<vmem>>, %arg3: memref<1x128xf32, #tpu.memory_space<vmem>>, %arg4: memref<128x128xbf16, #tpu.memory_space<vmem>>, %arg5: memref<1x128xf32, #tpu.memory_space<vmem>>, %arg6: memref<1x5x128xf32, #tpu.memory_space<vmem>>) attributes {dimension_semantics = [#tpu.dimension_semantics<parallel>], iteration_bounds = array<i64: 2>, scalar_prefetch = 0 : i64, scratch_operands = 0 : i64, tpu.core_type = #tpu.core_type<tc>, window_params = [{transform_indices = @transform_0, window_bounds = array<i64: 1, 5, 128>}, {pipeline_mode = #tpu.pipeline_mode<synchronous>, transform_indices = @transform_1, window_bounds = array<i64: 1, 128>}, {pipeline_mode = #tpu.pipeline_mode<synchronous>, transform_indices = @transform_2, window_bounds = array<i64: 1, 128>}, {pipeline_mode = #tpu.pipeline_mode<synchronous>, transform_indices = @transform_3, window_bounds = array<i64: 128, 128>}, {pipeline_mode = #tpu.pipeline_mode<synchronous>, transform_indices = @transform_4, window_bounds = array<i64: 1, 128>}, {transform_indices = @transform_5, window_bounds = array<i64: 1, 5, 128>}]} {
    %c0 = arith.constant 0 : index
    %c0_0 = arith.constant 0 : index
    %c0_1 = arith.constant 0 : index
    %0 = vector.load %arg1[%c0, %c0_0, %c0_1] : memref<1x5x128xf32, #tpu.memory_space<vmem>>, vector<1x5x128xf32>
    %1 = vector.shape_cast %0 : vector<1x5x128xf32> to vector<5x128xf32>
    %c0_2 = arith.constant 0 : index
    %c0_3 = arith.constant 0 : index
    %2 = vector.load %arg2[%c0_2, %c0_3] : memref<1x128xf32, #tpu.memory_space<vmem>>, vector<1x128xf32>
    %c0_4 = arith.constant 0 : index
    %c0_5 = arith.constant 0 : index
    %3 = vector.load %arg3[%c0_4, %c0_5] : memref<1x128xf32, #tpu.memory_space<vmem>>, vector<1x128xf32>
    %cst = arith.constant dense<0.000000e+00> : vector<5xf32>
    %4 = vector.multi_reduction <add>, %1, %cst [1] : vector<5x128xf32> to vector<5xf32>
    %5 = vector.shape_cast %4 : vector<5xf32> to vector<5x1xf32>
    %cst_6 = arith.constant 1.280000e+02 : f32
    %6 = vector.broadcast %cst_6 : f32 to vector<5x1xf32>
    %7 = arith.divf %5, %6 : vector<5x1xf32>
    %8 = vector.broadcast %7 : vector<5x1xf32> to vector<5x128xf32>
    %9 = arith.subf %1, %8 : vector<5x128xf32>
    %10 = arith.mulf %9, %9 : vector<5x128xf32>
    %cst_7 = arith.constant dense<0.000000e+00> : vector<5xf32>
    %11 = vector.multi_reduction <add>, %10, %cst_7 [1] : vector<5x128xf32> to vector<5xf32>
    %12 = vector.shape_cast %11 : vector<5xf32> to vector<5x1xf32>
    %cst_8 = arith.constant 1.280000e+02 : f32
    %13 = vector.broadcast %cst_8 : f32 to vector<5x1xf32>
    %14 = arith.divf %12, %13 : vector<5x1xf32>
    %cst_9 = arith.constant 9.99999974E-6 : f32
    %15 = vector.broadcast %cst_9 : f32 to vector<5x1xf32>
    %16 = arith.addf %14, %15 : vector<5x1xf32>
    %17 = math.rsqrt %16 : vector<5x1xf32>
    %18 = vector.broadcast %17 : vector<5x1xf32> to vector<5x128xf32>
    %19 = arith.mulf %9, %18 : vector<5x128xf32>
    %20 = vector.broadcast %2 : vector<1x128xf32> to vector<5x128xf32>
    %21 = arith.mulf %19, %20 : vector<5x128xf32>
    %22 = vector.broadcast %3 : vector<1x128xf32> to vector<5x128xf32>
    %23 = arith.addf %21, %22 : vector<5x128xf32>
    %24 = arith.truncf %23 : vector<5x128xf32> to vector<5x128xbf16>
    %c0_10 = arith.constant 0 : index
    %c0_11 = arith.constant 0 : index
    %25 = vector.load %arg4[%c0_10, %c0_11] : memref<128x128xbf16, #tpu.memory_space<vmem>>, vector<128x128xbf16>
    %cst_12 = arith.constant dense<0.000000e+00> : vector<5x128xf32>
    %26 = tpu.matmul %24, %25, %cst_12 {dimension_numbers = #tpu.dot_dimension_numbers<[1], [0], [0], [1], [0, 0, 1, 1], [], []>} : vector<5x128xbf16>, vector<128x128xbf16>, vector<5x128xf32> -> vector<5x128xf32>
    %c0_13 = arith.constant 0 : index
    %c0_14 = arith.constant 0 : index
    %27 = vector.load %arg5[%c0_13, %c0_14] : memref<1x128xf32, #tpu.memory_space<vmem>>, vector<1x128xf32>
    %28 = vector.broadcast %27 : vector<1x128xf32> to vector<5x128xf32>
    %29 = arith.addf %26, %28 : vector<5x128xf32>
    %c0_15 = arith.constant 0 : index
    %c0_16 = arith.constant 0 : index
    %c0_17 = arith.constant 0 : index
    %30 = vector.load %arg6[%c0_15, %c0_16, %c0_17] : memref<1x5x128xf32, #tpu.memory_space<vmem>>, vector<1x5x128xf32>
    %31 = vector.shape_cast %30 : vector<1x5x128xf32> to vector<5x128xf32>
    %32 = vector.shape_cast %29 : vector<5x128xf32> to vector<1x5x128xf32>
    tpu.vector_store %arg6[%c0_15, %c0_16, %c0_17], %32 {strides = array<i32>} : memref<1x5x128xf32, #tpu.memory_space<vmem>>, vector<1x5x128xf32>,
    return
  }
  func.func @transform_0(%arg0: i32) -> (i32, i32, i32) {
    %c0_i32 = arith.constant 0 : i32
    %c0_i32_0 = arith.constant 0 : i32
    %c0_i32_1 = arith.constant 0 : i32
    return %arg0, %c0_i32, %c0_i32_0 : i32, i32, i32
  }
  func.func @transform_1(%arg0: i32) -> (i32, i32) {
    %c0_i32 = arith.constant 0 : i32
    %c0_i32_0 = arith.constant 0 : i32
    %c0_i32_1 = arith.constant 0 : i32
    return %c0_i32, %c0_i32_0 : i32, i32
  }
  func.func @transform_2(%arg0: i32) -> (i32, i32) {
    %c0_i32 = arith.constant 0 : i32
    %c0_i32_0 = arith.constant 0 : i32
    %c0_i32_1 = arith.constant 0 : i32
    return %c0_i32, %c0_i32_0 : i32, i32
  }
  func.func @transform_3(%arg0: i32) -> (i32, i32) {
    %c0_i32 = arith.constant 0 : i32
    %c0_i32_0 = arith.constant 0 : i32
    %c0_i32_1 = arith.constant 0 : i32
    return %c0_i32, %c0_i32_0 : i32, i32
  }
  func.func @transform_4(%arg0: i32) -> (i32, i32) {
    %c0_i32 = arith.constant 0 : i32
    %c0_i32_0 = arith.constant 0 : i32
    %c0_i32_1 = arith.constant 0 : i32
    return %c0_i32, %c0_i32_0 : i32, i32
  }
  func.func @transform_5(%arg0: i32) -> (i32, i32, i32) {
    %c0_i32 = arith.constant 0 : i32
    %c0_i32_0 = arith.constant 0 : i32
    %c0_i32_1 = arith.constant 0 : i32
    return %arg0, %c0_i32, %c0_i32_0 : i32, i32, i32
  }
}

module attributes {stable_mosaic.version = 11 : i64} {
  func.func @_block_kernel(%arg0: i32, %arg1: memref<1x5x128xf32, #tpu.memory_space<vmem>>, %arg2: memref<1x128xf32, #tpu.memory_space<vmem>>, %arg3: memref<1x128xf32, #tpu.memory_space<vmem>>, %arg4: memref<128x384xbf16, #tpu.memory_space<vmem>>, %arg5: memref<1x384xf32, #tpu.memory_space<vmem>>, %arg6: memref<128x128xbf16, #tpu.memory_space<vmem>>, %arg7: memref<1x128xf32, #tpu.memory_space<vmem>>, %arg8: memref<1x128xf32, #tpu.memory_space<vmem>>, %arg9: memref<1x128xf32, #tpu.memory_space<vmem>>, %arg10: memref<128x512xbf16, #tpu.memory_space<vmem>>, %arg11: memref<1x512xf32, #tpu.memory_space<vmem>>, %arg12: memref<512x128xbf16, #tpu.memory_space<vmem>>, %arg13: memref<1x128xf32, #tpu.memory_space<vmem>>, %arg14: memref<1x5x128xf32, #tpu.memory_space<vmem>>) attributes {dimension_semantics = [#tpu.dimension_semantics<parallel>], iteration_bounds = array<i64: 2>, scalar_prefetch = 0 : i64, scratch_operands = 0 : i64, tpu.core_type = #tpu.core_type<tc>, window_params = [{transform_indices = @transform_0, window_bounds = array<i64: 1, 5, 128>}, {pipeline_mode = #tpu.pipeline_mode<synchronous>, transform_indices = @transform_1, window_bounds = array<i64: 1, 128>}, {pipeline_mode = #tpu.pipeline_mode<synchronous>, transform_indices = @transform_2, window_bounds = array<i64: 1, 128>}, {pipeline_mode = #tpu.pipeline_mode<synchronous>, transform_indices = @transform_3, window_bounds = array<i64: 128, 384>}, {pipeline_mode = #tpu.pipeline_mode<synchronous>, transform_indices = @transform_4, window_bounds = array<i64: 1, 384>}, {pipeline_mode = #tpu.pipeline_mode<synchronous>, transform_indices = @transform_5, window_bounds = array<i64: 128, 128>}, {pipeline_mode = #tpu.pipeline_mode<synchronous>, transform_indices = @transform_6, window_bounds = array<i64: 1, 128>}, {pipeline_mode = #tpu.pipeline_mode<synchronous>, transform_indices = @transform_7, window_bounds = array<i64: 1, 128>}, {pipeline_mode = #tpu.pipeline_mode<synchronous>, transform_indices = @transform_8, window_bounds = array<i64: 1, 128>}, {pipeline_mode = #tpu.pipeline_mode<synchronous>, transform_indices = @transform_9, window_bounds = array<i64: 128, 512>}, {pipeline_mode = #tpu.pipeline_mode<synchronous>, transform_indices = @transform_10, window_bounds = array<i64: 1, 512>}, {pipeline_mode = #tpu.pipeline_mode<synchronous>, transform_indices = @transform_11, window_bounds = array<i64: 512, 128>}, {pipeline_mode = #tpu.pipeline_mode<synchronous>, transform_indices = @transform_12, window_bounds = array<i64: 1, 128>}, {transform_indices = @transform_13, window_bounds = array<i64: 1, 5, 128>}]} {
    %c0 = arith.constant 0 : index
    %c0_0 = arith.constant 0 : index
    %c0_1 = arith.constant 0 : index
    %0 = vector.load %arg1[%c0, %c0_0, %c0_1] : memref<1x5x128xf32, #tpu.memory_space<vmem>>, vector<1x5x128xf32>
    %1 = vector.shape_cast %0 : vector<1x5x128xf32> to vector<5x128xf32>
    %c0_2 = arith.constant 0 : index
    %c0_3 = arith.constant 0 : index
    %2 = vector.load %arg2[%c0_2, %c0_3] : memref<1x128xf32, #tpu.memory_space<vmem>>, vector<1x128xf32>
    %c0_4 = arith.constant 0 : index
    %c0_5 = arith.constant 0 : index
    %3 = vector.load %arg3[%c0_4, %c0_5] : memref<1x128xf32, #tpu.memory_space<vmem>>, vector<1x128xf32>
    %cst = arith.constant dense<0.000000e+00> : vector<5xf32>
    %4 = vector.multi_reduction <add>, %1, %cst [1] : vector<5x128xf32> to vector<5xf32>
    %5 = vector.shape_cast %4 : vector<5xf32> to vector<5x1xf32>
    %cst_6 = arith.constant 1.280000e+02 : f32
    %6 = vector.broadcast %cst_6 : f32 to vector<5x1xf32>
    %7 = arith.divf %5, %6 : vector<5x1xf32>
    %8 = vector.broadcast %7 : vector<5x1xf32> to vector<5x128xf32>
    %9 = arith.subf %1, %8 : vector<5x128xf32>
    %10 = arith.mulf %9, %9 : vector<5x128xf32>
    %cst_7 = arith.constant dense<0.000000e+00> : vector<5xf32>
    %11 = vector.multi_reduction <add>, %10, %cst_7 [1] : vector<5x128xf32> to vector<5xf32>
    %12 = vector.shape_cast %11 : vector<5xf32> to vector<5x1xf32>
    %cst_8 = arith.constant 1.280000e+02 : f32
    %13 = vector.broadcast %cst_8 : f32 to vector<5x1xf32>
    %14 = arith.divf %12, %13 : vector<5x1xf32>
    %cst_9 = arith.constant 9.99999974E-6 : f32
    %15 = vector.broadcast %cst_9 : f32 to vector<5x1xf32>
    %16 = arith.addf %14, %15 : vector<5x1xf32>
    %17 = math.rsqrt %16 : vector<5x1xf32>
    %18 = vector.broadcast %17 : vector<5x1xf32> to vector<5x128xf32>
    %19 = arith.mulf %9, %18 : vector<5x128xf32>
    %20 = vector.broadcast %2 : vector<1x128xf32> to vector<5x128xf32>
    %21 = arith.mulf %19, %20 : vector<5x128xf32>
    %22 = vector.broadcast %3 : vector<1x128xf32> to vector<5x128xf32>
    %23 = arith.addf %21, %22 : vector<5x128xf32>
    %24 = arith.truncf %23 : vector<5x128xf32> to vector<5x128xbf16>
    %c0_10 = arith.constant 0 : index
    %c0_11 = arith.constant 0 : index
    %25 = vector.load %arg4[%c0_10, %c0_11] : memref<128x384xbf16, #tpu.memory_space<vmem>>, vector<128x384xbf16>
    %cst_12 = arith.constant dense<0.000000e+00> : vector<5x384xf32>
    %26 = tpu.matmul %24, %25, %cst_12 {dimension_numbers = #tpu.dot_dimension_numbers<[1], [0], [0], [1], [0, 0, 1, 1], [], []>} : vector<5x128xbf16>, vector<128x384xbf16>, vector<5x384xf32> -> vector<5x384xf32>
    %c0_13 = arith.constant 0 : index
    %c0_14 = arith.constant 0 : index
    %27 = vector.load %arg5[%c0_13, %c0_14] : memref<1x384xf32, #tpu.memory_space<vmem>>, vector<1x384xf32>
    %28 = vector.broadcast %27 : vector<1x384xf32> to vector<5x384xf32>
    %29 = arith.addf %26, %28 : vector<5x384xf32>
    %30 = vector.extract_strided_slice %29 {offsets = [0, 0], sizes = [5, 128], strides = [1, 1]} : vector<5x384xf32> to vector<5x128xf32>
    %31 = vector.extract_strided_slice %29 {offsets = [0, 128], sizes = [5, 128], strides = [1, 1]} : vector<5x384xf32> to vector<5x128xf32>
    %32 = vector.extract_strided_slice %29 {offsets = [0, 256], sizes = [5, 128], strides = [1, 1]} : vector<5x384xf32> to vector<5x128xf32>
    %33 = tpu.iota {dimensions = array<i32: 1>} : vector<1x128xi32>
    %cst_15 = arith.constant 0.000000e+00 : f32
    %34 = vector.broadcast %cst_15 : f32 to vector<5x128xf32>
    %c0_i32 = arith.constant 0 : i32
    %35 = vector.broadcast %c0_i32 : i32 to vector<1x128xi32>
    %36 = arith.cmpi sge, %33, %35 : vector<1x128xi32>
    %c32_i32 = arith.constant 32 : i32
    %37 = vector.broadcast %c32_i32 : i32 to vector<1x128xi32>
    %38 = arith.cmpi slt, %33, %37 : vector<1x128xi32>
    %39 = arith.andi %36, %38 : vector<1x128xi1>
    %40 = arith.extui %39 : vector<1x128xi1> to vector<1x128xi32>
    %41 = arith.sitofp %40 : vector<1x128xi32> to vector<1x128xf32>
    %42 = vector.broadcast %41 : vector<1x128xf32> to vector<5x128xf32>
    %43 = arith.mulf %30, %42 : vector<5x128xf32>
    %cst_16 = arith.constant dense<0.000000e+00> : vector<5xf32>
    %44 = vector.multi_reduction <add>, %43, %cst_16 [1] : vector<5x128xf32> to vector<5xf32>
    %45 = vector.shape_cast %44 : vector<5xf32> to vector<5x1xf32>
    %cst_17 = arith.constant 3.125000e-02 : f32
    %46 = vector.broadcast %cst_17 : f32 to vector<5x1xf32>
    %47 = arith.mulf %45, %46 : vector<5x1xf32>
    %48 = vector.broadcast %47 : vector<5x1xf32> to vector<5x128xf32>
    %49 = arith.subf %30, %48 : vector<5x128xf32>
    %50 = vector.broadcast %41 : vector<1x128xf32> to vector<5x128xf32>
    %51 = arith.mulf %49, %50 : vector<5x128xf32>
    %52 = arith.mulf %51, %51 : vector<5x128xf32>
    %cst_18 = arith.constant dense<0.000000e+00> : vector<5xf32>
    %53 = vector.multi_reduction <add>, %52, %cst_18 [1] : vector<5x128xf32> to vector<5xf32>
    %54 = vector.shape_cast %53 : vector<5xf32> to vector<5x1xf32>
    %cst_19 = arith.constant 3.125000e-02 : f32
    %55 = vector.broadcast %cst_19 : f32 to vector<5x1xf32>
    %56 = arith.mulf %54, %55 : vector<5x1xf32>
    %cst_20 = arith.constant 9.99999974E-6 : f32
    %57 = vector.broadcast %cst_20 : f32 to vector<5x1xf32>
    %58 = arith.addf %56, %57 : vector<5x1xf32>
    %59 = math.rsqrt %58 : vector<5x1xf32>
    %60 = vector.broadcast %59 : vector<5x1xf32> to vector<5x128xf32>
    %61 = arith.mulf %51, %60 : vector<5x128xf32>
    %62 = vector.broadcast %41 : vector<1x128xf32> to vector<5x128xf32>
    %63 = arith.mulf %31, %62 : vector<5x128xf32>
    %cst_21 = arith.constant dense<0.000000e+00> : vector<5xf32>
    %64 = vector.multi_reduction <add>, %63, %cst_21 [1] : vector<5x128xf32> to vector<5xf32>
    %65 = vector.shape_cast %64 : vector<5xf32> to vector<5x1xf32>
    %cst_22 = arith.constant 3.125000e-02 : f32
    %66 = vector.broadcast %cst_22 : f32 to vector<5x1xf32>
    %67 = arith.mulf %65, %66 : vector<5x1xf32>
    %68 = vector.broadcast %67 : vector<5x1xf32> to vector<5x128xf32>
    %69 = arith.subf %31, %68 : vector<5x128xf32>
    %70 = vector.broadcast %41 : vector<1x128xf32> to vector<5x128xf32>
    %71 = arith.mulf %69, %70 : vector<5x128xf32>
    %72 = arith.mulf %71, %71 : vector<5x128xf32>
    %cst_23 = arith.constant dense<0.000000e+00> : vector<5xf32>
    %73 = vector.multi_reduction <add>, %72, %cst_23 [1] : vector<5x128xf32> to vector<5xf32>
    %74 = vector.shape_cast %73 : vector<5xf32> to vector<5x1xf32>
    %cst_24 = arith.constant 3.125000e-02 : f32
    %75 = vector.broadcast %cst_24 : f32 to vector<5x1xf32>
    %76 = arith.mulf %74, %75 : vector<5x1xf32>
    %cst_25 = arith.constant 9.99999974E-6 : f32
    %77 = vector.broadcast %cst_25 : f32 to vector<5x1xf32>
    %78 = arith.addf %76, %77 : vector<5x1xf32>
    %79 = math.rsqrt %78 : vector<5x1xf32>
    %80 = vector.broadcast %79 : vector<5x1xf32> to vector<5x128xf32>
    %81 = arith.mulf %71, %80 : vector<5x128xf32>
    %cst_26 = arith.constant dense<0.000000e+00> : vector<5x5xf32>
    %82 = tpu.matmul %61, %81, %cst_26 {dimension_numbers = #tpu.dot_dimension_numbers<[1], [1], [0], [0], [0, 0, 1, 0], [], []>} : vector<5x128xf32>, vector<5x128xf32>, vector<5x5xf32> -> vector<5x5xf32>
    %cst_27 = arith.constant 0.176776692 : f32
    %83 = vector.broadcast %cst_27 : f32 to vector<5x5xf32>
    %84 = arith.mulf %82, %83 : vector<5x5xf32>
    %cst_28 = arith.constant dense<0xFF800000> : vector<5xf32>
    %85 = vector.multi_reduction <maximumf>, %84, %cst_28 [1] : vector<5x5xf32> to vector<5xf32>
    %86 = vector.shape_cast %85 : vector<5xf32> to vector<5x1xf32>
    %87 = vector.broadcast %86 : vector<5x1xf32> to vector<5x5xf32>
    %88 = arith.subf %84, %87 : vector<5x5xf32>
    %89 = math.exp %88 : vector<5x5xf32>
    %cst_29 = arith.constant dense<0.000000e+00> : vector<5xf32>
    %90 = vector.multi_reduction <add>, %89, %cst_29 [1] : vector<5x5xf32> to vector<5xf32>
    %91 = vector.shape_cast %90 : vector<5xf32> to vector<5x1xf32>
    %92 = tpu.reciprocal %91 {approx = true} : vector<5x1xf32> -> vector<5x1xf32>
    %93 = vector.broadcast %92 : vector<5x1xf32> to vector<5x5xf32>
    %94 = arith.mulf %89, %93 : vector<5x5xf32>
    %95 = vector.broadcast %41 : vector<1x128xf32> to vector<5x128xf32>
    %96 = arith.mulf %32, %95 : vector<5x128xf32>
    %cst_30 = arith.constant dense<0.000000e+00> : vector<5x128xf32>
    %97 = tpu.matmul %94, %96, %cst_30 {dimension_numbers = #tpu.dot_dimension_numbers<[1], [0], [0], [1], [0, 0, 1, 1], [], []>} : vector<5x5xf32>, vector<5x128xf32>, vector<5x128xf32> -> vector<5x128xf32>
    %98 = arith.addf %34, %97 : vector<5x128xf32>
    %c32_i32_31 = arith.constant 32 : i32
    %99 = vector.broadcast %c32_i32_31 : i32 to vector<1x128xi32>
    %100 = arith.cmpi sge, %33, %99 : vector<1x128xi32>
    %c64_i32 = arith.constant 64 : i32
    %101 = vector.broadcast %c64_i32 : i32 to vector<1x128xi32>
    %102 = arith.cmpi slt, %33, %101 : vector<1x128xi32>
    %103 = arith.andi %100, %102 : vector<1x128xi1>
    %104 = arith.extui %103 : vector<1x128xi1> to vector<1x128xi32>
    %105 = arith.sitofp %104 : vector<1x128xi32> to vector<1x128xf32>
    %106 = vector.broadcast %105 : vector<1x128xf32> to vector<5x128xf32>
    %107 = arith.mulf %30, %106 : vector<5x128xf32>
    %cst_32 = arith.constant dense<0.000000e+00> : vector<5xf32>
    %108 = vector.multi_reduction <add>, %107, %cst_32 [1] : vector<5x128xf32> to vector<5xf32>
    %109 = vector.shape_cast %108 : vector<5xf32> to vector<5x1xf32>
    %cst_33 = arith.constant 3.125000e-02 : f32
    %110 = vector.broadcast %cst_33 : f32 to vector<5x1xf32>
    %111 = arith.mulf %109, %110 : vector<5x1xf32>
    %112 = vector.broadcast %111 : vector<5x1xf32> to vector<5x128xf32>
    %113 = arith.subf %30, %112 : vector<5x128xf32>
    %114 = vector.broadcast %105 : vector<1x128xf32> to vector<5x128xf32>
    %115 = arith.mulf %113, %114 : vector<5x128xf32>
    %116 = arith.mulf %115, %115 : vector<5x128xf32>
    %cst_34 = arith.constant dense<0.000000e+00> : vector<5xf32>
    %117 = vector.multi_reduction <add>, %116, %cst_34 [1] : vector<5x128xf32> to vector<5xf32>
    %118 = vector.shape_cast %117 : vector<5xf32> to vector<5x1xf32>
    %cst_35 = arith.constant 3.125000e-02 : f32
    %119 = vector.broadcast %cst_35 : f32 to vector<5x1xf32>
    %120 = arith.mulf %118, %119 : vector<5x1xf32>
    %cst_36 = arith.constant 9.99999974E-6 : f32
    %121 = vector.broadcast %cst_36 : f32 to vector<5x1xf32>
    %122 = arith.addf %120, %121 : vector<5x1xf32>
    %123 = math.rsqrt %122 : vector<5x1xf32>
    %124 = vector.broadcast %123 : vector<5x1xf32> to vector<5x128xf32>
    %125 = arith.mulf %115, %124 : vector<5x128xf32>
    %126 = vector.broadcast %105 : vector<1x128xf32> to vector<5x128xf32>
    %127 = arith.mulf %31, %126 : vector<5x128xf32>
    %cst_37 = arith.constant dense<0.000000e+00> : vector<5xf32>
    %128 = vector.multi_reduction <add>, %127, %cst_37 [1] : vector<5x128xf32> to vector<5xf32>
    %129 = vector.shape_cast %128 : vector<5xf32> to vector<5x1xf32>
    %cst_38 = arith.constant 3.125000e-02 : f32
    %130 = vector.broadcast %cst_38 : f32 to vector<5x1xf32>
    %131 = arith.mulf %129, %130 : vector<5x1xf32>
    %132 = vector.broadcast %131 : vector<5x1xf32> to vector<5x128xf32>
    %133 = arith.subf %31, %132 : vector<5x128xf32>
    %134 = vector.broadcast %105 : vector<1x128xf32> to vector<5x128xf32>
    %135 = arith.mulf %133, %134 : vector<5x128xf32>
    %136 = arith.mulf %135, %135 : vector<5x128xf32>
    %cst_39 = arith.constant dense<0.000000e+00> : vector<5xf32>
    %137 = vector.multi_reduction <add>, %136, %cst_39 [1] : vector<5x128xf32> to vector<5xf32>
    %138 = vector.shape_cast %137 : vector<5xf32> to vector<5x1xf32>
    %cst_40 = arith.constant 3.125000e-02 : f32
    %139 = vector.broadcast %cst_40 : f32 to vector<5x1xf32>
    %140 = arith.mulf %138, %139 : vector<5x1xf32>
    %cst_41 = arith.constant 9.99999974E-6 : f32
    %141 = vector.broadcast %cst_41 : f32 to vector<5x1xf32>
    %142 = arith.addf %140, %141 : vector<5x1xf32>
    %143 = math.rsqrt %142 : vector<5x1xf32>
    %144 = vector.broadcast %143 : vector<5x1xf32> to vector<5x128xf32>
    %145 = arith.mulf %135, %144 : vector<5x128xf32>
    %cst_42 = arith.constant dense<0.000000e+00> : vector<5x5xf32>
    %146 = tpu.matmul %125, %145, %cst_42 {dimension_numbers = #tpu.dot_dimension_numbers<[1], [1], [0], [0], [0, 0, 1, 0], [], []>} : vector<5x128xf32>, vector<5x128xf32>, vector<5x5xf32> -> vector<5x5xf32>
    %cst_43 = arith.constant 0.176776692 : f32
    %147 = vector.broadcast %cst_43 : f32 to vector<5x5xf32>
    %148 = arith.mulf %146, %147 : vector<5x5xf32>
    %cst_44 = arith.constant dense<0xFF800000> : vector<5xf32>
    %149 = vector.multi_reduction <maximumf>, %148, %cst_44 [1] : vector<5x5xf32> to vector<5xf32>
    %150 = vector.shape_cast %149 : vector<5xf32> to vector<5x1xf32>
    %151 = vector.broadcast %150 : vector<5x1xf32> to vector<5x5xf32>
    %152 = arith.subf %148, %151 : vector<5x5xf32>
    %153 = math.exp %152 : vector<5x5xf32>
    %cst_45 = arith.constant dense<0.000000e+00> : vector<5xf32>
    %154 = vector.multi_reduction <add>, %153, %cst_45 [1] : vector<5x5xf32> to vector<5xf32>
    %155 = vector.shape_cast %154 : vector<5xf32> to vector<5x1xf32>
    %156 = tpu.reciprocal %155 {approx = true} : vector<5x1xf32> -> vector<5x1xf32>
    %157 = vector.broadcast %156 : vector<5x1xf32> to vector<5x5xf32>
    %158 = arith.mulf %153, %157 : vector<5x5xf32>
    %159 = vector.broadcast %105 : vector<1x128xf32> to vector<5x128xf32>
    %160 = arith.mulf %32, %159 : vector<5x128xf32>
    %cst_46 = arith.constant dense<0.000000e+00> : vector<5x128xf32>
    %161 = tpu.matmul %158, %160, %cst_46 {dimension_numbers = #tpu.dot_dimension_numbers<[1], [0], [0], [1], [0, 0, 1, 1], [], []>} : vector<5x5xf32>, vector<5x128xf32>, vector<5x128xf32> -> vector<5x128xf32>
    %162 = arith.addf %98, %161 : vector<5x128xf32>
    %c64_i32_47 = arith.constant 64 : i32
    %163 = vector.broadcast %c64_i32_47 : i32 to vector<1x128xi32>
    %164 = arith.cmpi sge, %33, %163 : vector<1x128xi32>
    %c96_i32 = arith.constant 96 : i32
    %165 = vector.broadcast %c96_i32 : i32 to vector<1x128xi32>
    %166 = arith.cmpi slt, %33, %165 : vector<1x128xi32>
    %167 = arith.andi %164, %166 : vector<1x128xi1>
    %168 = arith.extui %167 : vector<1x128xi1> to vector<1x128xi32>
    %169 = arith.sitofp %168 : vector<1x128xi32> to vector<1x128xf32>
    %170 = vector.broadcast %169 : vector<1x128xf32> to vector<5x128xf32>
    %171 = arith.mulf %30, %170 : vector<5x128xf32>
    %cst_48 = arith.constant dense<0.000000e+00> : vector<5xf32>
    %172 = vector.multi_reduction <add>, %171, %cst_48 [1] : vector<5x128xf32> to vector<5xf32>
    %173 = vector.shape_cast %172 : vector<5xf32> to vector<5x1xf32>
    %cst_49 = arith.constant 3.125000e-02 : f32
    %174 = vector.broadcast %cst_49 : f32 to vector<5x1xf32>
    %175 = arith.mulf %173, %174 : vector<5x1xf32>
    %176 = vector.broadcast %175 : vector<5x1xf32> to vector<5x128xf32>
    %177 = arith.subf %30, %176 : vector<5x128xf32>
    %178 = vector.broadcast %169 : vector<1x128xf32> to vector<5x128xf32>
    %179 = arith.mulf %177, %178 : vector<5x128xf32>
    %180 = arith.mulf %179, %179 : vector<5x128xf32>
    %cst_50 = arith.constant dense<0.000000e+00> : vector<5xf32>
    %181 = vector.multi_reduction <add>, %180, %cst_50 [1] : vector<5x128xf32> to vector<5xf32>
    %182 = vector.shape_cast %181 : vector<5xf32> to vector<5x1xf32>
    %cst_51 = arith.constant 3.125000e-02 : f32
    %183 = vector.broadcast %cst_51 : f32 to vector<5x1xf32>
    %184 = arith.mulf %182, %183 : vector<5x1xf32>
    %cst_52 = arith.constant 9.99999974E-6 : f32
    %185 = vector.broadcast %cst_52 : f32 to vector<5x1xf32>
    %186 = arith.addf %184, %185 : vector<5x1xf32>
    %187 = math.rsqrt %186 : vector<5x1xf32>
    %188 = vector.broadcast %187 : vector<5x1xf32> to vector<5x128xf32>
    %189 = arith.mulf %179, %188 : vector<5x128xf32>
    %190 = vector.broadcast %169 : vector<1x128xf32> to vector<5x128xf32>
    %191 = arith.mulf %31, %190 : vector<5x128xf32>
    %cst_53 = arith.constant dense<0.000000e+00> : vector<5xf32>
    %192 = vector.multi_reduction <add>, %191, %cst_53 [1] : vector<5x128xf32> to vector<5xf32>
    %193 = vector.shape_cast %192 : vector<5xf32> to vector<5x1xf32>
    %cst_54 = arith.constant 3.125000e-02 : f32
    %194 = vector.broadcast %cst_54 : f32 to vector<5x1xf32>
    %195 = arith.mulf %193, %194 : vector<5x1xf32>
    %196 = vector.broadcast %195 : vector<5x1xf32> to vector<5x128xf32>
    %197 = arith.subf %31, %196 : vector<5x128xf32>
    %198 = vector.broadcast %169 : vector<1x128xf32> to vector<5x128xf32>
    %199 = arith.mulf %197, %198 : vector<5x128xf32>
    %200 = arith.mulf %199, %199 : vector<5x128xf32>
    %cst_55 = arith.constant dense<0.000000e+00> : vector<5xf32>
    %201 = vector.multi_reduction <add>, %200, %cst_55 [1] : vector<5x128xf32> to vector<5xf32>
    %202 = vector.shape_cast %201 : vector<5xf32> to vector<5x1xf32>
    %cst_56 = arith.constant 3.125000e-02 : f32
    %203 = vector.broadcast %cst_56 : f32 to vector<5x1xf32>
    %204 = arith.mulf %202, %203 : vector<5x1xf32>
    %cst_57 = arith.constant 9.99999974E-6 : f32
    %205 = vector.broadcast %cst_57 : f32 to vector<5x1xf32>
    %206 = arith.addf %204, %205 : vector<5x1xf32>
    %207 = math.rsqrt %206 : vector<5x1xf32>
    %208 = vector.broadcast %207 : vector<5x1xf32> to vector<5x128xf32>
    %209 = arith.mulf %199, %208 : vector<5x128xf32>
    %cst_58 = arith.constant dense<0.000000e+00> : vector<5x5xf32>
    %210 = tpu.matmul %189, %209, %cst_58 {dimension_numbers = #tpu.dot_dimension_numbers<[1], [1], [0], [0], [0, 0, 1, 0], [], []>} : vector<5x128xf32>, vector<5x128xf32>, vector<5x5xf32> -> vector<5x5xf32>
    %cst_59 = arith.constant 0.176776692 : f32
    %211 = vector.broadcast %cst_59 : f32 to vector<5x5xf32>
    %212 = arith.mulf %210, %211 : vector<5x5xf32>
    %cst_60 = arith.constant dense<0xFF800000> : vector<5xf32>
    %213 = vector.multi_reduction <maximumf>, %212, %cst_60 [1] : vector<5x5xf32> to vector<5xf32>
    %214 = vector.shape_cast %213 : vector<5xf32> to vector<5x1xf32>
    %215 = vector.broadcast %214 : vector<5x1xf32> to vector<5x5xf32>
    %216 = arith.subf %212, %215 : vector<5x5xf32>
    %217 = math.exp %216 : vector<5x5xf32>
    %cst_61 = arith.constant dense<0.000000e+00> : vector<5xf32>
    %218 = vector.multi_reduction <add>, %217, %cst_61 [1] : vector<5x5xf32> to vector<5xf32>
    %219 = vector.shape_cast %218 : vector<5xf32> to vector<5x1xf32>
    %220 = tpu.reciprocal %219 {approx = true} : vector<5x1xf32> -> vector<5x1xf32>
    %221 = vector.broadcast %220 : vector<5x1xf32> to vector<5x5xf32>
    %222 = arith.mulf %217, %221 : vector<5x5xf32>
    %223 = vector.broadcast %169 : vector<1x128xf32> to vector<5x128xf32>
    %224 = arith.mulf %32, %223 : vector<5x128xf32>
    %cst_62 = arith.constant dense<0.000000e+00> : vector<5x128xf32>
    %225 = tpu.matmul %222, %224, %cst_62 {dimension_numbers = #tpu.dot_dimension_numbers<[1], [0], [0], [1], [0, 0, 1, 1], [], []>} : vector<5x5xf32>, vector<5x128xf32>, vector<5x128xf32> -> vector<5x128xf32>
    %226 = arith.addf %162, %225 : vector<5x128xf32>
    %c96_i32_63 = arith.constant 96 : i32
    %227 = vector.broadcast %c96_i32_63 : i32 to vector<1x128xi32>
    %228 = arith.cmpi sge, %33, %227 : vector<1x128xi32>
    %c128_i32 = arith.constant 128 : i32
    %229 = vector.broadcast %c128_i32 : i32 to vector<1x128xi32>
    %230 = arith.cmpi slt, %33, %229 : vector<1x128xi32>
    %231 = arith.andi %228, %230 : vector<1x128xi1>
    %232 = arith.extui %231 : vector<1x128xi1> to vector<1x128xi32>
    %233 = arith.sitofp %232 : vector<1x128xi32> to vector<1x128xf32>
    %234 = vector.broadcast %233 : vector<1x128xf32> to vector<5x128xf32>
    %235 = arith.mulf %30, %234 : vector<5x128xf32>
    %cst_64 = arith.constant dense<0.000000e+00> : vector<5xf32>
    %236 = vector.multi_reduction <add>, %235, %cst_64 [1] : vector<5x128xf32> to vector<5xf32>
    %237 = vector.shape_cast %236 : vector<5xf32> to vector<5x1xf32>
    %cst_65 = arith.constant 3.125000e-02 : f32
    %238 = vector.broadcast %cst_65 : f32 to vector<5x1xf32>
    %239 = arith.mulf %237, %238 : vector<5x1xf32>
    %240 = vector.broadcast %239 : vector<5x1xf32> to vector<5x128xf32>
    %241 = arith.subf %30, %240 : vector<5x128xf32>
    %242 = vector.broadcast %233 : vector<1x128xf32> to vector<5x128xf32>
    %243 = arith.mulf %241, %242 : vector<5x128xf32>
    %244 = arith.mulf %243, %243 : vector<5x128xf32>
    %cst_66 = arith.constant dense<0.000000e+00> : vector<5xf32>
    %245 = vector.multi_reduction <add>, %244, %cst_66 [1] : vector<5x128xf32> to vector<5xf32>
    %246 = vector.shape_cast %245 : vector<5xf32> to vector<5x1xf32>
    %cst_67 = arith.constant 3.125000e-02 : f32
    %247 = vector.broadcast %cst_67 : f32 to vector<5x1xf32>
    %248 = arith.mulf %246, %247 : vector<5x1xf32>
    %cst_68 = arith.constant 9.99999974E-6 : f32
    %249 = vector.broadcast %cst_68 : f32 to vector<5x1xf32>
    %250 = arith.addf %248, %249 : vector<5x1xf32>
    %251 = math.rsqrt %250 : vector<5x1xf32>
    %252 = vector.broadcast %251 : vector<5x1xf32> to vector<5x128xf32>
    %253 = arith.mulf %243, %252 : vector<5x128xf32>
    %254 = vector.broadcast %233 : vector<1x128xf32> to vector<5x128xf32>
    %255 = arith.mulf %31, %254 : vector<5x128xf32>
    %cst_69 = arith.constant dense<0.000000e+00> : vector<5xf32>
    %256 = vector.multi_reduction <add>, %255, %cst_69 [1] : vector<5x128xf32> to vector<5xf32>
    %257 = vector.shape_cast %256 : vector<5xf32> to vector<5x1xf32>
    %cst_70 = arith.constant 3.125000e-02 : f32
    %258 = vector.broadcast %cst_70 : f32 to vector<5x1xf32>
    %259 = arith.mulf %257, %258 : vector<5x1xf32>
    %260 = vector.broadcast %259 : vector<5x1xf32> to vector<5x128xf32>
    %261 = arith.subf %31, %260 : vector<5x128xf32>
    %262 = vector.broadcast %233 : vector<1x128xf32> to vector<5x128xf32>
    %263 = arith.mulf %261, %262 : vector<5x128xf32>
    %264 = arith.mulf %263, %263 : vector<5x128xf32>
    %cst_71 = arith.constant dense<0.000000e+00> : vector<5xf32>
    %265 = vector.multi_reduction <add>, %264, %cst_71 [1] : vector<5x128xf32> to vector<5xf32>
    %266 = vector.shape_cast %265 : vector<5xf32> to vector<5x1xf32>
    %cst_72 = arith.constant 3.125000e-02 : f32
    %267 = vector.broadcast %cst_72 : f32 to vector<5x1xf32>
    %268 = arith.mulf %266, %267 : vector<5x1xf32>
    %cst_73 = arith.constant 9.99999974E-6 : f32
    %269 = vector.broadcast %cst_73 : f32 to vector<5x1xf32>
    %270 = arith.addf %268, %269 : vector<5x1xf32>
    %271 = math.rsqrt %270 : vector<5x1xf32>
    %272 = vector.broadcast %271 : vector<5x1xf32> to vector<5x128xf32>
    %273 = arith.mulf %263, %272 : vector<5x128xf32>
    %cst_74 = arith.constant dense<0.000000e+00> : vector<5x5xf32>
    %274 = tpu.matmul %253, %273, %cst_74 {dimension_numbers = #tpu.dot_dimension_numbers<[1], [1], [0], [0], [0, 0, 1, 0], [], []>} : vector<5x128xf32>, vector<5x128xf32>, vector<5x5xf32> -> vector<5x5xf32>
    %cst_75 = arith.constant 0.176776692 : f32
    %275 = vector.broadcast %cst_75 : f32 to vector<5x5xf32>
    %276 = arith.mulf %274, %275 : vector<5x5xf32>
    %cst_76 = arith.constant dense<0xFF800000> : vector<5xf32>
    %277 = vector.multi_reduction <maximumf>, %276, %cst_76 [1] : vector<5x5xf32> to vector<5xf32>
    %278 = vector.shape_cast %277 : vector<5xf32> to vector<5x1xf32>
    %279 = vector.broadcast %278 : vector<5x1xf32> to vector<5x5xf32>
    %280 = arith.subf %276, %279 : vector<5x5xf32>
    %281 = math.exp %280 : vector<5x5xf32>
    %cst_77 = arith.constant dense<0.000000e+00> : vector<5xf32>
    %282 = vector.multi_reduction <add>, %281, %cst_77 [1] : vector<5x5xf32> to vector<5xf32>
    %283 = vector.shape_cast %282 : vector<5xf32> to vector<5x1xf32>
    %284 = tpu.reciprocal %283 {approx = true} : vector<5x1xf32> -> vector<5x1xf32>
    %285 = vector.broadcast %284 : vector<5x1xf32> to vector<5x5xf32>
    %286 = arith.mulf %281, %285 : vector<5x5xf32>
    %287 = vector.broadcast %233 : vector<1x128xf32> to vector<5x128xf32>
    %288 = arith.mulf %32, %287 : vector<5x128xf32>
    %cst_78 = arith.constant dense<0.000000e+00> : vector<5x128xf32>
    %289 = tpu.matmul %286, %288, %cst_78 {dimension_numbers = #tpu.dot_dimension_numbers<[1], [0], [0], [1], [0, 0, 1, 1], [], []>} : vector<5x5xf32>, vector<5x128xf32>, vector<5x128xf32> -> vector<5x128xf32>
    %290 = arith.addf %226, %289 : vector<5x128xf32>
    %291 = arith.truncf %290 : vector<5x128xf32> to vector<5x128xbf16>
    %c0_79 = arith.constant 0 : index
    %c0_80 = arith.constant 0 : index
    %292 = vector.load %arg6[%c0_79, %c0_80] : memref<128x128xbf16, #tpu.memory_space<vmem>>, vector<128x128xbf16>
    %cst_81 = arith.constant dense<0.000000e+00> : vector<5x128xf32>
    %293 = tpu.matmul %291, %292, %cst_81 {dimension_numbers = #tpu.dot_dimension_numbers<[1], [0], [0], [1], [0, 0, 1, 1], [], []>} : vector<5x128xbf16>, vector<128x128xbf16>, vector<5x128xf32> -> vector<5x128xf32>
    %c0_82 = arith.constant 0 : index
    %c0_83 = arith.constant 0 : index
    %294 = vector.load %arg7[%c0_82, %c0_83] : memref<1x128xf32, #tpu.memory_space<vmem>>, vector<1x128xf32>
    %295 = vector.broadcast %294 : vector<1x128xf32> to vector<5x128xf32>
    %296 = arith.addf %293, %295 : vector<5x128xf32>
    %297 = arith.addf %1, %296 : vector<5x128xf32>
    %c0_84 = arith.constant 0 : index
    %c0_85 = arith.constant 0 : index
    %298 = vector.load %arg8[%c0_84, %c0_85] : memref<1x128xf32, #tpu.memory_space<vmem>>, vector<1x128xf32>
    %c0_86 = arith.constant 0 : index
    %c0_87 = arith.constant 0 : index
    %299 = vector.load %arg9[%c0_86, %c0_87] : memref<1x128xf32, #tpu.memory_space<vmem>>, vector<1x128xf32>
    %cst_88 = arith.constant dense<0.000000e+00> : vector<5xf32>
    %300 = vector.multi_reduction <add>, %297, %cst_88 [1] : vector<5x128xf32> to vector<5xf32>
    %301 = vector.shape_cast %300 : vector<5xf32> to vector<5x1xf32>
    %cst_89 = arith.constant 1.280000e+02 : f32
    %302 = vector.broadcast %cst_89 : f32 to vector<5x1xf32>
    %303 = arith.divf %301, %302 : vector<5x1xf32>
    %304 = vector.broadcast %303 : vector<5x1xf32> to vector<5x128xf32>
    %305 = arith.subf %297, %304 : vector<5x128xf32>
    %306 = arith.mulf %305, %305 : vector<5x128xf32>
    %cst_90 = arith.constant dense<0.000000e+00> : vector<5xf32>
    %307 = vector.multi_reduction <add>, %306, %cst_90 [1] : vector<5x128xf32> to vector<5xf32>
    %308 = vector.shape_cast %307 : vector<5xf32> to vector<5x1xf32>
    %cst_91 = arith.constant 1.280000e+02 : f32
    %309 = vector.broadcast %cst_91 : f32 to vector<5x1xf32>
    %310 = arith.divf %308, %309 : vector<5x1xf32>
    %cst_92 = arith.constant 9.99999974E-6 : f32
    %311 = vector.broadcast %cst_92 : f32 to vector<5x1xf32>
    %312 = arith.addf %310, %311 : vector<5x1xf32>
    %313 = math.rsqrt %312 : vector<5x1xf32>
    %314 = vector.broadcast %313 : vector<5x1xf32> to vector<5x128xf32>
    %315 = arith.mulf %305, %314 : vector<5x128xf32>
    %316 = vector.broadcast %298 : vector<1x128xf32> to vector<5x128xf32>
    %317 = arith.mulf %315, %316 : vector<5x128xf32>
    %318 = vector.broadcast %299 : vector<1x128xf32> to vector<5x128xf32>
    %319 = arith.addf %317, %318 : vector<5x128xf32>
    %320 = arith.truncf %319 : vector<5x128xf32> to vector<5x128xbf16>
    %c0_93 = arith.constant 0 : index
    %c0_94 = arith.constant 0 : index
    %321 = vector.load %arg10[%c0_93, %c0_94] : memref<128x512xbf16, #tpu.memory_space<vmem>>, vector<128x512xbf16>
    %cst_95 = arith.constant dense<0.000000e+00> : vector<5x512xf32>
    %322 = tpu.matmul %320, %321, %cst_95 {dimension_numbers = #tpu.dot_dimension_numbers<[1], [0], [0], [1], [0, 0, 1, 1], [], []>} : vector<5x128xbf16>, vector<128x512xbf16>, vector<5x512xf32> -> vector<5x512xf32>
    %c0_96 = arith.constant 0 : index
    %c0_97 = arith.constant 0 : index
    %323 = vector.load %arg11[%c0_96, %c0_97] : memref<1x512xf32, #tpu.memory_space<vmem>>, vector<1x512xf32>
    %324 = vector.broadcast %323 : vector<1x512xf32> to vector<5x512xf32>
    %325 = arith.addf %322, %324 : vector<5x512xf32>
    %cst_98 = arith.constant 5.000000e-01 : f32
    %326 = vector.broadcast %cst_98 : f32 to vector<5x512xf32>
    %327 = arith.mulf %326, %325 : vector<5x512xf32>
    %cst_99 = arith.constant 0.707106769 : f32
    %328 = vector.broadcast %cst_99 : f32 to vector<5x512xf32>
    %329 = arith.mulf %325, %328 : vector<5x512xf32>
    %330 = math.absf %329 : vector<5x512xf32>
    %cst_100 = arith.constant 0.327591091 : f32
    %331 = vector.broadcast %cst_100 : f32 to vector<5x512xf32>
    %332 = arith.mulf %331, %330 : vector<5x512xf32>
    %cst_101 = arith.constant 1.000000e+00 : f32
    %333 = vector.broadcast %cst_101 : f32 to vector<5x512xf32>
    %334 = arith.addf %333, %332 : vector<5x512xf32>
    %cst_102 = arith.constant 1.000000e+00 : f32
    %335 = vector.broadcast %cst_102 : f32 to vector<5x512xf32>
    %336 = arith.divf %335, %334 : vector<5x512xf32>
    %cst_103 = arith.constant 1.06140542 : f32
    %337 = vector.broadcast %cst_103 : f32 to vector<5x512xf32>
    %338 = arith.mulf %337, %336 : vector<5x512xf32>
    %cst_104 = arith.constant -1.45315206 : f32
    %339 = vector.broadcast %cst_104 : f32 to vector<5x512xf32>
    %340 = arith.addf %338, %339 : vector<5x512xf32>
    %341 = arith.mulf %340, %336 : vector<5x512xf32>
    %cst_105 = arith.constant 1.42141378 : f32
    %342 = vector.broadcast %cst_105 : f32 to vector<5x512xf32>
    %343 = arith.addf %341, %342 : vector<5x512xf32>
    %344 = arith.mulf %343, %336 : vector<5x512xf32>
    %cst_106 = arith.constant -0.284496725 : f32
    %345 = vector.broadcast %cst_106 : f32 to vector<5x512xf32>
    %346 = arith.addf %344, %345 : vector<5x512xf32>
    %347 = arith.mulf %346, %336 : vector<5x512xf32>
    %cst_107 = arith.constant 0.254829586 : f32
    %348 = vector.broadcast %cst_107 : f32 to vector<5x512xf32>
    %349 = arith.addf %347, %348 : vector<5x512xf32>
    %350 = arith.mulf %349, %336 : vector<5x512xf32>
    %cst_108 = arith.constant 0.000000e+00 : f32
    %351 = vector.broadcast %cst_108 : f32 to vector<5x512xf32>
    %352 = arith.subf %351, %330 : vector<5x512xf32>
    %353 = arith.mulf %352, %330 : vector<5x512xf32>
    %354 = math.exp %353 : vector<5x512xf32>
    %355 = arith.mulf %350, %354 : vector<5x512xf32>
    %cst_109 = arith.constant 1.000000e+00 : f32
    %356 = vector.broadcast %cst_109 : f32 to vector<5x512xf32>
    %357 = arith.subf %356, %355 : vector<5x512xf32>
    %cst_110 = arith.constant 0.000000e+00 : f32
    %358 = vector.broadcast %cst_110 : f32 to vector<5x512xf32>
    %359 = arith.cmpf olt, %329, %358 : vector<5x512xf32>
    %cst_111 = arith.constant 0.000000e+00 : f32
    %360 = vector.broadcast %cst_111 : f32 to vector<5x512xf32>
    %361 = arith.subf %360, %357 : vector<5x512xf32>
    %362 = arith.select %359, %361, %357 : vector<5x512xi1>, vector<5x512xf32>
    %cst_112 = arith.constant 1.000000e+00 : f32
    %363 = vector.broadcast %cst_112 : f32 to vector<5x512xf32>
    %364 = arith.addf %363, %362 : vector<5x512xf32>
    %365 = arith.mulf %327, %364 : vector<5x512xf32>
    %366 = arith.truncf %365 : vector<5x512xf32> to vector<5x512xbf16>
    %c0_113 = arith.constant 0 : index
    %c0_114 = arith.constant 0 : index
    %367 = vector.load %arg12[%c0_113, %c0_114] : memref<512x128xbf16, #tpu.memory_space<vmem>>, vector<512x128xbf16>
    %cst_115 = arith.constant dense<0.000000e+00> : vector<5x128xf32>
    %368 = tpu.matmul %366, %367, %cst_115 {dimension_numbers = #tpu.dot_dimension_numbers<[1], [0], [0], [1], [0, 0, 1, 1], [], []>} : vector<5x512xbf16>, vector<512x128xbf16>, vector<5x128xf32> -> vector<5x128xf32>
    %c0_116 = arith.constant 0 : index
    %c0_117 = arith.constant 0 : index
    %369 = vector.load %arg13[%c0_116, %c0_117] : memref<1x128xf32, #tpu.memory_space<vmem>>, vector<1x128xf32>
    %370 = vector.broadcast %369 : vector<1x128xf32> to vector<5x128xf32>
    %371 = arith.addf %368, %370 : vector<5x128xf32>
    %372 = arith.addf %297, %371 : vector<5x128xf32>
    %c0_118 = arith.constant 0 : index
    %c0_119 = arith.constant 0 : index
    %c0_120 = arith.constant 0 : index
    %373 = vector.load %arg14[%c0_118, %c0_119, %c0_120] : memref<1x5x128xf32, #tpu.memory_space<vmem>>, vector<1x5x128xf32>
    %374 = vector.shape_cast %373 : vector<1x5x128xf32> to vector<5x128xf32>
    %375 = vector.shape_cast %372 : vector<5x128xf32> to vector<1x5x128xf32>
    tpu.vector_store %arg14[%c0_118, %c0_119, %c0_120], %375 {strides = array<i32>} : memref<1x5x128xf32, #tpu.memory_space<vmem>>, vector<1x5x128xf32>,
    return
  }
  func.func @transform_0(%arg0: i32) -> (i32, i32, i32) {
    %c0_i32 = arith.constant 0 : i32
    %c0_i32_0 = arith.constant 0 : i32
    %c0_i32_1 = arith.constant 0 : i32
    return %arg0, %c0_i32, %c0_i32_0 : i32, i32, i32
  }
  func.func @transform_1(%arg0: i32) -> (i32, i32) {
    %c0_i32 = arith.constant 0 : i32
    %c0_i32_0 = arith.constant 0 : i32
    %c0_i32_1 = arith.constant 0 : i32
    return %c0_i32, %c0_i32_0 : i32, i32
  }
  func.func @transform_2(%arg0: i32) -> (i32, i32) {
    %c0_i32 = arith.constant 0 : i32
    %c0_i32_0 = arith.constant 0 : i32
    %c0_i32_1 = arith.constant 0 : i32
    return %c0_i32, %c0_i32_0 : i32, i32
  }
  func.func @transform_3(%arg0: i32) -> (i32, i32) {
    %c0_i32 = arith.constant 0 : i32
    %c0_i32_0 = arith.constant 0 : i32
    %c0_i32_1 = arith.constant 0 : i32
    return %c0_i32, %c0_i32_0 : i32, i32
  }
  func.func @transform_4(%arg0: i32) -> (i32, i32) {
    %c0_i32 = arith.constant 0 : i32
    %c0_i32_0 = arith.constant 0 : i32
    %c0_i32_1 = arith.constant 0 : i32
    return %c0_i32, %c0_i32_0 : i32, i32
  }
  func.func @transform_5(%arg0: i32) -> (i32, i32) {
    %c0_i32 = arith.constant 0 : i32
    %c0_i32_0 = arith.constant 0 : i32
    %c0_i32_1 = arith.constant 0 : i32
    return %c0_i32, %c0_i32_0 : i32, i32
  }
  func.func @transform_6(%arg0: i32) -> (i32, i32) {
    %c0_i32 = arith.constant 0 : i32
    %c0_i32_0 = arith.constant 0 : i32
    %c0_i32_1 = arith.constant 0 : i32
    return %c0_i32, %c0_i32_0 : i32, i32
  }
  func.func @transform_7(%arg0: i32) -> (i32, i32) {
    %c0_i32 = arith.constant 0 : i32
    %c0_i32_0 = arith.constant 0 : i32
    %c0_i32_1 = arith.constant 0 : i32
    return %c0_i32, %c0_i32_0 : i32, i32
  }
  func.func @transform_8(%arg0: i32) -> (i32, i32) {
    %c0_i32 = arith.constant 0 : i32
    %c0_i32_0 = arith.constant 0 : i32
    %c0_i32_1 = arith.constant 0 : i32
    return %c0_i32, %c0_i32_0 : i32, i32
  }
  func.func @transform_9(%arg0: i32) -> (i32, i32) {
    %c0_i32 = arith.constant 0 : i32
    %c0_i32_0 = arith.constant 0 : i32
    %c0_i32_1 = arith.constant 0 : i32
    return %c0_i32, %c0_i32_0 : i32, i32
  }
  func.func @transform_10(%arg0: i32) -> (i32, i32) {
    %c0_i32 = arith.constant 0 : i32
    %c0_i32_0 = arith.constant 0 : i32
    %c0_i32_1 = arith.constant 0 : i32
    return %c0_i32, %c0_i32_0 : i32, i32
  }
  func.func @transform_11(%arg0: i32) -> (i32, i32) {
    %c0_i32 = arith.constant 0 : i32
    %c0_i32_0 = arith.constant 0 : i32
    %c0_i32_1 = arith.constant 0 : i32
    return %c0_i32, %c0_i32_0 : i32, i32
  }
  func.func @transform_12(%arg0: i32) -> (i32, i32) {
    %c0_i32 = arith.constant 0 : i32
    %c0_i32_0 = arith.constant 0 : i32
    %c0_i32_1 = arith.constant 0 : i32
    return %c0_i32, %c0_i32_0 : i32, i32
  }
  func.func @transform_13(%arg0: i32) -> (i32, i32, i32) {
    %c0_i32 = arith.constant 0 : i32
    %c0_i32_0 = arith.constant 0 : i32
    %c0_i32_1 = arith.constant 0 : i32
    return %arg0, %c0_i32, %c0_i32_0 : i32, i32, i32
  }
}

module attributes {stable_mosaic.version = 11 : i64} {
  func.func @_block_kernel(%arg0: i32, %arg1: memref<1x17x128xf32, #tpu.memory_space<vmem>>, %arg2: memref<1x128xf32, #tpu.memory_space<vmem>>, %arg3: memref<1x128xf32, #tpu.memory_space<vmem>>, %arg4: memref<128x384xbf16, #tpu.memory_space<vmem>>, %arg5: memref<1x384xf32, #tpu.memory_space<vmem>>, %arg6: memref<128x128xbf16, #tpu.memory_space<vmem>>, %arg7: memref<1x128xf32, #tpu.memory_space<vmem>>, %arg8: memref<1x128xf32, #tpu.memory_space<vmem>>, %arg9: memref<1x128xf32, #tpu.memory_space<vmem>>, %arg10: memref<128x512xbf16, #tpu.memory_space<vmem>>, %arg11: memref<1x512xf32, #tpu.memory_space<vmem>>, %arg12: memref<512x128xbf16, #tpu.memory_space<vmem>>, %arg13: memref<1x128xf32, #tpu.memory_space<vmem>>, %arg14: memref<1x17x128xf32, #tpu.memory_space<vmem>>) attributes {dimension_semantics = [#tpu.dimension_semantics<parallel>], iteration_bounds = array<i64: 2>, scalar_prefetch = 0 : i64, scratch_operands = 0 : i64, tpu.core_type = #tpu.core_type<tc>, window_params = [{transform_indices = @transform_0, window_bounds = array<i64: 1, 17, 128>}, {pipeline_mode = #tpu.pipeline_mode<synchronous>, transform_indices = @transform_1, window_bounds = array<i64: 1, 128>}, {pipeline_mode = #tpu.pipeline_mode<synchronous>, transform_indices = @transform_2, window_bounds = array<i64: 1, 128>}, {pipeline_mode = #tpu.pipeline_mode<synchronous>, transform_indices = @transform_3, window_bounds = array<i64: 128, 384>}, {pipeline_mode = #tpu.pipeline_mode<synchronous>, transform_indices = @transform_4, window_bounds = array<i64: 1, 384>}, {pipeline_mode = #tpu.pipeline_mode<synchronous>, transform_indices = @transform_5, window_bounds = array<i64: 128, 128>}, {pipeline_mode = #tpu.pipeline_mode<synchronous>, transform_indices = @transform_6, window_bounds = array<i64: 1, 128>}, {pipeline_mode = #tpu.pipeline_mode<synchronous>, transform_indices = @transform_7, window_bounds = array<i64: 1, 128>}, {pipeline_mode = #tpu.pipeline_mode<synchronous>, transform_indices = @transform_8, window_bounds = array<i64: 1, 128>}, {pipeline_mode = #tpu.pipeline_mode<synchronous>, transform_indices = @transform_9, window_bounds = array<i64: 128, 512>}, {pipeline_mode = #tpu.pipeline_mode<synchronous>, transform_indices = @transform_10, window_bounds = array<i64: 1, 512>}, {pipeline_mode = #tpu.pipeline_mode<synchronous>, transform_indices = @transform_11, window_bounds = array<i64: 512, 128>}, {pipeline_mode = #tpu.pipeline_mode<synchronous>, transform_indices = @transform_12, window_bounds = array<i64: 1, 128>}, {transform_indices = @transform_13, window_bounds = array<i64: 1, 17, 128>}]} {
    %c0 = arith.constant 0 : index
    %c0_0 = arith.constant 0 : index
    %c0_1 = arith.constant 0 : index
    %0 = vector.load %arg1[%c0, %c0_0, %c0_1] : memref<1x17x128xf32, #tpu.memory_space<vmem>>, vector<1x17x128xf32>
    %1 = vector.shape_cast %0 : vector<1x17x128xf32> to vector<17x128xf32>
    %c0_2 = arith.constant 0 : index
    %c0_3 = arith.constant 0 : index
    %2 = vector.load %arg2[%c0_2, %c0_3] : memref<1x128xf32, #tpu.memory_space<vmem>>, vector<1x128xf32>
    %c0_4 = arith.constant 0 : index
    %c0_5 = arith.constant 0 : index
    %3 = vector.load %arg3[%c0_4, %c0_5] : memref<1x128xf32, #tpu.memory_space<vmem>>, vector<1x128xf32>
    %cst = arith.constant dense<0.000000e+00> : vector<17xf32>
    %4 = vector.multi_reduction <add>, %1, %cst [1] : vector<17x128xf32> to vector<17xf32>
    %5 = vector.shape_cast %4 : vector<17xf32> to vector<17x1xf32>
    %cst_6 = arith.constant 1.280000e+02 : f32
    %6 = vector.broadcast %cst_6 : f32 to vector<17x1xf32>
    %7 = arith.divf %5, %6 : vector<17x1xf32>
    %8 = vector.broadcast %7 : vector<17x1xf32> to vector<17x128xf32>
    %9 = arith.subf %1, %8 : vector<17x128xf32>
    %10 = arith.mulf %9, %9 : vector<17x128xf32>
    %cst_7 = arith.constant dense<0.000000e+00> : vector<17xf32>
    %11 = vector.multi_reduction <add>, %10, %cst_7 [1] : vector<17x128xf32> to vector<17xf32>
    %12 = vector.shape_cast %11 : vector<17xf32> to vector<17x1xf32>
    %cst_8 = arith.constant 1.280000e+02 : f32
    %13 = vector.broadcast %cst_8 : f32 to vector<17x1xf32>
    %14 = arith.divf %12, %13 : vector<17x1xf32>
    %cst_9 = arith.constant 9.99999974E-6 : f32
    %15 = vector.broadcast %cst_9 : f32 to vector<17x1xf32>
    %16 = arith.addf %14, %15 : vector<17x1xf32>
    %17 = math.rsqrt %16 : vector<17x1xf32>
    %18 = vector.broadcast %17 : vector<17x1xf32> to vector<17x128xf32>
    %19 = arith.mulf %9, %18 : vector<17x128xf32>
    %20 = vector.broadcast %2 : vector<1x128xf32> to vector<17x128xf32>
    %21 = arith.mulf %19, %20 : vector<17x128xf32>
    %22 = vector.broadcast %3 : vector<1x128xf32> to vector<17x128xf32>
    %23 = arith.addf %21, %22 : vector<17x128xf32>
    %24 = arith.truncf %23 : vector<17x128xf32> to vector<17x128xbf16>
    %c0_10 = arith.constant 0 : index
    %c0_11 = arith.constant 0 : index
    %25 = vector.load %arg4[%c0_10, %c0_11] : memref<128x384xbf16, #tpu.memory_space<vmem>>, vector<128x384xbf16>
    %cst_12 = arith.constant dense<0.000000e+00> : vector<17x384xf32>
    %26 = tpu.matmul %24, %25, %cst_12 {dimension_numbers = #tpu.dot_dimension_numbers<[1], [0], [0], [1], [0, 0, 1, 1], [], []>} : vector<17x128xbf16>, vector<128x384xbf16>, vector<17x384xf32> -> vector<17x384xf32>
    %c0_13 = arith.constant 0 : index
    %c0_14 = arith.constant 0 : index
    %27 = vector.load %arg5[%c0_13, %c0_14] : memref<1x384xf32, #tpu.memory_space<vmem>>, vector<1x384xf32>
    %28 = vector.broadcast %27 : vector<1x384xf32> to vector<17x384xf32>
    %29 = arith.addf %26, %28 : vector<17x384xf32>
    %30 = vector.extract_strided_slice %29 {offsets = [0, 0], sizes = [17, 128], strides = [1, 1]} : vector<17x384xf32> to vector<17x128xf32>
    %31 = vector.extract_strided_slice %29 {offsets = [0, 128], sizes = [17, 128], strides = [1, 1]} : vector<17x384xf32> to vector<17x128xf32>
    %32 = vector.extract_strided_slice %29 {offsets = [0, 256], sizes = [17, 128], strides = [1, 1]} : vector<17x384xf32> to vector<17x128xf32>
    %33 = tpu.iota {dimensions = array<i32: 1>} : vector<1x128xi32>
    %cst_15 = arith.constant 0.000000e+00 : f32
    %34 = vector.broadcast %cst_15 : f32 to vector<17x128xf32>
    %c0_i32 = arith.constant 0 : i32
    %35 = vector.broadcast %c0_i32 : i32 to vector<1x128xi32>
    %36 = arith.cmpi sge, %33, %35 : vector<1x128xi32>
    %c32_i32 = arith.constant 32 : i32
    %37 = vector.broadcast %c32_i32 : i32 to vector<1x128xi32>
    %38 = arith.cmpi slt, %33, %37 : vector<1x128xi32>
    %39 = arith.andi %36, %38 : vector<1x128xi1>
    %40 = arith.extui %39 : vector<1x128xi1> to vector<1x128xi32>
    %41 = arith.sitofp %40 : vector<1x128xi32> to vector<1x128xf32>
    %42 = vector.broadcast %41 : vector<1x128xf32> to vector<17x128xf32>
    %43 = arith.mulf %30, %42 : vector<17x128xf32>
    %cst_16 = arith.constant dense<0.000000e+00> : vector<17xf32>
    %44 = vector.multi_reduction <add>, %43, %cst_16 [1] : vector<17x128xf32> to vector<17xf32>
    %45 = vector.shape_cast %44 : vector<17xf32> to vector<17x1xf32>
    %cst_17 = arith.constant 3.125000e-02 : f32
    %46 = vector.broadcast %cst_17 : f32 to vector<17x1xf32>
    %47 = arith.mulf %45, %46 : vector<17x1xf32>
    %48 = vector.broadcast %47 : vector<17x1xf32> to vector<17x128xf32>
    %49 = arith.subf %30, %48 : vector<17x128xf32>
    %50 = vector.broadcast %41 : vector<1x128xf32> to vector<17x128xf32>
    %51 = arith.mulf %49, %50 : vector<17x128xf32>
    %52 = arith.mulf %51, %51 : vector<17x128xf32>
    %cst_18 = arith.constant dense<0.000000e+00> : vector<17xf32>
    %53 = vector.multi_reduction <add>, %52, %cst_18 [1] : vector<17x128xf32> to vector<17xf32>
    %54 = vector.shape_cast %53 : vector<17xf32> to vector<17x1xf32>
    %cst_19 = arith.constant 3.125000e-02 : f32
    %55 = vector.broadcast %cst_19 : f32 to vector<17x1xf32>
    %56 = arith.mulf %54, %55 : vector<17x1xf32>
    %cst_20 = arith.constant 9.99999974E-6 : f32
    %57 = vector.broadcast %cst_20 : f32 to vector<17x1xf32>
    %58 = arith.addf %56, %57 : vector<17x1xf32>
    %59 = math.rsqrt %58 : vector<17x1xf32>
    %60 = vector.broadcast %59 : vector<17x1xf32> to vector<17x128xf32>
    %61 = arith.mulf %51, %60 : vector<17x128xf32>
    %62 = vector.broadcast %41 : vector<1x128xf32> to vector<17x128xf32>
    %63 = arith.mulf %31, %62 : vector<17x128xf32>
    %cst_21 = arith.constant dense<0.000000e+00> : vector<17xf32>
    %64 = vector.multi_reduction <add>, %63, %cst_21 [1] : vector<17x128xf32> to vector<17xf32>
    %65 = vector.shape_cast %64 : vector<17xf32> to vector<17x1xf32>
    %cst_22 = arith.constant 3.125000e-02 : f32
    %66 = vector.broadcast %cst_22 : f32 to vector<17x1xf32>
    %67 = arith.mulf %65, %66 : vector<17x1xf32>
    %68 = vector.broadcast %67 : vector<17x1xf32> to vector<17x128xf32>
    %69 = arith.subf %31, %68 : vector<17x128xf32>
    %70 = vector.broadcast %41 : vector<1x128xf32> to vector<17x128xf32>
    %71 = arith.mulf %69, %70 : vector<17x128xf32>
    %72 = arith.mulf %71, %71 : vector<17x128xf32>
    %cst_23 = arith.constant dense<0.000000e+00> : vector<17xf32>
    %73 = vector.multi_reduction <add>, %72, %cst_23 [1] : vector<17x128xf32> to vector<17xf32>
    %74 = vector.shape_cast %73 : vector<17xf32> to vector<17x1xf32>
    %cst_24 = arith.constant 3.125000e-02 : f32
    %75 = vector.broadcast %cst_24 : f32 to vector<17x1xf32>
    %76 = arith.mulf %74, %75 : vector<17x1xf32>
    %cst_25 = arith.constant 9.99999974E-6 : f32
    %77 = vector.broadcast %cst_25 : f32 to vector<17x1xf32>
    %78 = arith.addf %76, %77 : vector<17x1xf32>
    %79 = math.rsqrt %78 : vector<17x1xf32>
    %80 = vector.broadcast %79 : vector<17x1xf32> to vector<17x128xf32>
    %81 = arith.mulf %71, %80 : vector<17x128xf32>
    %cst_26 = arith.constant dense<0.000000e+00> : vector<17x17xf32>
    %82 = tpu.matmul %61, %81, %cst_26 {dimension_numbers = #tpu.dot_dimension_numbers<[1], [1], [0], [0], [0, 0, 1, 0], [], []>} : vector<17x128xf32>, vector<17x128xf32>, vector<17x17xf32> -> vector<17x17xf32>
    %cst_27 = arith.constant 0.176776692 : f32
    %83 = vector.broadcast %cst_27 : f32 to vector<17x17xf32>
    %84 = arith.mulf %82, %83 : vector<17x17xf32>
    %cst_28 = arith.constant dense<0xFF800000> : vector<17xf32>
    %85 = vector.multi_reduction <maximumf>, %84, %cst_28 [1] : vector<17x17xf32> to vector<17xf32>
    %86 = vector.shape_cast %85 : vector<17xf32> to vector<17x1xf32>
    %87 = vector.broadcast %86 : vector<17x1xf32> to vector<17x17xf32>
    %88 = arith.subf %84, %87 : vector<17x17xf32>
    %89 = math.exp %88 : vector<17x17xf32>
    %cst_29 = arith.constant dense<0.000000e+00> : vector<17xf32>
    %90 = vector.multi_reduction <add>, %89, %cst_29 [1] : vector<17x17xf32> to vector<17xf32>
    %91 = vector.shape_cast %90 : vector<17xf32> to vector<17x1xf32>
    %92 = tpu.reciprocal %91 {approx = true} : vector<17x1xf32> -> vector<17x1xf32>
    %93 = vector.broadcast %92 : vector<17x1xf32> to vector<17x17xf32>
    %94 = arith.mulf %89, %93 : vector<17x17xf32>
    %95 = vector.broadcast %41 : vector<1x128xf32> to vector<17x128xf32>
    %96 = arith.mulf %32, %95 : vector<17x128xf32>
    %cst_30 = arith.constant dense<0.000000e+00> : vector<17x128xf32>
    %97 = tpu.matmul %94, %96, %cst_30 {dimension_numbers = #tpu.dot_dimension_numbers<[1], [0], [0], [1], [0, 0, 1, 1], [], []>} : vector<17x17xf32>, vector<17x128xf32>, vector<17x128xf32> -> vector<17x128xf32>
    %98 = arith.addf %34, %97 : vector<17x128xf32>
    %c32_i32_31 = arith.constant 32 : i32
    %99 = vector.broadcast %c32_i32_31 : i32 to vector<1x128xi32>
    %100 = arith.cmpi sge, %33, %99 : vector<1x128xi32>
    %c64_i32 = arith.constant 64 : i32
    %101 = vector.broadcast %c64_i32 : i32 to vector<1x128xi32>
    %102 = arith.cmpi slt, %33, %101 : vector<1x128xi32>
    %103 = arith.andi %100, %102 : vector<1x128xi1>
    %104 = arith.extui %103 : vector<1x128xi1> to vector<1x128xi32>
    %105 = arith.sitofp %104 : vector<1x128xi32> to vector<1x128xf32>
    %106 = vector.broadcast %105 : vector<1x128xf32> to vector<17x128xf32>
    %107 = arith.mulf %30, %106 : vector<17x128xf32>
    %cst_32 = arith.constant dense<0.000000e+00> : vector<17xf32>
    %108 = vector.multi_reduction <add>, %107, %cst_32 [1] : vector<17x128xf32> to vector<17xf32>
    %109 = vector.shape_cast %108 : vector<17xf32> to vector<17x1xf32>
    %cst_33 = arith.constant 3.125000e-02 : f32
    %110 = vector.broadcast %cst_33 : f32 to vector<17x1xf32>
    %111 = arith.mulf %109, %110 : vector<17x1xf32>
    %112 = vector.broadcast %111 : vector<17x1xf32> to vector<17x128xf32>
    %113 = arith.subf %30, %112 : vector<17x128xf32>
    %114 = vector.broadcast %105 : vector<1x128xf32> to vector<17x128xf32>
    %115 = arith.mulf %113, %114 : vector<17x128xf32>
    %116 = arith.mulf %115, %115 : vector<17x128xf32>
    %cst_34 = arith.constant dense<0.000000e+00> : vector<17xf32>
    %117 = vector.multi_reduction <add>, %116, %cst_34 [1] : vector<17x128xf32> to vector<17xf32>
    %118 = vector.shape_cast %117 : vector<17xf32> to vector<17x1xf32>
    %cst_35 = arith.constant 3.125000e-02 : f32
    %119 = vector.broadcast %cst_35 : f32 to vector<17x1xf32>
    %120 = arith.mulf %118, %119 : vector<17x1xf32>
    %cst_36 = arith.constant 9.99999974E-6 : f32
    %121 = vector.broadcast %cst_36 : f32 to vector<17x1xf32>
    %122 = arith.addf %120, %121 : vector<17x1xf32>
    %123 = math.rsqrt %122 : vector<17x1xf32>
    %124 = vector.broadcast %123 : vector<17x1xf32> to vector<17x128xf32>
    %125 = arith.mulf %115, %124 : vector<17x128xf32>
    %126 = vector.broadcast %105 : vector<1x128xf32> to vector<17x128xf32>
    %127 = arith.mulf %31, %126 : vector<17x128xf32>
    %cst_37 = arith.constant dense<0.000000e+00> : vector<17xf32>
    %128 = vector.multi_reduction <add>, %127, %cst_37 [1] : vector<17x128xf32> to vector<17xf32>
    %129 = vector.shape_cast %128 : vector<17xf32> to vector<17x1xf32>
    %cst_38 = arith.constant 3.125000e-02 : f32
    %130 = vector.broadcast %cst_38 : f32 to vector<17x1xf32>
    %131 = arith.mulf %129, %130 : vector<17x1xf32>
    %132 = vector.broadcast %131 : vector<17x1xf32> to vector<17x128xf32>
    %133 = arith.subf %31, %132 : vector<17x128xf32>
    %134 = vector.broadcast %105 : vector<1x128xf32> to vector<17x128xf32>
    %135 = arith.mulf %133, %134 : vector<17x128xf32>
    %136 = arith.mulf %135, %135 : vector<17x128xf32>
    %cst_39 = arith.constant dense<0.000000e+00> : vector<17xf32>
    %137 = vector.multi_reduction <add>, %136, %cst_39 [1] : vector<17x128xf32> to vector<17xf32>
    %138 = vector.shape_cast %137 : vector<17xf32> to vector<17x1xf32>
    %cst_40 = arith.constant 3.125000e-02 : f32
    %139 = vector.broadcast %cst_40 : f32 to vector<17x1xf32>
    %140 = arith.mulf %138, %139 : vector<17x1xf32>
    %cst_41 = arith.constant 9.99999974E-6 : f32
    %141 = vector.broadcast %cst_41 : f32 to vector<17x1xf32>
    %142 = arith.addf %140, %141 : vector<17x1xf32>
    %143 = math.rsqrt %142 : vector<17x1xf32>
    %144 = vector.broadcast %143 : vector<17x1xf32> to vector<17x128xf32>
    %145 = arith.mulf %135, %144 : vector<17x128xf32>
    %cst_42 = arith.constant dense<0.000000e+00> : vector<17x17xf32>
    %146 = tpu.matmul %125, %145, %cst_42 {dimension_numbers = #tpu.dot_dimension_numbers<[1], [1], [0], [0], [0, 0, 1, 0], [], []>} : vector<17x128xf32>, vector<17x128xf32>, vector<17x17xf32> -> vector<17x17xf32>
    %cst_43 = arith.constant 0.176776692 : f32
    %147 = vector.broadcast %cst_43 : f32 to vector<17x17xf32>
    %148 = arith.mulf %146, %147 : vector<17x17xf32>
    %cst_44 = arith.constant dense<0xFF800000> : vector<17xf32>
    %149 = vector.multi_reduction <maximumf>, %148, %cst_44 [1] : vector<17x17xf32> to vector<17xf32>
    %150 = vector.shape_cast %149 : vector<17xf32> to vector<17x1xf32>
    %151 = vector.broadcast %150 : vector<17x1xf32> to vector<17x17xf32>
    %152 = arith.subf %148, %151 : vector<17x17xf32>
    %153 = math.exp %152 : vector<17x17xf32>
    %cst_45 = arith.constant dense<0.000000e+00> : vector<17xf32>
    %154 = vector.multi_reduction <add>, %153, %cst_45 [1] : vector<17x17xf32> to vector<17xf32>
    %155 = vector.shape_cast %154 : vector<17xf32> to vector<17x1xf32>
    %156 = tpu.reciprocal %155 {approx = true} : vector<17x1xf32> -> vector<17x1xf32>
    %157 = vector.broadcast %156 : vector<17x1xf32> to vector<17x17xf32>
    %158 = arith.mulf %153, %157 : vector<17x17xf32>
    %159 = vector.broadcast %105 : vector<1x128xf32> to vector<17x128xf32>
    %160 = arith.mulf %32, %159 : vector<17x128xf32>
    %cst_46 = arith.constant dense<0.000000e+00> : vector<17x128xf32>
    %161 = tpu.matmul %158, %160, %cst_46 {dimension_numbers = #tpu.dot_dimension_numbers<[1], [0], [0], [1], [0, 0, 1, 1], [], []>} : vector<17x17xf32>, vector<17x128xf32>, vector<17x128xf32> -> vector<17x128xf32>
    %162 = arith.addf %98, %161 : vector<17x128xf32>
    %c64_i32_47 = arith.constant 64 : i32
    %163 = vector.broadcast %c64_i32_47 : i32 to vector<1x128xi32>
    %164 = arith.cmpi sge, %33, %163 : vector<1x128xi32>
    %c96_i32 = arith.constant 96 : i32
    %165 = vector.broadcast %c96_i32 : i32 to vector<1x128xi32>
    %166 = arith.cmpi slt, %33, %165 : vector<1x128xi32>
    %167 = arith.andi %164, %166 : vector<1x128xi1>
    %168 = arith.extui %167 : vector<1x128xi1> to vector<1x128xi32>
    %169 = arith.sitofp %168 : vector<1x128xi32> to vector<1x128xf32>
    %170 = vector.broadcast %169 : vector<1x128xf32> to vector<17x128xf32>
    %171 = arith.mulf %30, %170 : vector<17x128xf32>
    %cst_48 = arith.constant dense<0.000000e+00> : vector<17xf32>
    %172 = vector.multi_reduction <add>, %171, %cst_48 [1] : vector<17x128xf32> to vector<17xf32>
    %173 = vector.shape_cast %172 : vector<17xf32> to vector<17x1xf32>
    %cst_49 = arith.constant 3.125000e-02 : f32
    %174 = vector.broadcast %cst_49 : f32 to vector<17x1xf32>
    %175 = arith.mulf %173, %174 : vector<17x1xf32>
    %176 = vector.broadcast %175 : vector<17x1xf32> to vector<17x128xf32>
    %177 = arith.subf %30, %176 : vector<17x128xf32>
    %178 = vector.broadcast %169 : vector<1x128xf32> to vector<17x128xf32>
    %179 = arith.mulf %177, %178 : vector<17x128xf32>
    %180 = arith.mulf %179, %179 : vector<17x128xf32>
    %cst_50 = arith.constant dense<0.000000e+00> : vector<17xf32>
    %181 = vector.multi_reduction <add>, %180, %cst_50 [1] : vector<17x128xf32> to vector<17xf32>
    %182 = vector.shape_cast %181 : vector<17xf32> to vector<17x1xf32>
    %cst_51 = arith.constant 3.125000e-02 : f32
    %183 = vector.broadcast %cst_51 : f32 to vector<17x1xf32>
    %184 = arith.mulf %182, %183 : vector<17x1xf32>
    %cst_52 = arith.constant 9.99999974E-6 : f32
    %185 = vector.broadcast %cst_52 : f32 to vector<17x1xf32>
    %186 = arith.addf %184, %185 : vector<17x1xf32>
    %187 = math.rsqrt %186 : vector<17x1xf32>
    %188 = vector.broadcast %187 : vector<17x1xf32> to vector<17x128xf32>
    %189 = arith.mulf %179, %188 : vector<17x128xf32>
    %190 = vector.broadcast %169 : vector<1x128xf32> to vector<17x128xf32>
    %191 = arith.mulf %31, %190 : vector<17x128xf32>
    %cst_53 = arith.constant dense<0.000000e+00> : vector<17xf32>
    %192 = vector.multi_reduction <add>, %191, %cst_53 [1] : vector<17x128xf32> to vector<17xf32>
    %193 = vector.shape_cast %192 : vector<17xf32> to vector<17x1xf32>
    %cst_54 = arith.constant 3.125000e-02 : f32
    %194 = vector.broadcast %cst_54 : f32 to vector<17x1xf32>
    %195 = arith.mulf %193, %194 : vector<17x1xf32>
    %196 = vector.broadcast %195 : vector<17x1xf32> to vector<17x128xf32>
    %197 = arith.subf %31, %196 : vector<17x128xf32>
    %198 = vector.broadcast %169 : vector<1x128xf32> to vector<17x128xf32>
    %199 = arith.mulf %197, %198 : vector<17x128xf32>
    %200 = arith.mulf %199, %199 : vector<17x128xf32>
    %cst_55 = arith.constant dense<0.000000e+00> : vector<17xf32>
    %201 = vector.multi_reduction <add>, %200, %cst_55 [1] : vector<17x128xf32> to vector<17xf32>
    %202 = vector.shape_cast %201 : vector<17xf32> to vector<17x1xf32>
    %cst_56 = arith.constant 3.125000e-02 : f32
    %203 = vector.broadcast %cst_56 : f32 to vector<17x1xf32>
    %204 = arith.mulf %202, %203 : vector<17x1xf32>
    %cst_57 = arith.constant 9.99999974E-6 : f32
    %205 = vector.broadcast %cst_57 : f32 to vector<17x1xf32>
    %206 = arith.addf %204, %205 : vector<17x1xf32>
    %207 = math.rsqrt %206 : vector<17x1xf32>
    %208 = vector.broadcast %207 : vector<17x1xf32> to vector<17x128xf32>
    %209 = arith.mulf %199, %208 : vector<17x128xf32>
    %cst_58 = arith.constant dense<0.000000e+00> : vector<17x17xf32>
    %210 = tpu.matmul %189, %209, %cst_58 {dimension_numbers = #tpu.dot_dimension_numbers<[1], [1], [0], [0], [0, 0, 1, 0], [], []>} : vector<17x128xf32>, vector<17x128xf32>, vector<17x17xf32> -> vector<17x17xf32>
    %cst_59 = arith.constant 0.176776692 : f32
    %211 = vector.broadcast %cst_59 : f32 to vector<17x17xf32>
    %212 = arith.mulf %210, %211 : vector<17x17xf32>
    %cst_60 = arith.constant dense<0xFF800000> : vector<17xf32>
    %213 = vector.multi_reduction <maximumf>, %212, %cst_60 [1] : vector<17x17xf32> to vector<17xf32>
    %214 = vector.shape_cast %213 : vector<17xf32> to vector<17x1xf32>
    %215 = vector.broadcast %214 : vector<17x1xf32> to vector<17x17xf32>
    %216 = arith.subf %212, %215 : vector<17x17xf32>
    %217 = math.exp %216 : vector<17x17xf32>
    %cst_61 = arith.constant dense<0.000000e+00> : vector<17xf32>
    %218 = vector.multi_reduction <add>, %217, %cst_61 [1] : vector<17x17xf32> to vector<17xf32>
    %219 = vector.shape_cast %218 : vector<17xf32> to vector<17x1xf32>
    %220 = tpu.reciprocal %219 {approx = true} : vector<17x1xf32> -> vector<17x1xf32>
    %221 = vector.broadcast %220 : vector<17x1xf32> to vector<17x17xf32>
    %222 = arith.mulf %217, %221 : vector<17x17xf32>
    %223 = vector.broadcast %169 : vector<1x128xf32> to vector<17x128xf32>
    %224 = arith.mulf %32, %223 : vector<17x128xf32>
    %cst_62 = arith.constant dense<0.000000e+00> : vector<17x128xf32>
    %225 = tpu.matmul %222, %224, %cst_62 {dimension_numbers = #tpu.dot_dimension_numbers<[1], [0], [0], [1], [0, 0, 1, 1], [], []>} : vector<17x17xf32>, vector<17x128xf32>, vector<17x128xf32> -> vector<17x128xf32>
    %226 = arith.addf %162, %225 : vector<17x128xf32>
    %c96_i32_63 = arith.constant 96 : i32
    %227 = vector.broadcast %c96_i32_63 : i32 to vector<1x128xi32>
    %228 = arith.cmpi sge, %33, %227 : vector<1x128xi32>
    %c128_i32 = arith.constant 128 : i32
    %229 = vector.broadcast %c128_i32 : i32 to vector<1x128xi32>
    %230 = arith.cmpi slt, %33, %229 : vector<1x128xi32>
    %231 = arith.andi %228, %230 : vector<1x128xi1>
    %232 = arith.extui %231 : vector<1x128xi1> to vector<1x128xi32>
    %233 = arith.sitofp %232 : vector<1x128xi32> to vector<1x128xf32>
    %234 = vector.broadcast %233 : vector<1x128xf32> to vector<17x128xf32>
    %235 = arith.mulf %30, %234 : vector<17x128xf32>
    %cst_64 = arith.constant dense<0.000000e+00> : vector<17xf32>
    %236 = vector.multi_reduction <add>, %235, %cst_64 [1] : vector<17x128xf32> to vector<17xf32>
    %237 = vector.shape_cast %236 : vector<17xf32> to vector<17x1xf32>
    %cst_65 = arith.constant 3.125000e-02 : f32
    %238 = vector.broadcast %cst_65 : f32 to vector<17x1xf32>
    %239 = arith.mulf %237, %238 : vector<17x1xf32>
    %240 = vector.broadcast %239 : vector<17x1xf32> to vector<17x128xf32>
    %241 = arith.subf %30, %240 : vector<17x128xf32>
    %242 = vector.broadcast %233 : vector<1x128xf32> to vector<17x128xf32>
    %243 = arith.mulf %241, %242 : vector<17x128xf32>
    %244 = arith.mulf %243, %243 : vector<17x128xf32>
    %cst_66 = arith.constant dense<0.000000e+00> : vector<17xf32>
    %245 = vector.multi_reduction <add>, %244, %cst_66 [1] : vector<17x128xf32> to vector<17xf32>
    %246 = vector.shape_cast %245 : vector<17xf32> to vector<17x1xf32>
    %cst_67 = arith.constant 3.125000e-02 : f32
    %247 = vector.broadcast %cst_67 : f32 to vector<17x1xf32>
    %248 = arith.mulf %246, %247 : vector<17x1xf32>
    %cst_68 = arith.constant 9.99999974E-6 : f32
    %249 = vector.broadcast %cst_68 : f32 to vector<17x1xf32>
    %250 = arith.addf %248, %249 : vector<17x1xf32>
    %251 = math.rsqrt %250 : vector<17x1xf32>
    %252 = vector.broadcast %251 : vector<17x1xf32> to vector<17x128xf32>
    %253 = arith.mulf %243, %252 : vector<17x128xf32>
    %254 = vector.broadcast %233 : vector<1x128xf32> to vector<17x128xf32>
    %255 = arith.mulf %31, %254 : vector<17x128xf32>
    %cst_69 = arith.constant dense<0.000000e+00> : vector<17xf32>
    %256 = vector.multi_reduction <add>, %255, %cst_69 [1] : vector<17x128xf32> to vector<17xf32>
    %257 = vector.shape_cast %256 : vector<17xf32> to vector<17x1xf32>
    %cst_70 = arith.constant 3.125000e-02 : f32
    %258 = vector.broadcast %cst_70 : f32 to vector<17x1xf32>
    %259 = arith.mulf %257, %258 : vector<17x1xf32>
    %260 = vector.broadcast %259 : vector<17x1xf32> to vector<17x128xf32>
    %261 = arith.subf %31, %260 : vector<17x128xf32>
    %262 = vector.broadcast %233 : vector<1x128xf32> to vector<17x128xf32>
    %263 = arith.mulf %261, %262 : vector<17x128xf32>
    %264 = arith.mulf %263, %263 : vector<17x128xf32>
    %cst_71 = arith.constant dense<0.000000e+00> : vector<17xf32>
    %265 = vector.multi_reduction <add>, %264, %cst_71 [1] : vector<17x128xf32> to vector<17xf32>
    %266 = vector.shape_cast %265 : vector<17xf32> to vector<17x1xf32>
    %cst_72 = arith.constant 3.125000e-02 : f32
    %267 = vector.broadcast %cst_72 : f32 to vector<17x1xf32>
    %268 = arith.mulf %266, %267 : vector<17x1xf32>
    %cst_73 = arith.constant 9.99999974E-6 : f32
    %269 = vector.broadcast %cst_73 : f32 to vector<17x1xf32>
    %270 = arith.addf %268, %269 : vector<17x1xf32>
    %271 = math.rsqrt %270 : vector<17x1xf32>
    %272 = vector.broadcast %271 : vector<17x1xf32> to vector<17x128xf32>
    %273 = arith.mulf %263, %272 : vector<17x128xf32>
    %cst_74 = arith.constant dense<0.000000e+00> : vector<17x17xf32>
    %274 = tpu.matmul %253, %273, %cst_74 {dimension_numbers = #tpu.dot_dimension_numbers<[1], [1], [0], [0], [0, 0, 1, 0], [], []>} : vector<17x128xf32>, vector<17x128xf32>, vector<17x17xf32> -> vector<17x17xf32>
    %cst_75 = arith.constant 0.176776692 : f32
    %275 = vector.broadcast %cst_75 : f32 to vector<17x17xf32>
    %276 = arith.mulf %274, %275 : vector<17x17xf32>
    %cst_76 = arith.constant dense<0xFF800000> : vector<17xf32>
    %277 = vector.multi_reduction <maximumf>, %276, %cst_76 [1] : vector<17x17xf32> to vector<17xf32>
    %278 = vector.shape_cast %277 : vector<17xf32> to vector<17x1xf32>
    %279 = vector.broadcast %278 : vector<17x1xf32> to vector<17x17xf32>
    %280 = arith.subf %276, %279 : vector<17x17xf32>
    %281 = math.exp %280 : vector<17x17xf32>
    %cst_77 = arith.constant dense<0.000000e+00> : vector<17xf32>
    %282 = vector.multi_reduction <add>, %281, %cst_77 [1] : vector<17x17xf32> to vector<17xf32>
    %283 = vector.shape_cast %282 : vector<17xf32> to vector<17x1xf32>
    %284 = tpu.reciprocal %283 {approx = true} : vector<17x1xf32> -> vector<17x1xf32>
    %285 = vector.broadcast %284 : vector<17x1xf32> to vector<17x17xf32>
    %286 = arith.mulf %281, %285 : vector<17x17xf32>
    %287 = vector.broadcast %233 : vector<1x128xf32> to vector<17x128xf32>
    %288 = arith.mulf %32, %287 : vector<17x128xf32>
    %cst_78 = arith.constant dense<0.000000e+00> : vector<17x128xf32>
    %289 = tpu.matmul %286, %288, %cst_78 {dimension_numbers = #tpu.dot_dimension_numbers<[1], [0], [0], [1], [0, 0, 1, 1], [], []>} : vector<17x17xf32>, vector<17x128xf32>, vector<17x128xf32> -> vector<17x128xf32>
    %290 = arith.addf %226, %289 : vector<17x128xf32>
    %291 = arith.truncf %290 : vector<17x128xf32> to vector<17x128xbf16>
    %c0_79 = arith.constant 0 : index
    %c0_80 = arith.constant 0 : index
    %292 = vector.load %arg6[%c0_79, %c0_80] : memref<128x128xbf16, #tpu.memory_space<vmem>>, vector<128x128xbf16>
    %cst_81 = arith.constant dense<0.000000e+00> : vector<17x128xf32>
    %293 = tpu.matmul %291, %292, %cst_81 {dimension_numbers = #tpu.dot_dimension_numbers<[1], [0], [0], [1], [0, 0, 1, 1], [], []>} : vector<17x128xbf16>, vector<128x128xbf16>, vector<17x128xf32> -> vector<17x128xf32>
    %c0_82 = arith.constant 0 : index
    %c0_83 = arith.constant 0 : index
    %294 = vector.load %arg7[%c0_82, %c0_83] : memref<1x128xf32, #tpu.memory_space<vmem>>, vector<1x128xf32>
    %295 = vector.broadcast %294 : vector<1x128xf32> to vector<17x128xf32>
    %296 = arith.addf %293, %295 : vector<17x128xf32>
    %297 = arith.addf %1, %296 : vector<17x128xf32>
    %c0_84 = arith.constant 0 : index
    %c0_85 = arith.constant 0 : index
    %298 = vector.load %arg8[%c0_84, %c0_85] : memref<1x128xf32, #tpu.memory_space<vmem>>, vector<1x128xf32>
    %c0_86 = arith.constant 0 : index
    %c0_87 = arith.constant 0 : index
    %299 = vector.load %arg9[%c0_86, %c0_87] : memref<1x128xf32, #tpu.memory_space<vmem>>, vector<1x128xf32>
    %cst_88 = arith.constant dense<0.000000e+00> : vector<17xf32>
    %300 = vector.multi_reduction <add>, %297, %cst_88 [1] : vector<17x128xf32> to vector<17xf32>
    %301 = vector.shape_cast %300 : vector<17xf32> to vector<17x1xf32>
    %cst_89 = arith.constant 1.280000e+02 : f32
    %302 = vector.broadcast %cst_89 : f32 to vector<17x1xf32>
    %303 = arith.divf %301, %302 : vector<17x1xf32>
    %304 = vector.broadcast %303 : vector<17x1xf32> to vector<17x128xf32>
    %305 = arith.subf %297, %304 : vector<17x128xf32>
    %306 = arith.mulf %305, %305 : vector<17x128xf32>
    %cst_90 = arith.constant dense<0.000000e+00> : vector<17xf32>
    %307 = vector.multi_reduction <add>, %306, %cst_90 [1] : vector<17x128xf32> to vector<17xf32>
    %308 = vector.shape_cast %307 : vector<17xf32> to vector<17x1xf32>
    %cst_91 = arith.constant 1.280000e+02 : f32
    %309 = vector.broadcast %cst_91 : f32 to vector<17x1xf32>
    %310 = arith.divf %308, %309 : vector<17x1xf32>
    %cst_92 = arith.constant 9.99999974E-6 : f32
    %311 = vector.broadcast %cst_92 : f32 to vector<17x1xf32>
    %312 = arith.addf %310, %311 : vector<17x1xf32>
    %313 = math.rsqrt %312 : vector<17x1xf32>
    %314 = vector.broadcast %313 : vector<17x1xf32> to vector<17x128xf32>
    %315 = arith.mulf %305, %314 : vector<17x128xf32>
    %316 = vector.broadcast %298 : vector<1x128xf32> to vector<17x128xf32>
    %317 = arith.mulf %315, %316 : vector<17x128xf32>
    %318 = vector.broadcast %299 : vector<1x128xf32> to vector<17x128xf32>
    %319 = arith.addf %317, %318 : vector<17x128xf32>
    %320 = arith.truncf %319 : vector<17x128xf32> to vector<17x128xbf16>
    %c0_93 = arith.constant 0 : index
    %c0_94 = arith.constant 0 : index
    %321 = vector.load %arg10[%c0_93, %c0_94] : memref<128x512xbf16, #tpu.memory_space<vmem>>, vector<128x512xbf16>
    %cst_95 = arith.constant dense<0.000000e+00> : vector<17x512xf32>
    %322 = tpu.matmul %320, %321, %cst_95 {dimension_numbers = #tpu.dot_dimension_numbers<[1], [0], [0], [1], [0, 0, 1, 1], [], []>} : vector<17x128xbf16>, vector<128x512xbf16>, vector<17x512xf32> -> vector<17x512xf32>
    %c0_96 = arith.constant 0 : index
    %c0_97 = arith.constant 0 : index
    %323 = vector.load %arg11[%c0_96, %c0_97] : memref<1x512xf32, #tpu.memory_space<vmem>>, vector<1x512xf32>
    %324 = vector.broadcast %323 : vector<1x512xf32> to vector<17x512xf32>
    %325 = arith.addf %322, %324 : vector<17x512xf32>
    %cst_98 = arith.constant 5.000000e-01 : f32
    %326 = vector.broadcast %cst_98 : f32 to vector<17x512xf32>
    %327 = arith.mulf %326, %325 : vector<17x512xf32>
    %cst_99 = arith.constant 0.707106769 : f32
    %328 = vector.broadcast %cst_99 : f32 to vector<17x512xf32>
    %329 = arith.mulf %325, %328 : vector<17x512xf32>
    %330 = math.absf %329 : vector<17x512xf32>
    %cst_100 = arith.constant 0.327591091 : f32
    %331 = vector.broadcast %cst_100 : f32 to vector<17x512xf32>
    %332 = arith.mulf %331, %330 : vector<17x512xf32>
    %cst_101 = arith.constant 1.000000e+00 : f32
    %333 = vector.broadcast %cst_101 : f32 to vector<17x512xf32>
    %334 = arith.addf %333, %332 : vector<17x512xf32>
    %cst_102 = arith.constant 1.000000e+00 : f32
    %335 = vector.broadcast %cst_102 : f32 to vector<17x512xf32>
    %336 = arith.divf %335, %334 : vector<17x512xf32>
    %cst_103 = arith.constant 1.06140542 : f32
    %337 = vector.broadcast %cst_103 : f32 to vector<17x512xf32>
    %338 = arith.mulf %337, %336 : vector<17x512xf32>
    %cst_104 = arith.constant -1.45315206 : f32
    %339 = vector.broadcast %cst_104 : f32 to vector<17x512xf32>
    %340 = arith.addf %338, %339 : vector<17x512xf32>
    %341 = arith.mulf %340, %336 : vector<17x512xf32>
    %cst_105 = arith.constant 1.42141378 : f32
    %342 = vector.broadcast %cst_105 : f32 to vector<17x512xf32>
    %343 = arith.addf %341, %342 : vector<17x512xf32>
    %344 = arith.mulf %343, %336 : vector<17x512xf32>
    %cst_106 = arith.constant -0.284496725 : f32
    %345 = vector.broadcast %cst_106 : f32 to vector<17x512xf32>
    %346 = arith.addf %344, %345 : vector<17x512xf32>
    %347 = arith.mulf %346, %336 : vector<17x512xf32>
    %cst_107 = arith.constant 0.254829586 : f32
    %348 = vector.broadcast %cst_107 : f32 to vector<17x512xf32>
    %349 = arith.addf %347, %348 : vector<17x512xf32>
    %350 = arith.mulf %349, %336 : vector<17x512xf32>
    %cst_108 = arith.constant 0.000000e+00 : f32
    %351 = vector.broadcast %cst_108 : f32 to vector<17x512xf32>
    %352 = arith.subf %351, %330 : vector<17x512xf32>
    %353 = arith.mulf %352, %330 : vector<17x512xf32>
    %354 = math.exp %353 : vector<17x512xf32>
    %355 = arith.mulf %350, %354 : vector<17x512xf32>
    %cst_109 = arith.constant 1.000000e+00 : f32
    %356 = vector.broadcast %cst_109 : f32 to vector<17x512xf32>
    %357 = arith.subf %356, %355 : vector<17x512xf32>
    %cst_110 = arith.constant 0.000000e+00 : f32
    %358 = vector.broadcast %cst_110 : f32 to vector<17x512xf32>
    %359 = arith.cmpf olt, %329, %358 : vector<17x512xf32>
    %cst_111 = arith.constant 0.000000e+00 : f32
    %360 = vector.broadcast %cst_111 : f32 to vector<17x512xf32>
    %361 = arith.subf %360, %357 : vector<17x512xf32>
    %362 = arith.select %359, %361, %357 : vector<17x512xi1>, vector<17x512xf32>
    %cst_112 = arith.constant 1.000000e+00 : f32
    %363 = vector.broadcast %cst_112 : f32 to vector<17x512xf32>
    %364 = arith.addf %363, %362 : vector<17x512xf32>
    %365 = arith.mulf %327, %364 : vector<17x512xf32>
    %366 = arith.truncf %365 : vector<17x512xf32> to vector<17x512xbf16>
    %c0_113 = arith.constant 0 : index
    %c0_114 = arith.constant 0 : index
    %367 = vector.load %arg12[%c0_113, %c0_114] : memref<512x128xbf16, #tpu.memory_space<vmem>>, vector<512x128xbf16>
    %cst_115 = arith.constant dense<0.000000e+00> : vector<17x128xf32>
    %368 = tpu.matmul %366, %367, %cst_115 {dimension_numbers = #tpu.dot_dimension_numbers<[1], [0], [0], [1], [0, 0, 1, 1], [], []>} : vector<17x512xbf16>, vector<512x128xbf16>, vector<17x128xf32> -> vector<17x128xf32>
    %c0_116 = arith.constant 0 : index
    %c0_117 = arith.constant 0 : index
    %369 = vector.load %arg13[%c0_116, %c0_117] : memref<1x128xf32, #tpu.memory_space<vmem>>, vector<1x128xf32>
    %370 = vector.broadcast %369 : vector<1x128xf32> to vector<17x128xf32>
    %371 = arith.addf %368, %370 : vector<17x128xf32>
    %372 = arith.addf %297, %371 : vector<17x128xf32>
    %c0_118 = arith.constant 0 : index
    %c0_119 = arith.constant 0 : index
    %c0_120 = arith.constant 0 : index
    %373 = vector.load %arg14[%c0_118, %c0_119, %c0_120] : memref<1x17x128xf32, #tpu.memory_space<vmem>>, vector<1x17x128xf32>
    %374 = vector.shape_cast %373 : vector<1x17x128xf32> to vector<17x128xf32>
    %375 = vector.shape_cast %372 : vector<17x128xf32> to vector<1x17x128xf32>
    tpu.vector_store %arg14[%c0_118, %c0_119, %c0_120], %375 {strides = array<i32>} : memref<1x17x128xf32, #tpu.memory_space<vmem>>, vector<1x17x128xf32>,
    return
  }
  func.func @transform_0(%arg0: i32) -> (i32, i32, i32) {
    %c0_i32 = arith.constant 0 : i32
    %c0_i32_0 = arith.constant 0 : i32
    %c0_i32_1 = arith.constant 0 : i32
    return %arg0, %c0_i32, %c0_i32_0 : i32, i32, i32
  }
  func.func @transform_1(%arg0: i32) -> (i32, i32) {
    %c0_i32 = arith.constant 0 : i32
    %c0_i32_0 = arith.constant 0 : i32
    %c0_i32_1 = arith.constant 0 : i32
    return %c0_i32, %c0_i32_0 : i32, i32
  }
  func.func @transform_2(%arg0: i32) -> (i32, i32) {
    %c0_i32 = arith.constant 0 : i32
    %c0_i32_0 = arith.constant 0 : i32
    %c0_i32_1 = arith.constant 0 : i32
    return %c0_i32, %c0_i32_0 : i32, i32
  }
  func.func @transform_3(%arg0: i32) -> (i32, i32) {
    %c0_i32 = arith.constant 0 : i32
    %c0_i32_0 = arith.constant 0 : i32
    %c0_i32_1 = arith.constant 0 : i32
    return %c0_i32, %c0_i32_0 : i32, i32
  }
  func.func @transform_4(%arg0: i32) -> (i32, i32) {
    %c0_i32 = arith.constant 0 : i32
    %c0_i32_0 = arith.constant 0 : i32
    %c0_i32_1 = arith.constant 0 : i32
    return %c0_i32, %c0_i32_0 : i32, i32
  }
  func.func @transform_5(%arg0: i32) -> (i32, i32) {
    %c0_i32 = arith.constant 0 : i32
    %c0_i32_0 = arith.constant 0 : i32
    %c0_i32_1 = arith.constant 0 : i32
    return %c0_i32, %c0_i32_0 : i32, i32
  }
  func.func @transform_6(%arg0: i32) -> (i32, i32) {
    %c0_i32 = arith.constant 0 : i32
    %c0_i32_0 = arith.constant 0 : i32
    %c0_i32_1 = arith.constant 0 : i32
    return %c0_i32, %c0_i32_0 : i32, i32
  }
  func.func @transform_7(%arg0: i32) -> (i32, i32) {
    %c0_i32 = arith.constant 0 : i32
    %c0_i32_0 = arith.constant 0 : i32
    %c0_i32_1 = arith.constant 0 : i32
    return %c0_i32, %c0_i32_0 : i32, i32
  }
  func.func @transform_8(%arg0: i32) -> (i32, i32) {
    %c0_i32 = arith.constant 0 : i32
    %c0_i32_0 = arith.constant 0 : i32
    %c0_i32_1 = arith.constant 0 : i32
    return %c0_i32, %c0_i32_0 : i32, i32
  }
  func.func @transform_9(%arg0: i32) -> (i32, i32) {
    %c0_i32 = arith.constant 0 : i32
    %c0_i32_0 = arith.constant 0 : i32
    %c0_i32_1 = arith.constant 0 : i32
    return %c0_i32, %c0_i32_0 : i32, i32
  }
  func.func @transform_10(%arg0: i32) -> (i32, i32) {
    %c0_i32 = arith.constant 0 : i32
    %c0_i32_0 = arith.constant 0 : i32
    %c0_i32_1 = arith.constant 0 : i32
    return %c0_i32, %c0_i32_0 : i32, i32
  }
  func.func @transform_11(%arg0: i32) -> (i32, i32) {
    %c0_i32 = arith.constant 0 : i32
    %c0_i32_0 = arith.constant 0 : i32
    %c0_i32_1 = arith.constant 0 : i32
    return %c0_i32, %c0_i32_0 : i32, i32
  }
  func.func @transform_12(%arg0: i32) -> (i32, i32) {
    %c0_i32 = arith.constant 0 : i32
    %c0_i32_0 = arith.constant 0 : i32
    %c0_i32_1 = arith.constant 0 : i32
    return %c0_i32, %c0_i32_0 : i32, i32
  }
  func.func @transform_13(%arg0: i32) -> (i32, i32, i32) {
    %c0_i32 = arith.constant 0 : i32
    %c0_i32_0 = arith.constant 0 : i32
    %c0_i32_1 = arith.constant 0 : i32
    return %arg0, %c0_i32, %c0_i32_0 : i32, i32, i32
  }
}

module attributes {stable_mosaic.version = 11 : i64} {
  func.func @_dec_final_kernel(%arg0: i32, %arg1: memref<1x17x128xf32, #tpu.memory_space<vmem>>, %arg2: memref<1x128xf32, #tpu.memory_space<vmem>>, %arg3: memref<1x128xf32, #tpu.memory_space<vmem>>, %arg4: memref<128x48xbf16, #tpu.memory_space<vmem>>, %arg5: memref<1x48xf32, #tpu.memory_space<vmem>>, %arg6: memref<1x17x48xf32, #tpu.memory_space<vmem>>, %arg7: memref<1x17x1xf32, #tpu.memory_space<vmem>>, %arg8: memref<1x17x48xf32, #tpu.memory_space<vmem>>, %arg9: memref<1x17x1xf32, #tpu.memory_space<vmem>>) attributes {dimension_semantics = [#tpu.dimension_semantics<parallel>], iteration_bounds = array<i64: 2>, scalar_prefetch = 0 : i64, scratch_operands = 0 : i64, tpu.core_type = #tpu.core_type<tc>, window_params = [{transform_indices = @transform_0, window_bounds = array<i64: 1, 17, 128>}, {pipeline_mode = #tpu.pipeline_mode<synchronous>, transform_indices = @transform_1, window_bounds = array<i64: 1, 128>}, {pipeline_mode = #tpu.pipeline_mode<synchronous>, transform_indices = @transform_2, window_bounds = array<i64: 1, 128>}, {pipeline_mode = #tpu.pipeline_mode<synchronous>, transform_indices = @transform_3, window_bounds = array<i64: 128, 48>}, {pipeline_mode = #tpu.pipeline_mode<synchronous>, transform_indices = @transform_4, window_bounds = array<i64: 1, 48>}, {transform_indices = @transform_5, window_bounds = array<i64: 1, 17, 48>}, {transform_indices = @transform_6, window_bounds = array<i64: 1, 17, 1>}, {transform_indices = @transform_7, window_bounds = array<i64: 1, 17, 48>}, {transform_indices = @transform_8, window_bounds = array<i64: 1, 17, 1>}]} {
    %c0 = arith.constant 0 : index
    %c0_0 = arith.constant 0 : index
    %c0_1 = arith.constant 0 : index
    %0 = vector.load %arg1[%c0, %c0_0, %c0_1] : memref<1x17x128xf32, #tpu.memory_space<vmem>>, vector<1x17x128xf32>
    %1 = vector.shape_cast %0 : vector<1x17x128xf32> to vector<17x128xf32>
    %c0_2 = arith.constant 0 : index
    %c0_3 = arith.constant 0 : index
    %2 = vector.load %arg2[%c0_2, %c0_3] : memref<1x128xf32, #tpu.memory_space<vmem>>, vector<1x128xf32>
    %c0_4 = arith.constant 0 : index
    %c0_5 = arith.constant 0 : index
    %3 = vector.load %arg3[%c0_4, %c0_5] : memref<1x128xf32, #tpu.memory_space<vmem>>, vector<1x128xf32>
    %cst = arith.constant dense<0.000000e+00> : vector<17xf32>
    %4 = vector.multi_reduction <add>, %1, %cst [1] : vector<17x128xf32> to vector<17xf32>
    %5 = vector.shape_cast %4 : vector<17xf32> to vector<17x1xf32>
    %cst_6 = arith.constant 1.280000e+02 : f32
    %6 = vector.broadcast %cst_6 : f32 to vector<17x1xf32>
    %7 = arith.divf %5, %6 : vector<17x1xf32>
    %8 = vector.broadcast %7 : vector<17x1xf32> to vector<17x128xf32>
    %9 = arith.subf %1, %8 : vector<17x128xf32>
    %10 = arith.mulf %9, %9 : vector<17x128xf32>
    %cst_7 = arith.constant dense<0.000000e+00> : vector<17xf32>
    %11 = vector.multi_reduction <add>, %10, %cst_7 [1] : vector<17x128xf32> to vector<17xf32>
    %12 = vector.shape_cast %11 : vector<17xf32> to vector<17x1xf32>
    %cst_8 = arith.constant 1.280000e+02 : f32
    %13 = vector.broadcast %cst_8 : f32 to vector<17x1xf32>
    %14 = arith.divf %12, %13 : vector<17x1xf32>
    %cst_9 = arith.constant 9.99999974E-6 : f32
    %15 = vector.broadcast %cst_9 : f32 to vector<17x1xf32>
    %16 = arith.addf %14, %15 : vector<17x1xf32>
    %17 = math.rsqrt %16 : vector<17x1xf32>
    %18 = vector.broadcast %17 : vector<17x1xf32> to vector<17x128xf32>
    %19 = arith.mulf %9, %18 : vector<17x128xf32>
    %20 = vector.broadcast %2 : vector<1x128xf32> to vector<17x128xf32>
    %21 = arith.mulf %19, %20 : vector<17x128xf32>
    %22 = vector.broadcast %3 : vector<1x128xf32> to vector<17x128xf32>
    %23 = arith.addf %21, %22 : vector<17x128xf32>
    %24 = arith.truncf %23 : vector<17x128xf32> to vector<17x128xbf16>
    %c0_10 = arith.constant 0 : index
    %c0_11 = arith.constant 0 : index
    %25 = vector.load %arg4[%c0_10, %c0_11] : memref<128x48xbf16, #tpu.memory_space<vmem>>, vector<128x48xbf16>
    %cst_12 = arith.constant dense<0.000000e+00> : vector<17x48xf32>
    %26 = tpu.matmul %24, %25, %cst_12 {dimension_numbers = #tpu.dot_dimension_numbers<[1], [0], [0], [1], [0, 0, 1, 1], [], []>} : vector<17x128xbf16>, vector<128x48xbf16>, vector<17x48xf32> -> vector<17x48xf32>
    %c0_13 = arith.constant 0 : index
    %c0_14 = arith.constant 0 : index
    %27 = vector.load %arg5[%c0_13, %c0_14] : memref<1x48xf32, #tpu.memory_space<vmem>>, vector<1x48xf32>
    %28 = vector.broadcast %27 : vector<1x48xf32> to vector<17x48xf32>
    %29 = arith.addf %26, %28 : vector<17x48xf32>
    %c0_15 = arith.constant 0 : index
    %c0_16 = arith.constant 0 : index
    %c0_17 = arith.constant 0 : index
    %30 = vector.load %arg8[%c0_15, %c0_16, %c0_17] : memref<1x17x48xf32, #tpu.memory_space<vmem>>, vector<1x17x48xf32>
    %31 = vector.shape_cast %30 : vector<1x17x48xf32> to vector<17x48xf32>
    %32 = vector.shape_cast %29 : vector<17x48xf32> to vector<1x17x48xf32>
    tpu.vector_store %arg8[%c0_15, %c0_16, %c0_17], %32 {strides = array<i32>} : memref<1x17x48xf32, #tpu.memory_space<vmem>>, vector<1x17x48xf32>,
    %c0_18 = arith.constant 0 : index
    %c0_19 = arith.constant 0 : index
    %c0_20 = arith.constant 0 : index
    %33 = vector.load %arg6[%c0_18, %c0_19, %c0_20] : memref<1x17x48xf32, #tpu.memory_space<vmem>>, vector<1x17x48xf32>
    %34 = vector.shape_cast %33 : vector<1x17x48xf32> to vector<17x48xf32>
    %35 = arith.subf %29, %34 : vector<17x48xf32>
    %36 = arith.mulf %35, %35 : vector<17x48xf32>
    %cst_21 = arith.constant dense<0.000000e+00> : vector<17xf32>
    %37 = vector.multi_reduction <add>, %36, %cst_21 [1] : vector<17x48xf32> to vector<17xf32>
    %38 = vector.shape_cast %37 : vector<17xf32> to vector<17x1xf32>
    %cst_22 = arith.constant 4.800000e+01 : f32
    %39 = vector.broadcast %cst_22 : f32 to vector<17x1xf32>
    %40 = arith.divf %38, %39 : vector<17x1xf32>
    %c0_23 = arith.constant 0 : index
    %c0_24 = arith.constant 0 : index
    %c0_25 = arith.constant 0 : index
    %41 = vector.load %arg7[%c0_23, %c0_24, %c0_25] : memref<1x17x1xf32, #tpu.memory_space<vmem>>, vector<1x17x1xf32>
    %42 = vector.shape_cast %41 : vector<1x17x1xf32> to vector<17x1xf32>
    %43 = arith.mulf %40, %42 : vector<17x1xf32>
    %c0_26 = arith.constant 0 : index
    %c0_27 = arith.constant 0 : index
    %c0_28 = arith.constant 0 : index
    %44 = vector.load %arg9[%c0_26, %c0_27, %c0_28] : memref<1x17x1xf32, #tpu.memory_space<vmem>>, vector<1x17x1xf32>
    %45 = vector.shape_cast %44 : vector<1x17x1xf32> to vector<17x1xf32>
    %46 = vector.shape_cast %43 : vector<17x1xf32> to vector<1x17x1xf32>
    tpu.vector_store %arg9[%c0_26, %c0_27, %c0_28], %46 {strides = array<i32>} : memref<1x17x1xf32, #tpu.memory_space<vmem>>, vector<1x17x1xf32>,
    return
  }
  func.func @transform_0(%arg0: i32) -> (i32, i32, i32) {
    %c0_i32 = arith.constant 0 : i32
    %c0_i32_0 = arith.constant 0 : i32
    %c0_i32_1 = arith.constant 0 : i32
    return %arg0, %c0_i32, %c0_i32_0 : i32, i32, i32
  }
  func.func @transform_1(%arg0: i32) -> (i32, i32) {
    %c0_i32 = arith.constant 0 : i32
    %c0_i32_0 = arith.constant 0 : i32
    %c0_i32_1 = arith.constant 0 : i32
    return %c0_i32, %c0_i32_0 : i32, i32
  }
  func.func @transform_2(%arg0: i32) -> (i32, i32) {
    %c0_i32 = arith.constant 0 : i32
    %c0_i32_0 = arith.constant 0 : i32
    %c0_i32_1 = arith.constant 0 : i32
    return %c0_i32, %c0_i32_0 : i32, i32
  }
  func.func @transform_3(%arg0: i32) -> (i32, i32) {
    %c0_i32 = arith.constant 0 : i32
    %c0_i32_0 = arith.constant 0 : i32
    %c0_i32_1 = arith.constant 0 : i32
    return %c0_i32, %c0_i32_0 : i32, i32
  }
  func.func @transform_4(%arg0: i32) -> (i32, i32) {
    %c0_i32 = arith.constant 0 : i32
    %c0_i32_0 = arith.constant 0 : i32
    %c0_i32_1 = arith.constant 0 : i32
    return %c0_i32, %c0_i32_0 : i32, i32
  }
  func.func @transform_5(%arg0: i32) -> (i32, i32, i32) {
    %c0_i32 = arith.constant 0 : i32
    %c0_i32_0 = arith.constant 0 : i32
    %c0_i32_1 = arith.constant 0 : i32
    return %arg0, %c0_i32, %c0_i32_0 : i32, i32, i32
  }
  func.func @transform_6(%arg0: i32) -> (i32, i32, i32) {
    %c0_i32 = arith.constant 0 : i32
    %c0_i32_0 = arith.constant 0 : i32
    %c0_i32_1 = arith.constant 0 : i32
    return %arg0, %c0_i32, %c0_i32_0 : i32, i32, i32
  }
  func.func @transform_7(%arg0: i32) -> (i32, i32, i32) {
    %c0_i32 = arith.constant 0 : i32
    %c0_i32_0 = arith.constant 0 : i32
    %c0_i32_1 = arith.constant 0 : i32
    return %arg0, %c0_i32, %c0_i32_0 : i32, i32, i32
  }
  func.func @transform_8(%arg0: i32) -> (i32, i32, i32) {
    %c0_i32 = arith.constant 0 : i32
    %c0_i32_0 = arith.constant 0 : i32
    %c0_i32_1 = arith.constant 0 : i32
    return %arg0, %c0_i32, %c0_i32_0 : i32, i32, i32
  }
}

</mosaic_0001>

<llo_original>
// kernel: anno_mae_forward.7
$region0: #{anno_mae_forward.7}
  #allocation0 [shape = 'u32[]', space=smem, size = 0x4, offset = 0x4, fixed_abs, tag = 'smem constant byte address 0x4 - core index']
  #allocation1 [shape = 'u32[144,128]{1,0:T(1,128)}', space=vmem, size = 0x12000, scoped, tag = 'internal scratch']
  %s0 = inlined_call_operand.vmem [shape: f32[2,16,48], index: 0, kind: input, shape index: {}]
  %s1 = inlined_call_operand.vmem [shape: bf16[48,128], index: 1, kind: input, shape index: {}]
  %s2 = inlined_call_operand.vmem [shape: f32[1,128], index: 2, kind: input, shape index: {}]
  %s3 = inlined_call_operand.vmem [shape: f32[16,128], index: 3, kind: input, shape index: {}]
  %s4 = inlined_call_operand.vmem [shape: f32[2,16,128], index: 4, kind: output, shape index: {}]
  %s5 = sld [smem:[#allocation0]]
  $region49: #{anno_mae_forward.7} parent=0
    _
  %s7 = ssub.s32 1, %s5
  %s8 = scalar_select 0, %s7, %s5
  loop: start=0, step=1, limit=4
  $region2: #{anno_mae_forward.7} parent=0 // loop_pre_header
    _
  $region3: #{anno_mae_forward.7} parent=0 // loop_header
    %s10 = sphi 0, %s14
    %p11 = scmp.ge.s32.totalorder %s10, 4
    %s20 = sphi 0, %s22
    %s23 = sphi 0, %s20
    %s24 = sphi 0, %s23
    %s40 = sphi 0, %s24
    %s44 = sphi 0, %s44
    %s46 = sphi 0, %s44
    %s47 = sphi 0, %s46
    %s61 = sphi 0, %s47
    %s65 = sphi 0, %s65
    %s67 = sphi 0, %s65
    %s68 = sphi 0, %s67
    %s82 = sphi 0, %s68
    %s86 = sphi 0, %s86
    %s88 = sphi 0, %s86
    %s89 = sphi 0, %s88
    %s103 = sphi 0, %s89
    %s109 = sphi 0, %s111
    %s112 = sphi 0, %s109
    %s113 = sphi 0, %s112
    %s129 = sphi 0, %s113
  $region4: #{anno_mae_forward.7} parent=0 // loop_header_branch
    %13 = sbr.rel (%p11) target = $region8
  $region5: #{anno_mae_forward.7} parent=0 // loop_body
    %s15 = ssub.s32 %s10, 1
    %s16 = ssub.s32 %s10, 2
    %s17 = sadd.s32 %s10, 1
    %s18 = ssub.s32 %s10, %s17
    %p19 = scmp.eq.s32.totalorder %s18, 0
    %s21 = sadd.s32 %s20, 1
    %s22 = scalar_select %p19, %s20, %s21
    %p25 = pneg %p19
    %p26 = scmp.eq.s32.totalorder %s10, 1
    %p27 = por %p25, %p26
    %p28 = scmp.ne.s32.totalorder %s20, %s23
    %p29 = scmp.eq.s32.totalorder %s10, 0
    %p30 = por %p28, %p29
    %p31 = scmp.ne.s32.totalorder %s20, %s23
    %p32 = scmp.eq.s32.totalorder %s15, 1
    %p33 = por %p31, %p32
    %p34 = scmp.ne.s32.totalorder %s23, %s24
    %p35 = scmp.eq.s32.totalorder %s15, 0
    %p36 = por %p34, %p35
    %p37 = scmp.ne.s32.totalorder %s23, %s24
    %p38 = scmp.eq.s32.totalorder %s16, 1
    %p39 = por %p37, %p38
    %p41 = scmp.ne.s32.totalorder %s24, %s40
    %p42 = scmp.eq.s32.totalorder %s16, 0
    %p43 = por %p41, %p42
    %s45 = sadd.s32 %s44, 1
    %p48 = scmp.eq.s32.totalorder %s10, 1
    %p49 = scmp.ne.s32.totalorder %s44, %s46
    %p50 = scmp.eq.s32.totalorder %s10, 0
    %p51 = por %p49, %p50
    %p52 = scmp.ne.s32.totalorder %s44, %s46
    %p53 = scmp.eq.s32.totalorder %s15, 1
    %p54 = por %p52, %p53
    %p55 = scmp.ne.s32.totalorder %s46, %s47
    %p56 = scmp.eq.s32.totalorder %s15, 0
    %p57 = por %p55, %p56
    %p58 = scmp.ne.s32.totalorder %s46, %s47
    %p59 = scmp.eq.s32.totalorder %s16, 1
    %p60 = por %p58, %p59
    %p62 = scmp.ne.s32.totalorder %s47, %s61
    %p63 = scmp.eq.s32.totalorder %s16, 0
    %p64 = por %p62, %p63
    %s66 = sadd.s32 %s65, 1
    %p69 = scmp.eq.s32.totalorder %s10, 1
    %p70 = scmp.ne.s32.totalorder %s65, %s67
    %p71 = scmp.eq.s32.totalorder %s10, 0
    %p72 = por %p70, %p71
    %p73 = scmp.ne.s32.totalorder %s65, %s67
    %p74 = scmp.eq.s32.totalorder %s15, 1
    %p75 = por %p73, %p74
    %p76 = scmp.ne.s32.totalorder %s67, %s68
    %p77 = scmp.eq.s32.totalorder %s15, 0
    %p78 = por %p76, %p77
    %p79 = scmp.ne.s32.totalorder %s67, %s68
    %p80 = scmp.eq.s32.totalorder %s16, 1
    %p81 = por %p79, %p80
    %p83 = scmp.ne.s32.totalorder %s68, %s82
    %p84 = scmp.eq.s32.totalorder %s16, 0
    %p85 = por %p83, %p84
    %s87 = sadd.s32 %s86, 1
    %p90 = scmp.eq.s32.totalorder %s10, 1
    %p91 = scmp.ne.s32.totalorder %s86, %s88
    %p92 = scmp.eq.s32.totalorder %s10, 0
    %p93 = por %p91, %p92
    %p94 = scmp.ne.s32.totalorder %s86, %s88
    %p95 = scmp.eq.s32.totalorder %s15, 1
    %p96 = por %p94, %p95
    %p97 = scmp.ne.s32.totalorder %s88, %s89
    %p98 = scmp.eq.s32.totalorder %s15, 0
    %p99 = por %p97, %p98
    %p100 = scmp.ne.s32.totalorder %s88, %s89
    %p101 = scmp.eq.s32.totalorder %s16, 1
    %p102 = por %p100, %p101
    %p104 = scmp.ne.s32.totalorder %s89, %s103
    %p105 = scmp.eq.s32.totalorder %s16, 0
    %p106 = por %p104, %p105
    %s107 = ssub.s32 %s10, %s17
    %p108 = scmp.eq.s32.totalorder %s107, 0
    %s110 = sadd.s32 %s109, 1
    %s111 = scalar_select %p108, %s109, %s110
    %p114 = pneg %p108
    %p115 = scmp.eq.s32.totalorder %s10, 1
    %p116 = por %p114, %p115
    %p117 = scmp.ne.s32.totalorder %s109, %s112
    %p118 = scmp.eq.s32.totalorder %s10, 0
    %p119 = por %p117, %p118
    %p120 = scmp.ne.s32.totalorder %s109, %s112
    %p121 = scmp.eq.s32.totalorder %s15, 1
    %p122 = por %p120, %p121
    %p123 = scmp.ne.s32.totalorder %s112, %s113
    %p124 = scmp.eq.s32.totalorder %s15, 0
    %p125 = por %p123, %p124
    %p126 = scmp.ne.s32.totalorder %s112, %s113
    %p127 = scmp.eq.s32.totalorder %s16, 1
    %p128 = por %p126, %p127
    %p130 = scmp.ne.s32.totalorder %s113, %s129
    %p131 = scmp.eq.s32.totalorder %s16, 0
    %p132 = por %p130, %p131
    %p133 = scmp.le.s32.totalorder 1, %s10
    %p134 = scmp.lt.s32.totalorder %s10, 3
    %p135 = pnand %p133, %p134
    %p136 = pneg %p135
    // Predicated region
    $region9: #{anno_mae_forward.7} parent=5 // pred_check
      _
    $region10: #{anno_mae_forward.7} parent=5 // pred_check_branch
      %138 = sbr.rel (%p135) target = $region12
    $region11: #{anno_mae_forward.7} parent=5 // pred_region
      %s139 = ssub.s32 %s10, 1
      // Predicated region
      $region13: #{anno_mae_forward.7} parent=11 // pred_check
        %p140 = pneg %p57
      $region14: #{anno_mae_forward.7} parent=11 // pred_check_branch
        %142 = sbr.rel (%p140) target = $region16
      $region15: #{anno_mae_forward.7} parent=11 // pred_region
        _
      $region16: #{anno_mae_forward.7} parent=11 // pred_fallthru
        _
      // Predicated region
      $region17: #{anno_mae_forward.7} parent=11 // pred_check
        %p143 = pneg %p78
      $region18: #{anno_mae_forward.7} parent=11 // pred_check_branch
        %145 = sbr.rel (%p143) target = $region20
      $region19: #{anno_mae_forward.7} parent=11 // pred_region
        _
      $region20: #{anno_mae_forward.7} parent=11 // pred_fallthru
        _
      // Predicated region
      $region21: #{anno_mae_forward.7} parent=11 // pred_check
        %p146 = pneg %p99
      $region22: #{anno_mae_forward.7} parent=11 // pred_check_branch
        %148 = sbr.rel (%p146) target = $region24
      $region23: #{anno_mae_forward.7} parent=11 // pred_region
        _
      $region24: #{anno_mae_forward.7} parent=11 // pred_fallthru
        _
    $region12: #{anno_mae_forward.7} parent=5 // pred_fallthru
      _
    %p149 = scmp.lt.s32.totalorder %s10, 2
    // Predicated region
    $region25: #{anno_mae_forward.7} parent=5 // pred_check
      %p150 = pneg %p149
    $region26: #{anno_mae_forward.7} parent=5 // pred_check_branch
      %152 = sbr.rel (%p150) target = $region28
    $region27: #{anno_mae_forward.7} parent=5 // pred_region
      // Predicated region
      $region29: #{anno_mae_forward.7} parent=27 // pred_check
        %p153 = pneg %p30
      $region30: #{anno_mae_forward.7} parent=27 // pred_check_branch
        %155 = sbr.rel (%p153) target = $region32
      $region31: #{anno_mae_forward.7} parent=27 // pred_region
        %p156 = scmp.lt.s32.totalorder %s10, 1
        %s157 = scalar_select %p156, %s10, 1
        %s158 = smul.addr %s157, 2
        %s159 = smul.addr %s158, 8
        %s160 = scalar_lea.vmem %s0, %s159
      $region32: #{anno_mae_forward.7} parent=27 // pred_fallthru
        _
    $region28: #{anno_mae_forward.7} parent=5 // pred_fallthru
      _
    %p161 = scmp.le.s32.totalorder 1, %s10
    %p162 = scmp.lt.s32.totalorder %s10, 3
    %p163 = pnand %p161, %p162
    %p164 = pneg %p163
    // Predicated region
    $region33: #{anno_mae_forward.7} parent=5 // pred_check
      _
    $region34: #{anno_mae_forward.7} parent=5 // pred_check_branch
      %166 = sbr.rel (%p163) target = $region36
    $region35: #{anno_mae_forward.7} parent=5 // pred_region
      %s167 = ssub.s32 %s10, 1
      %p168 = scmp.lt.s32.totalorder %s15, 1
      %s169 = scalar_select %p168, %s15, 1
      %s170 = smul.addr %s169, 2
      %s171 = smul.addr %s170, 8
      %s172 = scalar_lea.vmem %s0, %s171
      %p173 = pneg %p36
      %p174 = pneg %p33
      %p175 = pneg %p57
      %p176 = pneg %p54
      %p177 = pneg %p78
      %p178 = pneg %p75
      %p179 = pneg %p99
      %p180 = pneg %p96
      %p181 = pneg %p125
      %p182 = pneg %p122
      %p183 = scmp.lt.s32.totalorder %s15, 1
      %s184 = scalar_select %p183, %s15, 1
      %s185 = smul.addr %s184, 2
      %s186 = smul.addr %s185, 8
      %s187 = scalar_lea.vmem %s4, %s186
      %p188 = scmp.lt.s32.totalorder %s15, 1
      %s189 = scalar_select %p188, %s15, 1
      %s190 = smul.addr %s189, 2
      %s191 = smul.addr %s190, 8
      %s192 = scalar_lea.vmem %s0, %s191
      %p193 = scmp.lt.s32.totalorder %s15, 1
      %s194 = scalar_select %p193, %s15, 1
      %s195 = smul.addr %s194, 2
      %s196 = smul.addr %s195, 8
      %s197 = scalar_lea.vmem %s4, %s196
      %v199 = vld [vmem:[%s192] sm:$0xff]
      %v200 = vld [vmem:[%s192 + $0x8] sm:$0xff]
      %v201 = vpack.c.bf16 %v200, %v199
      %v202 = vld [vmem:[%s1] sm:$0xf]
      %v203 = vld [vmem:[%s1 + $0x4] sm:$0xf]
      %v204 = vld [vmem:[%s1 + $0x8] sm:$0xf]
      %v205 = vld [vmem:[%s1 + $0xc] sm:$0xf]
      %v206 = vld [vmem:[%s1 + $0x10] sm:$0xf]
      %v207 = vld [vmem:[%s1 + $0x14] sm:$0xf]
      %v208 = vld [vmem:[%s2] sm:$0x1]
      %v210 = vlaneseq
      %v211 = vshrl.u32 %v210, 7
      %v212 = vsub.s32 0, %v211
      %v213 = vrot.slane %v208, %v212
      %v221 = vunpack.c.l.b16 %v202
      %v222 = vunpack.c.l.b16 %v203
      %v223 = vunpack.c.l.b16 %v204
      %v224 = vunpack.c.l.b16 %v205
      %v225 = vunpack.c.l.b16 %v206
      %v226 = vunpack.c.l.b16 %v207
      %v227 = vpack.c.b16 %v222, %v221
      %v228 = vpack.c.b16 %v224, %v223
      %v229 = vpack.c.b16 %v226, %v225
      %vm233 = vcmask 392192
      %v235 = vsel %vm233, %v201, 0
      %237 = vmatprep.subr.bf16.mxu0 0
      %238 = vmatpush1.bf16.msra.mxu0 0
      %239 = vmatprep.subr.bf16.mxu0 0
      %240 = vmatpush1.bf16.msra.mxu0 0
      %241 = vmatprep.subr.bf16.mxu0 0
      %242 = vmatpush1.bf16.msra.mxu0 0
      %243 = vmatprep.subr.bf16.mxu0 0
      %244 = vmatpush1.bf16.msra.mxu0 0
      %245 = vmatprep.subr.bf16.mxu0 0
      %246 = vmatpush1.bf16.msra.mxu0 0
      %247 = vmatprep.subr.bf16.mxu0 0
      %248 = vmatpush1.bf16.msra.mxu0 %v229
      %249 = vmatprep.subr.bf16.mxu0 0
      %250 = vmatpush1.bf16.msra.mxu0 %v228
      %251 = vmatprep.subr.bf16.mxu0 0
      %252 = vmatpush1.bf16.msra.mxu0 %v227
      %253 = vmatprep.subr.bf16.mxu0 0
      %254 = vmatpush2.bf16.msra.mxu0 0
      %255 = vmatprep.subr.bf16.mxu0 0
      %256 = vmatpush2.bf16.msra.mxu0 0
      %257 = vmatprep.subr.bf16.mxu0 0
      %258 = vmatpush2.bf16.msra.mxu0 0
      %259 = vmatprep.subr.bf16.mxu0 0
      %260 = vmatpush2.bf16.msra.mxu0 0
      %261 = vmatprep.subr.bf16.mxu0 0
      %262 = vmatpush2.bf16.msra.mxu0 0
      %263 = vmatprep.subr.bf16.mxu0 0
      %264 = vmatpush2.bf16.msra.mxu0 0
      %265 = vmatprep.subr.bf16.mxu0 0
      %266 = vmatpush2.bf16.msra.mxu0 0
      %267 = vmatprep.subr.bf16.mxu0 0
      %268 = vmatpush2.bf16.msra.mxu0 0
      %269 = vmatprep.mubr.bf16.mxu0 0
      %270 = vmatmul.mubr.bf16.gmra.mxu0 %v235
      %v271 = vpop.f32.mrf.mxu0
      %v272 = vadd.f32 %v213, %v271
      %v273 = vpop.f32.mrf.mxu0
      %v274 = vpop.f32.mrf.mxu0
      %v275 = vadd.f32 %v213, %v274
      %v276 = vpop.f32.mrf.mxu0
      %277 = vdwg.mxu0
      %v278 = vld [vmem:[%s3] sm:$0xff]
      %v279 = vld [vmem:[%s3 + $0x8] sm:$0xff]
      %v280 = vadd.f32 %v272, %v278
      %v281 = vadd.f32 %v275, %v279
      %282 = vst [vmem:[%s197] sm:$0xff] %v280
      %283 = vst [vmem:[%s197 + $0x8] sm:$0xff] %v281
      %p284 = scmp.lt.s32.totalorder %s15, 1
      %s285 = scalar_select %p284, %s15, 1
      %s286 = smul.addr %s285, 2
      %s287 = smul.addr %s286, 8
      %s288 = scalar_lea.vmem %s4, %s287
      // Predicated region
      $region37: #{anno_mae_forward.7} parent=35 // pred_check
        %p289 = pneg %p122
      $region38: #{anno_mae_forward.7} parent=35 // pred_check_branch
        %291 = sbr.rel (%p289) target = $region40
      $region39: #{anno_mae_forward.7} parent=35 // pred_region
        _
      $region40: #{anno_mae_forward.7} parent=35 // pred_fallthru
        _
    $region36: #{anno_mae_forward.7} parent=5 // pred_fallthru
      _
    %p292 = scmp.le.s32.totalorder 2, %s10
    // Predicated region
    $region41: #{anno_mae_forward.7} parent=5 // pred_check
      %p293 = pneg %p292
    $region42: #{anno_mae_forward.7} parent=5 // pred_check_branch
      %295 = sbr.rel (%p293) target = $region44
    $region43: #{anno_mae_forward.7} parent=5 // pred_region
      %s296 = ssub.s32 %s10, 2
      // Predicated region
      $region45: #{anno_mae_forward.7} parent=43 // pred_check
        %p297 = pneg %p128
      $region46: #{anno_mae_forward.7} parent=43 // pred_check_branch
        %299 = sbr.rel (%p297) target = $region48
      $region47: #{anno_mae_forward.7} parent=43 // pred_region
        %p300 = scmp.lt.s32.totalorder %s16, 1
        %s301 = scalar_select %p300, %s16, 1
        %s302 = smul.addr %s301, 2
        %s303 = smul.addr %s302, 8
        %s304 = scalar_lea.vmem %s4, %s303
      $region48: #{anno_mae_forward.7} parent=43 // pred_fallthru
        _
    $region44: #{anno_mae_forward.7} parent=5 // pred_fallthru
      _
  $region6: #{anno_mae_forward.7} parent=0 // loop_footer
    %s14 = sadd.s32 1, %s10
  $region7: #{anno_mae_forward.7} parent=0 // loop_footer_branch
    %9 = sbr.rel target = $region3
  $region8: #{anno_mae_forward.7} parent=0 // loop_exit
    _

// kernel: anno_mae_forward.10
$region0: #{anno_mae_forward.10}
  #allocation0 [shape = 'u32[]', space=smem, size = 0x4, offset = 0x4, fixed_abs, tag = 'smem constant byte address 0x4 - core index']
  #allocation1 [shape = 'u32[144,128]{1,0:T(1,128)}', space=vmem, size = 0x12000, scoped, tag = 'internal scratch']
  %s0 = inlined_call_operand.vmem [shape: f32[2,5,128], index: 0, kind: input, shape index: {}]
  %s1 = inlined_call_operand.vmem [shape: f32[1,128], index: 1, kind: input, shape index: {}]
  %s2 = inlined_call_operand.vmem [shape: f32[1,128], index: 2, kind: input, shape index: {}]
  %s3 = inlined_call_operand.vmem [shape: bf16[128,128], index: 3, kind: input, shape index: {}]
  %s4 = inlined_call_operand.vmem [shape: f32[1,128], index: 4, kind: input, shape index: {}]
  %s5 = inlined_call_operand.vmem [shape: f32[2,5,128], index: 5, kind: output, shape index: {}]
  %s6 = sld [smem:[#allocation0]]
  $region53: #{anno_mae_forward.10} parent=0
    _
  %s8 = ssub.s32 1, %s6
  %s9 = scalar_select 0, %s8, %s6
  loop: start=0, step=1, limit=4
  $region2: #{anno_mae_forward.10} parent=0 // loop_pre_header
    _
  $region3: #{anno_mae_forward.10} parent=0 // loop_header
    %s11 = sphi 0, %s15
    %p12 = scmp.ge.s32.totalorder %s11, 4
    %s21 = sphi 0, %s23
    %s24 = sphi 0, %s21
    %s25 = sphi 0, %s24
    %s41 = sphi 0, %s25
    %s45 = sphi 0, %s45
    %s47 = sphi 0, %s45
    %s48 = sphi 0, %s47
    %s62 = sphi 0, %s48
    %s66 = sphi 0, %s66
    %s68 = sphi 0, %s66
    %s69 = sphi 0, %s68
    %s83 = sphi 0, %s69
    %s87 = sphi 0, %s87
    %s89 = sphi 0, %s87
    %s90 = sphi 0, %s89
    %s104 = sphi 0, %s90
    %s108 = sphi 0, %s108
    %s110 = sphi 0, %s108
    %s111 = sphi 0, %s110
    %s125 = sphi 0, %s111
    %s131 = sphi 0, %s133
    %s134 = sphi 0, %s131
    %s135 = sphi 0, %s134
    %s151 = sphi 0, %s135
  $region4: #{anno_mae_forward.10} parent=0 // loop_header_branch
    %14 = sbr.rel (%p12) target = $region8
  $region5: #{anno_mae_forward.10} parent=0 // loop_body
    %s16 = ssub.s32 %s11, 1
    %s17 = ssub.s32 %s11, 2
    %s18 = sadd.s32 %s11, 1
    %s19 = ssub.s32 %s11, %s18
    %p20 = scmp.eq.s32.totalorder %s19, 0
    %s22 = sadd.s32 %s21, 1
    %s23 = scalar_select %p20, %s21, %s22
    %p26 = pneg %p20
    %p27 = scmp.eq.s32.totalorder %s11, 1
    %p28 = por %p26, %p27
    %p29 = scmp.ne.s32.totalorder %s21, %s24
    %p30 = scmp.eq.s32.totalorder %s11, 0
    %p31 = por %p29, %p30
    %p32 = scmp.ne.s32.totalorder %s21, %s24
    %p33 = scmp.eq.s32.totalorder %s16, 1
    %p34 = por %p32, %p33
    %p35 = scmp.ne.s32.totalorder %s24, %s25
    %p36 = scmp.eq.s32.totalorder %s16, 0
    %p37 = por %p35, %p36
    %p38 = scmp.ne.s32.totalorder %s24, %s25
    %p39 = scmp.eq.s32.totalorder %s17, 1
    %p40 = por %p38, %p39
    %p42 = scmp.ne.s32.totalorder %s25, %s41
    %p43 = scmp.eq.s32.totalorder %s17, 0
    %p44 = por %p42, %p43
    %s46 = sadd.s32 %s45, 1
    %p49 = scmp.eq.s32.totalorder %s11, 1
    %p50 = scmp.ne.s32.totalorder %s45, %s47
    %p51 = scmp.eq.s32.totalorder %s11, 0
    %p52 = por %p50, %p51
    %p53 = scmp.ne.s32.totalorder %s45, %s47
    %p54 = scmp.eq.s32.totalorder %s16, 1
    %p55 = por %p53, %p54
    %p56 = scmp.ne.s32.totalorder %s47, %s48
    %p57 = scmp.eq.s32.totalorder %s16, 0
    %p58 = por %p56, %p57
    %p59 = scmp.ne.s32.totalorder %s47, %s48
    %p60 = scmp.eq.s32.totalorder %s17, 1
    %p61 = por %p59, %p60
    %p63 = scmp.ne.s32.totalorder %s48, %s62
    %p64 = scmp.eq.s32.totalorder %s17, 0
    %p65 = por %p63, %p64
    %s67 = sadd.s32 %s66, 1
    %p70 = scmp.eq.s32.totalorder %s11, 1
    %p71 = scmp.ne.s32.totalorder %s66, %s68
    %p72 = scmp.eq.s32.totalorder %s11, 0
    %p73 = por %p71, %p72
    %p74 = scmp.ne.s32.totalorder %s66, %s68
    %p75 = scmp.eq.s32.totalorder %s16, 1
    %p76 = por %p74, %p75
    %p77 = scmp.ne.s32.totalorder %s68, %s69
    %p78 = scmp.eq.s32.totalorder %s16, 0
    %p79 = por %p77, %p78
    %p80 = scmp.ne.s32.totalorder %s68, %s69
    %p81 = scmp.eq.s32.totalorder %s17, 1
    %p82 = por %p80, %p81
    %p84 = scmp.ne.s32.totalorder %s69, %s83
    %p85 = scmp.eq.s32.totalorder %s17, 0
    %p86 = por %p84, %p85
    %s88 = sadd.s32 %s87, 1
    %p91 = scmp.eq.s32.totalorder %s11, 1
    %p92 = scmp.ne.s32.totalorder %s87, %s89
    %p93 = scmp.eq.s32.totalorder %s11, 0
    %p94 = por %p92, %p93
    %p95 = scmp.ne.s32.totalorder %s87, %s89
    %p96 = scmp.eq.s32.totalorder %s16, 1
    %p97 = por %p95, %p96
    %p98 = scmp.ne.s32.totalorder %s89, %s90
    %p99 = scmp.eq.s32.totalorder %s16, 0
    %p100 = por %p98, %p99
    %p101 = scmp.ne.s32.totalorder %s89, %s90
    %p102 = scmp.eq.s32.totalorder %s17, 1
    %p103 = por %p101, %p102
    %p105 = scmp.ne.s32.totalorder %s90, %s104
    %p106 = scmp.eq.s32.totalorder %s17, 0
    %p107 = por %p105, %p106
    %s109 = sadd.s32 %s108, 1
    %p112 = scmp.eq.s32.totalorder %s11, 1
    %p113 = scmp.ne.s32.totalorder %s108, %s110
    %p114 = scmp.eq.s32.totalorder %s11, 0
    %p115 = por %p113, %p114
    %p116 = scmp.ne.s32.totalorder %s108, %s110
    %p117 = scmp.eq.s32.totalorder %s16, 1
    %p118 = por %p116, %p117
    %p119 = scmp.ne.s32.totalorder %s110, %s111
    %p120 = scmp.eq.s32.totalorder %s16, 0
    %p121 = por %p119, %p120
    %p122 = scmp.ne.s32.totalorder %s110, %s111
    %p123 = scmp.eq.s32.totalorder %s17, 1
    %p124 = por %p122, %p123
    %p126 = scmp.ne.s32.totalorder %s111, %s125
    %p127 = scmp.eq.s32.totalorder %s17, 0
    %p128 = por %p126, %p127
    %s129 = ssub.s32 %s11, %s18
    %p130 = scmp.eq.s32.totalorder %s129, 0
    %s132 = sadd.s32 %s131, 1
    %s133 = scalar_select %p130, %s131, %s132
    %p136 = pneg %p130
    %p137 = scmp.eq.s32.totalorder %s11, 1
    %p138 = por %p136, %p137
    %p139 = scmp.ne.s32.totalorder %s131, %s134
    %p140 = scmp.eq.s32.totalorder %s11, 0
    %p141 = por %p139, %p140
    %p142 = scmp.ne.s32.totalorder %s131, %s134
    %p143 = scmp.eq.s32.totalorder %s16, 1
    %p144 = por %p142, %p143
    %p145 = scmp.ne.s32.totalorder %s134, %s135
    %p146 = scmp.eq.s32.totalorder %s16, 0
    %p147 = por %p145, %p146
    %p148 = scmp.ne.s32.totalorder %s134, %s135
    %p149 = scmp.eq.s32.totalorder %s17, 1
    %p150 = por %p148, %p149
    %p152 = scmp.ne.s32.totalorder %s135, %s151
    %p153 = scmp.eq.s32.totalorder %s17, 0
    %p154 = por %p152, %p153
    %p155 = scmp.le.s32.totalorder 1, %s11
    %p156 = scmp.lt.s32.totalorder %s11, 3
    %p157 = pnand %p155, %p156
    %p158 = pneg %p157
    // Predicated region
    $region9: #{anno_mae_forward.10} parent=5 // pred_check
      _
    $region10: #{anno_mae_forward.10} parent=5 // pred_check_branch
      %160 = sbr.rel (%p157) target = $region12
    $region11: #{anno_mae_forward.10} parent=5 // pred_region
      %s161 = ssub.s32 %s11, 1
      // Predicated region
      $region13: #{anno_mae_forward.10} parent=11 // pred_check
        %p162 = pneg %p58
      $region14: #{anno_mae_forward.10} parent=11 // pred_check_branch
        %164 = sbr.rel (%p162) target = $region16
      $region15: #{anno_mae_forward.10} parent=11 // pred_region
        _
      $region16: #{anno_mae_forward.10} parent=11 // pred_fallthru
        _
      // Predicated region
      $region17: #{anno_mae_forward.10} parent=11 // pred_check
        %p165 = pneg %p79
      $region18: #{anno_mae_forward.10} parent=11 // pred_check_branch
        %167 = sbr.rel (%p165) target = $region20
      $region19: #{anno_mae_forward.10} parent=11 // pred_region
        _
      $region20: #{anno_mae_forward.10} parent=11 // pred_fallthru
        _
      // Predicated region
      $region21: #{anno_mae_forward.10} parent=11 // pred_check
        %p168 = pneg %p100
      $region22: #{anno_mae_forward.10} parent=11 // pred_check_branch
        %170 = sbr.rel (%p168) target = $region24
      $region23: #{anno_mae_forward.10} parent=11 // pred_region
        _
      $region24: #{anno_mae_forward.10} parent=11 // pred_fallthru
        _
      // Predicated region
      $region25: #{anno_mae_forward.10} parent=11 // pred_check
        %p171 = pneg %p121
      $region26: #{anno_mae_forward.10} parent=11 // pred_check_branch
        %173 = sbr.rel (%p171) target = $region28
      $region27: #{anno_mae_forward.10} parent=11 // pred_region
        _
      $region28: #{anno_mae_forward.10} parent=11 // pred_fallthru
        _
    $region12: #{anno_mae_forward.10} parent=5 // pred_fallthru
      _
    %p174 = scmp.lt.s32.totalorder %s11, 2
    // Predicated region
    $region29: #{anno_mae_forward.10} parent=5 // pred_check
      %p175 = pneg %p174
    $region30: #{anno_mae_forward.10} parent=5 // pred_check_branch
      %177 = sbr.rel (%p175) target = $region32
    $region31: #{anno_mae_forward.10} parent=5 // pred_region
      // Predicated region
      $region33: #{anno_mae_forward.10} parent=31 // pred_check
        %p178 = pneg %p31
      $region34: #{anno_mae_forward.10} parent=31 // pred_check_branch
        %180 = sbr.rel (%p178) target = $region36
      $region35: #{anno_mae_forward.10} parent=31 // pred_region
        %p181 = scmp.lt.s32.totalorder %s11, 1
        %s182 = scalar_select %p181, %s11, 1
        %s183 = smul.addr %s182, 8
        %s184 = scalar_lea.vmem %s0, %s183
      $region36: #{anno_mae_forward.10} parent=31 // pred_fallthru
        _
    $region32: #{anno_mae_forward.10} parent=5 // pred_fallthru
      _
    %p185 = scmp.le.s32.totalorder 1, %s11
    %p186 = scmp.lt.s32.totalorder %s11, 3
    %p187 = pnand %p185, %p186
    %p188 = pneg %p187
    // Predicated region
    $region37: #{anno_mae_forward.10} parent=5 // pred_check
      _
    $region38: #{anno_mae_forward.10} parent=5 // pred_check_branch
      %190 = sbr.rel (%p187) target = $region40
    $region39: #{anno_mae_forward.10} parent=5 // pred_region
      %s191 = ssub.s32 %s11, 1
      %p192 = scmp.lt.s32.totalorder %s16, 1
      %s193 = scalar_select %p192, %s16, 1
      %s194 = smul.addr %s193, 8
      %s195 = scalar_lea.vmem %s0, %s194
      %p196 = pneg %p37
      %p197 = pneg %p34
      %p198 = pneg %p58
      %p199 = pneg %p55
      %p200 = pneg %p79
      %p201 = pneg %p76
      %p202 = pneg %p100
      %p203 = pneg %p97
      %p204 = pneg %p121
      %p205 = pneg %p118
      %p206 = pneg %p147
      %p207 = pneg %p144
      %p208 = scmp.lt.s32.totalorder %s16, 1
      %s209 = scalar_select %p208, %s16, 1
      %s210 = smul.addr %s209, 8
      %s211 = scalar_lea.vmem %s5, %s210
      %p212 = scmp.lt.s32.totalorder %s16, 1
      %s213 = scalar_select %p212, %s16, 1
      %s214 = smul.addr %s213, 8
      %s215 = scalar_lea.vmem %s0, %s214
      %p216 = scmp.lt.s32.totalorder %s16, 1
      %s217 = scalar_select %p216, %s16, 1
      %s218 = smul.addr %s217, 8
      %s219 = scalar_lea.vmem %s5, %s218
      %v221 = vld [vmem:[%s215] sm:$0x1f]
      %v222 = vld [vmem:[%s1] sm:$0x1]
      %v223 = vld [vmem:[%s2] sm:$0x1]
      %vm224 = vcmask 1044480
      %v225 = vsel %vm224, %v221, 0.0
      %226 = vadd.xlane.f32.xlu0 %v225
      %v227 = vpop.xlane.xlu0 %226
      %v228 = vrcp.pop 128.0
      %v229 = vmul.f32 %v227, %v228
      %v230 = vsub.f32 %v221, %v229
      %v231 = vmul.f32 %v230, %v230
      %v232 = vsel %vm224, %v231, 0.0
      %233 = vadd.xlane.f32.xlu0 %v232
      %v234 = vpop.xlane.xlu0 %233
      %v235 = vmul.f32 %v234, %v228
      %v236 = vadd.f32 %v235, 1e-05
      %v237 = vrsqrt.pop %v236
      %v238 = vmul.f32 %v230, %v237
      %v240 = vlaneseq
      %v241 = vshrl.u32 %v240, 7
      %v242 = vsub.s32 0, %v241
      %v243 = vrot.slane %v222, %v242
      %v245 = vmul.f32 %v238, %v243
      %v247 = vlaneseq
      %v248 = vshrl.u32 %v247, 7
      %v249 = vsub.s32 0, %v248
      %v250 = vrot.slane %v223, %v249
      %v252 = vadd.f32 %v245, %v250
      %v253 = vpack.c.bf16 %v252, %v252
      %v254 = vld [vmem:[%s3] sm:$0xf]
      %v255 = vld [vmem:[%s3 + $0x4] sm:$0xf]
      %v256 = vld [vmem:[%s3 + $0x8] sm:$0xf]
      %v257 = vld [vmem:[%s3 + $0xc] sm:$0xf]
      %v258 = vld [vmem:[%s3 + $0x10] sm:$0xf]
      %v259 = vld [vmem:[%s3 + $0x14] sm:$0xf]
      %v260 = vld [vmem:[%s3 + $0x18] sm:$0xf]
      %v261 = vld [vmem:[%s3 + $0x1c] sm:$0xf]
      %v262 = vld [vmem:[%s3 + $0x20] sm:$0xf]
      %v263 = vld [vmem:[%s3 + $0x24] sm:$0xf]
      %v264 = vld [vmem:[%s3 + $0x28] sm:$0xf]
      %v265 = vld [vmem:[%s3 + $0x2c] sm:$0xf]
      %v266 = vld [vmem:[%s3 + $0x30] sm:$0xf]
      %v267 = vld [vmem:[%s3 + $0x34] sm:$0xf]
      %v268 = vld [vmem:[%s3 + $0x38] sm:$0xf]
      %v269 = vld [vmem:[%s3 + $0x3c] sm:$0xf]
      %v270 = vld [vmem:[%s4] sm:$0x1]
      %v272 = vlaneseq
      %v273 = vshrl.u32 %v272, 7
      %v274 = vsub.s32 0, %v273
      %v275 = vrot.slane %v270, %v274
      %v293 = vunpack.c.l.b16 %v254
      %v294 = vunpack.c.l.b16 %v255
      %v295 = vunpack.c.l.b16 %v256
      %v296 = vunpack.c.l.b16 %v257
      %v297 = vunpack.c.l.b16 %v258
      %v298 = vunpack.c.l.b16 %v259
      %v299 = vunpack.c.l.b16 %v260
      %v300 = vunpack.c.l.b16 %v261
      %v301 = vunpack.c.l.b16 %v262
      %v302 = vunpack.c.l.b16 %v263
      %v303 = vunpack.c.l.b16 %v264
      %v304 = vunpack.c.l.b16 %v265
      %v305 = vunpack.c.l.b16 %v266
      %v306 = vunpack.c.l.b16 %v267
      %v307 = vunpack.c.l.b16 %v268
      %v308 = vunpack.c.l.b16 %v269
      %v309 = vpack.c.b16 %v294, %v293
      %v310 = vpack.c.b16 %v296, %v295
      %v311 = vpack.c.b16 %v298, %v297
      %v312 = vpack.c.b16 %v300, %v299
      %v313 = vpack.c.b16 %v302, %v301
      %v314 = vpack.c.b16 %v304, %v303
      %v315 = vpack.c.b16 %v306, %v305
      %v316 = vpack.c.b16 %v308, %v307
      %325 = vmatprep.subr.bf16.mxu0 0
      %326 = vmatpush1.bf16.msra.mxu0 %v316
      %327 = vmatprep.subr.bf16.mxu0 0
      %328 = vmatpush1.bf16.msra.mxu0 %v315
      %329 = vmatprep.subr.bf16.mxu0 0
      %330 = vmatpush1.bf16.msra.mxu0 %v314
      %331 = vmatprep.subr.bf16.mxu0 0
      %332 = vmatpush1.bf16.msra.mxu0 %v313
      %333 = vmatprep.subr.bf16.mxu0 0
      %334 = vmatpush1.bf16.msra.mxu0 %v312
      %335 = vmatprep.subr.bf16.mxu0 0
      %336 = vmatpush1.bf16.msra.mxu0 %v311
      %337 = vmatprep.subr.bf16.mxu0 0
      %338 = vmatpush1.bf16.msra.mxu0 %v310
      %339 = vmatprep.subr.bf16.mxu0 0
      %340 = vmatpush1.bf16.msra.mxu0 %v309
      %341 = vmatprep.subr.bf16.mxu0 0
      %342 = vmatpush2.bf16.msra.mxu0 0
      %343 = vmatprep.subr.bf16.mxu0 0
      %344 = vmatpush2.bf16.msra.mxu0 0
      %345 = vmatprep.subr.bf16.mxu0 0
      %346 = vmatpush2.bf16.msra.mxu0 0
      %347 = vmatprep.subr.bf16.mxu0 0
      %348 = vmatpush2.bf16.msra.mxu0 0
      %349 = vmatprep.subr.bf16.mxu0 0
      %350 = vmatpush2.bf16.msra.mxu0 0
      %351 = vmatprep.subr.bf16.mxu0 0
      %352 = vmatpush2.bf16.msra.mxu0 0
      %353 = vmatprep.subr.bf16.mxu0 0
      %354 = vmatpush2.bf16.msra.mxu0 0
      %355 = vmatprep.subr.bf16.mxu0 0
      %356 = vmatpush2.bf16.msra.mxu0 0
      %357 = vmatprep.mubr.bf16.mxu0 0
      %358 = vmatmul.mubr.bf16.gmra.mxu0 %v253
      %v359 = vpop.f32.mrf.mxu0
      %v360 = vadd.f32 %v275, %v359
      %v361 = vpop.f32.mrf.mxu0
      %v362 = vpop.f32.mrf.mxu0
      %v363 = vpop.f32.mrf.mxu0
      %364 = vdwg.mxu0
      %365 = vst [vmem:[%s219] sm:$0x1f] %v360
      %p366 = scmp.lt.s32.totalorder %s16, 1
      %s367 = scalar_select %p366, %s16, 1
      %s368 = smul.addr %s367, 8
      %s369 = scalar_lea.vmem %s5, %s368
      // Predicated region
      $region41: #{anno_mae_forward.10} parent=39 // pred_check
        %p370 = pneg %p144
      $region42: #{anno_mae_forward.10} parent=39 // pred_check_branch
        %372 = sbr.rel (%p370) target = $region44
      $region43: #{anno_mae_forward.10} parent=39 // pred_region
        _
      $region44: #{anno_mae_forward.10} parent=39 // pred_fallthru
        _
    $region40: #{anno_mae_forward.10} parent=5 // pred_fallthru
      _
    %p373 = scmp.le.s32.totalorder 2, %s11
    // Predicated region
    $region45: #{anno_mae_forward.10} parent=5 // pred_check
      %p374 = pneg %p373
    $region46: #{anno_mae_forward.10} parent=5 // pred_check_branch
      %376 = sbr.rel (%p374) target = $region48
    $region47: #{anno_mae_forward.10} parent=5 // pred_region
      %s377 = ssub.s32 %s11, 2
      // Predicated region
      $region49: #{anno_mae_forward.10} parent=47 // pred_check
        %p378 = pneg %p150
      $region50: #{anno_mae_forward.10} parent=47 // pred_check_branch
        %380 = sbr.rel (%p378) target = $region52
      $region51: #{anno_mae_forward.10} parent=47 // pred_region
        %p381 = scmp.lt.s32.totalorder %s17, 1
        %s382 = scalar_select %p381, %s17, 1
        %s383 = smul.addr %s382, 8
        %s384 = scalar_lea.vmem %s5, %s383
      $region52: #{anno_mae_forward.10} parent=47 // pred_fallthru
        _
    $region48: #{anno_mae_forward.10} parent=5 // pred_fallthru
      _
  $region6: #{anno_mae_forward.10} parent=0 // loop_footer
    %s15 = sadd.s32 1, %s11
  $region7: #{anno_mae_forward.10} parent=0 // loop_footer_branch
    %10 = sbr.rel target = $region3
  $region8: #{anno_mae_forward.10} parent=0 // loop_exit
    _

// kernel: anno_mae_forward.8
$region0: #{anno_mae_forward.8}
  #allocation0 [shape = 'u32[]', space=smem, size = 0x4, offset = 0x4, fixed_abs, tag = 'smem constant byte address 0x4 - core index']
  #allocation1 [shape = 'u32[144,128]{1,0:T(1,128)}', space=vmem, size = 0x12000, scoped, tag = 'internal scratch']
  %s0 = inlined_call_operand.vmem [shape: f32[2,5,128], index: 0, kind: input, shape index: {}]
  %s1 = inlined_call_operand.vmem [shape: f32[1,128], index: 1, kind: input, shape index: {}]
  %s2 = inlined_call_operand.vmem [shape: f32[1,128], index: 2, kind: input, shape index: {}]
  %s3 = inlined_call_operand.vmem [shape: bf16[128,384], index: 3, kind: input, shape index: {}]
  %s4 = inlined_call_operand.vmem [shape: f32[1,384], index: 4, kind: input, shape index: {}]
  %s5 = inlined_call_operand.vmem [shape: bf16[128,128], index: 5, kind: input, shape index: {}]
  %s6 = inlined_call_operand.vmem [shape: f32[1,128], index: 6, kind: input, shape index: {}]
  %s7 = inlined_call_operand.vmem [shape: f32[1,128], index: 7, kind: input, shape index: {}]
  %s8 = inlined_call_operand.vmem [shape: f32[1,128], index: 8, kind: input, shape index: {}]
  %s9 = inlined_call_operand.vmem [shape: bf16[128,512], index: 9, kind: input, shape index: {}]
  %s10 = inlined_call_operand.vmem [shape: f32[1,512], index: 10, kind: input, shape index: {}]
  %s11 = inlined_call_operand.vmem [shape: bf16[512,128], index: 11, kind: input, shape index: {}]
  %s12 = inlined_call_operand.vmem [shape: f32[1,128], index: 12, kind: input, shape index: {}]
  %s13 = inlined_call_operand.vmem [shape: f32[2,5,128], index: 13, kind: output, shape index: {}]
  %s14 = sld [smem:[#allocation0]]
  $region85: #{anno_mae_forward.8} parent=0
    _
  %s16 = ssub.s32 1, %s14
  %s17 = scalar_select 0, %s16, %s14
  loop: start=0, step=1, limit=4
  $region2: #{anno_mae_forward.8} parent=0 // loop_pre_header
    _
  $region3: #{anno_mae_forward.8} parent=0 // loop_header
    %s19 = sphi 0, %s23
    %p20 = scmp.ge.s32.totalorder %s19, 4
    %s29 = sphi 0, %s31
    %s32 = sphi 0, %s29
    %s33 = sphi 0, %s32
    %s49 = sphi 0, %s33
    %s53 = sphi 0, %s53
    %s55 = sphi 0, %s53
    %s56 = sphi 0, %s55
    %s70 = sphi 0, %s56
    %s74 = sphi 0, %s74
    %s76 = sphi 0, %s74
    %s77 = sphi 0, %s76
    %s91 = sphi 0, %s77
    %s95 = sphi 0, %s95
    %s97 = sphi 0, %s95
    %s98 = sphi 0, %s97
    %s112 = sphi 0, %s98
    %s116 = sphi 0, %s116
    %s118 = sphi 0, %s116
    %s119 = sphi 0, %s118
    %s133 = sphi 0, %s119
    %s137 = sphi 0, %s137
    %s139 = sphi 0, %s137
    %s140 = sphi 0, %s139
    %s154 = sphi 0, %s140
    %s158 = sphi 0, %s158
    %s160 = sphi 0, %s158
    %s161 = sphi 0, %s160
    %s175 = sphi 0, %s161
    %s179 = sphi 0, %s179
    %s181 = sphi 0, %s179
    %s182 = sphi 0, %s181
    %s196 = sphi 0, %s182
    %s200 = sphi 0, %s200
    %s202 = sphi 0, %s200
    %s203 = sphi 0, %s202
    %s217 = sphi 0, %s203
    %s221 = sphi 0, %s221
    %s223 = sphi 0, %s221
    %s224 = sphi 0, %s223
    %s238 = sphi 0, %s224
    %s242 = sphi 0, %s242
    %s244 = sphi 0, %s242
    %s245 = sphi 0, %s244
    %s259 = sphi 0, %s245
    %s263 = sphi 0, %s263
    %s265 = sphi 0, %s263
    %s266 = sphi 0, %s265
    %s280 = sphi 0, %s266
    %s284 = sphi 0, %s284
    %s286 = sphi 0, %s284
    %s287 = sphi 0, %s286
    %s301 = sphi 0, %s287
    %s307 = sphi 0, %s309
    %s310 = sphi 0, %s307
    %s311 = sphi 0, %s310
    %s327 = sphi 0, %s311
  $region4: #{anno_mae_forward.8} parent=0 // loop_header_branch
    %22 = sbr.rel (%p20) target = $region8
  $region5: #{anno_mae_forward.8} parent=0 // loop_body
    %s24 = ssub.s32 %s19, 1
    %s25 = ssub.s32 %s19, 2
    %s26 = sadd.s32 %s19, 1
    %s27 = ssub.s32 %s19, %s26
    %p28 = scmp.eq.s32.totalorder %s27, 0
    %s30 = sadd.s32 %s29, 1
    %s31 = scalar_select %p28, %s29, %s30
    %p34 = pneg %p28
    %p35 = scmp.eq.s32.totalorder %s19, 1
    %p36 = por %p34, %p35
    %p37 = scmp.ne.s32.totalorder %s29, %s32
    %p38 = scmp.eq.s32.totalorder %s19, 0
    %p39 = por %p37, %p38
    %p40 = scmp.ne.s32.totalorder %s29, %s32
    %p41 = scmp.eq.s32.totalorder %s24, 1
    %p42 = por %p40, %p41
    %p43 = scmp.ne.s32.totalorder %s32, %s33
    %p44 = scmp.eq.s32.totalorder %s24, 0
    %p45 = por %p43, %p44
    %p46 = scmp.ne.s32.totalorder %s32, %s33
    %p47 = scmp.eq.s32.totalorder %s25, 1
    %p48 = por %p46, %p47
    %p50 = scmp.ne.s32.totalorder %s33, %s49
    %p51 = scmp.eq.s32.totalorder %s25, 0
    %p52 = por %p50, %p51
    %s54 = sadd.s32 %s53, 1
    %p57 = scmp.eq.s32.totalorder %s19, 1
    %p58 = scmp.ne.s32.totalorder %s53, %s55
    %p59 = scmp.eq.s32.totalorder %s19, 0
    %p60 = por %p58, %p59
    %p61 = scmp.ne.s32.totalorder %s53, %s55
    %p62 = scmp.eq.s32.totalorder %s24, 1
    %p63 = por %p61, %p62
    %p64 = scmp.ne.s32.totalorder %s55, %s56
    %p65 = scmp.eq.s32.totalorder %s24, 0
    %p66 = por %p64, %p65
    %p67 = scmp.ne.s32.totalorder %s55, %s56
    %p68 = scmp.eq.s32.totalorder %s25, 1
    %p69 = por %p67, %p68
    %p71 = scmp.ne.s32.totalorder %s56, %s70
    %p72 = scmp.eq.s32.totalorder %s25, 0
    %p73 = por %p71, %p72
    %s75 = sadd.s32 %s74, 1
    %p78 = scmp.eq.s32.totalorder %s19, 1
    %p79 = scmp.ne.s32.totalorder %s74, %s76
    %p80 = scmp.eq.s32.totalorder %s19, 0
    %p81 = por %p79, %p80
    %p82 = scmp.ne.s32.totalorder %s74, %s76
    %p83 = scmp.eq.s32.totalorder %s24, 1
    %p84 = por %p82, %p83
    %p85 = scmp.ne.s32.totalorder %s76, %s77
    %p86 = scmp.eq.s32.totalorder %s24, 0
    %p87 = por %p85, %p86
    %p88 = scmp.ne.s32.totalorder %s76, %s77
    %p89 = scmp.eq.s32.totalorder %s25, 1
    %p90 = por %p88, %p89
    %p92 = scmp.ne.s32.totalorder %s77, %s91
    %p93 = scmp.eq.s32.totalorder %s25, 0
    %p94 = por %p92, %p93
    %s96 = sadd.s32 %s95, 1
    %p99 = scmp.eq.s32.totalorder %s19, 1
    %p100 = scmp.ne.s32.totalorder %s95, %s97
    %p101 = scmp.eq.s32.totalorder %s19, 0
    %p102 = por %p100, %p101
    %p103 = scmp.ne.s32.totalorder %s95, %s97
    %p104 = scmp.eq.s32.totalorder %s24, 1
    %p105 = por %p103, %p104
    %p106 = scmp.ne.s32.totalorder %s97, %s98
    %p107 = scmp.eq.s32.totalorder %s24, 0
    %p108 = por %p106, %p107
    %p109 = scmp.ne.s32.totalorder %s97, %s98
    %p110 = scmp.eq.s32.totalorder %s25, 1
    %p111 = por %p109, %p110
    %p113 = scmp.ne.s32.totalorder %s98, %s112
    %p114 = scmp.eq.s32.totalorder %s25, 0
    %p115 = por %p113, %p114
    %s117 = sadd.s32 %s116, 1
    %p120 = scmp.eq.s32.totalorder %s19, 1
    %p121 = scmp.ne.s32.totalorder %s116, %s118
    %p122 = scmp.eq.s32.totalorder %s19, 0
    %p123 = por %p121, %p122
    %p124 = scmp.ne.s32.totalorder %s116, %s118
    %p125 = scmp.eq.s32.totalorder %s24, 1
    %p126 = por %p124, %p125
    %p127 = scmp.ne.s32.totalorder %s118, %s119
    %p128 = scmp.eq.s32.totalorder %s24, 0
    %p129 = por %p127, %p128
    %p130 = scmp.ne.s32.totalorder %s118, %s119
    %p131 = scmp.eq.s32.totalorder %s25, 1
    %p132 = por %p130, %p131
    %p134 = scmp.ne.s32.totalorder %s119, %s133
    %p135 = scmp.eq.s32.totalorder %s25, 0
    %p136 = por %p134, %p135
    %s138 = sadd.s32 %s137, 1
    %p141 = scmp.eq.s32.totalorder %s19, 1
    %p142 = scmp.ne.s32.totalorder %s137, %s139
    %p143 = scmp.eq.s32.totalorder %s19, 0
    %p144 = por %p142, %p143
    %p145 = scmp.ne.s32.totalorder %s137, %s139
    %p146 = scmp.eq.s32.totalorder %s24, 1
    %p147 = por %p145, %p146
    %p148 = scmp.ne.s32.totalorder %s139, %s140
    %p149 = scmp.eq.s32.totalorder %s24, 0
    %p150 = por %p148, %p149
    %p151 = scmp.ne.s32.totalorder %s139, %s140
    %p152 = scmp.eq.s32.totalorder %s25, 1
    %p153 = por %p151, %p152
    %p155 = scmp.ne.s32.totalorder %s140, %s154
    %p156 = scmp.eq.s32.totalorder %s25, 0
    %p157 = por %p155, %p156
    %s159 = sadd.s32 %s158, 1
    %p162 = scmp.eq.s32.totalorder %s19, 1
    %p163 = scmp.ne.s32.totalorder %s158, %s160
    %p164 = scmp.eq.s32.totalorder %s19, 0
    %p165 = por %p163, %p164
    %p166 = scmp.ne.s32.totalorder %s158, %s160
    %p167 = scmp.eq.s32.totalorder %s24, 1
    %p168 = por %p166, %p167
    %p169 = scmp.ne.s32.totalorder %s160, %s161
    %p170 = scmp.eq.s32.totalorder %s24, 0
    %p171 = por %p169, %p170
    %p172 = scmp.ne.s32.totalorder %s160, %s161
    %p173 = scmp.eq.s32.totalorder %s25, 1
    %p174 = por %p172, %p173
    %p176 = scmp.ne.s32.totalorder %s161, %s175
    %p177 = scmp.eq.s32.totalorder %s25, 0
    %p178 = por %p176, %p177
    %s180 = sadd.s32 %s179, 1
    %p183 = scmp.eq.s32.totalorder %s19, 1
    %p184 = scmp.ne.s32.totalorder %s179, %s181
    %p185 = scmp.eq.s32.totalorder %s19, 0
    %p186 = por %p184, %p185
    %p187 = scmp.ne.s32.totalorder %s179, %s181
    %p188 = scmp.eq.s32.totalorder %s24, 1
    %p189 = por %p187, %p188
    %p190 = scmp.ne.s32.totalorder %s181, %s182
    %p191 = scmp.eq.s32.totalorder %s24, 0
    %p192 = por %p190, %p191
    %p193 = scmp.ne.s32.totalorder %s181, %s182
    %p194 = scmp.eq.s32.totalorder %s25, 1
    %p195 = por %p193, %p194
    %p197 = scmp.ne.s32.totalorder %s182, %s196
    %p198 = scmp.eq.s32.totalorder %s25, 0
    %p199 = por %p197, %p198
    %s201 = sadd.s32 %s200, 1
    %p204 = scmp.eq.s32.totalorder %s19, 1
    %p205 = scmp.ne.s32.totalorder %s200, %s202
    %p206 = scmp.eq.s32.totalorder %s19, 0
    %p207 = por %p205, %p206
    %p208 = scmp.ne.s32.totalorder %s200, %s202
    %p209 = scmp.eq.s32.totalorder %s24, 1
    %p210 = por %p208, %p209
    %p211 = scmp.ne.s32.totalorder %s202, %s203
    %p212 = scmp.eq.s32.totalorder %s24, 0
    %p213 = por %p211, %p212
    %p214 = scmp.ne.s32.totalorder %s202, %s203
    %p215 = scmp.eq.s32.totalorder %s25, 1
    %p216 = por %p214, %p215
    %p218 = scmp.ne.s32.totalorder %s203, %s217
    %p219 = scmp.eq.s32.totalorder %s25, 0
    %p220 = por %p218, %p219
    %s222 = sadd.s32 %s221, 1
    %p225 = scmp.eq.s32.totalorder %s19, 1
    %p226 = scmp.ne.s32.totalorder %s221, %s223
    %p227 = scmp.eq.s32.totalorder %s19, 0
    %p228 = por %p226, %p227
    %p229 = scmp.ne.s32.totalorder %s221, %s223
    %p230 = scmp.eq.s32.totalorder %s24, 1
    %p231 = por %p229, %p230
    %p232 = scmp.ne.s32.totalorder %s223, %s224
    %p233 = scmp.eq.s32.totalorder %s24, 0
    %p234 = por %p232, %p233
    %p235 = scmp.ne.s32.totalorder %s223, %s224
    %p236 = scmp.eq.s32.totalorder %s25, 1
    %p237 = por %p235, %p236
    %p239 = scmp.ne.s32.totalorder %s224, %s238
    %p240 = scmp.eq.s32.totalorder %s25, 0
    %p241 = por %p239, %p240
    %s243 = sadd.s32 %s242, 1
    %p246 = scmp.eq.s32.totalorder %s19, 1
    %p247 = scmp.ne.s32.totalorder %s242, %s244
    %p248 = scmp.eq.s32.totalorder %s19, 0
    %p249 = por %p247, %p248
    %p250 = scmp.ne.s32.totalorder %s242, %s244
    %p251 = scmp.eq.s32.totalorder %s24, 1
    %p252 = por %p250, %p251
    %p253 = scmp.ne.s32.totalorder %s244, %s245
    %p254 = scmp.eq.s32.totalorder %s24, 0
    %p255 = por %p253, %p254
    %p256 = scmp.ne.s32.totalorder %s244, %s245
    %p257 = scmp.eq.s32.totalorder %s25, 1
    %p258 = por %p256, %p257
    %p260 = scmp.ne.s32.totalorder %s245, %s259
    %p261 = scmp.eq.s32.totalorder %s25, 0
    %p262 = por %p260, %p261
    %s264 = sadd.s32 %s263, 1
    %p267 = scmp.eq.s32.totalorder %s19, 1
    %p268 = scmp.ne.s32.totalorder %s263, %s265
    %p269 = scmp.eq.s32.totalorder %s19, 0
    %p270 = por %p268, %p269
    %p271 = scmp.ne.s32.totalorder %s263, %s265
    %p272 = scmp.eq.s32.totalorder %s24, 1
    %p273 = por %p271, %p272
    %p274 = scmp.ne.s32.totalorder %s265, %s266
    %p275 = scmp.eq.s32.totalorder %s24, 0
    %p276 = por %p274, %p275
    %p277 = scmp.ne.s32.totalorder %s265, %s266
    %p278 = scmp.eq.s32.totalorder %s25, 1
    %p279 = por %p277, %p278
    %p281 = scmp.ne.s32.totalorder %s266, %s280
    %p282 = scmp.eq.s32.totalorder %s25, 0
    %p283 = por %p281, %p282
    %s285 = sadd.s32 %s284, 1
    %p288 = scmp.eq.s32.totalorder %s19, 1
    %p289 = scmp.ne.s32.totalorder %s284, %s286
    %p290 = scmp.eq.s32.totalorder %s19, 0
    %p291 = por %p289, %p290
    %p292 = scmp.ne.s32.totalorder %s284, %s286
    %p293 = scmp.eq.s32.totalorder %s24, 1
    %p294 = por %p292, %p293
    %p295 = scmp.ne.s32.totalorder %s286, %s287
    %p296 = scmp.eq.s32.totalorder %s24, 0
    %p297 = por %p295, %p296
    %p298 = scmp.ne.s32.totalorder %s286, %s287
    %p299 = scmp.eq.s32.totalorder %s25, 1
    %p300 = por %p298, %p299
    %p302 = scmp.ne.s32.totalorder %s287, %s301
    %p303 = scmp.eq.s32.totalorder %s25, 0
    %p304 = por %p302, %p303
    %s305 = ssub.s32 %s19, %s26
    %p306 = scmp.eq.s32.totalorder %s305, 0
    %s308 = sadd.s32 %s307, 1
    %s309 = scalar_select %p306, %s307, %s308
    %p312 = pneg %p306
    %p313 = scmp.eq.s32.totalorder %s19, 1
    %p314 = por %p312, %p313
    %p315 = scmp.ne.s32.totalorder %s307, %s310
    %p316 = scmp.eq.s32.totalorder %s19, 0
    %p317 = por %p315, %p316
    %p318 = scmp.ne.s32.totalorder %s307, %s310
    %p319 = scmp.eq.s32.totalorder %s24, 1
    %p320 = por %p318, %p319
    %p321 = scmp.ne.s32.totalorder %s310, %s311
    %p322 = scmp.eq.s32.totalorder %s24, 0
    %p323 = por %p321, %p322
    %p324 = scmp.ne.s32.totalorder %s310, %s311
    %p325 = scmp.eq.s32.totalorder %s25, 1
    %p326 = por %p324, %p325
    %p328 = scmp.ne.s32.totalorder %s311, %s327
    %p329 = scmp.eq.s32.totalorder %s25, 0
    %p330 = por %p328, %p329
    %p331 = scmp.le.s32.totalorder 1, %s19
    %p332 = scmp.lt.s32.totalorder %s19, 3
    %p333 = pnand %p331, %p332
    %p334 = pneg %p333
    // Predicated region
    $region9: #{anno_mae_forward.8} parent=5 // pred_check
      _
    $region10: #{anno_mae_forward.8} parent=5 // pred_check_branch
      %336 = sbr.rel (%p333) target = $region12
    $region11: #{anno_mae_forward.8} parent=5 // pred_region
      %s337 = ssub.s32 %s19, 1
      // Predicated region
      $region13: #{anno_mae_forward.8} parent=11 // pred_check
        %p338 = pneg %p66
      $region14: #{anno_mae_forward.8} parent=11 // pred_check_branch
        %340 = sbr.rel (%p338) target = $region16
      $region15: #{anno_mae_forward.8} parent=11 // pred_region
        _
      $region16: #{anno_mae_forward.8} parent=11 // pred_fallthru
        _
      // Predicated region
      $region17: #{anno_mae_forward.8} parent=11 // pred_check
        %p341 = pneg %p87
      $region18: #{anno_mae_forward.8} parent=11 // pred_check_branch
        %343 = sbr.rel (%p341) target = $region20
      $region19: #{anno_mae_forward.8} parent=11 // pred_region
        _
      $region20: #{anno_mae_forward.8} parent=11 // pred_fallthru
        _
      // Predicated region
      $region21: #{anno_mae_forward.8} parent=11 // pred_check
        %p344 = pneg %p108
      $region22: #{anno_mae_forward.8} parent=11 // pred_check_branch
        %346 = sbr.rel (%p344) target = $region24
      $region23: #{anno_mae_forward.8} parent=11 // pred_region
        _
      $region24: #{anno_mae_forward.8} parent=11 // pred_fallthru
        _
      // Predicated region
      $region25: #{anno_mae_forward.8} parent=11 // pred_check
        %p347 = pneg %p129
      $region26: #{anno_mae_forward.8} parent=11 // pred_check_branch
        %349 = sbr.rel (%p347) target = $region28
      $region27: #{anno_mae_forward.8} parent=11 // pred_region
        _
      $region28: #{anno_mae_forward.8} parent=11 // pred_fallthru
        _
      // Predicated region
      $region29: #{anno_mae_forward.8} parent=11 // pred_check
        %p350 = pneg %p150
      $region30: #{anno_mae_forward.8} parent=11 // pred_check_branch
        %352 = sbr.rel (%p350) target = $region32
      $region31: #{anno_mae_forward.8} parent=11 // pred_region
        _
      $region32: #{anno_mae_forward.8} parent=11 // pred_fallthru
        _
      // Predicated region
      $region33: #{anno_mae_forward.8} parent=11 // pred_check
        %p353 = pneg %p171
      $region34: #{anno_mae_forward.8} parent=11 // pred_check_branch
        %355 = sbr.rel (%p353) target = $region36
      $region35: #{anno_mae_forward.8} parent=11 // pred_region
        _
      $region36: #{anno_mae_forward.8} parent=11 // pred_fallthru
        _
      // Predicated region
      $region37: #{anno_mae_forward.8} parent=11 // pred_check
        %p356 = pneg %p192
      $region38: #{anno_mae_forward.8} parent=11 // pred_check_branch
        %358 = sbr.rel (%p356) target = $region40
      $region39: #{anno_mae_forward.8} parent=11 // pred_region
        _
      $region40: #{anno_mae_forward.8} parent=11 // pred_fallthru
        _
      // Predicated region
      $region41: #{anno_mae_forward.8} parent=11 // pred_check
        %p359 = pneg %p213
      $region42: #{anno_mae_forward.8} parent=11 // pred_check_branch
        %361 = sbr.rel (%p359) target = $region44
      $region43: #{anno_mae_forward.8} parent=11 // pred_region
        _
      $region44: #{anno_mae_forward.8} parent=11 // pred_fallthru
        _
      // Predicated region
      $region45: #{anno_mae_forward.8} parent=11 // pred_check
        %p362 = pneg %p234
      $region46: #{anno_mae_forward.8} parent=11 // pred_check_branch
        %364 = sbr.rel (%p362) target = $region48
      $region47: #{anno_mae_forward.8} parent=11 // pred_region
        _
      $region48: #{anno_mae_forward.8} parent=11 // pred_fallthru
        _
      // Predicated region
      $region49: #{anno_mae_forward.8} parent=11 // pred_check
        %p365 = pneg %p255
      $region50: #{anno_mae_forward.8} parent=11 // pred_check_branch
        %367 = sbr.rel (%p365) target = $region52
      $region51: #{anno_mae_forward.8} parent=11 // pred_region
        _
      $region52: #{anno_mae_forward.8} parent=11 // pred_fallthru
        _
      // Predicated region
      $region53: #{anno_mae_forward.8} parent=11 // pred_check
        %p368 = pneg %p276
      $region54: #{anno_mae_forward.8} parent=11 // pred_check_branch
        %370 = sbr.rel (%p368) target = $region56
      $region55: #{anno_mae_forward.8} parent=11 // pred_region
        _
      $region56: #{anno_mae_forward.8} parent=11 // pred_fallthru
        _
      // Predicated region
      $region57: #{anno_mae_forward.8} parent=11 // pred_check
        %p371 = pneg %p297
      $region58: #{anno_mae_forward.8} parent=11 // pred_check_branch
        %373 = sbr.rel (%p371) target = $region60
      $region59: #{anno_mae_forward.8} parent=11 // pred_region
        _
      $region60: #{anno_mae_forward.8} parent=11 // pred_fallthru
        _
    $region12: #{anno_mae_forward.8} parent=5 // pred_fallthru
      _
    %p374 = scmp.lt.s32.totalorder %s19, 2
    // Predicated region
    $region61: #{anno_mae_forward.8} parent=5 // pred_check
      %p375 = pneg %p374
    $region62: #{anno_mae_forward.8} parent=5 // pred_check_branch
      %377 = sbr.rel (%p375) target = $region64
    $region63: #{anno_mae_forward.8} parent=5 // pred_region
      // Predicated region
      $region65: #{anno_mae_forward.8} parent=63 // pred_check
        %p378 = pneg %p39
      $region66: #{anno_mae_forward.8} parent=63 // pred_check_branch
        %380 = sbr.rel (%p378) target = $region68
      $region67: #{anno_mae_forward.8} parent=63 // pred_region
        %p381 = scmp.lt.s32.totalorder %s19, 1
        %s382 = scalar_select %p381, %s19, 1
        %s383 = smul.addr %s382, 8
        %s384 = scalar_lea.vmem %s0, %s383
      $region68: #{anno_mae_forward.8} parent=63 // pred_fallthru
        _
    $region64: #{anno_mae_forward.8} parent=5 // pred_fallthru
      _
    %p385 = scmp.le.s32.totalorder 1, %s19
    %p386 = scmp.lt.s32.totalorder %s19, 3
    %p387 = pnand %p385, %p386
    %p388 = pneg %p387
    // Predicated region
    $region69: #{anno_mae_forward.8} parent=5 // pred_check
      _
    $region70: #{anno_mae_forward.8} parent=5 // pred_check_branch
      %390 = sbr.rel (%p387) target = $region72
    $region71: #{anno_mae_forward.8} parent=5 // pred_region
      %s391 = ssub.s32 %s19, 1
      %p392 = scmp.lt.s32.totalorder %s24, 1
      %s393 = scalar_select %p392, %s24, 1
      %s394 = smul.addr %s393, 8
      %s395 = scalar_lea.vmem %s0, %s394
      %p396 = pneg %p45
      %p397 = pneg %p42
      %p398 = pneg %p66
      %p399 = pneg %p63
      %p400 = pneg %p87
      %p401 = pneg %p84
      %p402 = pneg %p108
      %p403 = pneg %p105
      %p404 = pneg %p129
      %p405 = pneg %p126
      %p406 = pneg %p150
      %p407 = pneg %p147
      %p408 = pneg %p171
      %p409 = pneg %p168
      %p410 = pneg %p192
      %p411 = pneg %p189
      %p412 = pneg %p213
      %p413 = pneg %p210
      %p414 = pneg %p234
      %p415 = pneg %p231
      %p416 = pneg %p255
      %p417 = pneg %p252
      %p418 = pneg %p276
      %p419 = pneg %p273
      %p420 = pneg %p297
      %p421 = pneg %p294
      %p422 = pneg %p323
      %p423 = pneg %p320
      %p424 = scmp.lt.s32.totalorder %s24, 1
      %s425 = scalar_select %p424, %s24, 1
      %s426 = smul.addr %s425, 8
      %s427 = scalar_lea.vmem %s13, %s426
      %p428 = scmp.lt.s32.totalorder %s24, 1
      %s429 = scalar_select %p428, %s24, 1
      %s430 = smul.addr %s429, 8
      %s431 = scalar_lea.vmem %s0, %s430
      %p432 = scmp.lt.s32.totalorder %s24, 1
      %s433 = scalar_select %p432, %s24, 1
      %s434 = smul.addr %s433, 8
      %s435 = scalar_lea.vmem %s13, %s434
      %v437 = vld [vmem:[%s431] sm:$0x1f]
      %v438 = vld [vmem:[%s1] sm:$0x1]
      %v439 = vld [vmem:[%s2] sm:$0x1]
      %vm440 = vcmask 1044480
      %v441 = vsel %vm440, %v437, 0.0
      %442 = vadd.xlane.f32.xlu0 %v441
      %v443 = vpop.xlane.xlu0 %442
      %v444 = vrcp.pop 128.0
      %v445 = vmul.f32 %v443, %v444
      %v446 = vsub.f32 %v437, %v445
      %v447 = vmul.f32 %v446, %v446
      %v448 = vsel %vm440, %v447, 0.0
      %449 = vadd.xlane.f32.xlu0 %v448
      %v450 = vpop.xlane.xlu0 %449
      %v451 = vmul.f32 %v450, %v444
      %v452 = vadd.f32 %v451, 1e-05
      %v453 = vrsqrt.pop %v452
      %v454 = vmul.f32 %v446, %v453
      %v456 = vlaneseq
      %v457 = vshrl.u32 %v456, 7
      %v458 = vsub.s32 0, %v457
      %v459 = vrot.slane %v438, %v458
      %v461 = vmul.f32 %v454, %v459
      %v463 = vlaneseq
      %v464 = vshrl.u32 %v463, 7
      %v465 = vsub.s32 0, %v464
      %v466 = vrot.slane %v439, %v465
      %v468 = vadd.f32 %v461, %v466
      %v469 = vpack.c.bf16 %v468, %v468
      %v470 = vld [vmem:[%s3] sm:$0xff]
      %v471 = vld [vmem:[%s3 + $0x8] sm:$0xf]
      %v472 = vld [vmem:[%s3 + $0xc] sm:$0xff]
      %v473 = vld [vmem:[%s3 + $0x14] sm:$0xf]
      %v474 = vld [vmem:[%s3 + $0x18] sm:$0xff]
      %v475 = vld [vmem:[%s3 + $0x20] sm:$0xf]
      %v476 = vld [vmem:[%s3 + $0x24] sm:$0xff]
      %v477 = vld [vmem:[%s3 + $0x2c] sm:$0xf]
      %v478 = vld [vmem:[%s3 + $0x30] sm:$0xff]
      %v479 = vld [vmem:[%s3 + $0x38] sm:$0xf]
      %v480 = vld [vmem:[%s3 + $0x3c] sm:$0xff]
      %v481 = vld [vmem:[%s3 + $0x44] sm:$0xf]
      %v482 = vld [vmem:[%s3 + $0x48] sm:$0xff]
      %v483 = vld [vmem:[%s3 + $0x50] sm:$0xf]
      %v484 = vld [vmem:[%s3 + $0x54] sm:$0xff]
      %v485 = vld [vmem:[%s3 + $0x5c] sm:$0xf]
      %v486 = vld [vmem:[%s3 + $0x60] sm:$0xff]
      %v487 = vld [vmem:[%s3 + $0x68] sm:$0xf]
      %v488 = vld [vmem:[%s3 + $0x6c] sm:$0xff]
      %v489 = vld [vmem:[%s3 + $0x74] sm:$0xf]
      %v490 = vld [vmem:[%s3 + $0x78] sm:$0xff]
      %v491 = vld [vmem:[%s3 + $0x80] sm:$0xf]
      %v492 = vld [vmem:[%s3 + $0x84] sm:$0xff]
      %v493 = vld [vmem:[%s3 + $0x8c] sm:$0xf]
      %v494 = vld [vmem:[%s3 + $0x90] sm:$0xff]
      %v495 = vld [vmem:[%s3 + $0x98] sm:$0xf]
      %v496 = vld [vmem:[%s3 + $0x9c] sm:$0xff]
      %v497 = vld [vmem:[%s3 + $0xa4] sm:$0xf]
      %v498 = vld [vmem:[%s3 + $0xa8] sm:$0xff]
      %v499 = vld [vmem:[%s3 + $0xb0] sm:$0xf]
      %v500 = vld [vmem:[%s3 + $0xb4] sm:$0xff]
      %v501 = vld [vmem:[%s3 + $0xbc] sm:$0xf]
      %v502 = vld [vmem:[%s4] sm:$0x7]
      %v504 = vlaneseq
      %v505 = vshrl.u32 %v504, 7
      %v506 = vsub.s32 0, %v505
      %v507 = vrot.slane %v502, %v506
      %v508 = vlaneseq
      %v509 = vshrl.u32 %v508, 7
      %v510 = vsub.s32 1, %v509
      %v511 = vrot.slane %v502, %v510
      %v512 = vlaneseq
      %v513 = vshrl.u32 %v512, 7
      %v514 = vsub.s32 2, %v513
      %v515 = vrot.slane %v502, %v514
      %v551 = vunpack.c.l.b16 %v470
      %v552 = vunpack.c.h.b16 %v470
      %v553 = vunpack.c.l.b16 %v471
      %v554 = vunpack.c.l.b16 %v472
      %v555 = vunpack.c.h.b16 %v472
      %v556 = vunpack.c.l.b16 %v473
      %v557 = vunpack.c.l.b16 %v474
      %v558 = vunpack.c.h.b16 %v474
      %v559 = vunpack.c.l.b16 %v475
      %v560 = vunpack.c.l.b16 %v476
      %v561 = vunpack.c.h.b16 %v476
      %v562 = vunpack.c.l.b16 %v477
      %v563 = vunpack.c.l.b16 %v478
      %v564 = vunpack.c.h.b16 %v478
      %v565 = vunpack.c.l.b16 %v479
      %v566 = vunpack.c.l.b16 %v480
      %v567 = vunpack.c.h.b16 %v480
      %v568 = vunpack.c.l.b16 %v481
      %v569 = vunpack.c.l.b16 %v482
      %v570 = vunpack.c.h.b16 %v482
      %v571 = vunpack.c.l.b16 %v483
      %v572 = vunpack.c.l.b16 %v484
      %v573 = vunpack.c.h.b16 %v484
      %v574 = vunpack.c.l.b16 %v485
      %v575 = vunpack.c.l.b16 %v486
      %v576 = vunpack.c.h.b16 %v486
      %v577 = vunpack.c.l.b16 %v487
      %v578 = vunpack.c.l.b16 %v488
      %v579 = vunpack.c.h.b16 %v488
      %v580 = vunpack.c.l.b16 %v489
      %v581 = vunpack.c.l.b16 %v490
      %v582 = vunpack.c.h.b16 %v490
      %v583 = vunpack.c.l.b16 %v491
      %v584 = vunpack.c.l.b16 %v492
      %v585 = vunpack.c.h.b16 %v492
      %v586 = vunpack.c.l.b16 %v493
      %v587 = vunpack.c.l.b16 %v494
      %v588 = vunpack.c.h.b16 %v494
      %v589 = vunpack.c.l.b16 %v495
      %v590 = vunpack.c.l.b16 %v496
      %v591 = vunpack.c.h.b16 %v496
      %v592 = vunpack.c.l.b16 %v497
      %v593 = vunpack.c.l.b16 %v498
      %v594 = vunpack.c.h.b16 %v498
      %v595 = vunpack.c.l.b16 %v499
      %v596 = vunpack.c.l.b16 %v500
      %v597 = vunpack.c.h.b16 %v500
      %v598 = vunpack.c.l.b16 %v501
      %v599 = vpack.c.b16 %v554, %v551
      %v600 = vpack.c.b16 %v555, %v552
      %v601 = vpack.c.b16 %v556, %v553
      %v602 = vpack.c.b16 %v560, %v557
      %v603 = vpack.c.b16 %v561, %v558
      %v604 = vpack.c.b16 %v562, %v559
      %v605 = vpack.c.b16 %v566, %v563
      %v606 = vpack.c.b16 %v567, %v564
      %v607 = vpack.c.b16 %v568, %v565
      %v608 = vpack.c.b16 %v572, %v569
      %v609 = vpack.c.b16 %v573, %v570
      %v610 = vpack.c.b16 %v574, %v571
      %v611 = vpack.c.b16 %v578, %v575
      %v612 = vpack.c.b16 %v579, %v576
      %v613 = vpack.c.b16 %v580, %v577
      %v614 = vpack.c.b16 %v584, %v581
      %v615 = vpack.c.b16 %v585, %v582
      %v616 = vpack.c.b16 %v586, %v583
      %v617 = vpack.c.b16 %v590, %v587
      %v618 = vpack.c.b16 %v591, %v588
      %v619 = vpack.c.b16 %v592, %v589
      %v620 = vpack.c.b16 %v596, %v593
      %v621 = vpack.c.b16 %v597, %v594
      %v622 = vpack.c.b16 %v598, %v595
      %647 = vmatprep.subr.bf16.mxu0 %v621
      %648 = vmatpush1.bf16.msra.mxu0 %v620
      %649 = vmatprep.subr.bf16.mxu0 %v618
      %650 = vmatpush1.bf16.msra.mxu0 %v617
      %651 = vmatprep.subr.bf16.mxu0 %v615
      %652 = vmatpush1.bf16.msra.mxu0 %v614
      %653 = vmatprep.subr.bf16.mxu0 %v612
      %654 = vmatpush1.bf16.msra.mxu0 %v611
      %655 = vmatprep.subr.bf16.mxu0 %v609
      %656 = vmatpush1.bf16.msra.mxu0 %v608
      %657 = vmatprep.subr.bf16.mxu0 %v606
      %658 = vmatpush1.bf16.msra.mxu0 %v605
      %659 = vmatprep.subr.bf16.mxu0 %v603
      %660 = vmatpush1.bf16.msra.mxu0 %v602
      %661 = vmatprep.subr.bf16.mxu0 %v600
      %662 = vmatpush1.bf16.msra.mxu0 %v599
      %663 = vmatprep.subr.bf16.mxu0 0
      %664 = vmatpush2.bf16.msra.mxu0 0
      %665 = vmatprep.subr.bf16.mxu0 0
      %666 = vmatpush2.bf16.msra.mxu0 0
      %667 = vmatprep.subr.bf16.mxu0 0
      %668 = vmatpush2.bf16.msra.mxu0 0
      %669 = vmatprep.subr.bf16.mxu0 0
      %670 = vmatpush2.bf16.msra.mxu0 0
      %671 = vmatprep.subr.bf16.mxu0 0
      %672 = vmatpush2.bf16.msra.mxu0 0
      %673 = vmatprep.subr.bf16.mxu0 0
      %674 = vmatpush2.bf16.msra.mxu0 0
      %675 = vmatprep.subr.bf16.mxu0 0
      %676 = vmatpush2.bf16.msra.mxu0 0
      %677 = vmatprep.subr.bf16.mxu0 0
      %678 = vmatpush2.bf16.msra.mxu0 0
      %679 = vmatprep.mubr.bf16.mxu0 0
      %680 = vmatmul.mubr.bf16.gmra.mxu0 %v469
      %v681 = vpop.f32.mrf.mxu0
      %v682 = vadd.f32 %v507, %v681
      %v683 = vpop.f32.mrf.mxu0
      %v684 = vadd.f32 %v511, %v683
      %v685 = vpop.f32.mrf.mxu0
      %v686 = vpop.f32.mrf.mxu0
      %687 = vdwg.mxu0
      %688 = vmatprep.subr.bf16.mxu0 0
      %689 = vmatpush1.bf16.msra.mxu0 %v622
      %690 = vmatprep.subr.bf16.mxu0 0
      %691 = vmatpush1.bf16.msra.mxu0 %v619
      %692 = vmatprep.subr.bf16.mxu0 0
      %693 = vmatpush1.bf16.msra.mxu0 %v616
      %694 = vmatprep.subr.bf16.mxu0 0
      %695 = vmatpush1.bf16.msra.mxu0 %v613
      %696 = vmatprep.subr.bf16.mxu0 0
      %697 = vmatpush1.bf16.msra.mxu0 %v610
      %698 = vmatprep.subr.bf16.mxu0 0
      %699 = vmatpush1.bf16.msra.mxu0 %v607
      %700 = vmatprep.subr.bf16.mxu0 0
      %701 = vmatpush1.bf16.msra.mxu0 %v604
      %702 = vmatprep.subr.bf16.mxu0 0
      %703 = vmatpush1.bf16.msra.mxu0 %v601
      %704 = vmatprep.subr.bf16.mxu0 0
      %705 = vmatpush2.bf16.msra.mxu0 0
      %706 = vmatprep.subr.bf16.mxu0 0
      %707 = vmatpush2.bf16.msra.mxu0 0
      %708 = vmatprep.subr.bf16.mxu0 0
      %709 = vmatpush2.bf16.msra.mxu0 0
      %710 = vmatprep.subr.bf16.mxu0 0
      %711 = vmatpush2.bf16.msra.mxu0 0
      %712 = vmatprep.subr.bf16.mxu0 0
      %713 = vmatpush2.bf16.msra.mxu0 0
      %714 = vmatprep.subr.bf16.mxu0 0
      %715 = vmatpush2.bf16.msra.mxu0 0
      %716 = vmatprep.subr.bf16.mxu0 0
      %717 = vmatpush2.bf16.msra.mxu0 0
      %718 = vmatprep.subr.bf16.mxu0 0
      %719 = vmatpush2.bf16.msra.mxu0 0
      %720 = vmatprep.mubr.bf16.mxu0 0
      %721 = vmatmul.mubr.bf16.gmra.mxu0 %v469
      %v722 = vpop.f32.mrf.mxu0
      %v723 = vadd.f32 %v515, %v722
      %v724 = vpop.f32.mrf.mxu0
      %v725 = vpop.f32.mrf.mxu0
      %v726 = vpop.f32.mrf.mxu0
      %727 = vdwg.mxu0
      %v728 = vlaneseq
      %v729 = vand.u32 %v728, 127
      %vm730 = vcmp.ge.s32.totalorder %v729, 0
      %vm731 = vcmp.lt.s32.totalorder %v729, 32
      %vm732 = vmand %vm730, %vm731
      %v733 = vsel %vm732, 1, 0
      %v734 = vcvt.s32.f32 %v733
      %v735 = vmul.f32 %v682, %v734
      %v736 = vsel %vm440, %v735, 0.0
      %737 = vadd.xlane.f32.xlu0 %v736
      %v738 = vpop.xlane.xlu0 %737
      %v739 = vmul.f32 %v738, 0.03125
      %v740 = vsub.f32 %v682, %v739
      %v741 = vmul.f32 %v740, %v734
      %v742 = vmul.f32 %v741, %v741
      %v743 = vsel %vm440, %v742, 0.0
      %744 = vadd.xlane.f32.xlu0 %v743
      %v745 = vpop.xlane.xlu0 %744
      %v746 = vmul.f32 %v745, 0.03125
      %v747 = vadd.f32 %v746, 1e-05
      %v748 = vrsqrt.pop %v747
      %v749 = vmul.f32 %v741, %v748
      %v750 = vmul.f32 %v684, %v734
      %v751 = vsel %vm440, %v750, 0.0
      %752 = vadd.xlane.f32.xlu0 %v751
      %v753 = vpop.xlane.xlu0 %752
      %v754 = vmul.f32 %v753, 0.03125
      %v755 = vsub.f32 %v684, %v754
      %v756 = vmul.f32 %v755, %v734
      %v757 = vmul.f32 %v756, %v756
      %v758 = vsel %vm440, %v757, 0.0
      %759 = vadd.xlane.f32.xlu0 %v758
      %v760 = vpop.xlane.xlu0 %759
      %v761 = vmul.f32 %v760, 0.03125
      %v762 = vadd.f32 %v761, 1e-05
      %v763 = vrsqrt.pop %v762
      %v764 = vmul.f32 %v756, %v763
      %765 = vmatprep.subr.mxu0 0.0
      %766 = vmatpush1.xpose.msra.mxu0 0.0
      %767 = vmatprep.subr.mxu0 0.0
      %768 = vmatpush1.xpose.msra.mxu0 0.0
      %769 = vmatprep.subr.mxu0 0.0
      %770 = vmatpush1.xpose.msra.mxu0 0.0
      %771 = vmatprep.subr.mxu0 0.0
      %772 = vmatpush1.xpose.msra.mxu0 0.0
      %773 = vmatprep.subr.mxu0 0.0
      %774 = vmatpush1.xpose.msra.mxu0 0.0
      %775 = vmatprep.subr.mxu0 0.0
      %776 = vmatpush1.xpose.msra.mxu0 0.0
      %777 = vmatprep.subr.mxu0 0.0
      %778 = vmatpush1.xpose.msra.mxu0 0.0
      %779 = vmatprep.subr.mxu0 0.0
      %780 = vmatpush1.xpose.msra.mxu0 0.0
      %781 = vmatprep.subr.mxu0 0.0
      %782 = vmatpush1.xpose.msra.mxu0 0.0
      %783 = vmatprep.subr.mxu0 0.0
      %784 = vmatpush1.xpose.msra.mxu0 0.0
      %785 = vmatprep.subr.mxu0 0.0
      %786 = vmatpush1.xpose.msra.mxu0 0.0
      %787 = vmatprep.subr.mxu0 0.0
      %788 = vmatpush1.xpose.msra.mxu0 0.0
      %789 = vmatprep.subr.mxu0 0.0
      %790 = vmatpush1.xpose.msra.mxu0 0.0
      %791 = vmatprep.subr.mxu0 0.0
      %792 = vmatpush1.xpose.msra.mxu0 0.0
      %793 = vmatprep.subr.mxu0 0.0
      %794 = vmatpush1.xpose.msra.mxu0 0.0
      %795 = vmatprep.subr.mxu0 0.0
      %796 = vmatpush1.xpose.msra.mxu0 %v764
      %797 = vmatprep.subr.mxu0 0.0
      %798 = vmatpush2.xpose.msra.mxu0 0.0
      %799 = vmatprep.subr.mxu0 0.0
      %800 = vmatpush2.xpose.msra.mxu0 0.0
      %801 = vmatprep.subr.mxu0 0.0
      %802 = vmatpush2.xpose.msra.mxu0 0.0
      %803 = vmatprep.subr.mxu0 0.0
      %804 = vmatpush2.xpose.msra.mxu0 0.0
      %805 = vmatprep.subr.mxu0 0.0
      %806 = vmatpush2.xpose.msra.mxu0 0.0
      %807 = vmatprep.subr.mxu0 0.0
      %808 = vmatpush2.xpose.msra.mxu0 0.0
      %809 = vmatprep.subr.mxu0 0.0
      %810 = vmatpush2.xpose.msra.mxu0 0.0
      %811 = vmatprep.subr.mxu0 0.0
      %812 = vmatpush2.xpose.msra.mxu0 0.0
      %813 = vmatprep.subr.mxu0 0.0
      %814 = vmatpush2.xpose.msra.mxu0 0.0
      %815 = vmatprep.subr.mxu0 0.0
      %816 = vmatpush2.xpose.msra.mxu0 0.0
      %817 = vmatprep.subr.mxu0 0.0
      %818 = vmatpush2.xpose.msra.mxu0 0.0
      %819 = vmatprep.subr.mxu0 0.0
      %820 = vmatpush2.xpose.msra.mxu0 0.0
      %821 = vmatprep.subr.mxu0 0.0
      %822 = vmatpush2.xpose.msra.mxu0 0.0
      %823 = vmatprep.subr.mxu0 0.0
      %824 = vmatpush2.xpose.msra.mxu0 0.0
      %825 = vmatprep.subr.mxu0 0.0
      %826 = vmatpush2.xpose.msra.mxu0 0.0
      %827 = vmatprep.subr.mxu0 0.0
      %828 = vmatpush2.xpose.msra.mxu0 0.0
      %829 = vmatprep.mubr.f32.mxu0 0.0
      %830 = vmatmul.mubr.f32.gmra.mxu0 %v749
      %v831 = vpop.f32.mrf.mxu0
      %v832 = vadd.f32 0.0, %v831
      %v833 = vpop.f32.mrf.mxu0
      %834 = vdwg.mxu0
      %v835 = vmul.f32 %v832, 0.17677669
      %vm836 = vcmask 36864
      %v837 = vsel %vm836, %v835, -inf
      %838 = vmax.xlane.f32.xlu0 %v837
      %v839 = vpop.xlane.xlu0 %838
      %v840 = vsub.f32 %v835, %v839
      %v841 = vmul.f32 %v840, 1.442695
      %v842 = vpow.pop %v841
      %v843 = vsel %vm836, %v842, 0.0
      %844 = vadd.xlane.f32.xlu0 %v843
      %v845 = vpop.xlane.xlu0 %844
      %v846 = vrcp.pop %v845
      %v847 = vmul.f32 %v842, %v846
      %v848 = vmul.f32 %v723, %v734
      %vm849 = vcmp.ge.s32.totalorder %v729, 32
      %vm850 = vcmp.lt.s32.totalorder %v729, 64
      %vm851 = vmand %vm849, %vm850
      %v852 = vsel %vm851, 1, 0
      %v853 = vcvt.s32.f32 %v852
      %v854 = vmul.f32 %v682, %v853
      %v855 = vsel %vm440, %v854, 0.0
      %856 = vadd.xlane.f32.xlu0 %v855
      %v857 = vpop.xlane.xlu0 %856
      %v858 = vmul.f32 %v857, 0.03125
      %v859 = vsub.f32 %v682, %v858
      %v860 = vmul.f32 %v859, %v853
      %v861 = vmul.f32 %v860, %v860
      %v862 = vsel %vm440, %v861, 0.0
      %863 = vadd.xlane.f32.xlu0 %v862
      %v864 = vpop.xlane.xlu0 %863
      %v865 = vmul.f32 %v864, 0.03125
      %v866 = vadd.f32 %v865, 1e-05
      %v867 = vrsqrt.pop %v866
      %v868 = vmul.f32 %v860, %v867
      %v869 = vmul.f32 %v684, %v853
      %v870 = vsel %vm440, %v869, 0.0
      %871 = vadd.xlane.f32.xlu0 %v870
      %v872 = vpop.xlane.xlu0 %871
      %v873 = vmul.f32 %v872, 0.03125
      %v874 = vsub.f32 %v684, %v873
      %v875 = vmul.f32 %v874, %v853
      %v876 = vmul.f32 %v875, %v875
      %v877 = vsel %vm440, %v876, 0.0
      %878 = vadd.xlane.f32.xlu0 %v877
      %v879 = vpop.xlane.xlu0 %878
      %v880 = vmul.f32 %v879, 0.03125
      %v881 = vadd.f32 %v880, 1e-05
      %v882 = vrsqrt.pop %v881
      %v883 = vmul.f32 %v875, %v882
      %884 = vmatprep.subr.mxu0 0.0
      %885 = vmatpush1.xpose.msra.mxu0 0.0
      %886 = vmatprep.subr.mxu0 0.0
      %887 = vmatpush1.xpose.msra.mxu0 0.0
      %888 = vmatprep.subr.mxu0 0.0
      %889 = vmatpush1.xpose.msra.mxu0 0.0
      %890 = vmatprep.subr.mxu0 0.0
      %891 = vmatpush1.xpose.msra.mxu0 0.0
      %892 = vmatprep.subr.mxu0 0.0
      %893 = vmatpush1.xpose.msra.mxu0 0.0
      %894 = vmatprep.subr.mxu0 0.0
      %895 = vmatpush1.xpose.msra.mxu0 0.0
      %896 = vmatprep.subr.mxu0 0.0
      %897 = vmatpush1.xpose.msra.mxu0 0.0
      %898 = vmatprep.subr.mxu0 0.0
      %899 = vmatpush1.xpose.msra.mxu0 0.0
      %900 = vmatprep.subr.mxu0 0.0
      %901 = vmatpush1.xpose.msra.mxu0 0.0
      %902 = vmatprep.subr.mxu0 0.0
      %903 = vmatpush1.xpose.msra.mxu0 0.0
      %904 = vmatprep.subr.mxu0 0.0
      %905 = vmatpush1.xpose.msra.mxu0 0.0
      %906 = vmatprep.subr.mxu0 0.0
      %907 = vmatpush1.xpose.msra.mxu0 0.0
      %908 = vmatprep.subr.mxu0 0.0
      %909 = vmatpush1.xpose.msra.mxu0 0.0
      %910 = vmatprep.subr.mxu0 0.0
      %911 = vmatpush1.xpose.msra.mxu0 0.0
      %912 = vmatprep.subr.mxu0 0.0
      %913 = vmatpush1.xpose.msra.mxu0 0.0
      %914 = vmatprep.subr.mxu0 0.0
      %915 = vmatpush1.xpose.msra.mxu0 %v883
      %916 = vmatprep.subr.mxu0 0.0
      %917 = vmatpush2.xpose.msra.mxu0 0.0
      %918 = vmatprep.subr.mxu0 0.0
      %919 = vmatpush2.xpose.msra.mxu0 0.0
      %920 = vmatprep.subr.mxu0 0.0
      %921 = vmatpush2.xpose.msra.mxu0 0.0
      %922 = vmatprep.subr.mxu0 0.0
      %923 = vmatpush2.xpose.msra.mxu0 0.0
      %924 = vmatprep.subr.mxu0 0.0
      %925 = vmatpush2.xpose.msra.mxu0 0.0
      %926 = vmatprep.subr.mxu0 0.0
      %927 = vmatpush2.xpose.msra.mxu0 0.0
      %928 = vmatprep.subr.mxu0 0.0
      %929 = vmatpush2.xpose.msra.mxu0 0.0
      %930 = vmatprep.subr.mxu0 0.0
      %931 = vmatpush2.xpose.msra.mxu0 0.0
      %932 = vmatprep.subr.mxu0 0.0
      %933 = vmatpush2.xpose.msra.mxu0 0.0
      %934 = vmatprep.subr.mxu0 0.0
      %935 = vmatpush2.xpose.msra.mxu0 0.0
      %936 = vmatprep.subr.mxu0 0.0
      %937 = vmatpush2.xpose.msra.mxu0 0.0
      %938 = vmatprep.subr.mxu0 0.0
      %939 = vmatpush2.xpose.msra.mxu0 0.0
      %940 = vmatprep.subr.mxu0 0.0
      %941 = vmatpush2.xpose.msra.mxu0 0.0
      %942 = vmatprep.subr.mxu0 0.0
      %943 = vmatpush2.xpose.msra.mxu0 0.0
      %944 = vmatprep.subr.mxu0 0.0
      %945 = vmatpush2.xpose.msra.mxu0 0.0
      %946 = vmatprep.subr.mxu0 0.0
      %947 = vmatpush2.xpose.msra.mxu0 0.0
      %948 = vmatprep.mubr.f32.mxu0 0.0
      %949 = vmatmul.mubr.f32.gmra.mxu0 %v868
      %v950 = vpop.f32.mrf.mxu0
      %v951 = vadd.f32 0.0, %v950
      %v952 = vpop.f32.mrf.mxu0
      %953 = vdwg.mxu0
      %v954 = vmul.f32 %v951, 0.17677669
      %v955 = vsel %vm836, %v954, -inf
      %956 = vmax.xlane.f32.xlu0 %v955
      %v957 = vpop.xlane.xlu0 %956
      %v958 = vsub.f32 %v954, %v957
      %v959 = vmul.f32 %v958, 1.442695
      %v960 = vpow.pop %v959
      %v961 = vsel %vm836, %v960, 0.0
      %962 = vadd.xlane.f32.xlu0 %v961
      %v963 = vpop.xlane.xlu0 %962
      %v964 = vrcp.pop %v963
      %v965 = vmul.f32 %v960, %v964
      %v966 = vmul.f32 %v723, %v853
      %vm967 = vcmask 39936
      %v969 = vsel %vm967, %v965, 0
      %v972 = vsel %vm440, %v966, 0
      %974 = vmatprep.subr.mxu0 0.0
      %975 = vmatpush1.msra.mxu0 0.0
      %976 = vmatprep.subr.mxu0 0.0
      %977 = vmatpush1.msra.mxu0 0.0
      %978 = vmatprep.subr.mxu0 0.0
      %979 = vmatpush1.msra.mxu0 0.0
      %980 = vmatprep.subr.mxu0 0.0
      %981 = vmatpush1.msra.mxu0 0.0
      %982 = vmatprep.subr.mxu0 0.0
      %983 = vmatpush1.msra.mxu0 0.0
      %984 = vmatprep.subr.mxu0 0.0
      %985 = vmatpush1.msra.mxu0 0.0
      %986 = vmatprep.subr.mxu0 0.0
      %987 = vmatpush1.msra.mxu0 0.0
      %988 = vmatprep.subr.mxu0 0.0
      %989 = vmatpush1.msra.mxu0 0.0
      %990 = vmatprep.subr.mxu0 0.0
      %991 = vmatpush1.msra.mxu0 0.0
      %992 = vmatprep.subr.mxu0 0.0
      %993 = vmatpush1.msra.mxu0 0.0
      %994 = vmatprep.subr.mxu0 0.0
      %995 = vmatpush1.msra.mxu0 0.0
      %996 = vmatprep.subr.mxu0 0.0
      %997 = vmatpush1.msra.mxu0 0.0
      %998 = vmatprep.subr.mxu0 0.0
      %999 = vmatpush1.msra.mxu0 0.0
      %1000 = vmatprep.subr.mxu0 0.0
      %1001 = vmatpush1.msra.mxu0 0.0
      %1002 = vmatprep.subr.mxu0 0.0
      %1003 = vmatpush1.msra.mxu0 0.0
      %1004 = vmatprep.subr.mxu0 0.0
      %1005 = vmatpush1.msra.mxu0 %v972
      %1006 = vmatprep.subr.mxu0 0.0
      %1007 = vmatpush2.msra.mxu0 0.0
      %1008 = vmatprep.subr.mxu0 0.0
      %1009 = vmatpush2.msra.mxu0 0.0
      %1010 = vmatprep.subr.mxu0 0.0
      %1011 = vmatpush2.msra.mxu0 0.0
      %1012 = vmatprep.subr.mxu0 0.0
      %1013 = vmatpush2.msra.mxu0 0.0
      %1014 = vmatprep.subr.mxu0 0.0
      %1015 = vmatpush2.msra.mxu0 0.0
      %1016 = vmatprep.subr.mxu0 0.0
      %1017 = vmatpush2.msra.mxu0 0.0
      %1018 = vmatprep.subr.mxu0 0.0
      %1019 = vmatpush2.msra.mxu0 0.0
      %1020 = vmatprep.subr.mxu0 0.0
      %1021 = vmatpush2.msra.mxu0 0.0
      %1022 = vmatprep.subr.mxu0 0.0
      %1023 = vmatpush2.msra.mxu0 0.0
      %1024 = vmatprep.subr.mxu0 0.0
      %1025 = vmatpush2.msra.mxu0 0.0
      %1026 = vmatprep.subr.mxu0 0.0
      %1027 = vmatpush2.msra.mxu0 0.0
      %1028 = vmatprep.subr.mxu0 0.0
      %1029 = vmatpush2.msra.mxu0 0.0
      %1030 = vmatprep.subr.mxu0 0.0
      %1031 = vmatpush2.msra.mxu0 0.0
      %1032 = vmatprep.subr.mxu0 0.0
      %1033 = vmatpush2.msra.mxu0 0.0
      %1034 = vmatprep.subr.mxu0 0.0
      %1035 = vmatpush2.msra.mxu0 0.0
      %1036 = vmatprep.subr.mxu0 0.0
      %1037 = vmatpush2.msra.mxu0 0.0
      %1038 = vmatprep.mubr.f32.mxu0 0.0
      %1039 = vmatmul.mubr.f32.gmra.mxu0 %v969
      %v1040 = vpop.f32.mrf.mxu0
      %v1041 = vadd.f32 0.0, %v1040
      %v1042 = vpop.f32.mrf.mxu0
      %1043 = vdwg.mxu0
      %v1045 = vsel %vm967, %v847, 0
      %v1048 = vsel %vm440, %v848, 0
      %1050 = vmatprep.subr.mxu0 0.0
      %1051 = vmatpush1.msra.mxu0 0.0
      %1052 = vmatprep.subr.mxu0 0.0
      %1053 = vmatpush1.msra.mxu0 0.0
      %1054 = vmatprep.subr.mxu0 0.0
      %1055 = vmatpush1.msra.mxu0 0.0
      %1056 = vmatprep.subr.mxu0 0.0
      %1057 = vmatpush1.msra.mxu0 0.0
      %1058 = vmatprep.subr.mxu0 0.0
      %1059 = vmatpush1.msra.mxu0 0.0
      %1060 = vmatprep.subr.mxu0 0.0
      %1061 = vmatpush1.msra.mxu0 0.0
      %1062 = vmatprep.subr.mxu0 0.0
      %1063 = vmatpush1.msra.mxu0 0.0
      %1064 = vmatprep.subr.mxu0 0.0
      %1065 = vmatpush1.msra.mxu0 0.0
      %1066 = vmatprep.subr.mxu0 0.0
      %1067 = vmatpush1.msra.mxu0 0.0
      %1068 = vmatprep.subr.mxu0 0.0
      %1069 = vmatpush1.msra.mxu0 0.0
      %1070 = vmatprep.subr.mxu0 0.0
      %1071 = vmatpush1.msra.mxu0 0.0
      %1072 = vmatprep.subr.mxu0 0.0
      %1073 = vmatpush1.msra.mxu0 0.0
      %1074 = vmatprep.subr.mxu0 0.0
      %1075 = vmatpush1.msra.mxu0 0.0
      %1076 = vmatprep.subr.mxu0 0.0
      %1077 = vmatpush1.msra.mxu0 0.0
      %1078 = vmatprep.subr.mxu0 0.0
      %1079 = vmatpush1.msra.mxu0 0.0
      %1080 = vmatprep.subr.mxu0 0.0
      %1081 = vmatpush1.msra.mxu0 %v1048
      %1082 = vmatprep.subr.mxu0 0.0
      %1083 = vmatpush2.msra.mxu0 0.0
      %1084 = vmatprep.subr.mxu0 0.0
      %1085 = vmatpush2.msra.mxu0 0.0
      %1086 = vmatprep.subr.mxu0 0.0
      %1087 = vmatpush2.msra.mxu0 0.0
      %1088 = vmatprep.subr.mxu0 0.0
      %1089 = vmatpush2.msra.mxu0 0.0
      %1090 = vmatprep.subr.mxu0 0.0
      %1091 = vmatpush2.msra.mxu0 0.0
      %1092 = vmatprep.subr.mxu0 0.0
      %1093 = vmatpush2.msra.mxu0 0.0
      %1094 = vmatprep.subr.mxu0 0.0
      %1095 = vmatpush2.msra.mxu0 0.0
      %1096 = vmatprep.subr.mxu0 0.0
      %1097 = vmatpush2.msra.mxu0 0.0
      %1098 = vmatprep.subr.mxu0 0.0
      %1099 = vmatpush2.msra.mxu0 0.0
      %1100 = vmatprep.subr.mxu0 0.0
      %1101 = vmatpush2.msra.mxu0 0.0
      %1102 = vmatprep.subr.mxu0 0.0
      %1103 = vmatpush2.msra.mxu0 0.0
      %1104 = vmatprep.subr.mxu0 0.0
      %1105 = vmatpush2.msra.mxu0 0.0
      %1106 = vmatprep.subr.mxu0 0.0
      %1107 = vmatpush2.msra.mxu0 0.0
      %1108 = vmatprep.subr.mxu0 0.0
      %1109 = vmatpush2.msra.mxu0 0.0
      %1110 = vmatprep.subr.mxu0 0.0
      %1111 = vmatpush2.msra.mxu0 0.0
      %1112 = vmatprep.subr.mxu0 0.0
      %1113 = vmatpush2.msra.mxu0 0.0
      %1114 = vmatprep.mubr.f32.mxu0 0.0
      %1115 = vmatmul.mubr.f32.gmra.mxu0 %v1045
      %v1116 = vpop.f32.mrf.mxu0
      %v1117 = vadd.f32 %v1041, %v1116
      %v1118 = vpop.f32.mrf.mxu0
      %1119 = vdwg.mxu0
      %vm1120 = vcmp.ge.s32.totalorder %v729, 64
      %vm1121 = vcmp.lt.s32.totalorder %v729, 96
      %vm1122 = vmand %vm1120, %vm1121
      %v1123 = vsel %vm1122, 1, 0
      %v1124 = vcvt.s32.f32 %v1123
      %v1125 = vmul.f32 %v682, %v1124
      %v1126 = vsel %vm440, %v1125, 0.0
      %1127 = vadd.xlane.f32.xlu0 %v1126
      %v1128 = vpop.xlane.xlu0 %1127
      %v1129 = vmul.f32 %v1128, 0.03125
      %v1130 = vsub.f32 %v682, %v1129
      %v1131 = vmul.f32 %v1130, %v1124
      %v1132 = vmul.f32 %v1131, %v1131
      %v1133 = vsel %vm440, %v1132, 0.0
      %1134 = vadd.xlane.f32.xlu0 %v1133
      %v1135 = vpop.xlane.xlu0 %1134
      %v1136 = vmul.f32 %v1135, 0.03125
      %v1137 = vadd.f32 %v1136, 1e-05
      %v1138 = vrsqrt.pop %v1137
      %v1139 = vmul.f32 %v1131, %v1138
      %v1140 = vmul.f32 %v684, %v1124
      %v1141 = vsel %vm440, %v1140, 0.0
      %1142 = vadd.xlane.f32.xlu0 %v1141
      %v1143 = vpop.xlane.xlu0 %1142
      %v1144 = vmul.f32 %v1143, 0.03125
      %v1145 = vsub.f32 %v684, %v1144
      %v1146 = vmul.f32 %v1145, %v1124
      %v1147 = vmul.f32 %v1146, %v1146
      %v1148 = vsel %vm440, %v1147, 0.0
      %1149 = vadd.xlane.f32.xlu0 %v1148
      %v1150 = vpop.xlane.xlu0 %1149
      %v1151 = vmul.f32 %v1150, 0.03125
      %v1152 = vadd.f32 %v1151, 1e-05
      %v1153 = vrsqrt.pop %v1152
      %v1154 = vmul.f32 %v1146, %v1153
      %1155 = vmatprep.subr.mxu0 0.0
      %1156 = vmatpush1.xpose.msra.mxu0 0.0
      %1157 = vmatprep.subr.mxu0 0.0
      %1158 = vmatpush1.xpose.msra.mxu0 0.0
      %1159 = vmatprep.subr.mxu0 0.0
      %1160 = vmatpush1.xpose.msra.mxu0 0.0
      %1161 = vmatprep.subr.mxu0 0.0
      %1162 = vmatpush1.xpose.msra.mxu0 0.0
      %1163 = vmatprep.subr.mxu0 0.0
      %1164 = vmatpush1.xpose.msra.mxu0 0.0
      %1165 = vmatprep.subr.mxu0 0.0
      %1166 = vmatpush1.xpose.msra.mxu0 0.0
      %1167 = vmatprep.subr.mxu0 0.0
      %1168 = vmatpush1.xpose.msra.mxu0 0.0
      %1169 = vmatprep.subr.mxu0 0.0
      %1170 = vmatpush1.xpose.msra.mxu0 0.0
      %1171 = vmatprep.subr.mxu0 0.0
      %1172 = vmatpush1.xpose.msra.mxu0 0.0
      %1173 = vmatprep.subr.mxu0 0.0
      %1174 = vmatpush1.xpose.msra.mxu0 0.0
      %1175 = vmatprep.subr.mxu0 0.0
      %1176 = vmatpush1.xpose.msra.mxu0 0.0
      %1177 = vmatprep.subr.mxu0 0.0
      %1178 = vmatpush1.xpose.msra.mxu0 0.0
      %1179 = vmatprep.subr.mxu0 0.0
      %1180 = vmatpush1.xpose.msra.mxu0 0.0
      %1181 = vmatprep.subr.mxu0 0.0
      %1182 = vmatpush1.xpose.msra.mxu0 0.0
      %1183 = vmatprep.subr.mxu0 0.0
      %1184 = vmatpush1.xpose.msra.mxu0 0.0
      %1185 = vmatprep.subr.mxu0 0.0
      %1186 = vmatpush1.xpose.msra.mxu0 %v1154
      %1187 = vmatprep.subr.mxu0 0.0
      %1188 = vmatpush2.xpose.msra.mxu0 0.0
      %1189 = vmatprep.subr.mxu0 0.0
      %1190 = vmatpush2.xpose.msra.mxu0 0.0
      %1191 = vmatprep.subr.mxu0 0.0
      %1192 = vmatpush2.xpose.msra.mxu0 0.0
      %1193 = vmatprep.subr.mxu0 0.0
      %1194 = vmatpush2.xpose.msra.mxu0 0.0
      %1195 = vmatprep.subr.mxu0 0.0
      %1196 = vmatpush2.xpose.msra.mxu0 0.0
      %1197 = vmatprep.subr.mxu0 0.0
      %1198 = vmatpush2.xpose.msra.mxu0 0.0
      %1199 = vmatprep.subr.mxu0 0.0
      %1200 = vmatpush2.xpose.msra.mxu0 0.0
      %1201 = vmatprep.subr.mxu0 0.0
      %1202 = vmatpush2.xpose.msra.mxu0 0.0
      %1203 = vmatprep.subr.mxu0 0.0
      %1204 = vmatpush2.xpose.msra.mxu0 0.0
      %1205 = vmatprep.subr.mxu0 0.0
      %1206 = vmatpush2.xpose.msra.mxu0 0.0
      %1207 = vmatprep.subr.mxu0 0.0
      %1208 = vmatpush2.xpose.msra.mxu0 0.0
      %1209 = vmatprep.subr.mxu0 0.0
      %1210 = vmatpush2.xpose.msra.mxu0 0.0
      %1211 = vmatprep.subr.mxu0 0.0
      %1212 = vmatpush2.xpose.msra.mxu0 0.0
      %1213 = vmatprep.subr.mxu0 0.0
      %1214 = vmatpush2.xpose.msra.mxu0 0.0
      %1215 = vmatprep.subr.mxu0 0.0
      %1216 = vmatpush2.xpose.msra.mxu0 0.0
      %1217 = vmatprep.subr.mxu0 0.0
      %1218 = vmatpush2.xpose.msra.mxu0 0.0
      %1219 = vmatprep.mubr.f32.mxu0 0.0
      %1220 = vmatmul.mubr.f32.gmra.mxu0 %v1139
      %v1221 = vpop.f32.mrf.mxu0
      %v1222 = vadd.f32 0.0, %v1221
      %v1223 = vpop.f32.mrf.mxu0
      %1224 = vdwg.mxu0
      %v1225 = vmul.f32 %v1222, 0.17677669
      %v1226 = vsel %vm836, %v1225, -inf
      %1227 = vmax.xlane.f32.xlu0 %v1226
      %v1228 = vpop.xlane.xlu0 %1227
      %v1229 = vsub.f32 %v1225, %v1228
      %v1230 = vmul.f32 %v1229, 1.442695
      %v1231 = vpow.pop %v1230
      %v1232 = vsel %vm836, %v1231, 0.0
      %1233 = vadd.xlane.f32.xlu0 %v1232
      %v1234 = vpop.xlane.xlu0 %1233
      %v1235 = vrcp.pop %v1234
      %v1236 = vmul.f32 %v1231, %v1235
      %v1237 = vmul.f32 %v723, %v1124
      %v1239 = vsel %vm967, %v1236, 0
      %v1242 = vsel %vm440, %v1237, 0
      %1244 = vmatprep.subr.mxu0 0.0
      %1245 = vmatpush1.msra.mxu0 0.0
      %1246 = vmatprep.subr.mxu0 0.0
      %1247 = vmatpush1.msra.mxu0 0.0
      %1248 = vmatprep.subr.mxu0 0.0
      %1249 = vmatpush1.msra.mxu0 0.0
      %1250 = vmatprep.subr.mxu0 0.0
      %1251 = vmatpush1.msra.mxu0 0.0
      %1252 = vmatprep.subr.mxu0 0.0
      %1253 = vmatpush1.msra.mxu0 0.0
      %1254 = vmatprep.subr.mxu0 0.0
      %1255 = vmatpush1.msra.mxu0 0.0
      %1256 = vmatprep.subr.mxu0 0.0
      %1257 = vmatpush1.msra.mxu0 0.0
      %1258 = vmatprep.subr.mxu0 0.0
      %1259 = vmatpush1.msra.mxu0 0.0
      %1260 = vmatprep.subr.mxu0 0.0
      %1261 = vmatpush1.msra.mxu0 0.0
      %1262 = vmatprep.subr.mxu0 0.0
      %1263 = vmatpush1.msra.mxu0 0.0
      %1264 = vmatprep.subr.mxu0 0.0
      %1265 = vmatpush1.msra.mxu0 0.0
      %1266 = vmatprep.subr.mxu0 0.0
      %1267 = vmatpush1.msra.mxu0 0.0
      %1268 = vmatprep.subr.mxu0 0.0
      %1269 = vmatpush1.msra.mxu0 0.0
      %1270 = vmatprep.subr.mxu0 0.0
      %1271 = vmatpush1.msra.mxu0 0.0
      %1272 = vmatprep.subr.mxu0 0.0
      %1273 = vmatpush1.msra.mxu0 0.0
      %1274 = vmatprep.subr.mxu0 0.0
      %1275 = vmatpush1.msra.mxu0 %v1242
      %1276 = vmatprep.subr.mxu0 0.0
      %1277 = vmatpush2.msra.mxu0 0.0
      %1278 = vmatprep.subr.mxu0 0.0
      %1279 = vmatpush2.msra.mxu0 0.0
      %1280 = vmatprep.subr.mxu0 0.0
      %1281 = vmatpush2.msra.mxu0 0.0
      %1282 = vmatprep.subr.mxu0 0.0
      %1283 = vmatpush2.msra.mxu0 0.0
      %1284 = vmatprep.subr.mxu0 0.0
      %1285 = vmatpush2.msra.mxu0 0.0
      %1286 = vmatprep.subr.mxu0 0.0
      %1287 = vmatpush2.msra.mxu0 0.0
      %1288 = vmatprep.subr.mxu0 0.0
      %1289 = vmatpush2.msra.mxu0 0.0
      %1290 = vmatprep.subr.mxu0 0.0
      %1291 = vmatpush2.msra.mxu0 0.0
      %1292 = vmatprep.subr.mxu0 0.0
      %1293 = vmatpush2.msra.mxu0 0.0
      %1294 = vmatprep.subr.mxu0 0.0
      %1295 = vmatpush2.msra.mxu0 0.0
      %1296 = vmatprep.subr.mxu0 0.0
      %1297 = vmatpush2.msra.mxu0 0.0
      %1298 = vmatprep.subr.mxu0 0.0
      %1299 = vmatpush2.msra.mxu0 0.0
      %1300 = vmatprep.subr.mxu0 0.0
      %1301 = vmatpush2.msra.mxu0 0.0
      %1302 = vmatprep.subr.mxu0 0.0
      %1303 = vmatpush2.msra.mxu0 0.0
      %1304 = vmatprep.subr.mxu0 0.0
      %1305 = vmatpush2.msra.mxu0 0.0
      %1306 = vmatprep.subr.mxu0 0.0
      %1307 = vmatpush2.msra.mxu0 0.0
      %1308 = vmatprep.mubr.f32.mxu0 0.0
      %1309 = vmatmul.mubr.f32.gmra.mxu0 %v1239
      %v1310 = vpop.f32.mrf.mxu0
      %v1311 = vadd.f32 0.0, %v1310
      %v1312 = vpop.f32.mrf.mxu0
      %1313 = vdwg.mxu0
      %v1314 = vadd.f32 %v1117, %v1311
      %vm1315 = vcmp.ge.s32.totalorder %v729, 96
      %vm1316 = vcmp.lt.s32.totalorder %v729, 128
      %vm1317 = vmand %vm1315, %vm1316
      %v1318 = vsel %vm1317, 1, 0
      %v1319 = vcvt.s32.f32 %v1318
      %v1320 = vmul.f32 %v682, %v1319
      %v1321 = vsel %vm440, %v1320, 0.0
      %1322 = vadd.xlane.f32.xlu0 %v1321
      %v1323 = vpop.xlane.xlu0 %1322
      %v1324 = vmul.f32 %v1323, 0.03125
      %v1325 = vsub.f32 %v682, %v1324
      %v1326 = vmul.f32 %v1325, %v1319
      %v1327 = vmul.f32 %v1326, %v1326
      %v1328 = vsel %vm440, %v1327, 0.0
      %1329 = vadd.xlane.f32.xlu0 %v1328
      %v1330 = vpop.xlane.xlu0 %1329
      %v1331 = vmul.f32 %v1330, 0.03125
      %v1332 = vadd.f32 %v1331, 1e-05
      %v1333 = vrsqrt.pop %v1332
      %v1334 = vmul.f32 %v1326, %v1333
      %v1335 = vmul.f32 %v684, %v1319
      %v1336 = vsel %vm440, %v1335, 0.0
      %1337 = vadd.xlane.f32.xlu0 %v1336
      %v1338 = vpop.xlane.xlu0 %1337
      %v1339 = vmul.f32 %v1338, 0.03125
      %v1340 = vsub.f32 %v684, %v1339
      %v1341 = vmul.f32 %v1340, %v1319
      %v1342 = vmul.f32 %v1341, %v1341
      %v1343 = vsel %vm440, %v1342, 0.0
      %1344 = vadd.xlane.f32.xlu0 %v1343
      %v1345 = vpop.xlane.xlu0 %1344
      %v1346 = vmul.f32 %v1345, 0.03125
      %v1347 = vadd.f32 %v1346, 1e-05
      %v1348 = vrsqrt.pop %v1347
      %v1349 = vmul.f32 %v1341, %v1348
      %1350 = vmatprep.subr.mxu0 0.0
      %1351 = vmatpush1.xpose.msra.mxu0 0.0
      %1352 = vmatprep.subr.mxu0 0.0
      %1353 = vmatpush1.xpose.msra.mxu0 0.0
      %1354 = vmatprep.subr.mxu0 0.0
      %1355 = vmatpush1.xpose.msra.mxu0 0.0
      %1356 = vmatprep.subr.mxu0 0.0
      %1357 = vmatpush1.xpose.msra.mxu0 0.0
      %1358 = vmatprep.subr.mxu0 0.0
      %1359 = vmatpush1.xpose.msra.mxu0 0.0
      %1360 = vmatprep.subr.mxu0 0.0
      %1361 = vmatpush1.xpose.msra.mxu0 0.0
      %1362 = vmatprep.subr.mxu0 0.0
      %1363 = vmatpush1.xpose.msra.mxu0 0.0
      %1364 = vmatprep.subr.mxu0 0.0
      %1365 = vmatpush1.xpose.msra.mxu0 0.0
      %1366 = vmatprep.subr.mxu0 0.0
      %1367 = vmatpush1.xpose.msra.mxu0 0.0
      %1368 = vmatprep.subr.mxu0 0.0
      %1369 = vmatpush1.xpose.msra.mxu0 0.0
      %1370 = vmatprep.subr.mxu0 0.0
      %1371 = vmatpush1.xpose.msra.mxu0 0.0
      %1372 = vmatprep.subr.mxu0 0.0
      %1373 = vmatpush1.xpose.msra.mxu0 0.0
      %1374 = vmatprep.subr.mxu0 0.0
      %1375 = vmatpush1.xpose.msra.mxu0 0.0
      %1376 = vmatprep.subr.mxu0 0.0
      %1377 = vmatpush1.xpose.msra.mxu0 0.0
      %1378 = vmatprep.subr.mxu0 0.0
      %1379 = vmatpush1.xpose.msra.mxu0 0.0
      %1380 = vmatprep.subr.mxu0 0.0
      %1381 = vmatpush1.xpose.msra.mxu0 %v1349
      %1382 = vmatprep.subr.mxu0 0.0
      %1383 = vmatpush2.xpose.msra.mxu0 0.0
      %1384 = vmatprep.subr.mxu0 0.0
      %1385 = vmatpush2.xpose.msra.mxu0 0.0
      %1386 = vmatprep.subr.mxu0 0.0
      %1387 = vmatpush2.xpose.msra.mxu0 0.0
      %1388 = vmatprep.subr.mxu0 0.0
      %1389 = vmatpush2.xpose.msra.mxu0 0.0
      %1390 = vmatprep.subr.mxu0 0.0
      %1391 = vmatpush2.xpose.msra.mxu0 0.0
      %1392 = vmatprep.subr.mxu0 0.0
      %1393 = vmatpush2.xpose.msra.mxu0 0.0
      %1394 = vmatprep.subr.mxu0 0.0
      %1395 = vmatpush2.xpose.msra.mxu0 0.0
      %1396 = vmatprep.subr.mxu0 0.0
      %1397 = vmatpush2.xpose.msra.mxu0 0.0
      %1398 = vmatprep.subr.mxu0 0.0
      %1399 = vmatpush2.xpose.msra.mxu0 0.0
      %1400 = vmatprep.subr.mxu0 0.0
      %1401 = vmatpush2.xpose.msra.mxu0 0.0
      %1402 = vmatprep.subr.mxu0 0.0
      %1403 = vmatpush2.xpose.msra.mxu0 0.0
      %1404 = vmatprep.subr.mxu0 0.0
      %1405 = vmatpush2.xpose.msra.mxu0 0.0
      %1406 = vmatprep.subr.mxu0 0.0
      %1407 = vmatpush2.xpose.msra.mxu0 0.0
      %1408 = vmatprep.subr.mxu0 0.0
      %1409 = vmatpush2.xpose.msra.mxu0 0.0
      %1410 = vmatprep.subr.mxu0 0.0
      %1411 = vmatpush2.xpose.msra.mxu0 0.0
      %1412 = vmatprep.subr.mxu0 0.0
      %1413 = vmatpush2.xpose.msra.mxu0 0.0
      %1414 = vmatprep.mubr.f32.mxu0 0.0
      %1415 = vmatmul.mubr.f32.gmra.mxu0 %v1334
      %v1416 = vpop.f32.mrf.mxu0
      %v1417 = vadd.f32 0.0, %v1416
      %v1418 = vpop.f32.mrf.mxu0
      %1419 = vdwg.mxu0
      %v1420 = vmul.f32 %v1417, 0.17677669
      %v1421 = vsel %vm836, %v1420, -inf
      %1422 = vmax.xlane.f32.xlu0 %v1421
      %v1423 = vpop.xlane.xlu0 %1422
      %v1424 = vsub.f32 %v1420, %v1423
      %v1425 = vmul.f32 %v1424, 1.442695
      %v1426 = vpow.pop %v1425
      %v1427 = vsel %vm836, %v1426, 0.0
      %1428 = vadd.xlane.f32.xlu0 %v1427
      %v1429 = vpop.xlane.xlu0 %1428
      %v1430 = vrcp.pop %v1429
      %v1431 = vmul.f32 %v1426, %v1430
      %v1432 = vmul.f32 %v723, %v1319
      %v1434 = vsel %vm967, %v1431, 0
      %v1437 = vsel %vm440, %v1432, 0
      %1439 = vmatprep.subr.mxu0 0.0
      %1440 = vmatpush1.msra.mxu0 0.0
      %1441 = vmatprep.subr.mxu0 0.0
      %1442 = vmatpush1.msra.mxu0 0.0
      %1443 = vmatprep.subr.mxu0 0.0
      %1444 = vmatpush1.msra.mxu0 0.0
      %1445 = vmatprep.subr.mxu0 0.0
      %1446 = vmatpush1.msra.mxu0 0.0
      %1447 = vmatprep.subr.mxu0 0.0
      %1448 = vmatpush1.msra.mxu0 0.0
      %1449 = vmatprep.subr.mxu0 0.0
      %1450 = vmatpush1.msra.mxu0 0.0
      %1451 = vmatprep.subr.mxu0 0.0
      %1452 = vmatpush1.msra.mxu0 0.0
      %1453 = vmatprep.subr.mxu0 0.0
      %1454 = vmatpush1.msra.mxu0 0.0
      %1455 = vmatprep.subr.mxu0 0.0
      %1456 = vmatpush1.msra.mxu0 0.0
      %1457 = vmatprep.subr.mxu0 0.0
      %1458 = vmatpush1.msra.mxu0 0.0
      %1459 = vmatprep.subr.mxu0 0.0
      %1460 = vmatpush1.msra.mxu0 0.0
      %1461 = vmatprep.subr.mxu0 0.0
      %1462 = vmatpush1.msra.mxu0 0.0
      %1463 = vmatprep.subr.mxu0 0.0
      %1464 = vmatpush1.msra.mxu0 0.0
      %1465 = vmatprep.subr.mxu0 0.0
      %1466 = vmatpush1.msra.mxu0 0.0
      %1467 = vmatprep.subr.mxu0 0.0
      %1468 = vmatpush1.msra.mxu0 0.0
      %1469 = vmatprep.subr.mxu0 0.0
      %1470 = vmatpush1.msra.mxu0 %v1437
      %1471 = vmatprep.subr.mxu0 0.0
      %1472 = vmatpush2.msra.mxu0 0.0
      %1473 = vmatprep.subr.mxu0 0.0
      %1474 = vmatpush2.msra.mxu0 0.0
      %1475 = vmatprep.subr.mxu0 0.0
      %1476 = vmatpush2.msra.mxu0 0.0
      %1477 = vmatprep.subr.mxu0 0.0
      %1478 = vmatpush2.msra.mxu0 0.0
      %1479 = vmatprep.subr.mxu0 0.0
      %1480 = vmatpush2.msra.mxu0 0.0
      %1481 = vmatprep.subr.mxu0 0.0
      %1482 = vmatpush2.msra.mxu0 0.0
      %1483 = vmatprep.subr.mxu0 0.0
      %1484 = vmatpush2.msra.mxu0 0.0
      %1485 = vmatprep.subr.mxu0 0.0
      %1486 = vmatpush2.msra.mxu0 0.0
      %1487 = vmatprep.subr.mxu0 0.0
      %1488 = vmatpush2.msra.mxu0 0.0
      %1489 = vmatprep.subr.mxu0 0.0
      %1490 = vmatpush2.msra.mxu0 0.0
      %1491 = vmatprep.subr.mxu0 0.0
      %1492 = vmatpush2.msra.mxu0 0.0
      %1493 = vmatprep.subr.mxu0 0.0
      %1494 = vmatpush2.msra.mxu0 0.0
      %1495 = vmatprep.subr.mxu0 0.0
      %1496 = vmatpush2.msra.mxu0 0.0
      %1497 = vmatprep.subr.mxu0 0.0
      %1498 = vmatpush2.msra.mxu0 0.0
      %1499 = vmatprep.subr.mxu0 0.0
      %1500 = vmatpush2.msra.mxu0 0.0
      %1501 = vmatprep.subr.mxu0 0.0
      %1502 = vmatpush2.msra.mxu0 0.0
      %1503 = vmatprep.mubr.f32.mxu0 0.0
      %1504 = vmatmul.mubr.f32.gmra.mxu0 %v1434
      %v1505 = vpop.f32.mrf.mxu0
      %v1506 = vadd.f32 0.0, %v1505
      %v1507 = vpop.f32.mrf.mxu0
      %1508 = vdwg.mxu0
      %v1509 = vadd.f32 %v1314, %v1506
      %v1510 = vpack.c.bf16 %v1509, %v1509
      %v1511 = vld [vmem:[%s5] sm:$0xf]
      %v1512 = vld [vmem:[%s5 + $0x4] sm:$0xf]
      %v1513 = vld [vmem:[%s5 + $0x8] sm:$0xf]
      %v1514 = vld [vmem:[%s5 + $0xc] sm:$0xf]
      %v1515 = vld [vmem:[%s5 + $0x10] sm:$0xf]
      %v1516 = vld [vmem:[%s5 + $0x14] sm:$0xf]
      %v1517 = vld [vmem:[%s5 + $0x18] sm:$0xf]
      %v1518 = vld [vmem:[%s5 + $0x1c] sm:$0xf]
      %v1519 = vld [vmem:[%s5 + $0x20] sm:$0xf]
      %v1520 = vld [vmem:[%s5 + $0x24] sm:$0xf]
      %v1521 = vld [vmem:[%s5 + $0x28] sm:$0xf]
      %v1522 = vld [vmem:[%s5 + $0x2c] sm:$0xf]
      %v1523 = vld [vmem:[%s5 + $0x30] sm:$0xf]
      %v1524 = vld [vmem:[%s5 + $0x34] sm:$0xf]
      %v1525 = vld [vmem:[%s5 + $0x38] sm:$0xf]
      %v1526 = vld [vmem:[%s5 + $0x3c] sm:$0xf]
      %v1527 = vld [vmem:[%s6] sm:$0x1]
      %v1529 = vlaneseq
      %v1530 = vshrl.u32 %v1529, 7
      %v1531 = vsub.s32 0, %v1530
      %v1532 = vrot.slane %v1527, %v1531
      %v1550 = vunpack.c.l.b16 %v1511
      %v1551 = vunpack.c.l.b16 %v1512
      %v1552 = vunpack.c.l.b16 %v1513
      %v1553 = vunpack.c.l.b16 %v1514
      %v1554 = vunpack.c.l.b16 %v1515
      %v1555 = vunpack.c.l.b16 %v1516
      %v1556 = vunpack.c.l.b16 %v1517
      %v1557 = vunpack.c.l.b16 %v1518
      %v1558 = vunpack.c.l.b16 %v1519
      %v1559 = vunpack.c.l.b16 %v1520
      %v1560 = vunpack.c.l.b16 %v1521
      %v1561 = vunpack.c.l.b16 %v1522
      %v1562 = vunpack.c.l.b16 %v1523
      %v1563 = vunpack.c.l.b16 %v1524
      %v1564 = vunpack.c.l.b16 %v1525
      %v1565 = vunpack.c.l.b16 %v1526
      %v1566 = vpack.c.b16 %v1551, %v1550
      %v1567 = vpack.c.b16 %v1553, %v1552
      %v1568 = vpack.c.b16 %v1555, %v1554
      %v1569 = vpack.c.b16 %v1557, %v1556
      %v1570 = vpack.c.b16 %v1559, %v1558
      %v1571 = vpack.c.b16 %v1561, %v1560
      %v1572 = vpack.c.b16 %v1563, %v1562
      %v1573 = vpack.c.b16 %v1565, %v1564
      %1582 = vmatprep.subr.bf16.mxu0 0
      %1583 = vmatpush1.bf16.msra.mxu0 %v1573
      %1584 = vmatprep.subr.bf16.mxu0 0
      %1585 = vmatpush1.bf16.msra.mxu0 %v1572
      %1586 = vmatprep.subr.bf16.mxu0 0
      %1587 = vmatpush1.bf16.msra.mxu0 %v1571
      %1588 = vmatprep.subr.bf16.mxu0 0
      %1589 = vmatpush1.bf16.msra.mxu0 %v1570
      %1590 = vmatprep.subr.bf16.mxu0 0
      %1591 = vmatpush1.bf16.msra.mxu0 %v1569
      %1592 = vmatprep.subr.bf16.mxu0 0
      %1593 = vmatpush1.bf16.msra.mxu0 %v1568
      %1594 = vmatprep.subr.bf16.mxu0 0
      %1595 = vmatpush1.bf16.msra.mxu0 %v1567
      %1596 = vmatprep.subr.bf16.mxu0 0
      %1597 = vmatpush1.bf16.msra.mxu0 %v1566
      %1598 = vmatprep.subr.bf16.mxu0 0
      %1599 = vmatpush2.bf16.msra.mxu0 0
      %1600 = vmatprep.subr.bf16.mxu0 0
      %1601 = vmatpush2.bf16.msra.mxu0 0
      %1602 = vmatprep.subr.bf16.mxu0 0
      %1603 = vmatpush2.bf16.msra.mxu0 0
      %1604 = vmatprep.subr.bf16.mxu0 0
      %1605 = vmatpush2.bf16.msra.mxu0 0
      %1606 = vmatprep.subr.bf16.mxu0 0
      %1607 = vmatpush2.bf16.msra.mxu0 0
      %1608 = vmatprep.subr.bf16.mxu0 0
      %1609 = vmatpush2.bf16.msra.mxu0 0
      %1610 = vmatprep.subr.bf16.mxu0 0
      %1611 = vmatpush2.bf16.msra.mxu0 0
      %1612 = vmatprep.subr.bf16.mxu0 0
      %1613 = vmatpush2.bf16.msra.mxu0 0
      %1614 = vmatprep.mubr.bf16.mxu0 0
      %1615 = vmatmul.mubr.bf16.gmra.mxu0 %v1510
      %v1616 = vpop.f32.mrf.mxu0
      %v1617 = vadd.f32 %v1532, %v1616
      %v1618 = vpop.f32.mrf.mxu0
      %v1619 = vpop.f32.mrf.mxu0
      %v1620 = vpop.f32.mrf.mxu0
      %1621 = vdwg.mxu0
      %v1622 = vadd.f32 %v437, %v1617
      %v1623 = vld [vmem:[%s7] sm:$0x1]
      %v1624 = vld [vmem:[%s8] sm:$0x1]
      %v1625 = vsel %vm440, %v1622, 0.0
      %1626 = vadd.xlane.f32.xlu0 %v1625
      %v1627 = vpop.xlane.xlu0 %1626
      %v1628 = vmul.f32 %v1627, %v444
      %v1629 = vsub.f32 %v1622, %v1628
      %v1630 = vmul.f32 %v1629, %v1629
      %v1631 = vsel %vm440, %v1630, 0.0
      %1632 = vadd.xlane.f32.xlu0 %v1631
      %v1633 = vpop.xlane.xlu0 %1632
      %v1634 = vmul.f32 %v1633, %v444
      %v1635 = vadd.f32 %v1634, 1e-05
      %v1636 = vrsqrt.pop %v1635
      %v1637 = vmul.f32 %v1629, %v1636
      %v1639 = vlaneseq
      %v1640 = vshrl.u32 %v1639, 7
      %v1641 = vsub.s32 0, %v1640
      %v1642 = vrot.slane %v1623, %v1641
      %v1644 = vmul.f32 %v1637, %v1642
      %v1646 = vlaneseq
      %v1647 = vshrl.u32 %v1646, 7
      %v1648 = vsub.s32 0, %v1647
      %v1649 = vrot.slane %v1624, %v1648
      %v1651 = vadd.f32 %v1644, %v1649
      %v1652 = vpack.c.bf16 %v1651, %v1651
      %v1653 = vld [vmem:[%s9] sm:$0xff]
      %v1654 = vld [vmem:[%s9 + $0x8] sm:$0xff]
      %v1655 = vld [vmem:[%s9 + $0x10] sm:$0xff]
      %v1656 = vld [vmem:[%s9 + $0x18] sm:$0xff]
      %v1657 = vld [vmem:[%s9 + $0x20] sm:$0xff]
      %v1658 = vld [vmem:[%s9 + $0x28] sm:$0xff]
      %v1659 = vld [vmem:[%s9 + $0x30] sm:$0xff]
      %v1660 = vld [vmem:[%s9 + $0x38] sm:$0xff]
      %v1661 = vld [vmem:[%s9 + $0x40] sm:$0xff]
      %v1662 = vld [vmem:[%s9 + $0x48] sm:$0xff]
      %v1663 = vld [vmem:[%s9 + $0x50] sm:$0xff]
      %v1664 = vld [vmem:[%s9 + $0x58] sm:$0xff]
      %v1665 = vld [vmem:[%s9 + $0x60] sm:$0xff]
      %v1666 = vld [vmem:[%s9 + $0x68] sm:$0xff]
      %v1667 = vld [vmem:[%s9 + $0x70] sm:$0xff]
      %v1668 = vld [vmem:[%s9 + $0x78] sm:$0xff]
      %v1669 = vld [vmem:[%s9 + $0x80] sm:$0xff]
      %v1670 = vld [vmem:[%s9 + $0x88] sm:$0xff]
      %v1671 = vld [vmem:[%s9 + $0x90] sm:$0xff]
      %v1672 = vld [vmem:[%s9 + $0x98] sm:$0xff]
      %v1673 = vld [vmem:[%s9 + $0xa0] sm:$0xff]
      %v1674 = vld [vmem:[%s9 + $0xa8] sm:$0xff]
      %v1675 = vld [vmem:[%s9 + $0xb0] sm:$0xff]
      %v1676 = vld [vmem:[%s9 + $0xb8] sm:$0xff]
      %v1677 = vld [vmem:[%s9 + $0xc0] sm:$0xff]
      %v1678 = vld [vmem:[%s9 + $0xc8] sm:$0xff]
      %v1679 = vld [vmem:[%s9 + $0xd0] sm:$0xff]
      %v1680 = vld [vmem:[%s9 + $0xd8] sm:$0xff]
      %v1681 = vld [vmem:[%s9 + $0xe0] sm:$0xff]
      %v1682 = vld [vmem:[%s9 + $0xe8] sm:$0xff]
      %v1683 = vld [vmem:[%s9 + $0xf0] sm:$0xff]
      %v1684 = vld [vmem:[%s9 + $0xf8] sm:$0xff]
      %v1685 = vld [vmem:[%s10] sm:$0xf]
      %v1687 = vlaneseq
      %v1688 = vshrl.u32 %v1687, 7
      %v1689 = vsub.s32 0, %v1688
      %v1690 = vrot.slane %v1685, %v1689
      %v1691 = vlaneseq
      %v1692 = vshrl.u32 %v1691, 7
      %v1693 = vsub.s32 1, %v1692
      %v1694 = vrot.slane %v1685, %v1693
      %v1695 = vlaneseq
      %v1696 = vshrl.u32 %v1695, 7
      %v1697 = vsub.s32 2, %v1696
      %v1698 = vrot.slane %v1685, %v1697
      %v1699 = vlaneseq
      %v1700 = vshrl.u32 %v1699, 7
      %v1701 = vsub.s32 3, %v1700
      %v1702 = vrot.slane %v1685, %v1701
      %v1739 = vunpack.c.l.b16 %v1653
      %v1740 = vunpack.c.h.b16 %v1653
      %v1741 = vunpack.c.l.b16 %v1654
      %v1742 = vunpack.c.h.b16 %v1654
      %v1743 = vunpack.c.l.b16 %v1655
      %v1744 = vunpack.c.h.b16 %v1655
      %v1745 = vunpack.c.l.b16 %v1656
      %v1746 = vunpack.c.h.b16 %v1656
      %v1747 = vunpack.c.l.b16 %v1657
      %v1748 = vunpack.c.h.b16 %v1657
      %v1749 = vunpack.c.l.b16 %v1658
      %v1750 = vunpack.c.h.b16 %v1658
      %v1751 = vunpack.c.l.b16 %v1659
      %v1752 = vunpack.c.h.b16 %v1659
      %v1753 = vunpack.c.l.b16 %v1660
      %v1754 = vunpack.c.h.b16 %v1660
      %v1755 = vunpack.c.l.b16 %v1661
      %v1756 = vunpack.c.h.b16 %v1661
      %v1757 = vunpack.c.l.b16 %v1662
      %v1758 = vunpack.c.h.b16 %v1662
      %v1759 = vunpack.c.l.b16 %v1663
      %v1760 = vunpack.c.h.b16 %v1663
      %v1761 = vunpack.c.l.b16 %v1664
      %v1762 = vunpack.c.h.b16 %v1664
      %v1763 = vunpack.c.l.b16 %v1665
      %v1764 = vunpack.c.h.b16 %v1665
      %v1765 = vunpack.c.l.b16 %v1666
      %v1766 = vunpack.c.h.b16 %v1666
      %v1767 = vunpack.c.l.b16 %v1667
      %v1768 = vunpack.c.h.b16 %v1667
      %v1769 = vunpack.c.l.b16 %v1668
      %v1770 = vunpack.c.h.b16 %v1668
      %v1771 = vunpack.c.l.b16 %v1669
      %v1772 = vunpack.c.h.b16 %v1669
      %v1773 = vunpack.c.l.b16 %v1670
      %v1774 = vunpack.c.h.b16 %v1670
      %v1775 = vunpack.c.l.b16 %v1671
      %v1776 = vunpack.c.h.b16 %v1671
      %v1777 = vunpack.c.l.b16 %v1672
      %v1778 = vunpack.c.h.b16 %v1672
      %v1779 = vunpack.c.l.b16 %v1673
      %v1780 = vunpack.c.h.b16 %v1673
      %v1781 = vunpack.c.l.b16 %v1674
      %v1782 = vunpack.c.h.b16 %v1674
      %v1783 = vunpack.c.l.b16 %v1675
      %v1784 = vunpack.c.h.b16 %v1675
      %v1785 = vunpack.c.l.b16 %v1676
      %v1786 = vunpack.c.h.b16 %v1676
      %v1787 = vunpack.c.l.b16 %v1677
      %v1788 = vunpack.c.h.b16 %v1677
      %v1789 = vunpack.c.l.b16 %v1678
      %v1790 = vunpack.c.h.b16 %v1678
      %v1791 = vunpack.c.l.b16 %v1679
      %v1792 = vunpack.c.h.b16 %v1679
      %v1793 = vunpack.c.l.b16 %v1680
      %v1794 = vunpack.c.h.b16 %v1680
      %v1795 = vunpack.c.l.b16 %v1681
      %v1796 = vunpack.c.h.b16 %v1681
      %v1797 = vunpack.c.l.b16 %v1682
      %v1798 = vunpack.c.h.b16 %v1682
      %v1799 = vunpack.c.l.b16 %v1683
      %v1800 = vunpack.c.h.b16 %v1683
      %v1801 = vunpack.c.l.b16 %v1684
      %v1802 = vunpack.c.h.b16 %v1684
      %v1803 = vpack.c.b16 %v1743, %v1739
      %v1804 = vpack.c.b16 %v1744, %v1740
      %v1805 = vpack.c.b16 %v1745, %v1741
      %v1806 = vpack.c.b16 %v1746, %v1742
      %v1807 = vpack.c.b16 %v1751, %v1747
      %v1808 = vpack.c.b16 %v1752, %v1748
      %v1809 = vpack.c.b16 %v1753, %v1749
      %v1810 = vpack.c.b16 %v1754, %v1750
      %v1811 = vpack.c.b16 %v1759, %v1755
      %v1812 = vpack.c.b16 %v1760, %v1756
      %v1813 = vpack.c.b16 %v1761, %v1757
      %v1814 = vpack.c.b16 %v1762, %v1758
      %v1815 = vpack.c.b16 %v1767, %v1763
      %v1816 = vpack.c.b16 %v1768, %v1764
      %v1817 = vpack.c.b16 %v1769, %v1765
      %v1818 = vpack.c.b16 %v1770, %v1766
      %v1819 = vpack.c.b16 %v1775, %v1771
      %v1820 = vpack.c.b16 %v1776, %v1772
      %v1821 = vpack.c.b16 %v1777, %v1773
      %v1822 = vpack.c.b16 %v1778, %v1774
      %v1823 = vpack.c.b16 %v1783, %v1779
      %v1824 = vpack.c.b16 %v1784, %v1780
      %v1825 = vpack.c.b16 %v1785, %v1781
      %v1826 = vpack.c.b16 %v1786, %v1782
      %v1827 = vpack.c.b16 %v1791, %v1787
      %v1828 = vpack.c.b16 %v1792, %v1788
      %v1829 = vpack.c.b16 %v1793, %v1789
      %v1830 = vpack.c.b16 %v1794, %v1790
      %v1831 = vpack.c.b16 %v1799, %v1795
      %v1832 = vpack.c.b16 %v1800, %v1796
      %v1833 = vpack.c.b16 %v1801, %v1797
      %v1834 = vpack.c.b16 %v1802, %v1798
      %1867 = vmatprep.subr.bf16.mxu0 %v1832
      %1868 = vmatpush1.bf16.msra.mxu0 %v1831
      %1869 = vmatprep.subr.bf16.mxu0 %v1828
      %1870 = vmatpush1.bf16.msra.mxu0 %v1827
      %1871 = vmatprep.subr.bf16.mxu0 %v1824
      %1872 = vmatpush1.bf16.msra.mxu0 %v1823
      %1873 = vmatprep.subr.bf16.mxu0 %v1820
      %1874 = vmatpush1.bf16.msra.mxu0 %v1819
      %1875 = vmatprep.subr.bf16.mxu0 %v1816
      %1876 = vmatpush1.bf16.msra.mxu0 %v1815
      %1877 = vmatprep.subr.bf16.mxu0 %v1812
      %1878 = vmatpush1.bf16.msra.mxu0 %v1811
      %1879 = vmatprep.subr.bf16.mxu0 %v1808
      %1880 = vmatpush1.bf16.msra.mxu0 %v1807
      %1881 = vmatprep.subr.bf16.mxu0 %v1804
      %1882 = vmatpush1.bf16.msra.mxu0 %v1803
      %1883 = vmatprep.subr.bf16.mxu0 0
      %1884 = vmatpush2.bf16.msra.mxu0 0
      %1885 = vmatprep.subr.bf16.mxu0 0
      %1886 = vmatpush2.bf16.msra.mxu0 0
      %1887 = vmatprep.subr.bf16.mxu0 0
      %1888 = vmatpush2.bf16.msra.mxu0 0
      %1889 = vmatprep.subr.bf16.mxu0 0
      %1890 = vmatpush2.bf16.msra.mxu0 0
      %1891 = vmatprep.subr.bf16.mxu0 0
      %1892 = vmatpush2.bf16.msra.mxu0 0
      %1893 = vmatprep.subr.bf16.mxu0 0
      %1894 = vmatpush2.bf16.msra.mxu0 0
      %1895 = vmatprep.subr.bf16.mxu0 0
      %1896 = vmatpush2.bf16.msra.mxu0 0
      %1897 = vmatprep.subr.bf16.mxu0 0
      %1898 = vmatpush2.bf16.msra.mxu0 0
      %1899 = vmatprep.mubr.bf16.mxu0 0
      %1900 = vmatmul.mubr.bf16.gmra.mxu0 %v1652
      %v1901 = vpop.f32.mrf.mxu0
      %v1902 = vadd.f32 %v1690, %v1901
      %v1903 = vpop.f32.mrf.mxu0
      %v1904 = vadd.f32 %v1694, %v1903
      %v1905 = vpop.f32.mrf.mxu0
      %v1906 = vpop.f32.mrf.mxu0
      %1907 = vdwg.mxu0
      %1908 = vmatprep.subr.bf16.mxu0 %v1834
      %1909 = vmatpush1.bf16.msra.mxu0 %v1833
      %1910 = vmatprep.subr.bf16.mxu0 %v1830
      %1911 = vmatpush1.bf16.msra.mxu0 %v1829
      %1912 = vmatprep.subr.bf16.mxu0 %v1826
      %1913 = vmatpush1.bf16.msra.mxu0 %v1825
      %1914 = vmatprep.subr.bf16.mxu0 %v1822
      %1915 = vmatpush1.bf16.msra.mxu0 %v1821
      %1916 = vmatprep.subr.bf16.mxu0 %v1818
      %1917 = vmatpush1.bf16.msra.mxu0 %v1817
      %1918 = vmatprep.subr.bf16.mxu0 %v1814
      %1919 = vmatpush1.bf16.msra.mxu0 %v1813
      %1920 = vmatprep.subr.bf16.mxu0 %v1810
      %1921 = vmatpush1.bf16.msra.mxu0 %v1809
      %1922 = vmatprep.subr.bf16.mxu0 %v1806
      %1923 = vmatpush1.bf16.msra.mxu0 %v1805
      %1924 = vmatprep.subr.bf16.mxu0 0
      %1925 = vmatpush2.bf16.msra.mxu0 0
      %1926 = vmatprep.subr.bf16.mxu0 0
      %1927 = vmatpush2.bf16.msra.mxu0 0
      %1928 = vmatprep.subr.bf16.mxu0 0
      %1929 = vmatpush2.bf16.msra.mxu0 0
      %1930 = vmatprep.subr.bf16.mxu0 0
      %1931 = vmatpush2.bf16.msra.mxu0 0
      %1932 = vmatprep.subr.bf16.mxu0 0
      %1933 = vmatpush2.bf16.msra.mxu0 0
      %1934 = vmatprep.subr.bf16.mxu0 0
      %1935 = vmatpush2.bf16.msra.mxu0 0
      %1936 = vmatprep.subr.bf16.mxu0 0
      %1937 = vmatpush2.bf16.msra.mxu0 0
      %1938 = vmatprep.subr.bf16.mxu0 0
      %1939 = vmatpush2.bf16.msra.mxu0 0
      %1940 = vmatprep.mubr.bf16.mxu0 0
      %1941 = vmatmul.mubr.bf16.gmra.mxu0 %v1652
      %v1942 = vpop.f32.mrf.mxu0
      %v1943 = vadd.f32 %v1698, %v1942
      %v1944 = vpop.f32.mrf.mxu0
      %v1945 = vadd.f32 %v1702, %v1944
      %v1946 = vpop.f32.mrf.mxu0
      %v1947 = vpop.f32.mrf.mxu0
      %1948 = vdwg.mxu0
      %v1949 = vmul.f32 %v1902, 0.5
      %v1950 = vmul.f32 %v1904, 0.5
      %v1951 = vmul.f32 %v1943, 0.5
      %v1952 = vmul.f32 %v1945, 0.5
      %v1953 = vmul.f32 %v1902, 0.70710677
      %v1954 = vmul.f32 %v1904, 0.70710677
      %v1955 = vmul.f32 %v1943, 0.70710677
      %v1956 = vmul.f32 %v1945, 0.70710677
      %v1957 = vand.u32 2147483647, %v1953
      %v1958 = vand.u32 2147483647, %v1954
      %v1959 = vand.u32 2147483647, %v1955
      %v1960 = vand.u32 2147483647, %v1956
      %v1961 = vmul.f32 %v1957, 0.3275911
      %v1962 = vmul.f32 %v1958, 0.3275911
      %v1963 = vmul.f32 %v1959, 0.3275911
      %v1964 = vmul.f32 %v1960, 0.3275911
      %v1965 = vadd.f32 %v1961, 1.0
      %v1966 = vadd.f32 %v1962, 1.0
      %v1967 = vadd.f32 %v1963, 1.0
      %v1968 = vadd.f32 %v1964, 1.0
      %v1969 = vrcp.pop %v1965
      %v1970 = vmul.f32 1.0, %v1969
      %v1971 = vrcp.pop %v1966
      %v1972 = vmul.f32 1.0, %v1971
      %v1973 = vrcp.pop %v1967
      %v1974 = vmul.f32 1.0, %v1973
      %v1975 = vrcp.pop %v1968
      %v1976 = vmul.f32 1.0, %v1975
      %v1977 = vmul.f32 %v1970, 1.0614054
      %v1978 = vmul.f32 %v1972, 1.0614054
      %v1979 = vmul.f32 %v1974, 1.0614054
      %v1980 = vmul.f32 %v1976, 1.0614054
      %v1981 = vadd.f32 %v1977, -1.4531521
      %v1982 = vadd.f32 %v1978, -1.4531521
      %v1983 = vadd.f32 %v1979, -1.4531521
      %v1984 = vadd.f32 %v1980, -1.4531521
      %v1985 = vmul.f32 %v1981, %v1970
      %v1986 = vmul.f32 %v1982, %v1972
      %v1987 = vmul.f32 %v1983, %v1974
      %v1988 = vmul.f32 %v1984, %v1976
      %v1989 = vadd.f32 %v1985, 1.4214138
      %v1990 = vadd.f32 %v1986, 1.4214138
      %v1991 = vadd.f32 %v1987, 1.4214138
      %v1992 = vadd.f32 %v1988, 1.4214138
      %v1993 = vmul.f32 %v1989, %v1970
      %v1994 = vmul.f32 %v1990, %v1972
      %v1995 = vmul.f32 %v1991, %v1974
      %v1996 = vmul.f32 %v1992, %v1976
      %v1997 = vadd.f32 %v1993, -0.28449672
      %v1998 = vadd.f32 %v1994, -0.28449672
      %v1999 = vadd.f32 %v1995, -0.28449672
      %v2000 = vadd.f32 %v1996, -0.28449672
      %v2001 = vmul.f32 %v1997, %v1970
      %v2002 = vmul.f32 %v1998, %v1972
      %v2003 = vmul.f32 %v1999, %v1974
      %v2004 = vmul.f32 %v2000, %v1976
      %v2005 = vadd.f32 %v2001, 0.2548296
      %v2006 = vadd.f32 %v2002, 0.2548296
      %v2007 = vadd.f32 %v2003, 0.2548296
      %v2008 = vadd.f32 %v2004, 0.2548296
      %v2009 = vmul.f32 %v2005, %v1970
      %v2010 = vmul.f32 %v2006, %v1972
      %v2011 = vmul.f32 %v2007, %v1974
      %v2012 = vmul.f32 %v2008, %v1976
      %v2013 = vsub.f32 0.0, %v1957
      %v2014 = vsub.f32 0.0, %v1958
      %v2015 = vsub.f32 0.0, %v1959
      %v2016 = vsub.f32 0.0, %v1960
      %v2017 = vmul.f32 %v2013, %v1957
      %v2018 = vmul.f32 %v2014, %v1958
      %v2019 = vmul.f32 %v2015, %v1959
      %v2020 = vmul.f32 %v2016, %v1960
      %v2021 = vmul.f32 %v2017, 1.442695
      %v2022 = vpow.pop %v2021
      %v2023 = vmul.f32 %v2018, 1.442695
      %v2024 = vpow.pop %v2023
      %v2025 = vmul.f32 %v2019, 1.442695
      %v2026 = vpow.pop %v2025
      %v2027 = vmul.f32 %v2020, 1.442695
      %v2028 = vpow.pop %v2027
      %v2029 = vmul.f32 %v2009, %v2022
      %v2030 = vmul.f32 %v2010, %v2024
      %v2031 = vmul.f32 %v2011, %v2026
      %v2032 = vmul.f32 %v2012, %v2028
      %v2033 = vsub.f32 1.0, %v2029
      %v2034 = vsub.f32 1.0, %v2030
      %v2035 = vsub.f32 1.0, %v2031
      %v2036 = vsub.f32 1.0, %v2032
      %vm2037 = vcmp.lt.f32.partialorder %v1953, 0.0
      %vm2038 = vcmp.lt.f32.partialorder %v1954, 0.0
      %vm2039 = vcmp.lt.f32.partialorder %v1955, 0.0
      %vm2040 = vcmp.lt.f32.partialorder %v1956, 0.0
      %v2041 = vsub.f32 0.0, %v2033
      %v2042 = vsub.f32 0.0, %v2034
      %v2043 = vsub.f32 0.0, %v2035
      %v2044 = vsub.f32 0.0, %v2036
      %v2045 = vsel %vm2037, %v2041, %v2033
      %v2046 = vsel %vm2038, %v2042, %v2034
      %v2047 = vsel %vm2039, %v2043, %v2035
      %v2048 = vsel %vm2040, %v2044, %v2036
      %v2049 = vadd.f32 %v2045, 1.0
      %v2050 = vadd.f32 %v2046, 1.0
      %v2051 = vadd.f32 %v2047, 1.0
      %v2052 = vadd.f32 %v2048, 1.0
      %v2053 = vmul.f32 %v1949, %v2049
      %v2054 = vmul.f32 %v1950, %v2050
      %v2055 = vmul.f32 %v1951, %v2051
      %v2056 = vmul.f32 %v1952, %v2052
      %v2057 = vpack.c.bf16 %v2053, %v2053
      %v2058 = vpack.c.bf16 %v2054, %v2054
      %v2059 = vpack.c.bf16 %v2055, %v2055
      %v2060 = vpack.c.bf16 %v2056, %v2056
      %v2061 = vld [vmem:[%s11] sm:$0xf]
      %v2062 = vld [vmem:[%s11 + $0x4] sm:$0xf]
      %v2063 = vld [vmem:[%s11 + $0x8] sm:$0xf]
      %v2064 = vld [vmem:[%s11 + $0xc] sm:$0xf]
      %v2065 = vld [vmem:[%s11 + $0x10] sm:$0xf]
      %v2066 = vld [vmem:[%s11 + $0x14] sm:$0xf]
      %v2067 = vld [vmem:[%s11 + $0x18] sm:$0xf]
      %v2068 = vld [vmem:[%s11 + $0x1c] sm:$0xf]
      %v2069 = vld [vmem:[%s11 + $0x20] sm:$0xf]
      %v2070 = vld [vmem:[%s11 + $0x24] sm:$0xf]
      %v2071 = vld [vmem:[%s11 + $0x28] sm:$0xf]
      %v2072 = vld [vmem:[%s11 + $0x2c] sm:$0xf]
      %v2073 = vld [vmem:[%s11 + $0x30] sm:$0xf]
      %v2074 = vld [vmem:[%s11 + $0x34] sm:$0xf]
      %v2075 = vld [vmem:[%s11 + $0x38] sm:$0xf]
      %v2076 = vld [vmem:[%s11 + $0x3c] sm:$0xf]
      %v2077 = vld [vmem:[%s11 + $0x40] sm:$0xf]
      %v2078 = vld [vmem:[%s11 + $0x44] sm:$0xf]
      %v2079 = vld [vmem:[%s11 + $0x48] sm:$0xf]
      %v2080 = vld [vmem:[%s11 + $0x4c] sm:$0xf]
      %v2081 = vld [vmem:[%s11 + $0x50] sm:$0xf]
      %v2082 = vld [vmem:[%s11 + $0x54] sm:$0xf]
      %v2083 = vld [vmem:[%s11 + $0x58] sm:$0xf]
      %v2084 = vld [vmem:[%s11 + $0x5c] sm:$0xf]
      %v2085 = vld [vmem:[%s11 + $0x60] sm:$0xf]
      %v2086 = vld [vmem:[%s11 + $0x64] sm:$0xf]
      %v2087 = vld [vmem:[%s11 + $0x68] sm:$0xf]
      %v2088 = vld [vmem:[%s11 + $0x6c] sm:$0xf]
      %v2089 = vld [vmem:[%s11 + $0x70] sm:$0xf]
      %v2090 = vld [vmem:[%s11 + $0x74] sm:$0xf]
      %v2091 = vld [vmem:[%s11 + $0x78] sm:$0xf]
      %v2092 = vld [vmem:[%s11 + $0x7c] sm:$0xf]
      %v2093 = vld [vmem:[%s11 + $0x80] sm:$0xf]
      %v2094 = vld [vmem:[%s11 + $0x84] sm:$0xf]
      %v2095 = vld [vmem:[%s11 + $0x88] sm:$0xf]
      %v2096 = vld [vmem:[%s11 + $0x8c] sm:$0xf]
      %v2097 = vld [vmem:[%s11 + $0x90] sm:$0xf]
      %v2098 = vld [vmem:[%s11 + $0x94] sm:$0xf]
      %v2099 = vld [vmem:[%s11 + $0x98] sm:$0xf]
      %v2100 = vld [vmem:[%s11 + $0x9c] sm:$0xf]
      %v2101 = vld [vmem:[%s11 + $0xa0] sm:$0xf]
      %v2102 = vld [vmem:[%s11 + $0xa4] sm:$0xf]
      %v2103 = vld [vmem:[%s11 + $0xa8] sm:$0xf]
      %v2104 = vld [vmem:[%s11 + $0xac] sm:$0xf]
      %v2105 = vld [vmem:[%s11 + $0xb0] sm:$0xf]
      %v2106 = vld [vmem:[%s11 + $0xb4] sm:$0xf]
      %v2107 = vld [vmem:[%s11 + $0xb8] sm:$0xf]
      %v2108 = vld [vmem:[%s11 + $0xbc] sm:$0xf]
      %v2109 = vld [vmem:[%s11 + $0xc0] sm:$0xf]
      %v2110 = vld [vmem:[%s11 + $0xc4] sm:$0xf]
      %v2111 = vld [vmem:[%s11 + $0xc8] sm:$0xf]
      %v2112 = vld [vmem:[%s11 + $0xcc] sm:$0xf]
      %v2113 = vld [vmem:[%s11 + $0xd0] sm:$0xf]
      %v2114 = vld [vmem:[%s11 + $0xd4] sm:$0xf]
      %v2115 = vld [vmem:[%s11 + $0xd8] sm:$0xf]
      %v2116 = vld [vmem:[%s11 + $0xdc] sm:$0xf]
      %v2117 = vld [vmem:[%s11 + $0xe0] sm:$0xf]
      %v2118 = vld [vmem:[%s11 + $0xe4] sm:$0xf]
      %v2119 = vld [vmem:[%s11 + $0xe8] sm:$0xf]
      %v2120 = vld [vmem:[%s11 + $0xec] sm:$0xf]
      %v2121 = vld [vmem:[%s11 + $0xf0] sm:$0xf]
      %v2122 = vld [vmem:[%s11 + $0xf4] sm:$0xf]
      %v2123 = vld [vmem:[%s11 + $0xf8] sm:$0xf]
      %v2124 = vld [vmem:[%s11 + $0xfc] sm:$0xf]
      %v2125 = vld [vmem:[%s12] sm:$0x1]
      %v2127 = vlaneseq
      %v2128 = vshrl.u32 %v2127, 7
      %v2129 = vsub.s32 0, %v2128
      %v2130 = vrot.slane %v2125, %v2129
      %v2196 = vunpack.c.l.b16 %v2061
      %v2197 = vunpack.c.l.b16 %v2062
      %v2198 = vunpack.c.l.b16 %v2063
      %v2199 = vunpack.c.l.b16 %v2064
      %v2200 = vunpack.c.l.b16 %v2065
      %v2201 = vunpack.c.l.b16 %v2066
      %v2202 = vunpack.c.l.b16 %v2067
      %v2203 = vunpack.c.l.b16 %v2068
      %v2204 = vunpack.c.l.b16 %v2069
      %v2205 = vunpack.c.l.b16 %v2070
      %v2206 = vunpack.c.l.b16 %v2071
      %v2207 = vunpack.c.l.b16 %v2072
      %v2208 = vunpack.c.l.b16 %v2073
      %v2209 = vunpack.c.l.b16 %v2074
      %v2210 = vunpack.c.l.b16 %v2075
      %v2211 = vunpack.c.l.b16 %v2076
      %v2212 = vunpack.c.l.b16 %v2077
      %v2213 = vunpack.c.l.b16 %v2078
      %v2214 = vunpack.c.l.b16 %v2079
      %v2215 = vunpack.c.l.b16 %v2080
      %v2216 = vunpack.c.l.b16 %v2081
      %v2217 = vunpack.c.l.b16 %v2082
      %v2218 = vunpack.c.l.b16 %v2083
      %v2219 = vunpack.c.l.b16 %v2084
      %v2220 = vunpack.c.l.b16 %v2085
      %v2221 = vunpack.c.l.b16 %v2086
      %v2222 = vunpack.c.l.b16 %v2087
      %v2223 = vunpack.c.l.b16 %v2088
      %v2224 = vunpack.c.l.b16 %v2089
      %v2225 = vunpack.c.l.b16 %v2090
      %v2226 = vunpack.c.l.b16 %v2091
      %v2227 = vunpack.c.l.b16 %v2092
      %v2228 = vunpack.c.l.b16 %v2093
      %v2229 = vunpack.c.l.b16 %v2094
      %v2230 = vunpack.c.l.b16 %v2095
      %v2231 = vunpack.c.l.b16 %v2096
      %v2232 = vunpack.c.l.b16 %v2097
      %v2233 = vunpack.c.l.b16 %v2098
      %v2234 = vunpack.c.l.b16 %v2099
      %v2235 = vunpack.c.l.b16 %v2100
      %v2236 = vunpack.c.l.b16 %v2101
      %v2237 = vunpack.c.l.b16 %v2102
      %v2238 = vunpack.c.l.b16 %v2103
      %v2239 = vunpack.c.l.b16 %v2104
      %v2240 = vunpack.c.l.b16 %v2105
      %v2241 = vunpack.c.l.b16 %v2106
      %v2242 = vunpack.c.l.b16 %v2107
      %v2243 = vunpack.c.l.b16 %v2108
      %v2244 = vunpack.c.l.b16 %v2109
      %v2245 = vunpack.c.l.b16 %v2110
      %v2246 = vunpack.c.l.b16 %v2111
      %v2247 = vunpack.c.l.b16 %v2112
      %v2248 = vunpack.c.l.b16 %v2113
      %v2249 = vunpack.c.l.b16 %v2114
      %v2250 = vunpack.c.l.b16 %v2115
      %v2251 = vunpack.c.l.b16 %v2116
      %v2252 = vunpack.c.l.b16 %v2117
      %v2253 = vunpack.c.l.b16 %v2118
      %v2254 = vunpack.c.l.b16 %v2119
      %v2255 = vunpack.c.l.b16 %v2120
      %v2256 = vunpack.c.l.b16 %v2121
      %v2257 = vunpack.c.l.b16 %v2122
      %v2258 = vunpack.c.l.b16 %v2123
      %v2259 = vunpack.c.l.b16 %v2124
      %v2260 = vpack.c.b16 %v2197, %v2196
      %v2261 = vpack.c.b16 %v2199, %v2198
      %v2262 = vpack.c.b16 %v2201, %v2200
      %v2263 = vpack.c.b16 %v2203, %v2202
      %v2264 = vpack.c.b16 %v2205, %v2204
      %v2265 = vpack.c.b16 %v2207, %v2206
      %v2266 = vpack.c.b16 %v2209, %v2208
      %v2267 = vpack.c.b16 %v2211, %v2210
      %v2268 = vpack.c.b16 %v2213, %v2212
      %v2269 = vpack.c.b16 %v2215, %v2214
      %v2270 = vpack.c.b16 %v2217, %v2216
      %v2271 = vpack.c.b16 %v2219, %v2218
      %v2272 = vpack.c.b16 %v2221, %v2220
      %v2273 = vpack.c.b16 %v2223, %v2222
      %v2274 = vpack.c.b16 %v2225, %v2224
      %v2275 = vpack.c.b16 %v2227, %v2226
      %v2276 = vpack.c.b16 %v2229, %v2228
      %v2277 = vpack.c.b16 %v2231, %v2230
      %v2278 = vpack.c.b16 %v2233, %v2232
      %v2279 = vpack.c.b16 %v2235, %v2234
      %v2280 = vpack.c.b16 %v2237, %v2236
      %v2281 = vpack.c.b16 %v2239, %v2238
      %v2282 = vpack.c.b16 %v2241, %v2240
      %v2283 = vpack.c.b16 %v2243, %v2242
      %v2284 = vpack.c.b16 %v2245, %v2244
      %v2285 = vpack.c.b16 %v2247, %v2246
      %v2286 = vpack.c.b16 %v2249, %v2248
      %v2287 = vpack.c.b16 %v2251, %v2250
      %v2288 = vpack.c.b16 %v2253, %v2252
      %v2289 = vpack.c.b16 %v2255, %v2254
      %v2290 = vpack.c.b16 %v2257, %v2256
      %v2291 = vpack.c.b16 %v2259, %v2258
      %2324 = vmatprep.subr.bf16.mxu0 0
      %2325 = vmatpush1.bf16.msra.mxu0 %v2267
      %2326 = vmatprep.subr.bf16.mxu0 0
      %2327 = vmatpush1.bf16.msra.mxu0 %v2266
      %2328 = vmatprep.subr.bf16.mxu0 0
      %2329 = vmatpush1.bf16.msra.mxu0 %v2265
      %2330 = vmatprep.subr.bf16.mxu0 0
      %2331 = vmatpush1.bf16.msra.mxu0 %v2264
      %2332 = vmatprep.subr.bf16.mxu0 0
      %2333 = vmatpush1.bf16.msra.mxu0 %v2263
      %2334 = vmatprep.subr.bf16.mxu0 0
      %2335 = vmatpush1.bf16.msra.mxu0 %v2262
      %2336 = vmatprep.subr.bf16.mxu0 0
      %2337 = vmatpush1.bf16.msra.mxu0 %v2261
      %2338 = vmatprep.subr.bf16.mxu0 0
      %2339 = vmatpush1.bf16.msra.mxu0 %v2260
      %2340 = vmatprep.subr.bf16.mxu0 0
      %2341 = vmatpush2.bf16.msra.mxu0 %v2275
      %2342 = vmatprep.subr.bf16.mxu0 0
      %2343 = vmatpush2.bf16.msra.mxu0 %v2274
      %2344 = vmatprep.subr.bf16.mxu0 0
      %2345 = vmatpush2.bf16.msra.mxu0 %v2273
      %2346 = vmatprep.subr.bf16.mxu0 0
      %2347 = vmatpush2.bf16.msra.mxu0 %v2272
      %2348 = vmatprep.subr.bf16.mxu0 0
      %2349 = vmatpush2.bf16.msra.mxu0 %v2271
      %2350 = vmatprep.subr.bf16.mxu0 0
      %2351 = vmatpush2.bf16.msra.mxu0 %v2270
      %2352 = vmatprep.subr.bf16.mxu0 0
      %2353 = vmatpush2.bf16.msra.mxu0 %v2269
      %2354 = vmatprep.subr.bf16.mxu0 0
      %2355 = vmatpush2.bf16.msra.mxu0 %v2268
      %2356 = vmatprep.mubr.bf16.mxu0 %v2058
      %2357 = vmatmul.mubr.bf16.gmra.mxu0 %v2057
      %v2358 = vpop.f32.mrf.mxu0
      %v2359 = vadd.f32 %v2130, %v2358
      %v2360 = vpop.f32.mrf.mxu0
      %v2361 = vpop.f32.mrf.mxu0
      %v2362 = vpop.f32.mrf.mxu0
      %2363 = vdwg.mxu0
      %2364 = vmatprep.subr.bf16.mxu0 0
      %2365 = vmatpush1.bf16.msra.mxu0 %v2283
      %2366 = vmatprep.subr.bf16.mxu0 0
      %2367 = vmatpush1.bf16.msra.mxu0 %v2282
      %2368 = vmatprep.subr.bf16.mxu0 0
      %2369 = vmatpush1.bf16.msra.mxu0 %v2281
      %2370 = vmatprep.subr.bf16.mxu0 0
      %2371 = vmatpush1.bf16.msra.mxu0 %v2280
      %2372 = vmatprep.subr.bf16.mxu0 0
      %2373 = vmatpush1.bf16.msra.mxu0 %v2279
      %2374 = vmatprep.subr.bf16.mxu0 0
      %2375 = vmatpush1.bf16.msra.mxu0 %v2278
      %2376 = vmatprep.subr.bf16.mxu0 0
      %2377 = vmatpush1.bf16.msra.mxu0 %v2277
      %2378 = vmatprep.subr.bf16.mxu0 0
      %2379 = vmatpush1.bf16.msra.mxu0 %v2276
      %2380 = vmatprep.subr.bf16.mxu0 0
      %2381 = vmatpush2.bf16.msra.mxu0 %v2291
      %2382 = vmatprep.subr.bf16.mxu0 0
      %2383 = vmatpush2.bf16.msra.mxu0 %v2290
      %2384 = vmatprep.subr.bf16.mxu0 0
      %2385 = vmatpush2.bf16.msra.mxu0 %v2289
      %2386 = vmatprep.subr.bf16.mxu0 0
      %2387 = vmatpush2.bf16.msra.mxu0 %v2288
      %2388 = vmatprep.subr.bf16.mxu0 0
      %2389 = vmatpush2.bf16.msra.mxu0 %v2287
      %2390 = vmatprep.subr.bf16.mxu0 0
      %2391 = vmatpush2.bf16.msra.mxu0 %v2286
      %2392 = vmatprep.subr.bf16.mxu0 0
      %2393 = vmatpush2.bf16.msra.mxu0 %v2285
      %2394 = vmatprep.subr.bf16.mxu0 0
      %2395 = vmatpush2.bf16.msra.mxu0 %v2284
      %2396 = vmatprep.mubr.bf16.mxu0 %v2060
      %2397 = vmatmul.mubr.bf16.gmra.mxu0 %v2059
      %v2398 = vpop.f32.mrf.mxu0
      %v2399 = vadd.f32 %v2359, %v2398
      %v2400 = vpop.f32.mrf.mxu0
      %v2401 = vpop.f32.mrf.mxu0
      %v2402 = vpop.f32.mrf.mxu0
      %2403 = vdwg.mxu0
      %v2404 = vadd.f32 %v1622, %v2399
      %2405 = vst [vmem:[%s435] sm:$0x1f] %v2404
      %p2406 = scmp.lt.s32.totalorder %s24, 1
      %s2407 = scalar_select %p2406, %s24, 1
      %s2408 = smul.addr %s2407, 8
      %s2409 = scalar_lea.vmem %s13, %s2408
      // Predicated region
      $region73: #{anno_mae_forward.8} parent=71 // pred_check
        %p2410 = pneg %p320
      $region74: #{anno_mae_forward.8} parent=71 // pred_check_branch
        %2412 = sbr.rel (%p2410) target = $region76
      $region75: #{anno_mae_forward.8} parent=71 // pred_region
        _
      $region76: #{anno_mae_forward.8} parent=71 // pred_fallthru
        _
    $region72: #{anno_mae_forward.8} parent=5 // pred_fallthru
      _
    %p2413 = scmp.le.s32.totalorder 2, %s19
    // Predicated region
    $region77: #{anno_mae_forward.8} parent=5 // pred_check
      %p2414 = pneg %p2413
    $region78: #{anno_mae_forward.8} parent=5 // pred_check_branch
      %2416 = sbr.rel (%p2414) target = $region80
    $region79: #{anno_mae_forward.8} parent=5 // pred_region
      %s2417 = ssub.s32 %s19, 2
      // Predicated region
      $region81: #{anno_mae_forward.8} parent=79 // pred_check
        %p2418 = pneg %p326
      $region82: #{anno_mae_forward.8} parent=79 // pred_check_branch
        %2420 = sbr.rel (%p2418) target = $region84
      $region83: #{anno_mae_forward.8} parent=79 // pred_region
        %p2421 = scmp.lt.s32.totalorder %s25, 1
        %s2422 = scalar_select %p2421, %s25, 1
        %s2423 = smul.addr %s2422, 8
        %s2424 = scalar_lea.vmem %s13, %s2423
      $region84: #{anno_mae_forward.8} parent=79 // pred_fallthru
        _
    $region80: #{anno_mae_forward.8} parent=5 // pred_fallthru
      _
  $region6: #{anno_mae_forward.8} parent=0 // loop_footer
    %s23 = sadd.s32 1, %s19
  $region7: #{anno_mae_forward.8} parent=0 // loop_footer_branch
    %18 = sbr.rel target = $region3
  $region8: #{anno_mae_forward.8} parent=0 // loop_exit
    _

// kernel: anno_mae_forward.13
$region0: #{anno_mae_forward.13}
  #allocation0 [shape = 'u32[]', space=smem, size = 0x4, offset = 0x4, fixed_abs, tag = 'smem constant byte address 0x4 - core index']
  #allocation1 [shape = 'u32[144,128]{1,0:T(1,128)}', space=vmem, size = 0x12000, scoped, tag = 'internal scratch']
  %s0 = inlined_call_operand.vmem [shape: f32[2,17,128], index: 0, kind: input, shape index: {}]
  %s1 = inlined_call_operand.vmem [shape: f32[1,128], index: 1, kind: input, shape index: {}]
  %s2 = inlined_call_operand.vmem [shape: f32[1,128], index: 2, kind: input, shape index: {}]
  %s3 = inlined_call_operand.vmem [shape: bf16[128,48], index: 3, kind: input, shape index: {}]
  %s4 = inlined_call_operand.vmem [shape: f32[1,48], index: 4, kind: input, shape index: {}]
  %s5 = inlined_call_operand.vmem [shape: f32[2,17,48], index: 5, kind: input, shape index: {}]
  %s6 = inlined_call_operand.vmem [shape: f32[2,17,1], index: 6, kind: input, shape index: {}]
  %s7 = inlined_call_operand.vmem [shape: f32[2,17,48], index: 7, kind: output, shape index: {0}]
  %s8 = inlined_call_operand.vmem [shape: f32[2,17,1], index: 8, kind: output, shape index: {1}]
  %9 = xla_tuple %s7, %s8
  %s10 = sld [smem:[#allocation0]]
  $region69: #{anno_mae_forward.13} parent=0
    _
  %s12 = ssub.s32 1, %s10
  %s13 = scalar_select 0, %s12, %s10
  loop: start=0, step=1, limit=4
  $region2: #{anno_mae_forward.13} parent=0 // loop_pre_header
    _
  $region3: #{anno_mae_forward.13} parent=0 // loop_header
    %s15 = sphi 0, %s19
    %p16 = scmp.ge.s32.totalorder %s15, 4
    %s25 = sphi 0, %s27
    %s28 = sphi 0, %s25
    %s29 = sphi 0, %s28
    %s45 = sphi 0, %s29
    %s49 = sphi 0, %s49
    %s51 = sphi 0, %s49
    %s52 = sphi 0, %s51
    %s66 = sphi 0, %s52
    %s70 = sphi 0, %s70
    %s72 = sphi 0, %s70
    %s73 = sphi 0, %s72
    %s87 = sphi 0, %s73
    %s91 = sphi 0, %s91
    %s93 = sphi 0, %s91
    %s94 = sphi 0, %s93
    %s108 = sphi 0, %s94
    %s112 = sphi 0, %s112
    %s114 = sphi 0, %s112
    %s115 = sphi 0, %s114
    %s129 = sphi 0, %s115
    %s135 = sphi 0, %s137
    %s138 = sphi 0, %s135
    %s139 = sphi 0, %s138
    %s155 = sphi 0, %s139
    %s161 = sphi 0, %s163
    %s164 = sphi 0, %s161
    %s165 = sphi 0, %s164
    %s181 = sphi 0, %s165
    %s187 = sphi 0, %s189
    %s190 = sphi 0, %s187
    %s191 = sphi 0, %s190
    %s207 = sphi 0, %s191
    %s213 = sphi 0, %s215
    %s216 = sphi 0, %s213
    %s217 = sphi 0, %s216
    %s233 = sphi 0, %s217
  $region4: #{anno_mae_forward.13} parent=0 // loop_header_branch
    %18 = sbr.rel (%p16) target = $region8
  $region5: #{anno_mae_forward.13} parent=0 // loop_body
    %s20 = ssub.s32 %s15, 1
    %s21 = ssub.s32 %s15, 2
    %s22 = sadd.s32 %s15, 1
    %s23 = ssub.s32 %s15, %s22
    %p24 = scmp.eq.s32.totalorder %s23, 0
    %s26 = sadd.s32 %s25, 1
    %s27 = scalar_select %p24, %s25, %s26
    %p30 = pneg %p24
    %p31 = scmp.eq.s32.totalorder %s15, 1
    %p32 = por %p30, %p31
    %p33 = scmp.ne.s32.totalorder %s25, %s28
    %p34 = scmp.eq.s32.totalorder %s15, 0
    %p35 = por %p33, %p34
    %p36 = scmp.ne.s32.totalorder %s25, %s28
    %p37 = scmp.eq.s32.totalorder %s20, 1
    %p38 = por %p36, %p37
    %p39 = scmp.ne.s32.totalorder %s28, %s29
    %p40 = scmp.eq.s32.totalorder %s20, 0
    %p41 = por %p39, %p40
    %p42 = scmp.ne.s32.totalorder %s28, %s29
    %p43 = scmp.eq.s32.totalorder %s21, 1
    %p44 = por %p42, %p43
    %p46 = scmp.ne.s32.totalorder %s29, %s45
    %p47 = scmp.eq.s32.totalorder %s21, 0
    %p48 = por %p46, %p47
    %s50 = sadd.s32 %s49, 1
    %p53 = scmp.eq.s32.totalorder %s15, 1
    %p54 = scmp.ne.s32.totalorder %s49, %s51
    %p55 = scmp.eq.s32.totalorder %s15, 0
    %p56 = por %p54, %p55
    %p57 = scmp.ne.s32.totalorder %s49, %s51
    %p58 = scmp.eq.s32.totalorder %s20, 1
    %p59 = por %p57, %p58
    %p60 = scmp.ne.s32.totalorder %s51, %s52
    %p61 = scmp.eq.s32.totalorder %s20, 0
    %p62 = por %p60, %p61
    %p63 = scmp.ne.s32.totalorder %s51, %s52
    %p64 = scmp.eq.s32.totalorder %s21, 1
    %p65 = por %p63, %p64
    %p67 = scmp.ne.s32.totalorder %s52, %s66
    %p68 = scmp.eq.s32.totalorder %s21, 0
    %p69 = por %p67, %p68
    %s71 = sadd.s32 %s70, 1
    %p74 = scmp.eq.s32.totalorder %s15, 1
    %p75 = scmp.ne.s32.totalorder %s70, %s72
    %p76 = scmp.eq.s32.totalorder %s15, 0
    %p77 = por %p75, %p76
    %p78 = scmp.ne.s32.totalorder %s70, %s72
    %p79 = scmp.eq.s32.totalorder %s20, 1
    %p80 = por %p78, %p79
    %p81 = scmp.ne.s32.totalorder %s72, %s73
    %p82 = scmp.eq.s32.totalorder %s20, 0
    %p83 = por %p81, %p82
    %p84 = scmp.ne.s32.totalorder %s72, %s73
    %p85 = scmp.eq.s32.totalorder %s21, 1
    %p86 = por %p84, %p85
    %p88 = scmp.ne.s32.totalorder %s73, %s87
    %p89 = scmp.eq.s32.totalorder %s21, 0
    %p90 = por %p88, %p89
    %s92 = sadd.s32 %s91, 1
    %p95 = scmp.eq.s32.totalorder %s15, 1
    %p96 = scmp.ne.s32.totalorder %s91, %s93
    %p97 = scmp.eq.s32.totalorder %s15, 0
    %p98 = por %p96, %p97
    %p99 = scmp.ne.s32.totalorder %s91, %s93
    %p100 = scmp.eq.s32.totalorder %s20, 1
    %p101 = por %p99, %p100
    %p102 = scmp.ne.s32.totalorder %s93, %s94
    %p103 = scmp.eq.s32.totalorder %s20, 0
    %p104 = por %p102, %p103
    %p105 = scmp.ne.s32.totalorder %s93, %s94
    %p106 = scmp.eq.s32.totalorder %s21, 1
    %p107 = por %p105, %p106
    %p109 = scmp.ne.s32.totalorder %s94, %s108
    %p110 = scmp.eq.s32.totalorder %s21, 0
    %p111 = por %p109, %p110
    %s113 = sadd.s32 %s112, 1
    %p116 = scmp.eq.s32.totalorder %s15, 1
    %p117 = scmp.ne.s32.totalorder %s112, %s114
    %p118 = scmp.eq.s32.totalorder %s15, 0
    %p119 = por %p117, %p118
    %p120 = scmp.ne.s32.totalorder %s112, %s114
    %p121 = scmp.eq.s32.totalorder %s20, 1
    %p122 = por %p120, %p121
    %p123 = scmp.ne.s32.totalorder %s114, %s115
    %p124 = scmp.eq.s32.totalorder %s20, 0
    %p125 = por %p123, %p124
    %p126 = scmp.ne.s32.totalorder %s114, %s115
    %p127 = scmp.eq.s32.totalorder %s21, 1
    %p128 = por %p126, %p127
    %p130 = scmp.ne.s32.totalorder %s115, %s129
    %p131 = scmp.eq.s32.totalorder %s21, 0
    %p132 = por %p130, %p131
    %s133 = ssub.s32 %s15, %s22
    %p134 = scmp.eq.s32.totalorder %s133, 0
    %s136 = sadd.s32 %s135, 1
    %s137 = scalar_select %p134, %s135, %s136
    %p140 = pneg %p134
    %p141 = scmp.eq.s32.totalorder %s15, 1
    %p142 = por %p140, %p141
    %p143 = scmp.ne.s32.totalorder %s135, %s138
    %p144 = scmp.eq.s32.totalorder %s15, 0
    %p145 = por %p143, %p144
    %p146 = scmp.ne.s32.totalorder %s135, %s138
    %p147 = scmp.eq.s32.totalorder %s20, 1
    %p148 = por %p146, %p147
    %p149 = scmp.ne.s32.totalorder %s138, %s139
    %p150 = scmp.eq.s32.totalorder %s20, 0
    %p151 = por %p149, %p150
    %p152 = scmp.ne.s32.totalorder %s138, %s139
    %p153 = scmp.eq.s32.totalorder %s21, 1
    %p154 = por %p152, %p153
    %p156 = scmp.ne.s32.totalorder %s139, %s155
    %p157 = scmp.eq.s32.totalorder %s21, 0
    %p158 = por %p156, %p157
    %s159 = ssub.s32 %s15, %s22
    %p160 = scmp.eq.s32.totalorder %s159, 0
    %s162 = sadd.s32 %s161, 1
    %s163 = scalar_select %p160, %s161, %s162
    %p166 = pneg %p160
    %p167 = scmp.eq.s32.totalorder %s15, 1
    %p168 = por %p166, %p167
    %p169 = scmp.ne.s32.totalorder %s161, %s164
    %p170 = scmp.eq.s32.totalorder %s15, 0
    %p171 = por %p169, %p170
    %p172 = scmp.ne.s32.totalorder %s161, %s164
    %p173 = scmp.eq.s32.totalorder %s20, 1
    %p174 = por %p172, %p173
    %p175 = scmp.ne.s32.totalorder %s164, %s165
    %p176 = scmp.eq.s32.totalorder %s20, 0
    %p177 = por %p175, %p176
    %p178 = scmp.ne.s32.totalorder %s164, %s165
    %p179 = scmp.eq.s32.totalorder %s21, 1
    %p180 = por %p178, %p179
    %p182 = scmp.ne.s32.totalorder %s165, %s181
    %p183 = scmp.eq.s32.totalorder %s21, 0
    %p184 = por %p182, %p183
    %s185 = ssub.s32 %s15, %s22
    %p186 = scmp.eq.s32.totalorder %s185, 0
    %s188 = sadd.s32 %s187, 1
    %s189 = scalar_select %p186, %s187, %s188
    %p192 = pneg %p186
    %p193 = scmp.eq.s32.totalorder %s15, 1
    %p194 = por %p192, %p193
    %p195 = scmp.ne.s32.totalorder %s187, %s190
    %p196 = scmp.eq.s32.totalorder %s15, 0
    %p197 = por %p195, %p196
    %p198 = scmp.ne.s32.totalorder %s187, %s190
    %p199 = scmp.eq.s32.totalorder %s20, 1
    %p200 = por %p198, %p199
    %p201 = scmp.ne.s32.totalorder %s190, %s191
    %p202 = scmp.eq.s32.totalorder %s20, 0
    %p203 = por %p201, %p202
    %p204 = scmp.ne.s32.totalorder %s190, %s191
    %p205 = scmp.eq.s32.totalorder %s21, 1
    %p206 = por %p204, %p205
    %p208 = scmp.ne.s32.totalorder %s191, %s207
    %p209 = scmp.eq.s32.totalorder %s21, 0
    %p210 = por %p208, %p209
    %s211 = ssub.s32 %s15, %s22
    %p212 = scmp.eq.s32.totalorder %s211, 0
    %s214 = sadd.s32 %s213, 1
    %s215 = scalar_select %p212, %s213, %s214
    %p218 = pneg %p212
    %p219 = scmp.eq.s32.totalorder %s15, 1
    %p220 = por %p218, %p219
    %p221 = scmp.ne.s32.totalorder %s213, %s216
    %p222 = scmp.eq.s32.totalorder %s15, 0
    %p223 = por %p221, %p222
    %p224 = scmp.ne.s32.totalorder %s213, %s216
    %p225 = scmp.eq.s32.totalorder %s20, 1
    %p226 = por %p224, %p225
    %p227 = scmp.ne.s32.totalorder %s216, %s217
    %p228 = scmp.eq.s32.totalorder %s20, 0
    %p229 = por %p227, %p228
    %p230 = scmp.ne.s32.totalorder %s216, %s217
    %p231 = scmp.eq.s32.totalorder %s21, 1
    %p232 = por %p230, %p231
    %p234 = scmp.ne.s32.totalorder %s217, %s233
    %p235 = scmp.eq.s32.totalorder %s21, 0
    %p236 = por %p234, %p235
    %p237 = scmp.le.s32.totalorder 1, %s15
    %p238 = scmp.lt.s32.totalorder %s15, 3
    %p239 = pnand %p237, %p238
    %p240 = pneg %p239
    // Predicated region
    $region9: #{anno_mae_forward.13} parent=5 // pred_check
      _
    $region10: #{anno_mae_forward.13} parent=5 // pred_check_branch
      %242 = sbr.rel (%p239) target = $region12
    $region11: #{anno_mae_forward.13} parent=5 // pred_region
      %s243 = ssub.s32 %s15, 1
      // Predicated region
      $region13: #{anno_mae_forward.13} parent=11 // pred_check
        %p244 = pneg %p62
      $region14: #{anno_mae_forward.13} parent=11 // pred_check_branch
        %246 = sbr.rel (%p244) target = $region16
      $region15: #{anno_mae_forward.13} parent=11 // pred_region
        _
      $region16: #{anno_mae_forward.13} parent=11 // pred_fallthru
        _
      // Predicated region
      $region17: #{anno_mae_forward.13} parent=11 // pred_check
        %p247 = pneg %p83
      $region18: #{anno_mae_forward.13} parent=11 // pred_check_branch
        %249 = sbr.rel (%p247) target = $region20
      $region19: #{anno_mae_forward.13} parent=11 // pred_region
        _
      $region20: #{anno_mae_forward.13} parent=11 // pred_fallthru
        _
      // Predicated region
      $region21: #{anno_mae_forward.13} parent=11 // pred_check
        %p250 = pneg %p104
      $region22: #{anno_mae_forward.13} parent=11 // pred_check_branch
        %252 = sbr.rel (%p250) target = $region24
      $region23: #{anno_mae_forward.13} parent=11 // pred_region
        _
      $region24: #{anno_mae_forward.13} parent=11 // pred_fallthru
        _
      // Predicated region
      $region25: #{anno_mae_forward.13} parent=11 // pred_check
        %p253 = pneg %p125
      $region26: #{anno_mae_forward.13} parent=11 // pred_check_branch
        %255 = sbr.rel (%p253) target = $region28
      $region27: #{anno_mae_forward.13} parent=11 // pred_region
        _
      $region28: #{anno_mae_forward.13} parent=11 // pred_fallthru
        _
    $region12: #{anno_mae_forward.13} parent=5 // pred_fallthru
      _
    %p256 = scmp.lt.s32.totalorder %s15, 2
    // Predicated region
    $region29: #{anno_mae_forward.13} parent=5 // pred_check
      %p257 = pneg %p256
    $region30: #{anno_mae_forward.13} parent=5 // pred_check_branch
      %259 = sbr.rel (%p257) target = $region32
    $region31: #{anno_mae_forward.13} parent=5 // pred_region
      // Predicated region
      $region33: #{anno_mae_forward.13} parent=31 // pred_check
        %p260 = pneg %p35
      $region34: #{anno_mae_forward.13} parent=31 // pred_check_branch
        %262 = sbr.rel (%p260) target = $region36
      $region35: #{anno_mae_forward.13} parent=31 // pred_region
        %p263 = scmp.lt.s32.totalorder %s15, 1
        %s264 = scalar_select %p263, %s15, 1
        %s265 = smul.addr %s264, 3
        %s266 = smul.addr %s265, 8
        %s267 = scalar_lea.vmem %s0, %s266
      $region36: #{anno_mae_forward.13} parent=31 // pred_fallthru
        _
      // Predicated region
      $region37: #{anno_mae_forward.13} parent=31 // pred_check
        %p268 = pneg %p145
      $region38: #{anno_mae_forward.13} parent=31 // pred_check_branch
        %270 = sbr.rel (%p268) target = $region40
      $region39: #{anno_mae_forward.13} parent=31 // pred_region
        %p271 = scmp.lt.s32.totalorder %s15, 1
        %s272 = scalar_select %p271, %s15, 1
        %s273 = smul.addr %s272, 3
        %s274 = smul.addr %s273, 8
        %s275 = scalar_lea.vmem %s5, %s274
      $region40: #{anno_mae_forward.13} parent=31 // pred_fallthru
        _
      // Predicated region
      $region41: #{anno_mae_forward.13} parent=31 // pred_check
        %p276 = pneg %p171
      $region42: #{anno_mae_forward.13} parent=31 // pred_check_branch
        %278 = sbr.rel (%p276) target = $region44
      $region43: #{anno_mae_forward.13} parent=31 // pred_region
        %p279 = scmp.lt.s32.totalorder %s15, 1
        %s280 = scalar_select %p279, %s15, 1
        %s281 = smul.addr %s280, 3
        %s282 = smul.addr %s281, 8
        %s283 = scalar_lea.vmem %s6, %s282
      $region44: #{anno_mae_forward.13} parent=31 // pred_fallthru
        _
    $region32: #{anno_mae_forward.13} parent=5 // pred_fallthru
      _
    %p284 = scmp.le.s32.totalorder 1, %s15
    %p285 = scmp.lt.s32.totalorder %s15, 3
    %p286 = pnand %p284, %p285
    %p287 = pneg %p286
    // Predicated region
    $region45: #{anno_mae_forward.13} parent=5 // pred_check
      _
    $region46: #{anno_mae_forward.13} parent=5 // pred_check_branch
      %289 = sbr.rel (%p286) target = $region48
    $region47: #{anno_mae_forward.13} parent=5 // pred_region
      %s290 = ssub.s32 %s15, 1
      %p291 = scmp.lt.s32.totalorder %s20, 1
      %s292 = scalar_select %p291, %s20, 1
      %s293 = smul.addr %s292, 3
      %s294 = smul.addr %s293, 8
      %s295 = scalar_lea.vmem %s0, %s294
      %p296 = pneg %p41
      %p297 = pneg %p38
      %p298 = pneg %p62
      %p299 = pneg %p59
      %p300 = pneg %p83
      %p301 = pneg %p80
      %p302 = pneg %p104
      %p303 = pneg %p101
      %p304 = pneg %p125
      %p305 = pneg %p122
      %p306 = scmp.lt.s32.totalorder %s20, 1
      %s307 = scalar_select %p306, %s20, 1
      %s308 = smul.addr %s307, 3
      %s309 = smul.addr %s308, 8
      %s310 = scalar_lea.vmem %s5, %s309
      %p311 = pneg %p151
      %p312 = pneg %p148
      %p313 = scmp.lt.s32.totalorder %s20, 1
      %s314 = scalar_select %p313, %s20, 1
      %s315 = smul.addr %s314, 3
      %s316 = smul.addr %s315, 8
      %s317 = scalar_lea.vmem %s6, %s316
      %p318 = pneg %p177
      %p319 = pneg %p174
      %p320 = pneg %p203
      %p321 = pneg %p200
      %p322 = scmp.lt.s32.totalorder %s20, 1
      %s323 = scalar_select %p322, %s20, 1
      %s324 = smul.addr %s323, 3
      %s325 = smul.addr %s324, 8
      %s326 = scalar_lea.vmem %s7, %s325
      %p327 = pneg %p229
      %p328 = pneg %p226
      %p329 = scmp.lt.s32.totalorder %s20, 1
      %s330 = scalar_select %p329, %s20, 1
      %s331 = smul.addr %s330, 3
      %s332 = smul.addr %s331, 8
      %s333 = scalar_lea.vmem %s8, %s332
      %p334 = scmp.lt.s32.totalorder %s20, 1
      %s335 = scalar_select %p334, %s20, 1
      %s336 = smul.addr %s335, 3
      %s337 = smul.addr %s336, 8
      %s338 = scalar_lea.vmem %s0, %s337
      %p339 = scmp.lt.s32.totalorder %s20, 1
      %s340 = scalar_select %p339, %s20, 1
      %s341 = smul.addr %s340, 3
      %s342 = smul.addr %s341, 8
      %s343 = scalar_lea.vmem %s5, %s342
      %p344 = scmp.lt.s32.totalorder %s20, 1
      %s345 = scalar_select %p344, %s20, 1
      %s346 = smul.addr %s345, 3
      %s347 = smul.addr %s346, 8
      %s348 = scalar_lea.vmem %s6, %s347
      %p349 = scmp.lt.s32.totalorder %s20, 1
      %s350 = scalar_select %p349, %s20, 1
      %s351 = smul.addr %s350, 3
      %s352 = smul.addr %s351, 8
      %s353 = scalar_lea.vmem %s7, %s352
      %p354 = scmp.lt.s32.totalorder %s20, 1
      %s355 = scalar_select %p354, %s20, 1
      %s356 = smul.addr %s355, 3
      %s357 = smul.addr %s356, 8
      %s358 = scalar_lea.vmem %s8, %s357
      %v360 = vld [vmem:[%s338] sm:$0xff]
      %v361 = vld [vmem:[%s338 + $0x8] sm:$0xff]
      %v362 = vld [vmem:[%s338 + $0x10] sm:$0x1]
      %v363 = vld [vmem:[%s1] sm:$0x1]
      %v364 = vld [vmem:[%s2] sm:$0x1]
      %365 = vadd.xlane.f32.xlu0 %v360
      %v366 = vpop.xlane.xlu0 %365
      %367 = vadd.xlane.f32.xlu0 %v361
      %v368 = vpop.xlane.xlu0 %367
      %vm369 = vcmask 1040384
      %v370 = vsel %vm369, %v362, 0.0
      %371 = vadd.xlane.f32.xlu0 %v370
      %v372 = vpop.xlane.xlu0 %371
      %v373 = vrcp.pop 128.0
      %v374 = vmul.f32 %v366, %v373
      %v375 = vmul.f32 %v368, %v373
      %v376 = vmul.f32 %v372, %v373
      %v377 = vsub.f32 %v360, %v374
      %v378 = vsub.f32 %v361, %v375
      %v379 = vsub.f32 %v362, %v376
      %v380 = vmul.f32 %v377, %v377
      %v381 = vmul.f32 %v378, %v378
      %v382 = vmul.f32 %v379, %v379
      %383 = vadd.xlane.f32.xlu0 %v380
      %v384 = vpop.xlane.xlu0 %383
      %385 = vadd.xlane.f32.xlu0 %v381
      %v386 = vpop.xlane.xlu0 %385
      %v387 = vsel %vm369, %v382, 0.0
      %388 = vadd.xlane.f32.xlu0 %v387
      %v389 = vpop.xlane.xlu0 %388
      %v390 = vmul.f32 %v384, %v373
      %v391 = vmul.f32 %v386, %v373
      %v392 = vmul.f32 %v389, %v373
      %v393 = vadd.f32 %v390, 1e-05
      %v394 = vadd.f32 %v391, 1e-05
      %v395 = vadd.f32 %v392, 1e-05
      %v396 = vrsqrt.pop %v393
      %v397 = vrsqrt.pop %v394
      %v398 = vrsqrt.pop %v395
      %v399 = vmul.f32 %v377, %v396
      %v400 = vmul.f32 %v378, %v397
      %v401 = vmul.f32 %v379, %v398
      %v403 = vlaneseq
      %v404 = vshrl.u32 %v403, 7
      %v405 = vsub.s32 0, %v404
      %v406 = vrot.slane %v363, %v405
      %v408 = vmul.f32 %v399, %v406
      %v409 = vmul.f32 %v400, %v406
      %v410 = vmul.f32 %v401, %v406
      %v412 = vlaneseq
      %v413 = vshrl.u32 %v412, 7
      %v414 = vsub.s32 0, %v413
      %v415 = vrot.slane %v364, %v414
      %v417 = vadd.f32 %v408, %v415
      %v418 = vadd.f32 %v409, %v415
      %v419 = vadd.f32 %v410, %v415
      %v420 = vpack.c.bf16 %v418, %v417
      %v421 = vpack.c.bf16 %v419, %v419
      %v422 = vld [vmem:[%s3] sm:$0xf]
      %v423 = vld [vmem:[%s3 + $0x4] sm:$0xf]
      %v424 = vld [vmem:[%s3 + $0x8] sm:$0xf]
      %v425 = vld [vmem:[%s3 + $0xc] sm:$0xf]
      %v426 = vld [vmem:[%s3 + $0x10] sm:$0xf]
      %v427 = vld [vmem:[%s3 + $0x14] sm:$0xf]
      %v428 = vld [vmem:[%s3 + $0x18] sm:$0xf]
      %v429 = vld [vmem:[%s3 + $0x1c] sm:$0xf]
      %v430 = vld [vmem:[%s3 + $0x20] sm:$0xf]
      %v431 = vld [vmem:[%s3 + $0x24] sm:$0xf]
      %v432 = vld [vmem:[%s3 + $0x28] sm:$0xf]
      %v433 = vld [vmem:[%s3 + $0x2c] sm:$0xf]
      %v434 = vld [vmem:[%s3 + $0x30] sm:$0xf]
      %v435 = vld [vmem:[%s3 + $0x34] sm:$0xf]
      %v436 = vld [vmem:[%s3 + $0x38] sm:$0xf]
      %v437 = vld [vmem:[%s3 + $0x3c] sm:$0xf]
      %v438 = vld [vmem:[%s4] sm:$0x1]
      %v440 = vlaneseq
      %v441 = vshrl.u32 %v440, 7
      %v442 = vsub.s32 0, %v441
      %v443 = vrot.slane %v438, %v442
      %v461 = vunpack.c.l.b16 %v422
      %v462 = vunpack.c.l.b16 %v423
      %v463 = vunpack.c.l.b16 %v424
      %v464 = vunpack.c.l.b16 %v425
      %v465 = vunpack.c.l.b16 %v426
      %v466 = vunpack.c.l.b16 %v427
      %v467 = vunpack.c.l.b16 %v428
      %v468 = vunpack.c.l.b16 %v429
      %v469 = vunpack.c.l.b16 %v430
      %v470 = vunpack.c.l.b16 %v431
      %v471 = vunpack.c.l.b16 %v432
      %v472 = vunpack.c.l.b16 %v433
      %v473 = vunpack.c.l.b16 %v434
      %v474 = vunpack.c.l.b16 %v435
      %v475 = vunpack.c.l.b16 %v436
      %v476 = vunpack.c.l.b16 %v437
      %v477 = vpack.c.b16 %v462, %v461
      %v478 = vpack.c.b16 %v464, %v463
      %v479 = vpack.c.b16 %v466, %v465
      %v480 = vpack.c.b16 %v468, %v467
      %v481 = vpack.c.b16 %v470, %v469
      %v482 = vpack.c.b16 %v472, %v471
      %v483 = vpack.c.b16 %v474, %v473
      %v484 = vpack.c.b16 %v476, %v475
      %493 = vmatprep.subr.bf16.mxu0 0
      %494 = vmatpush1.bf16.msra.mxu0 %v484
      %495 = vmatprep.subr.bf16.mxu0 0
      %496 = vmatpush1.bf16.msra.mxu0 %v483
      %497 = vmatprep.subr.bf16.mxu0 0
      %498 = vmatpush1.bf16.msra.mxu0 %v482
      %499 = vmatprep.subr.bf16.mxu0 0
      %500 = vmatpush1.bf16.msra.mxu0 %v481
      %501 = vmatprep.subr.bf16.mxu0 0
      %502 = vmatpush1.bf16.msra.mxu0 %v480
      %503 = vmatprep.subr.bf16.mxu0 0
      %504 = vmatpush1.bf16.msra.mxu0 %v479
      %505 = vmatprep.subr.bf16.mxu0 0
      %506 = vmatpush1.bf16.msra.mxu0 %v478
      %507 = vmatprep.subr.bf16.mxu0 0
      %508 = vmatpush1.bf16.msra.mxu0 %v477
      %509 = vmatprep.subr.bf16.mxu0 0
      %510 = vmatpush2.bf16.msra.mxu0 0
      %511 = vmatprep.subr.bf16.mxu0 0
      %512 = vmatpush2.bf16.msra.mxu0 0
      %513 = vmatprep.subr.bf16.mxu0 0
      %514 = vmatpush2.bf16.msra.mxu0 0
      %515 = vmatprep.subr.bf16.mxu0 0
      %516 = vmatpush2.bf16.msra.mxu0 0
      %517 = vmatprep.subr.bf16.mxu0 0
      %518 = vmatpush2.bf16.msra.mxu0 0
      %519 = vmatprep.subr.bf16.mxu0 0
      %520 = vmatpush2.bf16.msra.mxu0 0
      %521 = vmatprep.subr.bf16.mxu0 0
      %522 = vmatpush2.bf16.msra.mxu0 0
      %523 = vmatprep.subr.bf16.mxu0 0
      %524 = vmatpush2.bf16.msra.mxu0 0
      %525 = vmatprep.mubr.bf16.mxu0 0
      %526 = vmatmul.mubr.bf16.gmra.mxu0 %v420
      %v527 = vpop.f32.mrf.mxu0
      %v528 = vadd.f32 %v443, %v527
      %v529 = vpop.f32.mrf.mxu0
      %v530 = vpop.f32.mrf.mxu0
      %v531 = vadd.f32 %v443, %v530
      %v532 = vpop.f32.mrf.mxu0
      %533 = vmatprep.mubr.bf16.mxu0 0
      %534 = vmatmul.mubr.bf16.gmra.mxu0 %v421
      %v535 = vpop.f32.mrf.mxu0
      %v536 = vadd.f32 %v443, %v535
      %v537 = vpop.f32.mrf.mxu0
      %v538 = vpop.f32.mrf.mxu0
      %v539 = vpop.f32.mrf.mxu0
      %540 = vdwg.mxu0
      %vm541 = vcmask 392192
      %542 = vst.msk [vmem:[%s353] sm:$0xff] %vm541, %v528
      %543 = vst.msk [vmem:[%s353 + $0x8] sm:$0xff] %vm541, %v531
      %vm544 = vcmask 385024
      %545 = vst.msk [vmem:[%s353 + $0x10] sm:$0x1] %vm544, %v536
      %v546 = vld [vmem:[%s343] sm:$0xff]
      %v547 = vld [vmem:[%s343 + $0x8] sm:$0xff]
      %v548 = vld [vmem:[%s343 + $0x10] sm:$0x1]
      %v549 = vsub.f32 %v528, %v546
      %v550 = vsub.f32 %v531, %v547
      %v551 = vsub.f32 %v536, %v548
      %v552 = vmul.f32 %v549, %v549
      %v553 = vmul.f32 %v550, %v550
      %v554 = vmul.f32 %v551, %v551
      %v555 = vsel %vm541, %v552, 0.0
      %556 = vadd.xlane.f32.xlu0 %v555
      %v557 = vpop.xlane.xlu0 %556
      %v558 = vsel %vm541, %v553, 0.0
      %559 = vadd.xlane.f32.xlu0 %v558
      %v560 = vpop.xlane.xlu0 %559
      %v561 = vsel %vm544, %v554, 0.0
      %562 = vadd.xlane.f32.xlu0 %v561
      %v563 = vpop.xlane.xlu0 %562
      %v564 = vrcp.pop 48.0
      %v565 = vmul.f32 %v557, %v564
      %v566 = vmul.f32 %v560, %v564
      %v567 = vmul.f32 %v563, %v564
      %v568 = vld [vmem:[%s348] sm:$0xff]
      %v569 = vld [vmem:[%s348 + $0x8] sm:$0xff]
      %v570 = vld [vmem:[%s348 + $0x10] sm:$0x1]
      %v571 = vmul.f32 %v565, %v568
      %v572 = vmul.f32 %v566, %v569
      %v573 = vmul.f32 %v567, %v570
      %vm574 = vcmask 7168
      %575 = vst.msk [vmem:[%s358] sm:$0xff] %vm574, %v571
      %576 = vst.msk [vmem:[%s358 + $0x8] sm:$0xff] %vm574, %v572
      %vm577 = vcmask 0
      %578 = vst.msk [vmem:[%s358 + $0x10] sm:$0x1] %vm577, %v573
      %p579 = scmp.lt.s32.totalorder %s20, 1
      %s580 = scalar_select %p579, %s20, 1
      %s581 = smul.addr %s580, 3
      %s582 = smul.addr %s581, 8
      %s583 = scalar_lea.vmem %s7, %s582
      %p584 = scmp.lt.s32.totalorder %s20, 1
      %s585 = scalar_select %p584, %s20, 1
      %s586 = smul.addr %s585, 3
      %s587 = smul.addr %s586, 8
      %s588 = scalar_lea.vmem %s8, %s587
      // Predicated region
      $region49: #{anno_mae_forward.13} parent=47 // pred_check
        %p589 = pneg %p200
      $region50: #{anno_mae_forward.13} parent=47 // pred_check_branch
        %591 = sbr.rel (%p589) target = $region52
      $region51: #{anno_mae_forward.13} parent=47 // pred_region
        _
      $region52: #{anno_mae_forward.13} parent=47 // pred_fallthru
        _
      // Predicated region
      $region53: #{anno_mae_forward.13} parent=47 // pred_check
        %p592 = pneg %p226
      $region54: #{anno_mae_forward.13} parent=47 // pred_check_branch
        %594 = sbr.rel (%p592) target = $region56
      $region55: #{anno_mae_forward.13} parent=47 // pred_region
        _
      $region56: #{anno_mae_forward.13} parent=47 // pred_fallthru
        _
    $region48: #{anno_mae_forward.13} parent=5 // pred_fallthru
      _
    %p595 = scmp.le.s32.totalorder 2, %s15
    // Predicated region
    $region57: #{anno_mae_forward.13} parent=5 // pred_check
      %p596 = pneg %p595
    $region58: #{anno_mae_forward.13} parent=5 // pred_check_branch
      %598 = sbr.rel (%p596) target = $region60
    $region59: #{anno_mae_forward.13} parent=5 // pred_region
      %s599 = ssub.s32 %s15, 2
      // Predicated region
      $region61: #{anno_mae_forward.13} parent=59 // pred_check
        %p600 = pneg %p206
      $region62: #{anno_mae_forward.13} parent=59 // pred_check_branch
        %602 = sbr.rel (%p600) target = $region64
      $region63: #{anno_mae_forward.13} parent=59 // pred_region
        %p603 = scmp.lt.s32.totalorder %s21, 1
        %s604 = scalar_select %p603, %s21, 1
        %s605 = smul.addr %s604, 3
        %s606 = smul.addr %s605, 8
        %s607 = scalar_lea.vmem %s7, %s606
      $region64: #{anno_mae_forward.13} parent=59 // pred_fallthru
        _
      // Predicated region
      $region65: #{anno_mae_forward.13} parent=59 // pred_check
        %p608 = pneg %p232
      $region66: #{anno_mae_forward.13} parent=59 // pred_check_branch
        %610 = sbr.rel (%p608) target = $region68
      $region67: #{anno_mae_forward.13} parent=59 // pred_region
        %p611 = scmp.lt.s32.totalorder %s21, 1
        %s612 = scalar_select %p611, %s21, 1
        %s613 = smul.addr %s612, 3
        %s614 = smul.addr %s613, 8
        %s615 = scalar_lea.vmem %s8, %s614
      $region68: #{anno_mae_forward.13} parent=59 // pred_fallthru
        _
    $region60: #{anno_mae_forward.13} parent=5 // pred_fallthru
      _
  $region6: #{anno_mae_forward.13} parent=0 // loop_footer
    %s19 = sadd.s32 1, %s15
  $region7: #{anno_mae_forward.13} parent=0 // loop_footer_branch
    %14 = sbr.rel target = $region3
  $region8: #{anno_mae_forward.13} parent=0 // loop_exit
    _

// kernel: anno_mae_forward.11
$region0: #{anno_mae_forward.11}
  #allocation0 [shape = 'u32[]', space=smem, size = 0x4, offset = 0x4, fixed_abs, tag = 'smem constant byte address 0x4 - core index']
  #allocation1 [shape = 'u32[144,128]{1,0:T(1,128)}', space=vmem, size = 0x12000, scoped, tag = 'internal scratch']
  %s0 = inlined_call_operand.vmem [shape: f32[2,17,128], index: 0, kind: input, shape index: {}]
  %s1 = inlined_call_operand.vmem [shape: f32[1,128], index: 1, kind: input, shape index: {}]
  %s2 = inlined_call_operand.vmem [shape: f32[1,128], index: 2, kind: input, shape index: {}]
  %s3 = inlined_call_operand.vmem [shape: bf16[128,384], index: 3, kind: input, shape index: {}]
  %s4 = inlined_call_operand.vmem [shape: f32[1,384], index: 4, kind: input, shape index: {}]
  %s5 = inlined_call_operand.vmem [shape: bf16[128,128], index: 5, kind: input, shape index: {}]
  %s6 = inlined_call_operand.vmem [shape: f32[1,128], index: 6, kind: input, shape index: {}]
  %s7 = inlined_call_operand.vmem [shape: f32[1,128], index: 7, kind: input, shape index: {}]
  %s8 = inlined_call_operand.vmem [shape: f32[1,128], index: 8, kind: input, shape index: {}]
  %s9 = inlined_call_operand.vmem [shape: bf16[128,512], index: 9, kind: input, shape index: {}]
  %s10 = inlined_call_operand.vmem [shape: f32[1,512], index: 10, kind: input, shape index: {}]
  %s11 = inlined_call_operand.vmem [shape: bf16[512,128], index: 11, kind: input, shape index: {}]
  %s12 = inlined_call_operand.vmem [shape: f32[1,128], index: 12, kind: input, shape index: {}]
  %s13 = inlined_call_operand.vmem [shape: f32[2,17,128], index: 13, kind: output, shape index: {}]
  %s14 = sld [smem:[#allocation0]]
  $region85: #{anno_mae_forward.11} parent=0
    _
  %s16 = ssub.s32 1, %s14
  %s17 = scalar_select 0, %s16, %s14
  loop: start=0, step=1, limit=4
  $region2: #{anno_mae_forward.11} parent=0 // loop_pre_header
    _
  $region3: #{anno_mae_forward.11} parent=0 // loop_header
    %s19 = sphi 0, %s23
    %p20 = scmp.ge.s32.totalorder %s19, 4
    %s29 = sphi 0, %s31
    %s32 = sphi 0, %s29
    %s33 = sphi 0, %s32
    %s49 = sphi 0, %s33
    %s53 = sphi 0, %s53
    %s55 = sphi 0, %s53
    %s56 = sphi 0, %s55
    %s70 = sphi 0, %s56
    %s74 = sphi 0, %s74
    %s76 = sphi 0, %s74
    %s77 = sphi 0, %s76
    %s91 = sphi 0, %s77
    %s95 = sphi 0, %s95
    %s97 = sphi 0, %s95
    %s98 = sphi 0, %s97
    %s112 = sphi 0, %s98
    %s116 = sphi 0, %s116
    %s118 = sphi 0, %s116
    %s119 = sphi 0, %s118
    %s133 = sphi 0, %s119
    %s137 = sphi 0, %s137
    %s139 = sphi 0, %s137
    %s140 = sphi 0, %s139
    %s154 = sphi 0, %s140
    %s158 = sphi 0, %s158
    %s160 = sphi 0, %s158
    %s161 = sphi 0, %s160
    %s175 = sphi 0, %s161
    %s179 = sphi 0, %s179
    %s181 = sphi 0, %s179
    %s182 = sphi 0, %s181
    %s196 = sphi 0, %s182
    %s200 = sphi 0, %s200
    %s202 = sphi 0, %s200
    %s203 = sphi 0, %s202
    %s217 = sphi 0, %s203
    %s221 = sphi 0, %s221
    %s223 = sphi 0, %s221
    %s224 = sphi 0, %s223
    %s238 = sphi 0, %s224
    %s242 = sphi 0, %s242
    %s244 = sphi 0, %s242
    %s245 = sphi 0, %s244
    %s259 = sphi 0, %s245
    %s263 = sphi 0, %s263
    %s265 = sphi 0, %s263
    %s266 = sphi 0, %s265
    %s280 = sphi 0, %s266
    %s284 = sphi 0, %s284
    %s286 = sphi 0, %s284
    %s287 = sphi 0, %s286
    %s301 = sphi 0, %s287
    %s307 = sphi 0, %s309
    %s310 = sphi 0, %s307
    %s311 = sphi 0, %s310
    %s327 = sphi 0, %s311
  $region4: #{anno_mae_forward.11} parent=0 // loop_header_branch
    %22 = sbr.rel (%p20) target = $region8
  $region5: #{anno_mae_forward.11} parent=0 // loop_body
    %s24 = ssub.s32 %s19, 1
    %s25 = ssub.s32 %s19, 2
    %s26 = sadd.s32 %s19, 1
    %s27 = ssub.s32 %s19, %s26
    %p28 = scmp.eq.s32.totalorder %s27, 0
    %s30 = sadd.s32 %s29, 1
    %s31 = scalar_select %p28, %s29, %s30
    %p34 = pneg %p28
    %p35 = scmp.eq.s32.totalorder %s19, 1
    %p36 = por %p34, %p35
    %p37 = scmp.ne.s32.totalorder %s29, %s32
    %p38 = scmp.eq.s32.totalorder %s19, 0
    %p39 = por %p37, %p38
    %p40 = scmp.ne.s32.totalorder %s29, %s32
    %p41 = scmp.eq.s32.totalorder %s24, 1
    %p42 = por %p40, %p41
    %p43 = scmp.ne.s32.totalorder %s32, %s33
    %p44 = scmp.eq.s32.totalorder %s24, 0
    %p45 = por %p43, %p44
    %p46 = scmp.ne.s32.totalorder %s32, %s33
    %p47 = scmp.eq.s32.totalorder %s25, 1
    %p48 = por %p46, %p47
    %p50 = scmp.ne.s32.totalorder %s33, %s49
    %p51 = scmp.eq.s32.totalorder %s25, 0
    %p52 = por %p50, %p51
    %s54 = sadd.s32 %s53, 1
    %p57 = scmp.eq.s32.totalorder %s19, 1
    %p58 = scmp.ne.s32.totalorder %s53, %s55
    %p59 = scmp.eq.s32.totalorder %s19, 0
    %p60 = por %p58, %p59
    %p61 = scmp.ne.s32.totalorder %s53, %s55
    %p62 = scmp.eq.s32.totalorder %s24, 1
    %p63 = por %p61, %p62
    %p64 = scmp.ne.s32.totalorder %s55, %s56
    %p65 = scmp.eq.s32.totalorder %s24, 0
    %p66 = por %p64, %p65
    %p67 = scmp.ne.s32.totalorder %s55, %s56
    %p68 = scmp.eq.s32.totalorder %s25, 1
    %p69 = por %p67, %p68
    %p71 = scmp.ne.s32.totalorder %s56, %s70
    %p72 = scmp.eq.s32.totalorder %s25, 0
    %p73 = por %p71, %p72
    %s75 = sadd.s32 %s74, 1
    %p78 = scmp.eq.s32.totalorder %s19, 1
    %p79 = scmp.ne.s32.totalorder %s74, %s76
    %p80 = scmp.eq.s32.totalorder %s19, 0
    %p81 = por %p79, %p80
    %p82 = scmp.ne.s32.totalorder %s74, %s76
    %p83 = scmp.eq.s32.totalorder %s24, 1
    %p84 = por %p82, %p83
    %p85 = scmp.ne.s32.totalorder %s76, %s77
    %p86 = scmp.eq.s32.totalorder %s24, 0
    %p87 = por %p85, %p86
    %p88 = scmp.ne.s32.totalorder %s76, %s77
    %p89 = scmp.eq.s32.totalorder %s25, 1
    %p90 = por %p88, %p89
    %p92 = scmp.ne.s32.totalorder %s77, %s91
    %p93 = scmp.eq.s32.totalorder %s25, 0
    %p94 = por %p92, %p93
    %s96 = sadd.s32 %s95, 1
    %p99 = scmp.eq.s32.totalorder %s19, 1
    %p100 = scmp.ne.s32.totalorder %s95, %s97
    %p101 = scmp.eq.s32.totalorder %s19, 0
    %p102 = por %p100, %p101
    %p103 = scmp.ne.s32.totalorder %s95, %s97
    %p104 = scmp.eq.s32.totalorder %s24, 1
    %p105 = por %p103, %p104
    %p106 = scmp.ne.s32.totalorder %s97, %s98
    %p107 = scmp.eq.s32.totalorder %s24, 0
    %p108 = por %p106, %p107
    %p109 = scmp.ne.s32.totalorder %s97, %s98
    %p110 = scmp.eq.s32.totalorder %s25, 1
    %p111 = por %p109, %p110
    %p113 = scmp.ne.s32.totalorder %s98, %s112
    %p114 = scmp.eq.s32.totalorder %s25, 0
    %p115 = por %p113, %p114
    %s117 = sadd.s32 %s116, 1
    %p120 = scmp.eq.s32.totalorder %s19, 1
    %p121 = scmp.ne.s32.totalorder %s116, %s118
    %p122 = scmp.eq.s32.totalorder %s19, 0
    %p123 = por %p121, %p122
    %p124 = scmp.ne.s32.totalorder %s116, %s118
    %p125 = scmp.eq.s32.totalorder %s24, 1
    %p126 = por %p124, %p125
    %p127 = scmp.ne.s32.totalorder %s118, %s119
    %p128 = scmp.eq.s32.totalorder %s24, 0
    %p129 = por %p127, %p128
    %p130 = scmp.ne.s32.totalorder %s118, %s119
    %p131 = scmp.eq.s32.totalorder %s25, 1
    %p132 = por %p130, %p131
    %p134 = scmp.ne.s32.totalorder %s119, %s133
    %p135 = scmp.eq.s32.totalorder %s25, 0
    %p136 = por %p134, %p135
    %s138 = sadd.s32 %s137, 1
    %p141 = scmp.eq.s32.totalorder %s19, 1
    %p142 = scmp.ne.s32.totalorder %s137, %s139
    %p143 = scmp.eq.s32.totalorder %s19, 0
    %p144 = por %p142, %p143
    %p145 = scmp.ne.s32.totalorder %s137, %s139
    %p146 = scmp.eq.s32.totalorder %s24, 1
    %p147 = por %p145, %p146
    %p148 = scmp.ne.s32.totalorder %s139, %s140
    %p149 = scmp.eq.s32.totalorder %s24, 0
    %p150 = por %p148, %p149
    %p151 = scmp.ne.s32.totalorder %s139, %s140
    %p152 = scmp.eq.s32.totalorder %s25, 1
    %p153 = por %p151, %p152
    %p155 = scmp.ne.s32.totalorder %s140, %s154
    %p156 = scmp.eq.s32.totalorder %s25, 0
    %p157 = por %p155, %p156
    %s159 = sadd.s32 %s158, 1
    %p162 = scmp.eq.s32.totalorder %s19, 1
    %p163 = scmp.ne.s32.totalorder %s158, %s160
    %p164 = scmp.eq.s32.totalorder %s19, 0
    %p165 = por %p163, %p164
    %p166 = scmp.ne.s32.totalorder %s158, %s160
    %p167 = scmp.eq.s32.totalorder %s24, 1
    %p168 = por %p166, %p167
    %p169 = scmp.ne.s32.totalorder %s160, %s161
    %p170 = scmp.eq.s32.totalorder %s24, 0
    %p171 = por %p169, %p170
    %p172 = scmp.ne.s32.totalorder %s160, %s161
    %p173 = scmp.eq.s32.totalorder %s25, 1
    %p174 = por %p172, %p173
    %p176 = scmp.ne.s32.totalorder %s161, %s175
    %p177 = scmp.eq.s32.totalorder %s25, 0
    %p178 = por %p176, %p177
    %s180 = sadd.s32 %s179, 1
    %p183 = scmp.eq.s32.totalorder %s19, 1
    %p184 = scmp.ne.s32.totalorder %s179, %s181
    %p185 = scmp.eq.s32.totalorder %s19, 0
    %p186 = por %p184, %p185
    %p187 = scmp.ne.s32.totalorder %s179, %s181
    %p188 = scmp.eq.s32.totalorder %s24, 1
    %p189 = por %p187, %p188
    %p190 = scmp.ne.s32.totalorder %s181, %s182
    %p191 = scmp.eq.s32.totalorder %s24, 0
    %p192 = por %p190, %p191
    %p193 = scmp.ne.s32.totalorder %s181, %s182
    %p194 = scmp.eq.s32.totalorder %s25, 1
    %p195 = por %p193, %p194
    %p197 = scmp.ne.s32.totalorder %s182, %s196
    %p198 = scmp.eq.s32.totalorder %s25, 0
    %p199 = por %p197, %p198
    %s201 = sadd.s32 %s200, 1
    %p204 = scmp.eq.s32.totalorder %s19, 1
    %p205 = scmp.ne.s32.totalorder %s200, %s202
    %p206 = scmp.eq.s32.totalorder %s19, 0
    %p207 = por %p205, %p206
    %p208 = scmp.ne.s32.totalorder %s200, %s202
    %p209 = scmp.eq.s32.totalorder %s24, 1
    %p210 = por %p208, %p209
    %p211 = scmp.ne.s32.totalorder %s202, %s203
    %p212 = scmp.eq.s32.totalorder %s24, 0
    %p213 = por %p211, %p212
    %p214 = scmp.ne.s32.totalorder %s202, %s203
    %p215 = scmp.eq.s32.totalorder %s25, 1
    %p216 = por %p214, %p215
    %p218 = scmp.ne.s32.totalorder %s203, %s217
    %p219 = scmp.eq.s32.totalorder %s25, 0
    %p220 = por %p218, %p219
    %s222 = sadd.s32 %s221, 1
    %p225 = scmp.eq.s32.totalorder %s19, 1
    %p226 = scmp.ne.s32.totalorder %s221, %s223
    %p227 = scmp.eq.s32.totalorder %s19, 0
    %p228 = por %p226, %p227
    %p229 = scmp.ne.s32.totalorder %s221, %s223
    %p230 = scmp.eq.s32.totalorder %s24, 1
    %p231 = por %p229, %p230
    %p232 = scmp.ne.s32.totalorder %s223, %s224
    %p233 = scmp.eq.s32.totalorder %s24, 0
    %p234 = por %p232, %p233
    %p235 = scmp.ne.s32.totalorder %s223, %s224
    %p236 = scmp.eq.s32.totalorder %s25, 1
    %p237 = por %p235, %p236
    %p239 = scmp.ne.s32.totalorder %s224, %s238
    %p240 = scmp.eq.s32.totalorder %s25, 0
    %p241 = por %p239, %p240
    %s243 = sadd.s32 %s242, 1
    %p246 = scmp.eq.s32.totalorder %s19, 1
    %p247 = scmp.ne.s32.totalorder %s242, %s244
    %p248 = scmp.eq.s32.totalorder %s19, 0
    %p249 = por %p247, %p248
    %p250 = scmp.ne.s32.totalorder %s242, %s244
    %p251 = scmp.eq.s32.totalorder %s24, 1
    %p252 = por %p250, %p251
    %p253 = scmp.ne.s32.totalorder %s244, %s245
    %p254 = scmp.eq.s32.totalorder %s24, 0
    %p255 = por %p253, %p254
    %p256 = scmp.ne.s32.totalorder %s244, %s245
    %p257 = scmp.eq.s32.totalorder %s25, 1
    %p258 = por %p256, %p257
    %p260 = scmp.ne.s32.totalorder %s245, %s259
    %p261 = scmp.eq.s32.totalorder %s25, 0
    %p262 = por %p260, %p261
    %s264 = sadd.s32 %s263, 1
    %p267 = scmp.eq.s32.totalorder %s19, 1
    %p268 = scmp.ne.s32.totalorder %s263, %s265
    %p269 = scmp.eq.s32.totalorder %s19, 0
    %p270 = por %p268, %p269
    %p271 = scmp.ne.s32.totalorder %s263, %s265
    %p272 = scmp.eq.s32.totalorder %s24, 1
    %p273 = por %p271, %p272
    %p274 = scmp.ne.s32.totalorder %s265, %s266
    %p275 = scmp.eq.s32.totalorder %s24, 0
    %p276 = por %p274, %p275
    %p277 = scmp.ne.s32.totalorder %s265, %s266
    %p278 = scmp.eq.s32.totalorder %s25, 1
    %p279 = por %p277, %p278
    %p281 = scmp.ne.s32.totalorder %s266, %s280
    %p282 = scmp.eq.s32.totalorder %s25, 0
    %p283 = por %p281, %p282
    %s285 = sadd.s32 %s284, 1
    %p288 = scmp.eq.s32.totalorder %s19, 1
    %p289 = scmp.ne.s32.totalorder %s284, %s286
    %p290 = scmp.eq.s32.totalorder %s19, 0
    %p291 = por %p289, %p290
    %p292 = scmp.ne.s32.totalorder %s284, %s286
    %p293 = scmp.eq.s32.totalorder %s24, 1
    %p294 = por %p292, %p293
    %p295 = scmp.ne.s32.totalorder %s286, %s287
    %p296 = scmp.eq.s32.totalorder %s24, 0
    %p297 = por %p295, %p296
    %p298 = scmp.ne.s32.totalorder %s286, %s287
    %p299 = scmp.eq.s32.totalorder %s25, 1
    %p300 = por %p298, %p299
    %p302 = scmp.ne.s32.totalorder %s287, %s301
    %p303 = scmp.eq.s32.totalorder %s25, 0
    %p304 = por %p302, %p303
    %s305 = ssub.s32 %s19, %s26
    %p306 = scmp.eq.s32.totalorder %s305, 0
    %s308 = sadd.s32 %s307, 1
    %s309 = scalar_select %p306, %s307, %s308
    %p312 = pneg %p306
    %p313 = scmp.eq.s32.totalorder %s19, 1
    %p314 = por %p312, %p313
    %p315 = scmp.ne.s32.totalorder %s307, %s310
    %p316 = scmp.eq.s32.totalorder %s19, 0
    %p317 = por %p315, %p316
    %p318 = scmp.ne.s32.totalorder %s307, %s310
    %p319 = scmp.eq.s32.totalorder %s24, 1
    %p320 = por %p318, %p319
    %p321 = scmp.ne.s32.totalorder %s310, %s311
    %p322 = scmp.eq.s32.totalorder %s24, 0
    %p323 = por %p321, %p322
    %p324 = scmp.ne.s32.totalorder %s310, %s311
    %p325 = scmp.eq.s32.totalorder %s25, 1
    %p326 = por %p324, %p325
    %p328 = scmp.ne.s32.totalorder %s311, %s327
    %p329 = scmp.eq.s32.totalorder %s25, 0
    %p330 = por %p328, %p329
    %p331 = scmp.le.s32.totalorder 1, %s19
    %p332 = scmp.lt.s32.totalorder %s19, 3
    %p333 = pnand %p331, %p332
    %p334 = pneg %p333
    // Predicated region
    $region9: #{anno_mae_forward.11} parent=5 // pred_check
      _
    $region10: #{anno_mae_forward.11} parent=5 // pred_check_branch
      %336 = sbr.rel (%p333) target = $region12
    $region11: #{anno_mae_forward.11} parent=5 // pred_region
      %s337 = ssub.s32 %s19, 1
      // Predicated region
      $region13: #{anno_mae_forward.11} parent=11 // pred_check
        %p338 = pneg %p66
      $region14: #{anno_mae_forward.11} parent=11 // pred_check_branch
        %340 = sbr.rel (%p338) target = $region16
      $region15: #{anno_mae_forward.11} parent=11 // pred_region
        _
      $region16: #{anno_mae_forward.11} parent=11 // pred_fallthru
        _
      // Predicated region
      $region17: #{anno_mae_forward.11} parent=11 // pred_check
        %p341 = pneg %p87
      $region18: #{anno_mae_forward.11} parent=11 // pred_check_branch
        %343 = sbr.rel (%p341) target = $region20
      $region19: #{anno_mae_forward.11} parent=11 // pred_region
        _
      $region20: #{anno_mae_forward.11} parent=11 // pred_fallthru
        _
      // Predicated region
      $region21: #{anno_mae_forward.11} parent=11 // pred_check
        %p344 = pneg %p108
      $region22: #{anno_mae_forward.11} parent=11 // pred_check_branch
        %346 = sbr.rel (%p344) target = $region24
      $region23: #{anno_mae_forward.11} parent=11 // pred_region
        _
      $region24: #{anno_mae_forward.11} parent=11 // pred_fallthru
        _
      // Predicated region
      $region25: #{anno_mae_forward.11} parent=11 // pred_check
        %p347 = pneg %p129
      $region26: #{anno_mae_forward.11} parent=11 // pred_check_branch
        %349 = sbr.rel (%p347) target = $region28
      $region27: #{anno_mae_forward.11} parent=11 // pred_region
        _
      $region28: #{anno_mae_forward.11} parent=11 // pred_fallthru
        _
      // Predicated region
      $region29: #{anno_mae_forward.11} parent=11 // pred_check
        %p350 = pneg %p150
      $region30: #{anno_mae_forward.11} parent=11 // pred_check_branch
        %352 = sbr.rel (%p350) target = $region32
      $region31: #{anno_mae_forward.11} parent=11 // pred_region
        _
      $region32: #{anno_mae_forward.11} parent=11 // pred_fallthru
        _
      // Predicated region
      $region33: #{anno_mae_forward.11} parent=11 // pred_check
        %p353 = pneg %p171
      $region34: #{anno_mae_forward.11} parent=11 // pred_check_branch
        %355 = sbr.rel (%p353) target = $region36
      $region35: #{anno_mae_forward.11} parent=11 // pred_region
        _
      $region36: #{anno_mae_forward.11} parent=11 // pred_fallthru
        _
      // Predicated region
      $region37: #{anno_mae_forward.11} parent=11 // pred_check
        %p356 = pneg %p192
      $region38: #{anno_mae_forward.11} parent=11 // pred_check_branch
        %358 = sbr.rel (%p356) target = $region40
      $region39: #{anno_mae_forward.11} parent=11 // pred_region
        _
      $region40: #{anno_mae_forward.11} parent=11 // pred_fallthru
        _
      // Predicated region
      $region41: #{anno_mae_forward.11} parent=11 // pred_check
        %p359 = pneg %p213
      $region42: #{anno_mae_forward.11} parent=11 // pred_check_branch
        %361 = sbr.rel (%p359) target = $region44
      $region43: #{anno_mae_forward.11} parent=11 // pred_region
        _
      $region44: #{anno_mae_forward.11} parent=11 // pred_fallthru
        _
      // Predicated region
      $region45: #{anno_mae_forward.11} parent=11 // pred_check
        %p362 = pneg %p234
      $region46: #{anno_mae_forward.11} parent=11 // pred_check_branch
        %364 = sbr.rel (%p362) target = $region48
      $region47: #{anno_mae_forward.11} parent=11 // pred_region
        _
      $region48: #{anno_mae_forward.11} parent=11 // pred_fallthru
        _
      // Predicated region
      $region49: #{anno_mae_forward.11} parent=11 // pred_check
        %p365 = pneg %p255
      $region50: #{anno_mae_forward.11} parent=11 // pred_check_branch
        %367 = sbr.rel (%p365) target = $region52
      $region51: #{anno_mae_forward.11} parent=11 // pred_region
        _
      $region52: #{anno_mae_forward.11} parent=11 // pred_fallthru
        _
      // Predicated region
      $region53: #{anno_mae_forward.11} parent=11 // pred_check
        %p368 = pneg %p276
      $region54: #{anno_mae_forward.11} parent=11 // pred_check_branch
        %370 = sbr.rel (%p368) target = $region56
      $region55: #{anno_mae_forward.11} parent=11 // pred_region
        _
      $region56: #{anno_mae_forward.11} parent=11 // pred_fallthru
        _
      // Predicated region
      $region57: #{anno_mae_forward.11} parent=11 // pred_check
        %p371 = pneg %p297
      $region58: #{anno_mae_forward.11} parent=11 // pred_check_branch
        %373 = sbr.rel (%p371) target = $region60
      $region59: #{anno_mae_forward.11} parent=11 // pred_region
        _
      $region60: #{anno_mae_forward.11} parent=11 // pred_fallthru
        _
    $region12: #{anno_mae_forward.11} parent=5 // pred_fallthru
      _
    %p374 = scmp.lt.s32.totalorder %s19, 2
    // Predicated region
    $region61: #{anno_mae_forward.11} parent=5 // pred_check
      %p375 = pneg %p374
    $region62: #{anno_mae_forward.11} parent=5 // pred_check_branch
      %377 = sbr.rel (%p375) target = $region64
    $region63: #{anno_mae_forward.11} parent=5 // pred_region
      // Predicated region
      $region65: #{anno_mae_forward.11} parent=63 // pred_check
        %p378 = pneg %p39
      $region66: #{anno_mae_forward.11} parent=63 // pred_check_branch
        %380 = sbr.rel (%p378) target = $region68
      $region67: #{anno_mae_forward.11} parent=63 // pred_region
        %p381 = scmp.lt.s32.totalorder %s19, 1
        %s382 = scalar_select %p381, %s19, 1
        %s383 = smul.addr %s382, 3
        %s384 = smul.addr %s383, 8
        %s385 = scalar_lea.vmem %s0, %s384
      $region68: #{anno_mae_forward.11} parent=63 // pred_fallthru
        _
    $region64: #{anno_mae_forward.11} parent=5 // pred_fallthru
      _
    %p386 = scmp.le.s32.totalorder 1, %s19
    %p387 = scmp.lt.s32.totalorder %s19, 3
    %p388 = pnand %p386, %p387
    %p389 = pneg %p388
    // Predicated region
    $region69: #{anno_mae_forward.11} parent=5 // pred_check
      _
    $region70: #{anno_mae_forward.11} parent=5 // pred_check_branch
      %391 = sbr.rel (%p388) target = $region72
    $region71: #{anno_mae_forward.11} parent=5 // pred_region
      %s392 = ssub.s32 %s19, 1
      %p393 = scmp.lt.s32.totalorder %s24, 1
      %s394 = scalar_select %p393, %s24, 1
      %s395 = smul.addr %s394, 3
      %s396 = smul.addr %s395, 8
      %s397 = scalar_lea.vmem %s0, %s396
      %p398 = pneg %p45
      %p399 = pneg %p42
      %p400 = pneg %p66
      %p401 = pneg %p63
      %p402 = pneg %p87
      %p403 = pneg %p84
      %p404 = pneg %p108
      %p405 = pneg %p105
      %p406 = pneg %p129
      %p407 = pneg %p126
      %p408 = pneg %p150
      %p409 = pneg %p147
      %p410 = pneg %p171
      %p411 = pneg %p168
      %p412 = pneg %p192
      %p413 = pneg %p189
      %p414 = pneg %p213
      %p415 = pneg %p210
      %p416 = pneg %p234
      %p417 = pneg %p231
      %p418 = pneg %p255
      %p419 = pneg %p252
      %p420 = pneg %p276
      %p421 = pneg %p273
      %p422 = pneg %p297
      %p423 = pneg %p294
      %p424 = pneg %p323
      %p425 = pneg %p320
      %p426 = scmp.lt.s32.totalorder %s24, 1
      %s427 = scalar_select %p426, %s24, 1
      %s428 = smul.addr %s427, 3
      %s429 = smul.addr %s428, 8
      %s430 = scalar_lea.vmem %s13, %s429
      %p431 = scmp.lt.s32.totalorder %s24, 1
      %s432 = scalar_select %p431, %s24, 1
      %s433 = smul.addr %s432, 3
      %s434 = smul.addr %s433, 8
      %s435 = scalar_lea.vmem %s0, %s434
      %p436 = scmp.lt.s32.totalorder %s24, 1
      %s437 = scalar_select %p436, %s24, 1
      %s438 = smul.addr %s437, 3
      %s439 = smul.addr %s438, 8
      %s440 = scalar_lea.vmem %s13, %s439
      %v442 = vld [vmem:[%s435] sm:$0xff]
      %v443 = vld [vmem:[%s435 + $0x8] sm:$0xff]
      %v444 = vld [vmem:[%s435 + $0x10] sm:$0x1]
      %v445 = vld [vmem:[%s1] sm:$0x1]
      %v446 = vld [vmem:[%s2] sm:$0x1]
      %447 = vadd.xlane.f32.xlu0 %v442
      %v448 = vpop.xlane.xlu0 %447
      %449 = vadd.xlane.f32.xlu0 %v443
      %v450 = vpop.xlane.xlu0 %449
      %vm451 = vcmask 1040384
      %v452 = vsel %vm451, %v444, 0.0
      %453 = vadd.xlane.f32.xlu0 %v452
      %v454 = vpop.xlane.xlu0 %453
      %v455 = vrcp.pop 128.0
      %v456 = vmul.f32 %v448, %v455
      %v457 = vmul.f32 %v450, %v455
      %v458 = vmul.f32 %v454, %v455
      %v459 = vsub.f32 %v442, %v456
      %v460 = vsub.f32 %v443, %v457
      %v461 = vsub.f32 %v444, %v458
      %v462 = vmul.f32 %v459, %v459
      %v463 = vmul.f32 %v460, %v460
      %v464 = vmul.f32 %v461, %v461
      %465 = vadd.xlane.f32.xlu0 %v462
      %v466 = vpop.xlane.xlu0 %465
      %467 = vadd.xlane.f32.xlu0 %v463
      %v468 = vpop.xlane.xlu0 %467
      %v469 = vsel %vm451, %v464, 0.0
      %470 = vadd.xlane.f32.xlu0 %v469
      %v471 = vpop.xlane.xlu0 %470
      %v472 = vmul.f32 %v466, %v455
      %v473 = vmul.f32 %v468, %v455
      %v474 = vmul.f32 %v471, %v455
      %v475 = vadd.f32 %v472, 1e-05
      %v476 = vadd.f32 %v473, 1e-05
      %v477 = vadd.f32 %v474, 1e-05
      %v478 = vrsqrt.pop %v475
      %v479 = vrsqrt.pop %v476
      %v480 = vrsqrt.pop %v477
      %v481 = vmul.f32 %v459, %v478
      %v482 = vmul.f32 %v460, %v479
      %v483 = vmul.f32 %v461, %v480
      %v485 = vlaneseq
      %v486 = vshrl.u32 %v485, 7
      %v487 = vsub.s32 0, %v486
      %v488 = vrot.slane %v445, %v487
      %v490 = vmul.f32 %v481, %v488
      %v491 = vmul.f32 %v482, %v488
      %v492 = vmul.f32 %v483, %v488
      %v494 = vlaneseq
      %v495 = vshrl.u32 %v494, 7
      %v496 = vsub.s32 0, %v495
      %v497 = vrot.slane %v446, %v496
      %v499 = vadd.f32 %v490, %v497
      %v500 = vadd.f32 %v491, %v497
      %v501 = vadd.f32 %v492, %v497
      %v502 = vpack.c.bf16 %v500, %v499
      %v503 = vpack.c.bf16 %v501, %v501
      %v504 = vld [vmem:[%s3] sm:$0xff]
      %v505 = vld [vmem:[%s3 + $0x8] sm:$0xf]
      %v506 = vld [vmem:[%s3 + $0xc] sm:$0xff]
      %v507 = vld [vmem:[%s3 + $0x14] sm:$0xf]
      %v508 = vld [vmem:[%s3 + $0x18] sm:$0xff]
      %v509 = vld [vmem:[%s3 + $0x20] sm:$0xf]
      %v510 = vld [vmem:[%s3 + $0x24] sm:$0xff]
      %v511 = vld [vmem:[%s3 + $0x2c] sm:$0xf]
      %v512 = vld [vmem:[%s3 + $0x30] sm:$0xff]
      %v513 = vld [vmem:[%s3 + $0x38] sm:$0xf]
      %v514 = vld [vmem:[%s3 + $0x3c] sm:$0xff]
      %v515 = vld [vmem:[%s3 + $0x44] sm:$0xf]
      %v516 = vld [vmem:[%s3 + $0x48] sm:$0xff]
      %v517 = vld [vmem:[%s3 + $0x50] sm:$0xf]
      %v518 = vld [vmem:[%s3 + $0x54] sm:$0xff]
      %v519 = vld [vmem:[%s3 + $0x5c] sm:$0xf]
      %v520 = vld [vmem:[%s3 + $0x60] sm:$0xff]
      %v521 = vld [vmem:[%s3 + $0x68] sm:$0xf]
      %v522 = vld [vmem:[%s3 + $0x6c] sm:$0xff]
      %v523 = vld [vmem:[%s3 + $0x74] sm:$0xf]
      %v524 = vld [vmem:[%s3 + $0x78] sm:$0xff]
      %v525 = vld [vmem:[%s3 + $0x80] sm:$0xf]
      %v526 = vld [vmem:[%s3 + $0x84] sm:$0xff]
      %v527 = vld [vmem:[%s3 + $0x8c] sm:$0xf]
      %v528 = vld [vmem:[%s3 + $0x90] sm:$0xff]
      %v529 = vld [vmem:[%s3 + $0x98] sm:$0xf]
      %v530 = vld [vmem:[%s3 + $0x9c] sm:$0xff]
      %v531 = vld [vmem:[%s3 + $0xa4] sm:$0xf]
      %v532 = vld [vmem:[%s3 + $0xa8] sm:$0xff]
      %v533 = vld [vmem:[%s3 + $0xb0] sm:$0xf]
      %v534 = vld [vmem:[%s3 + $0xb4] sm:$0xff]
      %v535 = vld [vmem:[%s3 + $0xbc] sm:$0xf]
      %v536 = vld [vmem:[%s4] sm:$0x7]
      %v538 = vlaneseq
      %v539 = vshrl.u32 %v538, 7
      %v540 = vsub.s32 0, %v539
      %v541 = vrot.slane %v536, %v540
      %v542 = vlaneseq
      %v543 = vshrl.u32 %v542, 7
      %v544 = vsub.s32 1, %v543
      %v545 = vrot.slane %v536, %v544
      %v546 = vlaneseq
      %v547 = vshrl.u32 %v546, 7
      %v548 = vsub.s32 2, %v547
      %v549 = vrot.slane %v536, %v548
      %v585 = vunpack.c.l.b16 %v504
      %v586 = vunpack.c.h.b16 %v504
      %v587 = vunpack.c.l.b16 %v505
      %v588 = vunpack.c.l.b16 %v506
      %v589 = vunpack.c.h.b16 %v506
      %v590 = vunpack.c.l.b16 %v507
      %v591 = vunpack.c.l.b16 %v508
      %v592 = vunpack.c.h.b16 %v508
      %v593 = vunpack.c.l.b16 %v509
      %v594 = vunpack.c.l.b16 %v510
      %v595 = vunpack.c.h.b16 %v510
      %v596 = vunpack.c.l.b16 %v511
      %v597 = vunpack.c.l.b16 %v512
      %v598 = vunpack.c.h.b16 %v512
      %v599 = vunpack.c.l.b16 %v513
      %v600 = vunpack.c.l.b16 %v514
      %v601 = vunpack.c.h.b16 %v514
      %v602 = vunpack.c.l.b16 %v515
      %v603 = vunpack.c.l.b16 %v516
      %v604 = vunpack.c.h.b16 %v516
      %v605 = vunpack.c.l.b16 %v517
      %v606 = vunpack.c.l.b16 %v518
      %v607 = vunpack.c.h.b16 %v518
      %v608 = vunpack.c.l.b16 %v519
      %v609 = vunpack.c.l.b16 %v520
      %v610 = vunpack.c.h.b16 %v520
      %v611 = vunpack.c.l.b16 %v521
      %v612 = vunpack.c.l.b16 %v522
      %v613 = vunpack.c.h.b16 %v522
      %v614 = vunpack.c.l.b16 %v523
      %v615 = vunpack.c.l.b16 %v524
      %v616 = vunpack.c.h.b16 %v524
      %v617 = vunpack.c.l.b16 %v525
      %v618 = vunpack.c.l.b16 %v526
      %v619 = vunpack.c.h.b16 %v526
      %v620 = vunpack.c.l.b16 %v527
      %v621 = vunpack.c.l.b16 %v528
      %v622 = vunpack.c.h.b16 %v528
      %v623 = vunpack.c.l.b16 %v529
      %v624 = vunpack.c.l.b16 %v530
      %v625 = vunpack.c.h.b16 %v530
      %v626 = vunpack.c.l.b16 %v531
      %v627 = vunpack.c.l.b16 %v532
      %v628 = vunpack.c.h.b16 %v532
      %v629 = vunpack.c.l.b16 %v533
      %v630 = vunpack.c.l.b16 %v534
      %v631 = vunpack.c.h.b16 %v534
      %v632 = vunpack.c.l.b16 %v535
      %v633 = vpack.c.b16 %v588, %v585
      %v634 = vpack.c.b16 %v589, %v586
      %v635 = vpack.c.b16 %v590, %v587
      %v636 = vpack.c.b16 %v594, %v591
      %v637 = vpack.c.b16 %v595, %v592
      %v638 = vpack.c.b16 %v596, %v593
      %v639 = vpack.c.b16 %v600, %v597
      %v640 = vpack.c.b16 %v601, %v598
      %v641 = vpack.c.b16 %v602, %v599
      %v642 = vpack.c.b16 %v606, %v603
      %v643 = vpack.c.b16 %v607, %v604
      %v644 = vpack.c.b16 %v608, %v605
      %v645 = vpack.c.b16 %v612, %v609
      %v646 = vpack.c.b16 %v613, %v610
      %v647 = vpack.c.b16 %v614, %v611
      %v648 = vpack.c.b16 %v618, %v615
      %v649 = vpack.c.b16 %v619, %v616
      %v650 = vpack.c.b16 %v620, %v617
      %v651 = vpack.c.b16 %v624, %v621
      %v652 = vpack.c.b16 %v625, %v622
      %v653 = vpack.c.b16 %v626, %v623
      %v654 = vpack.c.b16 %v630, %v627
      %v655 = vpack.c.b16 %v631, %v628
      %v656 = vpack.c.b16 %v632, %v629
      %681 = vmatprep.subr.bf16.mxu0 %v655
      %682 = vmatpush1.bf16.msra.mxu0 %v654
      %683 = vmatprep.subr.bf16.mxu0 %v652
      %684 = vmatpush1.bf16.msra.mxu0 %v651
      %685 = vmatprep.subr.bf16.mxu0 %v649
      %686 = vmatpush1.bf16.msra.mxu0 %v648
      %687 = vmatprep.subr.bf16.mxu0 %v646
      %688 = vmatpush1.bf16.msra.mxu0 %v645
      %689 = vmatprep.subr.bf16.mxu0 %v643
      %690 = vmatpush1.bf16.msra.mxu0 %v642
      %691 = vmatprep.subr.bf16.mxu0 %v640
      %692 = vmatpush1.bf16.msra.mxu0 %v639
      %693 = vmatprep.subr.bf16.mxu0 %v637
      %694 = vmatpush1.bf16.msra.mxu0 %v636
      %695 = vmatprep.subr.bf16.mxu0 %v634
      %696 = vmatpush1.bf16.msra.mxu0 %v633
      %697 = vmatprep.subr.bf16.mxu0 0
      %698 = vmatpush2.bf16.msra.mxu0 0
      %699 = vmatprep.subr.bf16.mxu0 0
      %700 = vmatpush2.bf16.msra.mxu0 0
      %701 = vmatprep.subr.bf16.mxu0 0
      %702 = vmatpush2.bf16.msra.mxu0 0
      %703 = vmatprep.subr.bf16.mxu0 0
      %704 = vmatpush2.bf16.msra.mxu0 0
      %705 = vmatprep.subr.bf16.mxu0 0
      %706 = vmatpush2.bf16.msra.mxu0 0
      %707 = vmatprep.subr.bf16.mxu0 0
      %708 = vmatpush2.bf16.msra.mxu0 0
      %709 = vmatprep.subr.bf16.mxu0 0
      %710 = vmatpush2.bf16.msra.mxu0 0
      %711 = vmatprep.subr.bf16.mxu0 0
      %712 = vmatpush2.bf16.msra.mxu0 0
      %713 = vmatprep.mubr.bf16.mxu0 0
      %714 = vmatmul.mubr.bf16.gmra.mxu0 %v502
      %v715 = vpop.f32.mrf.mxu0
      %v716 = vadd.f32 %v541, %v715
      %v717 = vpop.f32.mrf.mxu0
      %v718 = vadd.f32 %v545, %v717
      %v719 = vpop.f32.mrf.mxu0
      %v720 = vadd.f32 %v541, %v719
      %v721 = vpop.f32.mrf.mxu0
      %v722 = vadd.f32 %v545, %v721
      %723 = vmatprep.mubr.bf16.mxu0 0
      %724 = vmatmul.mubr.bf16.gmra.mxu0 %v503
      %v725 = vpop.f32.mrf.mxu0
      %v726 = vadd.f32 %v541, %v725
      %v727 = vpop.f32.mrf.mxu0
      %v728 = vadd.f32 %v545, %v727
      %v729 = vpop.f32.mrf.mxu0
      %v730 = vpop.f32.mrf.mxu0
      %731 = vdwg.mxu0
      %732 = vmatprep.subr.bf16.mxu0 0
      %733 = vmatpush1.bf16.msra.mxu0 %v656
      %734 = vmatprep.subr.bf16.mxu0 0
      %735 = vmatpush1.bf16.msra.mxu0 %v653
      %736 = vmatprep.subr.bf16.mxu0 0
      %737 = vmatpush1.bf16.msra.mxu0 %v650
      %738 = vmatprep.subr.bf16.mxu0 0
      %739 = vmatpush1.bf16.msra.mxu0 %v647
      %740 = vmatprep.subr.bf16.mxu0 0
      %741 = vmatpush1.bf16.msra.mxu0 %v644
      %742 = vmatprep.subr.bf16.mxu0 0
      %743 = vmatpush1.bf16.msra.mxu0 %v641
      %744 = vmatprep.subr.bf16.mxu0 0
      %745 = vmatpush1.bf16.msra.mxu0 %v638
      %746 = vmatprep.subr.bf16.mxu0 0
      %747 = vmatpush1.bf16.msra.mxu0 %v635
      %748 = vmatprep.subr.bf16.mxu0 0
      %749 = vmatpush2.bf16.msra.mxu0 0
      %750 = vmatprep.subr.bf16.mxu0 0
      %751 = vmatpush2.bf16.msra.mxu0 0
      %752 = vmatprep.subr.bf16.mxu0 0
      %753 = vmatpush2.bf16.msra.mxu0 0
      %754 = vmatprep.subr.bf16.mxu0 0
      %755 = vmatpush2.bf16.msra.mxu0 0
      %756 = vmatprep.subr.bf16.mxu0 0
      %757 = vmatpush2.bf16.msra.mxu0 0
      %758 = vmatprep.subr.bf16.mxu0 0
      %759 = vmatpush2.bf16.msra.mxu0 0
      %760 = vmatprep.subr.bf16.mxu0 0
      %761 = vmatpush2.bf16.msra.mxu0 0
      %762 = vmatprep.subr.bf16.mxu0 0
      %763 = vmatpush2.bf16.msra.mxu0 0
      %764 = vmatprep.mubr.bf16.mxu0 0
      %765 = vmatmul.mubr.bf16.gmra.mxu0 %v502
      %v766 = vpop.f32.mrf.mxu0
      %v767 = vadd.f32 %v549, %v766
      %v768 = vpop.f32.mrf.mxu0
      %v769 = vpop.f32.mrf.mxu0
      %v770 = vadd.f32 %v549, %v769
      %v771 = vpop.f32.mrf.mxu0
      %772 = vmatprep.mubr.bf16.mxu0 0
      %773 = vmatmul.mubr.bf16.gmra.mxu0 %v503
      %v774 = vpop.f32.mrf.mxu0
      %v775 = vadd.f32 %v549, %v774
      %v776 = vpop.f32.mrf.mxu0
      %v777 = vpop.f32.mrf.mxu0
      %v778 = vpop.f32.mrf.mxu0
      %779 = vdwg.mxu0
      %v780 = vlaneseq
      %v781 = vand.u32 %v780, 127
      %vm782 = vcmp.ge.s32.totalorder %v781, 0
      %vm783 = vcmp.lt.s32.totalorder %v781, 32
      %vm784 = vmand %vm782, %vm783
      %v785 = vsel %vm784, 1, 0
      %v786 = vcvt.s32.f32 %v785
      %v787 = vmul.f32 %v716, %v786
      %v788 = vmul.f32 %v720, %v786
      %v789 = vmul.f32 %v726, %v786
      %790 = vadd.xlane.f32.xlu0 %v787
      %v791 = vpop.xlane.xlu0 %790
      %792 = vadd.xlane.f32.xlu0 %v788
      %v793 = vpop.xlane.xlu0 %792
      %v794 = vsel %vm451, %v789, 0.0
      %795 = vadd.xlane.f32.xlu0 %v794
      %v796 = vpop.xlane.xlu0 %795
      %v797 = vmul.f32 %v791, 0.03125
      %v798 = vmul.f32 %v793, 0.03125
      %v799 = vmul.f32 %v796, 0.03125
      %v800 = vsub.f32 %v716, %v797
      %v801 = vsub.f32 %v720, %v798
      %v802 = vsub.f32 %v726, %v799
      %v803 = vmul.f32 %v800, %v786
      %v804 = vmul.f32 %v801, %v786
      %v805 = vmul.f32 %v802, %v786
      %v806 = vmul.f32 %v803, %v803
      %v807 = vmul.f32 %v804, %v804
      %v808 = vmul.f32 %v805, %v805
      %809 = vadd.xlane.f32.xlu0 %v806
      %v810 = vpop.xlane.xlu0 %809
      %811 = vadd.xlane.f32.xlu0 %v807
      %v812 = vpop.xlane.xlu0 %811
      %v813 = vsel %vm451, %v808, 0.0
      %814 = vadd.xlane.f32.xlu0 %v813
      %v815 = vpop.xlane.xlu0 %814
      %v816 = vmul.f32 %v810, 0.03125
      %v817 = vmul.f32 %v812, 0.03125
      %v818 = vmul.f32 %v815, 0.03125
      %v819 = vadd.f32 %v816, 1e-05
      %v820 = vadd.f32 %v817, 1e-05
      %v821 = vadd.f32 %v818, 1e-05
      %v822 = vrsqrt.pop %v819
      %v823 = vrsqrt.pop %v820
      %v824 = vrsqrt.pop %v821
      %v825 = vmul.f32 %v803, %v822
      %v826 = vmul.f32 %v804, %v823
      %v827 = vmul.f32 %v805, %v824
      %v828 = vmul.f32 %v718, %v786
      %v829 = vmul.f32 %v722, %v786
      %v830 = vmul.f32 %v728, %v786
      %831 = vadd.xlane.f32.xlu0 %v828
      %v832 = vpop.xlane.xlu0 %831
      %833 = vadd.xlane.f32.xlu0 %v829
      %v834 = vpop.xlane.xlu0 %833
      %v835 = vsel %vm451, %v830, 0.0
      %836 = vadd.xlane.f32.xlu0 %v835
      %v837 = vpop.xlane.xlu0 %836
      %v838 = vmul.f32 %v832, 0.03125
      %v839 = vmul.f32 %v834, 0.03125
      %v840 = vmul.f32 %v837, 0.03125
      %v841 = vsub.f32 %v718, %v838
      %v842 = vsub.f32 %v722, %v839
      %v843 = vsub.f32 %v728, %v840
      %v844 = vmul.f32 %v841, %v786
      %v845 = vmul.f32 %v842, %v786
      %v846 = vmul.f32 %v843, %v786
      %v847 = vmul.f32 %v844, %v844
      %v848 = vmul.f32 %v845, %v845
      %v849 = vmul.f32 %v846, %v846
      %850 = vadd.xlane.f32.xlu0 %v847
      %v851 = vpop.xlane.xlu0 %850
      %852 = vadd.xlane.f32.xlu0 %v848
      %v853 = vpop.xlane.xlu0 %852
      %v854 = vsel %vm451, %v849, 0.0
      %855 = vadd.xlane.f32.xlu0 %v854
      %v856 = vpop.xlane.xlu0 %855
      %v857 = vmul.f32 %v851, 0.03125
      %v858 = vmul.f32 %v853, 0.03125
      %v859 = vmul.f32 %v856, 0.03125
      %v860 = vadd.f32 %v857, 1e-05
      %v861 = vadd.f32 %v858, 1e-05
      %v862 = vadd.f32 %v859, 1e-05
      %v863 = vrsqrt.pop %v860
      %v864 = vrsqrt.pop %v861
      %v865 = vrsqrt.pop %v862
      %v866 = vmul.f32 %v844, %v863
      %v867 = vmul.f32 %v845, %v864
      %v868 = vmul.f32 %v846, %v865
      %869 = vmatprep.subr.mxu0 0.0
      %870 = vmatpush1.xpose.msra.mxu0 0.0
      %871 = vmatprep.subr.mxu0 0.0
      %872 = vmatpush1.xpose.msra.mxu0 0.0
      %873 = vmatprep.subr.mxu0 0.0
      %874 = vmatpush1.xpose.msra.mxu0 0.0
      %875 = vmatprep.subr.mxu0 0.0
      %876 = vmatpush1.xpose.msra.mxu0 0.0
      %877 = vmatprep.subr.mxu0 0.0
      %878 = vmatpush1.xpose.msra.mxu0 0.0
      %879 = vmatprep.subr.mxu0 0.0
      %880 = vmatpush1.xpose.msra.mxu0 0.0
      %881 = vmatprep.subr.mxu0 0.0
      %882 = vmatpush1.xpose.msra.mxu0 0.0
      %883 = vmatprep.subr.mxu0 0.0
      %884 = vmatpush1.xpose.msra.mxu0 0.0
      %885 = vmatprep.subr.mxu0 0.0
      %886 = vmatpush1.xpose.msra.mxu0 0.0
      %887 = vmatprep.subr.mxu0 0.0
      %888 = vmatpush1.xpose.msra.mxu0 0.0
      %889 = vmatprep.subr.mxu0 0.0
      %890 = vmatpush1.xpose.msra.mxu0 0.0
      %891 = vmatprep.subr.mxu0 0.0
      %892 = vmatpush1.xpose.msra.mxu0 0.0
      %893 = vmatprep.subr.mxu0 0.0
      %894 = vmatpush1.xpose.msra.mxu0 0.0
      %895 = vmatprep.subr.mxu0 0.0
      %896 = vmatpush1.xpose.msra.mxu0 %v868
      %897 = vmatprep.subr.mxu0 0.0
      %898 = vmatpush1.xpose.msra.mxu0 %v867
      %899 = vmatprep.subr.mxu0 0.0
      %900 = vmatpush1.xpose.msra.mxu0 %v866
      %901 = vmatprep.subr.mxu0 0.0
      %902 = vmatpush2.xpose.msra.mxu0 0.0
      %903 = vmatprep.subr.mxu0 0.0
      %904 = vmatpush2.xpose.msra.mxu0 0.0
      %905 = vmatprep.subr.mxu0 0.0
      %906 = vmatpush2.xpose.msra.mxu0 0.0
      %907 = vmatprep.subr.mxu0 0.0
      %908 = vmatpush2.xpose.msra.mxu0 0.0
      %909 = vmatprep.subr.mxu0 0.0
      %910 = vmatpush2.xpose.msra.mxu0 0.0
      %911 = vmatprep.subr.mxu0 0.0
      %912 = vmatpush2.xpose.msra.mxu0 0.0
      %913 = vmatprep.subr.mxu0 0.0
      %914 = vmatpush2.xpose.msra.mxu0 0.0
      %915 = vmatprep.subr.mxu0 0.0
      %916 = vmatpush2.xpose.msra.mxu0 0.0
      %917 = vmatprep.subr.mxu0 0.0
      %918 = vmatpush2.xpose.msra.mxu0 0.0
      %919 = vmatprep.subr.mxu0 0.0
      %920 = vmatpush2.xpose.msra.mxu0 0.0
      %921 = vmatprep.subr.mxu0 0.0
      %922 = vmatpush2.xpose.msra.mxu0 0.0
      %923 = vmatprep.subr.mxu0 0.0
      %924 = vmatpush2.xpose.msra.mxu0 0.0
      %925 = vmatprep.subr.mxu0 0.0
      %926 = vmatpush2.xpose.msra.mxu0 0.0
      %927 = vmatprep.subr.mxu0 0.0
      %928 = vmatpush2.xpose.msra.mxu0 0.0
      %929 = vmatprep.subr.mxu0 0.0
      %930 = vmatpush2.xpose.msra.mxu0 0.0
      %931 = vmatprep.subr.mxu0 0.0
      %932 = vmatpush2.xpose.msra.mxu0 0.0
      %933 = vmatprep.mubr.f32.mxu0 0.0
      %934 = vmatmul.mubr.f32.gmra.mxu0 %v825
      %v935 = vpop.f32.mrf.mxu0
      %v936 = vadd.f32 0.0, %v935
      %v937 = vpop.f32.mrf.mxu0
      %938 = vmatprep.mubr.f32.mxu0 0.0
      %939 = vmatmul.mubr.f32.gmra.mxu0 %v826
      %v940 = vpop.f32.mrf.mxu0
      %v941 = vadd.f32 0.0, %v940
      %v942 = vpop.f32.mrf.mxu0
      %943 = vmatprep.mubr.f32.mxu0 0.0
      %944 = vmatmul.mubr.f32.gmra.mxu0 %v827
      %v945 = vpop.f32.mrf.mxu0
      %v946 = vadd.f32 0.0, %v945
      %v947 = vpop.f32.mrf.mxu0
      %948 = vdwg.mxu0
      %v949 = vmul.f32 %v936, 0.17677669
      %v950 = vmul.f32 %v941, 0.17677669
      %v951 = vmul.f32 %v946, 0.17677669
      %vm952 = vcmask 138240
      %v953 = vsel %vm952, %v949, -inf
      %954 = vmax.xlane.f32.xlu0 %v953
      %v955 = vpop.xlane.xlu0 %954
      %v956 = vsel %vm952, %v950, -inf
      %957 = vmax.xlane.f32.xlu0 %v956
      %v958 = vpop.xlane.xlu0 %957
      %vm959 = vcmask 131072
      %v960 = vsel %vm959, %v951, -inf
      %961 = vmax.xlane.f32.xlu0 %v960
      %v962 = vpop.xlane.xlu0 %961
      %v963 = vsub.f32 %v949, %v955
      %v964 = vsub.f32 %v950, %v958
      %v965 = vsub.f32 %v951, %v962
      %v966 = vmul.f32 %v963, 1.442695
      %v967 = vpow.pop %v966
      %v968 = vmul.f32 %v964, 1.442695
      %v969 = vpow.pop %v968
      %v970 = vmul.f32 %v965, 1.442695
      %v971 = vpow.pop %v970
      %v972 = vsel %vm952, %v967, 0.0
      %973 = vadd.xlane.f32.xlu0 %v972
      %v974 = vpop.xlane.xlu0 %973
      %v975 = vsel %vm952, %v969, 0.0
      %976 = vadd.xlane.f32.xlu0 %v975
      %v977 = vpop.xlane.xlu0 %976
      %v978 = vsel %vm959, %v971, 0.0
      %979 = vadd.xlane.f32.xlu0 %v978
      %v980 = vpop.xlane.xlu0 %979
      %v981 = vrcp.pop %v974
      %v982 = vrcp.pop %v977
      %v983 = vrcp.pop %v980
      %v984 = vmul.f32 %v967, %v981
      %v985 = vmul.f32 %v969, %v982
      %v986 = vmul.f32 %v971, %v983
      %v987 = vmul.f32 %v767, %v786
      %v988 = vmul.f32 %v770, %v786
      %v989 = vmul.f32 %v775, %v786
      %vm990 = vcmp.ge.s32.totalorder %v781, 32
      %vm991 = vcmp.lt.s32.totalorder %v781, 64
      %vm992 = vmand %vm990, %vm991
      %v993 = vsel %vm992, 1, 0
      %v994 = vcvt.s32.f32 %v993
      %v995 = vmul.f32 %v716, %v994
      %v996 = vmul.f32 %v720, %v994
      %v997 = vmul.f32 %v726, %v994
      %998 = vadd.xlane.f32.xlu0 %v995
      %v999 = vpop.xlane.xlu0 %998
      %1000 = vadd.xlane.f32.xlu0 %v996
      %v1001 = vpop.xlane.xlu0 %1000
      %v1002 = vsel %vm451, %v997, 0.0
      %1003 = vadd.xlane.f32.xlu0 %v1002
      %v1004 = vpop.xlane.xlu0 %1003
      %v1005 = vmul.f32 %v999, 0.03125
      %v1006 = vmul.f32 %v1001, 0.03125
      %v1007 = vmul.f32 %v1004, 0.03125
      %v1008 = vsub.f32 %v716, %v1005
      %v1009 = vsub.f32 %v720, %v1006
      %v1010 = vsub.f32 %v726, %v1007
      %v1011 = vmul.f32 %v1008, %v994
      %v1012 = vmul.f32 %v1009, %v994
      %v1013 = vmul.f32 %v1010, %v994
      %v1014 = vmul.f32 %v1011, %v1011
      %v1015 = vmul.f32 %v1012, %v1012
      %v1016 = vmul.f32 %v1013, %v1013
      %1017 = vadd.xlane.f32.xlu0 %v1014
      %v1018 = vpop.xlane.xlu0 %1017
      %1019 = vadd.xlane.f32.xlu0 %v1015
      %v1020 = vpop.xlane.xlu0 %1019
      %v1021 = vsel %vm451, %v1016, 0.0
      %1022 = vadd.xlane.f32.xlu0 %v1021
      %v1023 = vpop.xlane.xlu0 %1022
      %v1024 = vmul.f32 %v1018, 0.03125
      %v1025 = vmul.f32 %v1020, 0.03125
      %v1026 = vmul.f32 %v1023, 0.03125
      %v1027 = vadd.f32 %v1024, 1e-05
      %v1028 = vadd.f32 %v1025, 1e-05
      %v1029 = vadd.f32 %v1026, 1e-05
      %v1030 = vrsqrt.pop %v1027
      %v1031 = vrsqrt.pop %v1028
      %v1032 = vrsqrt.pop %v1029
      %v1033 = vmul.f32 %v1011, %v1030
      %v1034 = vmul.f32 %v1012, %v1031
      %v1035 = vmul.f32 %v1013, %v1032
      %v1036 = vmul.f32 %v718, %v994
      %v1037 = vmul.f32 %v722, %v994
      %v1038 = vmul.f32 %v728, %v994
      %1039 = vadd.xlane.f32.xlu0 %v1036
      %v1040 = vpop.xlane.xlu0 %1039
      %1041 = vadd.xlane.f32.xlu0 %v1037
      %v1042 = vpop.xlane.xlu0 %1041
      %v1043 = vsel %vm451, %v1038, 0.0
      %1044 = vadd.xlane.f32.xlu0 %v1043
      %v1045 = vpop.xlane.xlu0 %1044
      %v1046 = vmul.f32 %v1040, 0.03125
      %v1047 = vmul.f32 %v1042, 0.03125
      %v1048 = vmul.f32 %v1045, 0.03125
      %v1049 = vsub.f32 %v718, %v1046
      %v1050 = vsub.f32 %v722, %v1047
      %v1051 = vsub.f32 %v728, %v1048
      %v1052 = vmul.f32 %v1049, %v994
      %v1053 = vmul.f32 %v1050, %v994
      %v1054 = vmul.f32 %v1051, %v994
      %v1055 = vmul.f32 %v1052, %v1052
      %v1056 = vmul.f32 %v1053, %v1053
      %v1057 = vmul.f32 %v1054, %v1054
      %1058 = vadd.xlane.f32.xlu0 %v1055
      %v1059 = vpop.xlane.xlu0 %1058
      %1060 = vadd.xlane.f32.xlu0 %v1056
      %v1061 = vpop.xlane.xlu0 %1060
      %v1062 = vsel %vm451, %v1057, 0.0
      %1063 = vadd.xlane.f32.xlu0 %v1062
      %v1064 = vpop.xlane.xlu0 %1063
      %v1065 = vmul.f32 %v1059, 0.03125
      %v1066 = vmul.f32 %v1061, 0.03125
      %v1067 = vmul.f32 %v1064, 0.03125
      %v1068 = vadd.f32 %v1065, 1e-05
      %v1069 = vadd.f32 %v1066, 1e-05
      %v1070 = vadd.f32 %v1067, 1e-05
      %v1071 = vrsqrt.pop %v1068
      %v1072 = vrsqrt.pop %v1069
      %v1073 = vrsqrt.pop %v1070
      %v1074 = vmul.f32 %v1052, %v1071
      %v1075 = vmul.f32 %v1053, %v1072
      %v1076 = vmul.f32 %v1054, %v1073
      %1077 = vmatprep.subr.mxu0 0.0
      %1078 = vmatpush1.xpose.msra.mxu0 0.0
      %1079 = vmatprep.subr.mxu0 0.0
      %1080 = vmatpush1.xpose.msra.mxu0 0.0
      %1081 = vmatprep.subr.mxu0 0.0
      %1082 = vmatpush1.xpose.msra.mxu0 0.0
      %1083 = vmatprep.subr.mxu0 0.0
      %1084 = vmatpush1.xpose.msra.mxu0 0.0
      %1085 = vmatprep.subr.mxu0 0.0
      %1086 = vmatpush1.xpose.msra.mxu0 0.0
      %1087 = vmatprep.subr.mxu0 0.0
      %1088 = vmatpush1.xpose.msra.mxu0 0.0
      %1089 = vmatprep.subr.mxu0 0.0
      %1090 = vmatpush1.xpose.msra.mxu0 0.0
      %1091 = vmatprep.subr.mxu0 0.0
      %1092 = vmatpush1.xpose.msra.mxu0 0.0
      %1093 = vmatprep.subr.mxu0 0.0
      %1094 = vmatpush1.xpose.msra.mxu0 0.0
      %1095 = vmatprep.subr.mxu0 0.0
      %1096 = vmatpush1.xpose.msra.mxu0 0.0
      %1097 = vmatprep.subr.mxu0 0.0
      %1098 = vmatpush1.xpose.msra.mxu0 0.0
      %1099 = vmatprep.subr.mxu0 0.0
      %1100 = vmatpush1.xpose.msra.mxu0 0.0
      %1101 = vmatprep.subr.mxu0 0.0
      %1102 = vmatpush1.xpose.msra.mxu0 0.0
      %1103 = vmatprep.subr.mxu0 0.0
      %1104 = vmatpush1.xpose.msra.mxu0 %v1076
      %1105 = vmatprep.subr.mxu0 0.0
      %1106 = vmatpush1.xpose.msra.mxu0 %v1075
      %1107 = vmatprep.subr.mxu0 0.0
      %1108 = vmatpush1.xpose.msra.mxu0 %v1074
      %1109 = vmatprep.subr.mxu0 0.0
      %1110 = vmatpush2.xpose.msra.mxu0 0.0
      %1111 = vmatprep.subr.mxu0 0.0
      %1112 = vmatpush2.xpose.msra.mxu0 0.0
      %1113 = vmatprep.subr.mxu0 0.0
      %1114 = vmatpush2.xpose.msra.mxu0 0.0
      %1115 = vmatprep.subr.mxu0 0.0
      %1116 = vmatpush2.xpose.msra.mxu0 0.0
      %1117 = vmatprep.subr.mxu0 0.0
      %1118 = vmatpush2.xpose.msra.mxu0 0.0
      %1119 = vmatprep.subr.mxu0 0.0
      %1120 = vmatpush2.xpose.msra.mxu0 0.0
      %1121 = vmatprep.subr.mxu0 0.0
      %1122 = vmatpush2.xpose.msra.mxu0 0.0
      %1123 = vmatprep.subr.mxu0 0.0
      %1124 = vmatpush2.xpose.msra.mxu0 0.0
      %1125 = vmatprep.subr.mxu0 0.0
      %1126 = vmatpush2.xpose.msra.mxu0 0.0
      %1127 = vmatprep.subr.mxu0 0.0
      %1128 = vmatpush2.xpose.msra.mxu0 0.0
      %1129 = vmatprep.subr.mxu0 0.0
      %1130 = vmatpush2.xpose.msra.mxu0 0.0
      %1131 = vmatprep.subr.mxu0 0.0
      %1132 = vmatpush2.xpose.msra.mxu0 0.0
      %1133 = vmatprep.subr.mxu0 0.0
      %1134 = vmatpush2.xpose.msra.mxu0 0.0
      %1135 = vmatprep.subr.mxu0 0.0
      %1136 = vmatpush2.xpose.msra.mxu0 0.0
      %1137 = vmatprep.subr.mxu0 0.0
      %1138 = vmatpush2.xpose.msra.mxu0 0.0
      %1139 = vmatprep.subr.mxu0 0.0
      %1140 = vmatpush2.xpose.msra.mxu0 0.0
      %1141 = vmatprep.mubr.f32.mxu0 0.0
      %1142 = vmatmul.mubr.f32.gmra.mxu0 %v1033
      %v1143 = vpop.f32.mrf.mxu0
      %v1144 = vadd.f32 0.0, %v1143
      %v1145 = vpop.f32.mrf.mxu0
      %1146 = vmatprep.mubr.f32.mxu0 0.0
      %1147 = vmatmul.mubr.f32.gmra.mxu0 %v1034
      %v1148 = vpop.f32.mrf.mxu0
      %v1149 = vadd.f32 0.0, %v1148
      %v1150 = vpop.f32.mrf.mxu0
      %1151 = vmatprep.mubr.f32.mxu0 0.0
      %1152 = vmatmul.mubr.f32.gmra.mxu0 %v1035
      %v1153 = vpop.f32.mrf.mxu0
      %v1154 = vadd.f32 0.0, %v1153
      %v1155 = vpop.f32.mrf.mxu0
      %1156 = vdwg.mxu0
      %v1157 = vmul.f32 %v1144, 0.17677669
      %v1158 = vmul.f32 %v1149, 0.17677669
      %v1159 = vmul.f32 %v1154, 0.17677669
      %v1160 = vsel %vm952, %v1157, -inf
      %1161 = vmax.xlane.f32.xlu0 %v1160
      %v1162 = vpop.xlane.xlu0 %1161
      %v1163 = vsel %vm952, %v1158, -inf
      %1164 = vmax.xlane.f32.xlu0 %v1163
      %v1165 = vpop.xlane.xlu0 %1164
      %v1166 = vsel %vm959, %v1159, -inf
      %1167 = vmax.xlane.f32.xlu0 %v1166
      %v1168 = vpop.xlane.xlu0 %1167
      %v1169 = vsub.f32 %v1157, %v1162
      %v1170 = vsub.f32 %v1158, %v1165
      %v1171 = vsub.f32 %v1159, %v1168
      %v1172 = vmul.f32 %v1169, 1.442695
      %v1173 = vpow.pop %v1172
      %v1174 = vmul.f32 %v1170, 1.442695
      %v1175 = vpow.pop %v1174
      %v1176 = vmul.f32 %v1171, 1.442695
      %v1177 = vpow.pop %v1176
      %v1178 = vsel %vm952, %v1173, 0.0
      %1179 = vadd.xlane.f32.xlu0 %v1178
      %v1180 = vpop.xlane.xlu0 %1179
      %v1181 = vsel %vm952, %v1175, 0.0
      %1182 = vadd.xlane.f32.xlu0 %v1181
      %v1183 = vpop.xlane.xlu0 %1182
      %v1184 = vsel %vm959, %v1177, 0.0
      %1185 = vadd.xlane.f32.xlu0 %v1184
      %v1186 = vpop.xlane.xlu0 %1185
      %v1187 = vrcp.pop %v1180
      %v1188 = vrcp.pop %v1183
      %v1189 = vrcp.pop %v1186
      %v1190 = vmul.f32 %v1173, %v1187
      %v1191 = vmul.f32 %v1175, %v1188
      %v1192 = vmul.f32 %v1177, %v1189
      %v1193 = vmul.f32 %v767, %v994
      %v1194 = vmul.f32 %v770, %v994
      %v1195 = vmul.f32 %v775, %v994
      %v1197 = vsel %vm952, %v1190, 0
      %v1200 = vsel %vm952, %v1191, 0
      %v1203 = vsel %vm952, %v1192, 0
      %v1206 = vsel %vm451, %v1195, 0
      %1208 = vmatprep.subr.mxu0 0.0
      %1209 = vmatpush1.msra.mxu0 0.0
      %1210 = vmatprep.subr.mxu0 0.0
      %1211 = vmatpush1.msra.mxu0 0.0
      %1212 = vmatprep.subr.mxu0 0.0
      %1213 = vmatpush1.msra.mxu0 0.0
      %1214 = vmatprep.subr.mxu0 0.0
      %1215 = vmatpush1.msra.mxu0 0.0
      %1216 = vmatprep.subr.mxu0 0.0
      %1217 = vmatpush1.msra.mxu0 0.0
      %1218 = vmatprep.subr.mxu0 0.0
      %1219 = vmatpush1.msra.mxu0 0.0
      %1220 = vmatprep.subr.mxu0 0.0
      %1221 = vmatpush1.msra.mxu0 0.0
      %1222 = vmatprep.subr.mxu0 0.0
      %1223 = vmatpush1.msra.mxu0 0.0
      %1224 = vmatprep.subr.mxu0 0.0
      %1225 = vmatpush1.msra.mxu0 0.0
      %1226 = vmatprep.subr.mxu0 0.0
      %1227 = vmatpush1.msra.mxu0 0.0
      %1228 = vmatprep.subr.mxu0 0.0
      %1229 = vmatpush1.msra.mxu0 0.0
      %1230 = vmatprep.subr.mxu0 0.0
      %1231 = vmatpush1.msra.mxu0 0.0
      %1232 = vmatprep.subr.mxu0 0.0
      %1233 = vmatpush1.msra.mxu0 0.0
      %1234 = vmatprep.subr.mxu0 0.0
      %1235 = vmatpush1.msra.mxu0 %v1206
      %1236 = vmatprep.subr.mxu0 0.0
      %1237 = vmatpush1.msra.mxu0 %v1194
      %1238 = vmatprep.subr.mxu0 0.0
      %1239 = vmatpush1.msra.mxu0 %v1193
      %1240 = vmatprep.subr.mxu0 0.0
      %1241 = vmatpush2.msra.mxu0 0.0
      %1242 = vmatprep.subr.mxu0 0.0
      %1243 = vmatpush2.msra.mxu0 0.0
      %1244 = vmatprep.subr.mxu0 0.0
      %1245 = vmatpush2.msra.mxu0 0.0
      %1246 = vmatprep.subr.mxu0 0.0
      %1247 = vmatpush2.msra.mxu0 0.0
      %1248 = vmatprep.subr.mxu0 0.0
      %1249 = vmatpush2.msra.mxu0 0.0
      %1250 = vmatprep.subr.mxu0 0.0
      %1251 = vmatpush2.msra.mxu0 0.0
      %1252 = vmatprep.subr.mxu0 0.0
      %1253 = vmatpush2.msra.mxu0 0.0
      %1254 = vmatprep.subr.mxu0 0.0
      %1255 = vmatpush2.msra.mxu0 0.0
      %1256 = vmatprep.subr.mxu0 0.0
      %1257 = vmatpush2.msra.mxu0 0.0
      %1258 = vmatprep.subr.mxu0 0.0
      %1259 = vmatpush2.msra.mxu0 0.0
      %1260 = vmatprep.subr.mxu0 0.0
      %1261 = vmatpush2.msra.mxu0 0.0
      %1262 = vmatprep.subr.mxu0 0.0
      %1263 = vmatpush2.msra.mxu0 0.0
      %1264 = vmatprep.subr.mxu0 0.0
      %1265 = vmatpush2.msra.mxu0 0.0
      %1266 = vmatprep.subr.mxu0 0.0
      %1267 = vmatpush2.msra.mxu0 0.0
      %1268 = vmatprep.subr.mxu0 0.0
      %1269 = vmatpush2.msra.mxu0 0.0
      %1270 = vmatprep.subr.mxu0 0.0
      %1271 = vmatpush2.msra.mxu0 0.0
      %1272 = vmatprep.mubr.f32.mxu0 0.0
      %1273 = vmatmul.mubr.f32.gmra.mxu0 %v1197
      %v1274 = vpop.f32.mrf.mxu0
      %v1275 = vadd.f32 0.0, %v1274
      %v1276 = vpop.f32.mrf.mxu0
      %1277 = vmatprep.mubr.f32.mxu0 0.0
      %1278 = vmatmul.mubr.f32.gmra.mxu0 %v1200
      %v1279 = vpop.f32.mrf.mxu0
      %v1280 = vadd.f32 0.0, %v1279
      %v1281 = vpop.f32.mrf.mxu0
      %1282 = vmatprep.mubr.f32.mxu0 0.0
      %1283 = vmatmul.mubr.f32.gmra.mxu0 %v1203
      %v1284 = vpop.f32.mrf.mxu0
      %v1285 = vadd.f32 0.0, %v1284
      %v1286 = vpop.f32.mrf.mxu0
      %1287 = vdwg.mxu0
      %v1289 = vsel %vm952, %v984, 0
      %v1292 = vsel %vm952, %v985, 0
      %v1295 = vsel %vm952, %v986, 0
      %v1298 = vsel %vm451, %v989, 0
      %1300 = vmatprep.subr.mxu0 0.0
      %1301 = vmatpush1.msra.mxu0 0.0
      %1302 = vmatprep.subr.mxu0 0.0
      %1303 = vmatpush1.msra.mxu0 0.0
      %1304 = vmatprep.subr.mxu0 0.0
      %1305 = vmatpush1.msra.mxu0 0.0
      %1306 = vmatprep.subr.mxu0 0.0
      %1307 = vmatpush1.msra.mxu0 0.0
      %1308 = vmatprep.subr.mxu0 0.0
      %1309 = vmatpush1.msra.mxu0 0.0
      %1310 = vmatprep.subr.mxu0 0.0
      %1311 = vmatpush1.msra.mxu0 0.0
      %1312 = vmatprep.subr.mxu0 0.0
      %1313 = vmatpush1.msra.mxu0 0.0
      %1314 = vmatprep.subr.mxu0 0.0
      %1315 = vmatpush1.msra.mxu0 0.0
      %1316 = vmatprep.subr.mxu0 0.0
      %1317 = vmatpush1.msra.mxu0 0.0
      %1318 = vmatprep.subr.mxu0 0.0
      %1319 = vmatpush1.msra.mxu0 0.0
      %1320 = vmatprep.subr.mxu0 0.0
      %1321 = vmatpush1.msra.mxu0 0.0
      %1322 = vmatprep.subr.mxu0 0.0
      %1323 = vmatpush1.msra.mxu0 0.0
      %1324 = vmatprep.subr.mxu0 0.0
      %1325 = vmatpush1.msra.mxu0 0.0
      %1326 = vmatprep.subr.mxu0 0.0
      %1327 = vmatpush1.msra.mxu0 %v1298
      %1328 = vmatprep.subr.mxu0 0.0
      %1329 = vmatpush1.msra.mxu0 %v988
      %1330 = vmatprep.subr.mxu0 0.0
      %1331 = vmatpush1.msra.mxu0 %v987
      %1332 = vmatprep.subr.mxu0 0.0
      %1333 = vmatpush2.msra.mxu0 0.0
      %1334 = vmatprep.subr.mxu0 0.0
      %1335 = vmatpush2.msra.mxu0 0.0
      %1336 = vmatprep.subr.mxu0 0.0
      %1337 = vmatpush2.msra.mxu0 0.0
      %1338 = vmatprep.subr.mxu0 0.0
      %1339 = vmatpush2.msra.mxu0 0.0
      %1340 = vmatprep.subr.mxu0 0.0
      %1341 = vmatpush2.msra.mxu0 0.0
      %1342 = vmatprep.subr.mxu0 0.0
      %1343 = vmatpush2.msra.mxu0 0.0
      %1344 = vmatprep.subr.mxu0 0.0
      %1345 = vmatpush2.msra.mxu0 0.0
      %1346 = vmatprep.subr.mxu0 0.0
      %1347 = vmatpush2.msra.mxu0 0.0
      %1348 = vmatprep.subr.mxu0 0.0
      %1349 = vmatpush2.msra.mxu0 0.0
      %1350 = vmatprep.subr.mxu0 0.0
      %1351 = vmatpush2.msra.mxu0 0.0
      %1352 = vmatprep.subr.mxu0 0.0
      %1353 = vmatpush2.msra.mxu0 0.0
      %1354 = vmatprep.subr.mxu0 0.0
      %1355 = vmatpush2.msra.mxu0 0.0
      %1356 = vmatprep.subr.mxu0 0.0
      %1357 = vmatpush2.msra.mxu0 0.0
      %1358 = vmatprep.subr.mxu0 0.0
      %1359 = vmatpush2.msra.mxu0 0.0
      %1360 = vmatprep.subr.mxu0 0.0
      %1361 = vmatpush2.msra.mxu0 0.0
      %1362 = vmatprep.subr.mxu0 0.0
      %1363 = vmatpush2.msra.mxu0 0.0
      %1364 = vmatprep.mubr.f32.mxu0 0.0
      %1365 = vmatmul.mubr.f32.gmra.mxu0 %v1289
      %v1366 = vpop.f32.mrf.mxu0
      %v1367 = vadd.f32 %v1275, %v1366
      %v1368 = vpop.f32.mrf.mxu0
      %1369 = vmatprep.mubr.f32.mxu0 0.0
      %1370 = vmatmul.mubr.f32.gmra.mxu0 %v1292
      %v1371 = vpop.f32.mrf.mxu0
      %v1372 = vadd.f32 %v1280, %v1371
      %v1373 = vpop.f32.mrf.mxu0
      %1374 = vmatprep.mubr.f32.mxu0 0.0
      %1375 = vmatmul.mubr.f32.gmra.mxu0 %v1295
      %v1376 = vpop.f32.mrf.mxu0
      %v1377 = vadd.f32 %v1285, %v1376
      %v1378 = vpop.f32.mrf.mxu0
      %1379 = vdwg.mxu0
      %vm1380 = vcmp.ge.s32.totalorder %v781, 64
      %vm1381 = vcmp.lt.s32.totalorder %v781, 96
      %vm1382 = vmand %vm1380, %vm1381
      %v1383 = vsel %vm1382, 1, 0
      %v1384 = vcvt.s32.f32 %v1383
      %v1385 = vmul.f32 %v716, %v1384
      %v1386 = vmul.f32 %v720, %v1384
      %v1387 = vmul.f32 %v726, %v1384
      %1388 = vadd.xlane.f32.xlu0 %v1385
      %v1389 = vpop.xlane.xlu0 %1388
      %1390 = vadd.xlane.f32.xlu0 %v1386
      %v1391 = vpop.xlane.xlu0 %1390
      %v1392 = vsel %vm451, %v1387, 0.0
      %1393 = vadd.xlane.f32.xlu0 %v1392
      %v1394 = vpop.xlane.xlu0 %1393
      %v1395 = vmul.f32 %v1389, 0.03125
      %v1396 = vmul.f32 %v1391, 0.03125
      %v1397 = vmul.f32 %v1394, 0.03125
      %v1398 = vsub.f32 %v716, %v1395
      %v1399 = vsub.f32 %v720, %v1396
      %v1400 = vsub.f32 %v726, %v1397
      %v1401 = vmul.f32 %v1398, %v1384
      %v1402 = vmul.f32 %v1399, %v1384
      %v1403 = vmul.f32 %v1400, %v1384
      %v1404 = vmul.f32 %v1401, %v1401
      %v1405 = vmul.f32 %v1402, %v1402
      %v1406 = vmul.f32 %v1403, %v1403
      %1407 = vadd.xlane.f32.xlu0 %v1404
      %v1408 = vpop.xlane.xlu0 %1407
      %1409 = vadd.xlane.f32.xlu0 %v1405
      %v1410 = vpop.xlane.xlu0 %1409
      %v1411 = vsel %vm451, %v1406, 0.0
      %1412 = vadd.xlane.f32.xlu0 %v1411
      %v1413 = vpop.xlane.xlu0 %1412
      %v1414 = vmul.f32 %v1408, 0.03125
      %v1415 = vmul.f32 %v1410, 0.03125
      %v1416 = vmul.f32 %v1413, 0.03125
      %v1417 = vadd.f32 %v1414, 1e-05
      %v1418 = vadd.f32 %v1415, 1e-05
      %v1419 = vadd.f32 %v1416, 1e-05
      %v1420 = vrsqrt.pop %v1417
      %v1421 = vrsqrt.pop %v1418
      %v1422 = vrsqrt.pop %v1419
      %v1423 = vmul.f32 %v1401, %v1420
      %v1424 = vmul.f32 %v1402, %v1421
      %v1425 = vmul.f32 %v1403, %v1422
      %v1426 = vmul.f32 %v718, %v1384
      %v1427 = vmul.f32 %v722, %v1384
      %v1428 = vmul.f32 %v728, %v1384
      %1429 = vadd.xlane.f32.xlu0 %v1426
      %v1430 = vpop.xlane.xlu0 %1429
      %1431 = vadd.xlane.f32.xlu0 %v1427
      %v1432 = vpop.xlane.xlu0 %1431
      %v1433 = vsel %vm451, %v1428, 0.0
      %1434 = vadd.xlane.f32.xlu0 %v1433
      %v1435 = vpop.xlane.xlu0 %1434
      %v1436 = vmul.f32 %v1430, 0.03125
      %v1437 = vmul.f32 %v1432, 0.03125
      %v1438 = vmul.f32 %v1435, 0.03125
      %v1439 = vsub.f32 %v718, %v1436
      %v1440 = vsub.f32 %v722, %v1437
      %v1441 = vsub.f32 %v728, %v1438
      %v1442 = vmul.f32 %v1439, %v1384
      %v1443 = vmul.f32 %v1440, %v1384
      %v1444 = vmul.f32 %v1441, %v1384
      %v1445 = vmul.f32 %v1442, %v1442
      %v1446 = vmul.f32 %v1443, %v1443
      %v1447 = vmul.f32 %v1444, %v1444
      %1448 = vadd.xlane.f32.xlu0 %v1445
      %v1449 = vpop.xlane.xlu0 %1448
      %1450 = vadd.xlane.f32.xlu0 %v1446
      %v1451 = vpop.xlane.xlu0 %1450
      %v1452 = vsel %vm451, %v1447, 0.0
      %1453 = vadd.xlane.f32.xlu0 %v1452
      %v1454 = vpop.xlane.xlu0 %1453
      %v1455 = vmul.f32 %v1449, 0.03125
      %v1456 = vmul.f32 %v1451, 0.03125
      %v1457 = vmul.f32 %v1454, 0.03125
      %v1458 = vadd.f32 %v1455, 1e-05
      %v1459 = vadd.f32 %v1456, 1e-05
      %v1460 = vadd.f32 %v1457, 1e-05
      %v1461 = vrsqrt.pop %v1458
      %v1462 = vrsqrt.pop %v1459
      %v1463 = vrsqrt.pop %v1460
      %v1464 = vmul.f32 %v1442, %v1461
      %v1465 = vmul.f32 %v1443, %v1462
      %v1466 = vmul.f32 %v1444, %v1463
      %1467 = vmatprep.subr.mxu0 0.0
      %1468 = vmatpush1.xpose.msra.mxu0 0.0
      %1469 = vmatprep.subr.mxu0 0.0
      %1470 = vmatpush1.xpose.msra.mxu0 0.0
      %1471 = vmatprep.subr.mxu0 0.0
      %1472 = vmatpush1.xpose.msra.mxu0 0.0
      %1473 = vmatprep.subr.mxu0 0.0
      %1474 = vmatpush1.xpose.msra.mxu0 0.0
      %1475 = vmatprep.subr.mxu0 0.0
      %1476 = vmatpush1.xpose.msra.mxu0 0.0
      %1477 = vmatprep.subr.mxu0 0.0
      %1478 = vmatpush1.xpose.msra.mxu0 0.0
      %1479 = vmatprep.subr.mxu0 0.0
      %1480 = vmatpush1.xpose.msra.mxu0 0.0
      %1481 = vmatprep.subr.mxu0 0.0
      %1482 = vmatpush1.xpose.msra.mxu0 0.0
      %1483 = vmatprep.subr.mxu0 0.0
      %1484 = vmatpush1.xpose.msra.mxu0 0.0
      %1485 = vmatprep.subr.mxu0 0.0
      %1486 = vmatpush1.xpose.msra.mxu0 0.0
      %1487 = vmatprep.subr.mxu0 0.0
      %1488 = vmatpush1.xpose.msra.mxu0 0.0
      %1489 = vmatprep.subr.mxu0 0.0
      %1490 = vmatpush1.xpose.msra.mxu0 0.0
      %1491 = vmatprep.subr.mxu0 0.0
      %1492 = vmatpush1.xpose.msra.mxu0 0.0
      %1493 = vmatprep.subr.mxu0 0.0
      %1494 = vmatpush1.xpose.msra.mxu0 %v1466
      %1495 = vmatprep.subr.mxu0 0.0
      %1496 = vmatpush1.xpose.msra.mxu0 %v1465
      %1497 = vmatprep.subr.mxu0 0.0
      %1498 = vmatpush1.xpose.msra.mxu0 %v1464
      %1499 = vmatprep.subr.mxu0 0.0
      %1500 = vmatpush2.xpose.msra.mxu0 0.0
      %1501 = vmatprep.subr.mxu0 0.0
      %1502 = vmatpush2.xpose.msra.mxu0 0.0
      %1503 = vmatprep.subr.mxu0 0.0
      %1504 = vmatpush2.xpose.msra.mxu0 0.0
      %1505 = vmatprep.subr.mxu0 0.0
      %1506 = vmatpush2.xpose.msra.mxu0 0.0
      %1507 = vmatprep.subr.mxu0 0.0
      %1508 = vmatpush2.xpose.msra.mxu0 0.0
      %1509 = vmatprep.subr.mxu0 0.0
      %1510 = vmatpush2.xpose.msra.mxu0 0.0
      %1511 = vmatprep.subr.mxu0 0.0
      %1512 = vmatpush2.xpose.msra.mxu0 0.0
      %1513 = vmatprep.subr.mxu0 0.0
      %1514 = vmatpush2.xpose.msra.mxu0 0.0
      %1515 = vmatprep.subr.mxu0 0.0
      %1516 = vmatpush2.xpose.msra.mxu0 0.0
      %1517 = vmatprep.subr.mxu0 0.0
      %1518 = vmatpush2.xpose.msra.mxu0 0.0
      %1519 = vmatprep.subr.mxu0 0.0
      %1520 = vmatpush2.xpose.msra.mxu0 0.0
      %1521 = vmatprep.subr.mxu0 0.0
      %1522 = vmatpush2.xpose.msra.mxu0 0.0
      %1523 = vmatprep.subr.mxu0 0.0
      %1524 = vmatpush2.xpose.msra.mxu0 0.0
      %1525 = vmatprep.subr.mxu0 0.0
      %1526 = vmatpush2.xpose.msra.mxu0 0.0
      %1527 = vmatprep.subr.mxu0 0.0
      %1528 = vmatpush2.xpose.msra.mxu0 0.0
      %1529 = vmatprep.subr.mxu0 0.0
      %1530 = vmatpush2.xpose.msra.mxu0 0.0
      %1531 = vmatprep.mubr.f32.mxu0 0.0
      %1532 = vmatmul.mubr.f32.gmra.mxu0 %v1423
      %v1533 = vpop.f32.mrf.mxu0
      %v1534 = vadd.f32 0.0, %v1533
      %v1535 = vpop.f32.mrf.mxu0
      %1536 = vmatprep.mubr.f32.mxu0 0.0
      %1537 = vmatmul.mubr.f32.gmra.mxu0 %v1424
      %v1538 = vpop.f32.mrf.mxu0
      %v1539 = vadd.f32 0.0, %v1538
      %v1540 = vpop.f32.mrf.mxu0
      %1541 = vmatprep.mubr.f32.mxu0 0.0
      %1542 = vmatmul.mubr.f32.gmra.mxu0 %v1425
      %v1543 = vpop.f32.mrf.mxu0
      %v1544 = vadd.f32 0.0, %v1543
      %v1545 = vpop.f32.mrf.mxu0
      %1546 = vdwg.mxu0
      %v1547 = vmul.f32 %v1534, 0.17677669
      %v1548 = vmul.f32 %v1539, 0.17677669
      %v1549 = vmul.f32 %v1544, 0.17677669
      %v1550 = vsel %vm952, %v1547, -inf
      %1551 = vmax.xlane.f32.xlu0 %v1550
      %v1552 = vpop.xlane.xlu0 %1551
      %v1553 = vsel %vm952, %v1548, -inf
      %1554 = vmax.xlane.f32.xlu0 %v1553
      %v1555 = vpop.xlane.xlu0 %1554
      %v1556 = vsel %vm959, %v1549, -inf
      %1557 = vmax.xlane.f32.xlu0 %v1556
      %v1558 = vpop.xlane.xlu0 %1557
      %v1559 = vsub.f32 %v1547, %v1552
      %v1560 = vsub.f32 %v1548, %v1555
      %v1561 = vsub.f32 %v1549, %v1558
      %v1562 = vmul.f32 %v1559, 1.442695
      %v1563 = vpow.pop %v1562
      %v1564 = vmul.f32 %v1560, 1.442695
      %v1565 = vpow.pop %v1564
      %v1566 = vmul.f32 %v1561, 1.442695
      %v1567 = vpow.pop %v1566
      %v1568 = vsel %vm952, %v1563, 0.0
      %1569 = vadd.xlane.f32.xlu0 %v1568
      %v1570 = vpop.xlane.xlu0 %1569
      %v1571 = vsel %vm952, %v1565, 0.0
      %1572 = vadd.xlane.f32.xlu0 %v1571
      %v1573 = vpop.xlane.xlu0 %1572
      %v1574 = vsel %vm959, %v1567, 0.0
      %1575 = vadd.xlane.f32.xlu0 %v1574
      %v1576 = vpop.xlane.xlu0 %1575
      %v1577 = vrcp.pop %v1570
      %v1578 = vrcp.pop %v1573
      %v1579 = vrcp.pop %v1576
      %v1580 = vmul.f32 %v1563, %v1577
      %v1581 = vmul.f32 %v1565, %v1578
      %v1582 = vmul.f32 %v1567, %v1579
      %v1583 = vmul.f32 %v767, %v1384
      %v1584 = vmul.f32 %v770, %v1384
      %v1585 = vmul.f32 %v775, %v1384
      %v1587 = vsel %vm952, %v1580, 0
      %v1590 = vsel %vm952, %v1581, 0
      %v1593 = vsel %vm952, %v1582, 0
      %v1596 = vsel %vm451, %v1585, 0
      %1598 = vmatprep.subr.mxu0 0.0
      %1599 = vmatpush1.msra.mxu0 0.0
      %1600 = vmatprep.subr.mxu0 0.0
      %1601 = vmatpush1.msra.mxu0 0.0
      %1602 = vmatprep.subr.mxu0 0.0
      %1603 = vmatpush1.msra.mxu0 0.0
      %1604 = vmatprep.subr.mxu0 0.0
      %1605 = vmatpush1.msra.mxu0 0.0
      %1606 = vmatprep.subr.mxu0 0.0
      %1607 = vmatpush1.msra.mxu0 0.0
      %1608 = vmatprep.subr.mxu0 0.0
      %1609 = vmatpush1.msra.mxu0 0.0
      %1610 = vmatprep.subr.mxu0 0.0
      %1611 = vmatpush1.msra.mxu0 0.0
      %1612 = vmatprep.subr.mxu0 0.0
      %1613 = vmatpush1.msra.mxu0 0.0
      %1614 = vmatprep.subr.mxu0 0.0
      %1615 = vmatpush1.msra.mxu0 0.0
      %1616 = vmatprep.subr.mxu0 0.0
      %1617 = vmatpush1.msra.mxu0 0.0
      %1618 = vmatprep.subr.mxu0 0.0
      %1619 = vmatpush1.msra.mxu0 0.0
      %1620 = vmatprep.subr.mxu0 0.0
      %1621 = vmatpush1.msra.mxu0 0.0
      %1622 = vmatprep.subr.mxu0 0.0
      %1623 = vmatpush1.msra.mxu0 0.0
      %1624 = vmatprep.subr.mxu0 0.0
      %1625 = vmatpush1.msra.mxu0 %v1596
      %1626 = vmatprep.subr.mxu0 0.0
      %1627 = vmatpush1.msra.mxu0 %v1584
      %1628 = vmatprep.subr.mxu0 0.0
      %1629 = vmatpush1.msra.mxu0 %v1583
      %1630 = vmatprep.subr.mxu0 0.0
      %1631 = vmatpush2.msra.mxu0 0.0
      %1632 = vmatprep.subr.mxu0 0.0
      %1633 = vmatpush2.msra.mxu0 0.0
      %1634 = vmatprep.subr.mxu0 0.0
      %1635 = vmatpush2.msra.mxu0 0.0
      %1636 = vmatprep.subr.mxu0 0.0
      %1637 = vmatpush2.msra.mxu0 0.0
      %1638 = vmatprep.subr.mxu0 0.0
      %1639 = vmatpush2.msra.mxu0 0.0
      %1640 = vmatprep.subr.mxu0 0.0
      %1641 = vmatpush2.msra.mxu0 0.0
      %1642 = vmatprep.subr.mxu0 0.0
      %1643 = vmatpush2.msra.mxu0 0.0
      %1644 = vmatprep.subr.mxu0 0.0
      %1645 = vmatpush2.msra.mxu0 0.0
      %1646 = vmatprep.subr.mxu0 0.0
      %1647 = vmatpush2.msra.mxu0 0.0
      %1648 = vmatprep.subr.mxu0 0.0
      %1649 = vmatpush2.msra.mxu0 0.0
      %1650 = vmatprep.subr.mxu0 0.0
      %1651 = vmatpush2.msra.mxu0 0.0
      %1652 = vmatprep.subr.mxu0 0.0
      %1653 = vmatpush2.msra.mxu0 0.0
      %1654 = vmatprep.subr.mxu0 0.0
      %1655 = vmatpush2.msra.mxu0 0.0
      %1656 = vmatprep.subr.mxu0 0.0
      %1657 = vmatpush2.msra.mxu0 0.0
      %1658 = vmatprep.subr.mxu0 0.0
      %1659 = vmatpush2.msra.mxu0 0.0
      %1660 = vmatprep.subr.mxu0 0.0
      %1661 = vmatpush2.msra.mxu0 0.0
      %1662 = vmatprep.mubr.f32.mxu0 0.0
      %1663 = vmatmul.mubr.f32.gmra.mxu0 %v1587
      %v1664 = vpop.f32.mrf.mxu0
      %v1665 = vadd.f32 0.0, %v1664
      %v1666 = vpop.f32.mrf.mxu0
      %1667 = vmatprep.mubr.f32.mxu0 0.0
      %1668 = vmatmul.mubr.f32.gmra.mxu0 %v1590
      %v1669 = vpop.f32.mrf.mxu0
      %v1670 = vadd.f32 0.0, %v1669
      %v1671 = vpop.f32.mrf.mxu0
      %1672 = vmatprep.mubr.f32.mxu0 0.0
      %1673 = vmatmul.mubr.f32.gmra.mxu0 %v1593
      %v1674 = vpop.f32.mrf.mxu0
      %v1675 = vadd.f32 0.0, %v1674
      %v1676 = vpop.f32.mrf.mxu0
      %1677 = vdwg.mxu0
      %v1678 = vadd.f32 %v1367, %v1665
      %v1679 = vadd.f32 %v1372, %v1670
      %v1680 = vadd.f32 %v1377, %v1675
      %vm1681 = vcmp.ge.s32.totalorder %v781, 96
      %vm1682 = vcmp.lt.s32.totalorder %v781, 128
      %vm1683 = vmand %vm1681, %vm1682
      %v1684 = vsel %vm1683, 1, 0
      %v1685 = vcvt.s32.f32 %v1684
      %v1686 = vmul.f32 %v716, %v1685
      %v1687 = vmul.f32 %v720, %v1685
      %v1688 = vmul.f32 %v726, %v1685
      %1689 = vadd.xlane.f32.xlu0 %v1686
      %v1690 = vpop.xlane.xlu0 %1689
      %1691 = vadd.xlane.f32.xlu0 %v1687
      %v1692 = vpop.xlane.xlu0 %1691
      %v1693 = vsel %vm451, %v1688, 0.0
      %1694 = vadd.xlane.f32.xlu0 %v1693
      %v1695 = vpop.xlane.xlu0 %1694
      %v1696 = vmul.f32 %v1690, 0.03125
      %v1697 = vmul.f32 %v1692, 0.03125
      %v1698 = vmul.f32 %v1695, 0.03125
      %v1699 = vsub.f32 %v716, %v1696
      %v1700 = vsub.f32 %v720, %v1697
      %v1701 = vsub.f32 %v726, %v1698
      %v1702 = vmul.f32 %v1699, %v1685
      %v1703 = vmul.f32 %v1700, %v1685
      %v1704 = vmul.f32 %v1701, %v1685
      %v1705 = vmul.f32 %v1702, %v1702
      %v1706 = vmul.f32 %v1703, %v1703
      %v1707 = vmul.f32 %v1704, %v1704
      %1708 = vadd.xlane.f32.xlu0 %v1705
      %v1709 = vpop.xlane.xlu0 %1708
      %1710 = vadd.xlane.f32.xlu0 %v1706
      %v1711 = vpop.xlane.xlu0 %1710
      %v1712 = vsel %vm451, %v1707, 0.0
      %1713 = vadd.xlane.f32.xlu0 %v1712
      %v1714 = vpop.xlane.xlu0 %1713
      %v1715 = vmul.f32 %v1709, 0.03125
      %v1716 = vmul.f32 %v1711, 0.03125
      %v1717 = vmul.f32 %v1714, 0.03125
      %v1718 = vadd.f32 %v1715, 1e-05
      %v1719 = vadd.f32 %v1716, 1e-05
      %v1720 = vadd.f32 %v1717, 1e-05
      %v1721 = vrsqrt.pop %v1718
      %v1722 = vrsqrt.pop %v1719
      %v1723 = vrsqrt.pop %v1720
      %v1724 = vmul.f32 %v1702, %v1721
      %v1725 = vmul.f32 %v1703, %v1722
      %v1726 = vmul.f32 %v1704, %v1723
      %v1727 = vmul.f32 %v718, %v1685
      %v1728 = vmul.f32 %v722, %v1685
      %v1729 = vmul.f32 %v728, %v1685
      %1730 = vadd.xlane.f32.xlu0 %v1727
      %v1731 = vpop.xlane.xlu0 %1730
      %1732 = vadd.xlane.f32.xlu0 %v1728
      %v1733 = vpop.xlane.xlu0 %1732
      %v1734 = vsel %vm451, %v1729, 0.0
      %1735 = vadd.xlane.f32.xlu0 %v1734
      %v1736 = vpop.xlane.xlu0 %1735
      %v1737 = vmul.f32 %v1731, 0.03125
      %v1738 = vmul.f32 %v1733, 0.03125
      %v1739 = vmul.f32 %v1736, 0.03125
      %v1740 = vsub.f32 %v718, %v1737
      %v1741 = vsub.f32 %v722, %v1738
      %v1742 = vsub.f32 %v728, %v1739
      %v1743 = vmul.f32 %v1740, %v1685
      %v1744 = vmul.f32 %v1741, %v1685
      %v1745 = vmul.f32 %v1742, %v1685
      %v1746 = vmul.f32 %v1743, %v1743
      %v1747 = vmul.f32 %v1744, %v1744
      %v1748 = vmul.f32 %v1745, %v1745
      %1749 = vadd.xlane.f32.xlu0 %v1746
      %v1750 = vpop.xlane.xlu0 %1749
      %1751 = vadd.xlane.f32.xlu0 %v1747
      %v1752 = vpop.xlane.xlu0 %1751
      %v1753 = vsel %vm451, %v1748, 0.0
      %1754 = vadd.xlane.f32.xlu0 %v1753
      %v1755 = vpop.xlane.xlu0 %1754
      %v1756 = vmul.f32 %v1750, 0.03125
      %v1757 = vmul.f32 %v1752, 0.03125
      %v1758 = vmul.f32 %v1755, 0.03125
      %v1759 = vadd.f32 %v1756, 1e-05
      %v1760 = vadd.f32 %v1757, 1e-05
      %v1761 = vadd.f32 %v1758, 1e-05
      %v1762 = vrsqrt.pop %v1759
      %v1763 = vrsqrt.pop %v1760
      %v1764 = vrsqrt.pop %v1761
      %v1765 = vmul.f32 %v1743, %v1762
      %v1766 = vmul.f32 %v1744, %v1763
      %v1767 = vmul.f32 %v1745, %v1764
      %1768 = vmatprep.subr.mxu0 0.0
      %1769 = vmatpush1.xpose.msra.mxu0 0.0
      %1770 = vmatprep.subr.mxu0 0.0
      %1771 = vmatpush1.xpose.msra.mxu0 0.0
      %1772 = vmatprep.subr.mxu0 0.0
      %1773 = vmatpush1.xpose.msra.mxu0 0.0
      %1774 = vmatprep.subr.mxu0 0.0
      %1775 = vmatpush1.xpose.msra.mxu0 0.0
      %1776 = vmatprep.subr.mxu0 0.0
      %1777 = vmatpush1.xpose.msra.mxu0 0.0
      %1778 = vmatprep.subr.mxu0 0.0
      %1779 = vmatpush1.xpose.msra.mxu0 0.0
      %1780 = vmatprep.subr.mxu0 0.0
      %1781 = vmatpush1.xpose.msra.mxu0 0.0
      %1782 = vmatprep.subr.mxu0 0.0
      %1783 = vmatpush1.xpose.msra.mxu0 0.0
      %1784 = vmatprep.subr.mxu0 0.0
      %1785 = vmatpush1.xpose.msra.mxu0 0.0
      %1786 = vmatprep.subr.mxu0 0.0
      %1787 = vmatpush1.xpose.msra.mxu0 0.0
      %1788 = vmatprep.subr.mxu0 0.0
      %1789 = vmatpush1.xpose.msra.mxu0 0.0
      %1790 = vmatprep.subr.mxu0 0.0
      %1791 = vmatpush1.xpose.msra.mxu0 0.0
      %1792 = vmatprep.subr.mxu0 0.0
      %1793 = vmatpush1.xpose.msra.mxu0 0.0
      %1794 = vmatprep.subr.mxu0 0.0
      %1795 = vmatpush1.xpose.msra.mxu0 %v1767
      %1796 = vmatprep.subr.mxu0 0.0
      %1797 = vmatpush1.xpose.msra.mxu0 %v1766
      %1798 = vmatprep.subr.mxu0 0.0
      %1799 = vmatpush1.xpose.msra.mxu0 %v1765
      %1800 = vmatprep.subr.mxu0 0.0
      %1801 = vmatpush2.xpose.msra.mxu0 0.0
      %1802 = vmatprep.subr.mxu0 0.0
      %1803 = vmatpush2.xpose.msra.mxu0 0.0
      %1804 = vmatprep.subr.mxu0 0.0
      %1805 = vmatpush2.xpose.msra.mxu0 0.0
      %1806 = vmatprep.subr.mxu0 0.0
      %1807 = vmatpush2.xpose.msra.mxu0 0.0
      %1808 = vmatprep.subr.mxu0 0.0
      %1809 = vmatpush2.xpose.msra.mxu0 0.0
      %1810 = vmatprep.subr.mxu0 0.0
      %1811 = vmatpush2.xpose.msra.mxu0 0.0
      %1812 = vmatprep.subr.mxu0 0.0
      %1813 = vmatpush2.xpose.msra.mxu0 0.0
      %1814 = vmatprep.subr.mxu0 0.0
      %1815 = vmatpush2.xpose.msra.mxu0 0.0
      %1816 = vmatprep.subr.mxu0 0.0
      %1817 = vmatpush2.xpose.msra.mxu0 0.0
      %1818 = vmatprep.subr.mxu0 0.0
      %1819 = vmatpush2.xpose.msra.mxu0 0.0
      %1820 = vmatprep.subr.mxu0 0.0
      %1821 = vmatpush2.xpose.msra.mxu0 0.0
      %1822 = vmatprep.subr.mxu0 0.0
      %1823 = vmatpush2.xpose.msra.mxu0 0.0
      %1824 = vmatprep.subr.mxu0 0.0
      %1825 = vmatpush2.xpose.msra.mxu0 0.0
      %1826 = vmatprep.subr.mxu0 0.0
      %1827 = vmatpush2.xpose.msra.mxu0 0.0
      %1828 = vmatprep.subr.mxu0 0.0
      %1829 = vmatpush2.xpose.msra.mxu0 0.0
      %1830 = vmatprep.subr.mxu0 0.0
      %1831 = vmatpush2.xpose.msra.mxu0 0.0
      %1832 = vmatprep.mubr.f32.mxu0 0.0
      %1833 = vmatmul.mubr.f32.gmra.mxu0 %v1724
      %v1834 = vpop.f32.mrf.mxu0
      %v1835 = vadd.f32 0.0, %v1834
      %v1836 = vpop.f32.mrf.mxu0
      %1837 = vmatprep.mubr.f32.mxu0 0.0
      %1838 = vmatmul.mubr.f32.gmra.mxu0 %v1725
      %v1839 = vpop.f32.mrf.mxu0
      %v1840 = vadd.f32 0.0, %v1839
      %v1841 = vpop.f32.mrf.mxu0
      %1842 = vmatprep.mubr.f32.mxu0 0.0
      %1843 = vmatmul.mubr.f32.gmra.mxu0 %v1726
      %v1844 = vpop.f32.mrf.mxu0
      %v1845 = vadd.f32 0.0, %v1844
      %v1846 = vpop.f32.mrf.mxu0
      %1847 = vdwg.mxu0
      %v1848 = vmul.f32 %v1835, 0.17677669
      %v1849 = vmul.f32 %v1840, 0.17677669
      %v1850 = vmul.f32 %v1845, 0.17677669
      %v1851 = vsel %vm952, %v1848, -inf
      %1852 = vmax.xlane.f32.xlu0 %v1851
      %v1853 = vpop.xlane.xlu0 %1852
      %v1854 = vsel %vm952, %v1849, -inf
      %1855 = vmax.xlane.f32.xlu0 %v1854
      %v1856 = vpop.xlane.xlu0 %1855
      %v1857 = vsel %vm959, %v1850, -inf
      %1858 = vmax.xlane.f32.xlu0 %v1857
      %v1859 = vpop.xlane.xlu0 %1858
      %v1860 = vsub.f32 %v1848, %v1853
      %v1861 = vsub.f32 %v1849, %v1856
      %v1862 = vsub.f32 %v1850, %v1859
      %v1863 = vmul.f32 %v1860, 1.442695
      %v1864 = vpow.pop %v1863
      %v1865 = vmul.f32 %v1861, 1.442695
      %v1866 = vpow.pop %v1865
      %v1867 = vmul.f32 %v1862, 1.442695
      %v1868 = vpow.pop %v1867
      %v1869 = vsel %vm952, %v1864, 0.0
      %1870 = vadd.xlane.f32.xlu0 %v1869
      %v1871 = vpop.xlane.xlu0 %1870
      %v1872 = vsel %vm952, %v1866, 0.0
      %1873 = vadd.xlane.f32.xlu0 %v1872
      %v1874 = vpop.xlane.xlu0 %1873
      %v1875 = vsel %vm959, %v1868, 0.0
      %1876 = vadd.xlane.f32.xlu0 %v1875
      %v1877 = vpop.xlane.xlu0 %1876
      %v1878 = vrcp.pop %v1871
      %v1879 = vrcp.pop %v1874
      %v1880 = vrcp.pop %v1877
      %v1881 = vmul.f32 %v1864, %v1878
      %v1882 = vmul.f32 %v1866, %v1879
      %v1883 = vmul.f32 %v1868, %v1880
      %v1884 = vmul.f32 %v767, %v1685
      %v1885 = vmul.f32 %v770, %v1685
      %v1886 = vmul.f32 %v775, %v1685
      %v1888 = vsel %vm952, %v1881, 0
      %v1891 = vsel %vm952, %v1882, 0
      %v1894 = vsel %vm952, %v1883, 0
      %v1897 = vsel %vm451, %v1886, 0
      %1899 = vmatprep.subr.mxu0 0.0
      %1900 = vmatpush1.msra.mxu0 0.0
      %1901 = vmatprep.subr.mxu0 0.0
      %1902 = vmatpush1.msra.mxu0 0.0
      %1903 = vmatprep.subr.mxu0 0.0
      %1904 = vmatpush1.msra.mxu0 0.0
      %1905 = vmatprep.subr.mxu0 0.0
      %1906 = vmatpush1.msra.mxu0 0.0
      %1907 = vmatprep.subr.mxu0 0.0
      %1908 = vmatpush1.msra.mxu0 0.0
      %1909 = vmatprep.subr.mxu0 0.0
      %1910 = vmatpush1.msra.mxu0 0.0
      %1911 = vmatprep.subr.mxu0 0.0
      %1912 = vmatpush1.msra.mxu0 0.0
      %1913 = vmatprep.subr.mxu0 0.0
      %1914 = vmatpush1.msra.mxu0 0.0
      %1915 = vmatprep.subr.mxu0 0.0
      %1916 = vmatpush1.msra.mxu0 0.0
      %1917 = vmatprep.subr.mxu0 0.0
      %1918 = vmatpush1.msra.mxu0 0.0
      %1919 = vmatprep.subr.mxu0 0.0
      %1920 = vmatpush1.msra.mxu0 0.0
      %1921 = vmatprep.subr.mxu0 0.0
      %1922 = vmatpush1.msra.mxu0 0.0
      %1923 = vmatprep.subr.mxu0 0.0
      %1924 = vmatpush1.msra.mxu0 0.0
      %1925 = vmatprep.subr.mxu0 0.0
      %1926 = vmatpush1.msra.mxu0 %v1897
      %1927 = vmatprep.subr.mxu0 0.0
      %1928 = vmatpush1.msra.mxu0 %v1885
      %1929 = vmatprep.subr.mxu0 0.0
      %1930 = vmatpush1.msra.mxu0 %v1884
      %1931 = vmatprep.subr.mxu0 0.0
      %1932 = vmatpush2.msra.mxu0 0.0
      %1933 = vmatprep.subr.mxu0 0.0
      %1934 = vmatpush2.msra.mxu0 0.0
      %1935 = vmatprep.subr.mxu0 0.0
      %1936 = vmatpush2.msra.mxu0 0.0
      %1937 = vmatprep.subr.mxu0 0.0
      %1938 = vmatpush2.msra.mxu0 0.0
      %1939 = vmatprep.subr.mxu0 0.0
      %1940 = vmatpush2.msra.mxu0 0.0
      %1941 = vmatprep.subr.mxu0 0.0
      %1942 = vmatpush2.msra.mxu0 0.0
      %1943 = vmatprep.subr.mxu0 0.0
      %1944 = vmatpush2.msra.mxu0 0.0
      %1945 = vmatprep.subr.mxu0 0.0
      %1946 = vmatpush2.msra.mxu0 0.0
      %1947 = vmatprep.subr.mxu0 0.0
      %1948 = vmatpush2.msra.mxu0 0.0
      %1949 = vmatprep.subr.mxu0 0.0
      %1950 = vmatpush2.msra.mxu0 0.0
      %1951 = vmatprep.subr.mxu0 0.0
      %1952 = vmatpush2.msra.mxu0 0.0
      %1953 = vmatprep.subr.mxu0 0.0
      %1954 = vmatpush2.msra.mxu0 0.0
      %1955 = vmatprep.subr.mxu0 0.0
      %1956 = vmatpush2.msra.mxu0 0.0
      %1957 = vmatprep.subr.mxu0 0.0
      %1958 = vmatpush2.msra.mxu0 0.0
      %1959 = vmatprep.subr.mxu0 0.0
      %1960 = vmatpush2.msra.mxu0 0.0
      %1961 = vmatprep.subr.mxu0 0.0
      %1962 = vmatpush2.msra.mxu0 0.0
      %1963 = vmatprep.mubr.f32.mxu0 0.0
      %1964 = vmatmul.mubr.f32.gmra.mxu0 %v1888
      %v1965 = vpop.f32.mrf.mxu0
      %v1966 = vadd.f32 0.0, %v1965
      %v1967 = vpop.f32.mrf.mxu0
      %1968 = vmatprep.mubr.f32.mxu0 0.0
      %1969 = vmatmul.mubr.f32.gmra.mxu0 %v1891
      %v1970 = vpop.f32.mrf.mxu0
      %v1971 = vadd.f32 0.0, %v1970
      %v1972 = vpop.f32.mrf.mxu0
      %1973 = vmatprep.mubr.f32.mxu0 0.0
      %1974 = vmatmul.mubr.f32.gmra.mxu0 %v1894
      %v1975 = vpop.f32.mrf.mxu0
      %v1976 = vadd.f32 0.0, %v1975
      %v1977 = vpop.f32.mrf.mxu0
      %1978 = vdwg.mxu0
      %v1979 = vadd.f32 %v1678, %v1966
      %v1980 = vadd.f32 %v1679, %v1971
      %v1981 = vadd.f32 %v1680, %v1976
      %v1982 = vpack.c.bf16 %v1980, %v1979
      %v1983 = vpack.c.bf16 %v1981, %v1981
      %v1984 = vld [vmem:[%s5] sm:$0xf]
      %v1985 = vld [vmem:[%s5 + $0x4] sm:$0xf]
      %v1986 = vld [vmem:[%s5 + $0x8] sm:$0xf]
      %v1987 = vld [vmem:[%s5 + $0xc] sm:$0xf]
      %v1988 = vld [vmem:[%s5 + $0x10] sm:$0xf]
      %v1989 = vld [vmem:[%s5 + $0x14] sm:$0xf]
      %v1990 = vld [vmem:[%s5 + $0x18] sm:$0xf]
      %v1991 = vld [vmem:[%s5 + $0x1c] sm:$0xf]
      %v1992 = vld [vmem:[%s5 + $0x20] sm:$0xf]
      %v1993 = vld [vmem:[%s5 + $0x24] sm:$0xf]
      %v1994 = vld [vmem:[%s5 + $0x28] sm:$0xf]
      %v1995 = vld [vmem:[%s5 + $0x2c] sm:$0xf]
      %v1996 = vld [vmem:[%s5 + $0x30] sm:$0xf]
      %v1997 = vld [vmem:[%s5 + $0x34] sm:$0xf]
      %v1998 = vld [vmem:[%s5 + $0x38] sm:$0xf]
      %v1999 = vld [vmem:[%s5 + $0x3c] sm:$0xf]
      %v2000 = vld [vmem:[%s6] sm:$0x1]
      %v2002 = vlaneseq
      %v2003 = vshrl.u32 %v2002, 7
      %v2004 = vsub.s32 0, %v2003
      %v2005 = vrot.slane %v2000, %v2004
      %v2023 = vunpack.c.l.b16 %v1984
      %v2024 = vunpack.c.l.b16 %v1985
      %v2025 = vunpack.c.l.b16 %v1986
      %v2026 = vunpack.c.l.b16 %v1987
      %v2027 = vunpack.c.l.b16 %v1988
      %v2028 = vunpack.c.l.b16 %v1989
      %v2029 = vunpack.c.l.b16 %v1990
      %v2030 = vunpack.c.l.b16 %v1991
      %v2031 = vunpack.c.l.b16 %v1992
      %v2032 = vunpack.c.l.b16 %v1993
      %v2033 = vunpack.c.l.b16 %v1994
      %v2034 = vunpack.c.l.b16 %v1995
      %v2035 = vunpack.c.l.b16 %v1996
      %v2036 = vunpack.c.l.b16 %v1997
      %v2037 = vunpack.c.l.b16 %v1998
      %v2038 = vunpack.c.l.b16 %v1999
      %v2039 = vpack.c.b16 %v2024, %v2023
      %v2040 = vpack.c.b16 %v2026, %v2025
      %v2041 = vpack.c.b16 %v2028, %v2027
      %v2042 = vpack.c.b16 %v2030, %v2029
      %v2043 = vpack.c.b16 %v2032, %v2031
      %v2044 = vpack.c.b16 %v2034, %v2033
      %v2045 = vpack.c.b16 %v2036, %v2035
      %v2046 = vpack.c.b16 %v2038, %v2037
      %2055 = vmatprep.subr.bf16.mxu0 0
      %2056 = vmatpush1.bf16.msra.mxu0 %v2046
      %2057 = vmatprep.subr.bf16.mxu0 0
      %2058 = vmatpush1.bf16.msra.mxu0 %v2045
      %2059 = vmatprep.subr.bf16.mxu0 0
      %2060 = vmatpush1.bf16.msra.mxu0 %v2044
      %2061 = vmatprep.subr.bf16.mxu0 0
      %2062 = vmatpush1.bf16.msra.mxu0 %v2043
      %2063 = vmatprep.subr.bf16.mxu0 0
      %2064 = vmatpush1.bf16.msra.mxu0 %v2042
      %2065 = vmatprep.subr.bf16.mxu0 0
      %2066 = vmatpush1.bf16.msra.mxu0 %v2041
      %2067 = vmatprep.subr.bf16.mxu0 0
      %2068 = vmatpush1.bf16.msra.mxu0 %v2040
      %2069 = vmatprep.subr.bf16.mxu0 0
      %2070 = vmatpush1.bf16.msra.mxu0 %v2039
      %2071 = vmatprep.subr.bf16.mxu0 0
      %2072 = vmatpush2.bf16.msra.mxu0 0
      %2073 = vmatprep.subr.bf16.mxu0 0
      %2074 = vmatpush2.bf16.msra.mxu0 0
      %2075 = vmatprep.subr.bf16.mxu0 0
      %2076 = vmatpush2.bf16.msra.mxu0 0
      %2077 = vmatprep.subr.bf16.mxu0 0
      %2078 = vmatpush2.bf16.msra.mxu0 0
      %2079 = vmatprep.subr.bf16.mxu0 0
      %2080 = vmatpush2.bf16.msra.mxu0 0
      %2081 = vmatprep.subr.bf16.mxu0 0
      %2082 = vmatpush2.bf16.msra.mxu0 0
      %2083 = vmatprep.subr.bf16.mxu0 0
      %2084 = vmatpush2.bf16.msra.mxu0 0
      %2085 = vmatprep.subr.bf16.mxu0 0
      %2086 = vmatpush2.bf16.msra.mxu0 0
      %2087 = vmatprep.mubr.bf16.mxu0 0
      %2088 = vmatmul.mubr.bf16.gmra.mxu0 %v1982
      %v2089 = vpop.f32.mrf.mxu0
      %v2090 = vadd.f32 %v2005, %v2089
      %v2091 = vpop.f32.mrf.mxu0
      %v2092 = vpop.f32.mrf.mxu0
      %v2093 = vadd.f32 %v2005, %v2092
      %v2094 = vpop.f32.mrf.mxu0
      %2095 = vmatprep.mubr.bf16.mxu0 0
      %2096 = vmatmul.mubr.bf16.gmra.mxu0 %v1983
      %v2097 = vpop.f32.mrf.mxu0
      %v2098 = vadd.f32 %v2005, %v2097
      %v2099 = vpop.f32.mrf.mxu0
      %v2100 = vpop.f32.mrf.mxu0
      %v2101 = vpop.f32.mrf.mxu0
      %2102 = vdwg.mxu0
      %v2103 = vadd.f32 %v442, %v2090
      %v2104 = vadd.f32 %v443, %v2093
      %v2105 = vadd.f32 %v444, %v2098
      %v2106 = vld [vmem:[%s7] sm:$0x1]
      %v2107 = vld [vmem:[%s8] sm:$0x1]
      %2108 = vadd.xlane.f32.xlu0 %v2103
      %v2109 = vpop.xlane.xlu0 %2108
      %2110 = vadd.xlane.f32.xlu0 %v2104
      %v2111 = vpop.xlane.xlu0 %2110
      %v2112 = vsel %vm451, %v2105, 0.0
      %2113 = vadd.xlane.f32.xlu0 %v2112
      %v2114 = vpop.xlane.xlu0 %2113
      %v2115 = vmul.f32 %v2109, %v455
      %v2116 = vmul.f32 %v2111, %v455
      %v2117 = vmul.f32 %v2114, %v455
      %v2118 = vsub.f32 %v2103, %v2115
      %v2119 = vsub.f32 %v2104, %v2116
      %v2120 = vsub.f32 %v2105, %v2117
      %v2121 = vmul.f32 %v2118, %v2118
      %v2122 = vmul.f32 %v2119, %v2119
      %v2123 = vmul.f32 %v2120, %v2120
      %2124 = vadd.xlane.f32.xlu0 %v2121
      %v2125 = vpop.xlane.xlu0 %2124
      %2126 = vadd.xlane.f32.xlu0 %v2122
      %v2127 = vpop.xlane.xlu0 %2126
      %v2128 = vsel %vm451, %v2123, 0.0
      %2129 = vadd.xlane.f32.xlu0 %v2128
      %v2130 = vpop.xlane.xlu0 %2129
      %v2131 = vmul.f32 %v2125, %v455
      %v2132 = vmul.f32 %v2127, %v455
      %v2133 = vmul.f32 %v2130, %v455
      %v2134 = vadd.f32 %v2131, 1e-05
      %v2135 = vadd.f32 %v2132, 1e-05
      %v2136 = vadd.f32 %v2133, 1e-05
      %v2137 = vrsqrt.pop %v2134
      %v2138 = vrsqrt.pop %v2135
      %v2139 = vrsqrt.pop %v2136
      %v2140 = vmul.f32 %v2118, %v2137
      %v2141 = vmul.f32 %v2119, %v2138
      %v2142 = vmul.f32 %v2120, %v2139
      %v2144 = vlaneseq
      %v2145 = vshrl.u32 %v2144, 7
      %v2146 = vsub.s32 0, %v2145
      %v2147 = vrot.slane %v2106, %v2146
      %v2149 = vmul.f32 %v2140, %v2147
      %v2150 = vmul.f32 %v2141, %v2147
      %v2151 = vmul.f32 %v2142, %v2147
      %v2153 = vlaneseq
      %v2154 = vshrl.u32 %v2153, 7
      %v2155 = vsub.s32 0, %v2154
      %v2156 = vrot.slane %v2107, %v2155
      %v2158 = vadd.f32 %v2149, %v2156
      %v2159 = vadd.f32 %v2150, %v2156
      %v2160 = vadd.f32 %v2151, %v2156
      %v2161 = vpack.c.bf16 %v2159, %v2158
      %v2162 = vpack.c.bf16 %v2160, %v2160
      %v2163 = vld [vmem:[%s9] sm:$0xff]
      %v2164 = vld [vmem:[%s9 + $0x8] sm:$0xff]
      %v2165 = vld [vmem:[%s9 + $0x10] sm:$0xff]
      %v2166 = vld [vmem:[%s9 + $0x18] sm:$0xff]
      %v2167 = vld [vmem:[%s9 + $0x20] sm:$0xff]
      %v2168 = vld [vmem:[%s9 + $0x28] sm:$0xff]
      %v2169 = vld [vmem:[%s9 + $0x30] sm:$0xff]
      %v2170 = vld [vmem:[%s9 + $0x38] sm:$0xff]
      %v2171 = vld [vmem:[%s9 + $0x40] sm:$0xff]
      %v2172 = vld [vmem:[%s9 + $0x48] sm:$0xff]
      %v2173 = vld [vmem:[%s9 + $0x50] sm:$0xff]
      %v2174 = vld [vmem:[%s9 + $0x58] sm:$0xff]
      %v2175 = vld [vmem:[%s9 + $0x60] sm:$0xff]
      %v2176 = vld [vmem:[%s9 + $0x68] sm:$0xff]
      %v2177 = vld [vmem:[%s9 + $0x70] sm:$0xff]
      %v2178 = vld [vmem:[%s9 + $0x78] sm:$0xff]
      %v2179 = vld [vmem:[%s9 + $0x80] sm:$0xff]
      %v2180 = vld [vmem:[%s9 + $0x88] sm:$0xff]
      %v2181 = vld [vmem:[%s9 + $0x90] sm:$0xff]
      %v2182 = vld [vmem:[%s9 + $0x98] sm:$0xff]
      %v2183 = vld [vmem:[%s9 + $0xa0] sm:$0xff]
      %v2184 = vld [vmem:[%s9 + $0xa8] sm:$0xff]
      %v2185 = vld [vmem:[%s9 + $0xb0] sm:$0xff]
      %v2186 = vld [vmem:[%s9 + $0xb8] sm:$0xff]
      %v2187 = vld [vmem:[%s9 + $0xc0] sm:$0xff]
      %v2188 = vld [vmem:[%s9 + $0xc8] sm:$0xff]
      %v2189 = vld [vmem:[%s9 + $0xd0] sm:$0xff]
      %v2190 = vld [vmem:[%s9 + $0xd8] sm:$0xff]
      %v2191 = vld [vmem:[%s9 + $0xe0] sm:$0xff]
      %v2192 = vld [vmem:[%s9 + $0xe8] sm:$0xff]
      %v2193 = vld [vmem:[%s9 + $0xf0] sm:$0xff]
      %v2194 = vld [vmem:[%s9 + $0xf8] sm:$0xff]
      %v2195 = vld [vmem:[%s10] sm:$0xf]
      %v2197 = vlaneseq
      %v2198 = vshrl.u32 %v2197, 7
      %v2199 = vsub.s32 0, %v2198
      %v2200 = vrot.slane %v2195, %v2199
      %v2201 = vlaneseq
      %v2202 = vshrl.u32 %v2201, 7
      %v2203 = vsub.s32 1, %v2202
      %v2204 = vrot.slane %v2195, %v2203
      %v2205 = vlaneseq
      %v2206 = vshrl.u32 %v2205, 7
      %v2207 = vsub.s32 2, %v2206
      %v2208 = vrot.slane %v2195, %v2207
      %v2209 = vlaneseq
      %v2210 = vshrl.u32 %v2209, 7
      %v2211 = vsub.s32 3, %v2210
      %v2212 = vrot.slane %v2195, %v2211
      %v2249 = vunpack.c.l.b16 %v2163
      %v2250 = vunpack.c.h.b16 %v2163
      %v2251 = vunpack.c.l.b16 %v2164
      %v2252 = vunpack.c.h.b16 %v2164
      %v2253 = vunpack.c.l.b16 %v2165
      %v2254 = vunpack.c.h.b16 %v2165
      %v2255 = vunpack.c.l.b16 %v2166
      %v2256 = vunpack.c.h.b16 %v2166
      %v2257 = vunpack.c.l.b16 %v2167
      %v2258 = vunpack.c.h.b16 %v2167
      %v2259 = vunpack.c.l.b16 %v2168
      %v2260 = vunpack.c.h.b16 %v2168
      %v2261 = vunpack.c.l.b16 %v2169
      %v2262 = vunpack.c.h.b16 %v2169
      %v2263 = vunpack.c.l.b16 %v2170
      %v2264 = vunpack.c.h.b16 %v2170
      %v2265 = vunpack.c.l.b16 %v2171
      %v2266 = vunpack.c.h.b16 %v2171
      %v2267 = vunpack.c.l.b16 %v2172
      %v2268 = vunpack.c.h.b16 %v2172
      %v2269 = vunpack.c.l.b16 %v2173
      %v2270 = vunpack.c.h.b16 %v2173
      %v2271 = vunpack.c.l.b16 %v2174
      %v2272 = vunpack.c.h.b16 %v2174
      %v2273 = vunpack.c.l.b16 %v2175
      %v2274 = vunpack.c.h.b16 %v2175
      %v2275 = vunpack.c.l.b16 %v2176
      %v2276 = vunpack.c.h.b16 %v2176
      %v2277 = vunpack.c.l.b16 %v2177
      %v2278 = vunpack.c.h.b16 %v2177
      %v2279 = vunpack.c.l.b16 %v2178
      %v2280 = vunpack.c.h.b16 %v2178
      %v2281 = vunpack.c.l.b16 %v2179
      %v2282 = vunpack.c.h.b16 %v2179
      %v2283 = vunpack.c.l.b16 %v2180
      %v2284 = vunpack.c.h.b16 %v2180
      %v2285 = vunpack.c.l.b16 %v2181
      %v2286 = vunpack.c.h.b16 %v2181
      %v2287 = vunpack.c.l.b16 %v2182
      %v2288 = vunpack.c.h.b16 %v2182
      %v2289 = vunpack.c.l.b16 %v2183
      %v2290 = vunpack.c.h.b16 %v2183
      %v2291 = vunpack.c.l.b16 %v2184
      %v2292 = vunpack.c.h.b16 %v2184
      %v2293 = vunpack.c.l.b16 %v2185
      %v2294 = vunpack.c.h.b16 %v2185
      %v2295 = vunpack.c.l.b16 %v2186
      %v2296 = vunpack.c.h.b16 %v2186
      %v2297 = vunpack.c.l.b16 %v2187
      %v2298 = vunpack.c.h.b16 %v2187
      %v2299 = vunpack.c.l.b16 %v2188
      %v2300 = vunpack.c.h.b16 %v2188
      %v2301 = vunpack.c.l.b16 %v2189
      %v2302 = vunpack.c.h.b16 %v2189
      %v2303 = vunpack.c.l.b16 %v2190
      %v2304 = vunpack.c.h.b16 %v2190
      %v2305 = vunpack.c.l.b16 %v2191
      %v2306 = vunpack.c.h.b16 %v2191
      %v2307 = vunpack.c.l.b16 %v2192
      %v2308 = vunpack.c.h.b16 %v2192
      %v2309 = vunpack.c.l.b16 %v2193
      %v2310 = vunpack.c.h.b16 %v2193
      %v2311 = vunpack.c.l.b16 %v2194
      %v2312 = vunpack.c.h.b16 %v2194
      %v2313 = vpack.c.b16 %v2253, %v2249
      %v2314 = vpack.c.b16 %v2254, %v2250
      %v2315 = vpack.c.b16 %v2255, %v2251
      %v2316 = vpack.c.b16 %v2256, %v2252
      %v2317 = vpack.c.b16 %v2261, %v2257
      %v2318 = vpack.c.b16 %v2262, %v2258
      %v2319 = vpack.c.b16 %v2263, %v2259
      %v2320 = vpack.c.b16 %v2264, %v2260
      %v2321 = vpack.c.b16 %v2269, %v2265
      %v2322 = vpack.c.b16 %v2270, %v2266
      %v2323 = vpack.c.b16 %v2271, %v2267
      %v2324 = vpack.c.b16 %v2272, %v2268
      %v2325 = vpack.c.b16 %v2277, %v2273
      %v2326 = vpack.c.b16 %v2278, %v2274
      %v2327 = vpack.c.b16 %v2279, %v2275
      %v2328 = vpack.c.b16 %v2280, %v2276
      %v2329 = vpack.c.b16 %v2285, %v2281
      %v2330 = vpack.c.b16 %v2286, %v2282
      %v2331 = vpack.c.b16 %v2287, %v2283
      %v2332 = vpack.c.b16 %v2288, %v2284
      %v2333 = vpack.c.b16 %v2293, %v2289
      %v2334 = vpack.c.b16 %v2294, %v2290
      %v2335 = vpack.c.b16 %v2295, %v2291
      %v2336 = vpack.c.b16 %v2296, %v2292
      %v2337 = vpack.c.b16 %v2301, %v2297
      %v2338 = vpack.c.b16 %v2302, %v2298
      %v2339 = vpack.c.b16 %v2303, %v2299
      %v2340 = vpack.c.b16 %v2304, %v2300
      %v2341 = vpack.c.b16 %v2309, %v2305
      %v2342 = vpack.c.b16 %v2310, %v2306
      %v2343 = vpack.c.b16 %v2311, %v2307
      %v2344 = vpack.c.b16 %v2312, %v2308
      %2377 = vmatprep.subr.bf16.mxu0 %v2342
      %2378 = vmatpush1.bf16.msra.mxu0 %v2341
      %2379 = vmatprep.subr.bf16.mxu0 %v2338
      %2380 = vmatpush1.bf16.msra.mxu0 %v2337
      %2381 = vmatprep.subr.bf16.mxu0 %v2334
      %2382 = vmatpush1.bf16.msra.mxu0 %v2333
      %2383 = vmatprep.subr.bf16.mxu0 %v2330
      %2384 = vmatpush1.bf16.msra.mxu0 %v2329
      %2385 = vmatprep.subr.bf16.mxu0 %v2326
      %2386 = vmatpush1.bf16.msra.mxu0 %v2325
      %2387 = vmatprep.subr.bf16.mxu0 %v2322
      %2388 = vmatpush1.bf16.msra.mxu0 %v2321
      %2389 = vmatprep.subr.bf16.mxu0 %v2318
      %2390 = vmatpush1.bf16.msra.mxu0 %v2317
      %2391 = vmatprep.subr.bf16.mxu0 %v2314
      %2392 = vmatpush1.bf16.msra.mxu0 %v2313
      %2393 = vmatprep.subr.bf16.mxu0 0
      %2394 = vmatpush2.bf16.msra.mxu0 0
      %2395 = vmatprep.subr.bf16.mxu0 0
      %2396 = vmatpush2.bf16.msra.mxu0 0
      %2397 = vmatprep.subr.bf16.mxu0 0
      %2398 = vmatpush2.bf16.msra.mxu0 0
      %2399 = vmatprep.subr.bf16.mxu0 0
      %2400 = vmatpush2.bf16.msra.mxu0 0
      %2401 = vmatprep.subr.bf16.mxu0 0
      %2402 = vmatpush2.bf16.msra.mxu0 0
      %2403 = vmatprep.subr.bf16.mxu0 0
      %2404 = vmatpush2.bf16.msra.mxu0 0
      %2405 = vmatprep.subr.bf16.mxu0 0
      %2406 = vmatpush2.bf16.msra.mxu0 0
      %2407 = vmatprep.subr.bf16.mxu0 0
      %2408 = vmatpush2.bf16.msra.mxu0 0
      %2409 = vmatprep.mubr.bf16.mxu0 0
      %2410 = vmatmul.mubr.bf16.gmra.mxu0 %v2161
      %v2411 = vpop.f32.mrf.mxu0
      %v2412 = vadd.f32 %v2200, %v2411
      %v2413 = vpop.f32.mrf.mxu0
      %v2414 = vadd.f32 %v2204, %v2413
      %v2415 = vpop.f32.mrf.mxu0
      %v2416 = vadd.f32 %v2200, %v2415
      %v2417 = vpop.f32.mrf.mxu0
      %v2418 = vadd.f32 %v2204, %v2417
      %2419 = vmatprep.mubr.bf16.mxu0 0
      %2420 = vmatmul.mubr.bf16.gmra.mxu0 %v2162
      %v2421 = vpop.f32.mrf.mxu0
      %v2422 = vadd.f32 %v2200, %v2421
      %v2423 = vpop.f32.mrf.mxu0
      %v2424 = vadd.f32 %v2204, %v2423
      %v2425 = vpop.f32.mrf.mxu0
      %v2426 = vpop.f32.mrf.mxu0
      %2427 = vdwg.mxu0
      %2428 = vmatprep.subr.bf16.mxu0 %v2344
      %2429 = vmatpush1.bf16.msra.mxu0 %v2343
      %2430 = vmatprep.subr.bf16.mxu0 %v2340
      %2431 = vmatpush1.bf16.msra.mxu0 %v2339
      %2432 = vmatprep.subr.bf16.mxu0 %v2336
      %2433 = vmatpush1.bf16.msra.mxu0 %v2335
      %2434 = vmatprep.subr.bf16.mxu0 %v2332
      %2435 = vmatpush1.bf16.msra.mxu0 %v2331
      %2436 = vmatprep.subr.bf16.mxu0 %v2328
      %2437 = vmatpush1.bf16.msra.mxu0 %v2327
      %2438 = vmatprep.subr.bf16.mxu0 %v2324
      %2439 = vmatpush1.bf16.msra.mxu0 %v2323
      %2440 = vmatprep.subr.bf16.mxu0 %v2320
      %2441 = vmatpush1.bf16.msra.mxu0 %v2319
      %2442 = vmatprep.subr.bf16.mxu0 %v2316
      %2443 = vmatpush1.bf16.msra.mxu0 %v2315
      %2444 = vmatprep.subr.bf16.mxu0 0
      %2445 = vmatpush2.bf16.msra.mxu0 0
      %2446 = vmatprep.subr.bf16.mxu0 0
      %2447 = vmatpush2.bf16.msra.mxu0 0
      %2448 = vmatprep.subr.bf16.mxu0 0
      %2449 = vmatpush2.bf16.msra.mxu0 0
      %2450 = vmatprep.subr.bf16.mxu0 0
      %2451 = vmatpush2.bf16.msra.mxu0 0
      %2452 = vmatprep.subr.bf16.mxu0 0
      %2453 = vmatpush2.bf16.msra.mxu0 0
      %2454 = vmatprep.subr.bf16.mxu0 0
      %2455 = vmatpush2.bf16.msra.mxu0 0
      %2456 = vmatprep.subr.bf16.mxu0 0
      %2457 = vmatpush2.bf16.msra.mxu0 0
      %2458 = vmatprep.subr.bf16.mxu0 0
      %2459 = vmatpush2.bf16.msra.mxu0 0
      %2460 = vmatprep.mubr.bf16.mxu0 0
      %2461 = vmatmul.mubr.bf16.gmra.mxu0 %v2161
      %v2462 = vpop.f32.mrf.mxu0
      %v2463 = vadd.f32 %v2208, %v2462
      %v2464 = vpop.f32.mrf.mxu0
      %v2465 = vadd.f32 %v2212, %v2464
      %v2466 = vpop.f32.mrf.mxu0
      %v2467 = vadd.f32 %v2208, %v2466
      %v2468 = vpop.f32.mrf.mxu0
      %v2469 = vadd.f32 %v2212, %v2468
      %2470 = vmatprep.mubr.bf16.mxu0 0
      %2471 = vmatmul.mubr.bf16.gmra.mxu0 %v2162
      %v2472 = vpop.f32.mrf.mxu0
      %v2473 = vadd.f32 %v2208, %v2472
      %v2474 = vpop.f32.mrf.mxu0
      %v2475 = vadd.f32 %v2212, %v2474
      %v2476 = vpop.f32.mrf.mxu0
      %v2477 = vpop.f32.mrf.mxu0
      %2478 = vdwg.mxu0
      %v2479 = vmul.f32 %v2412, 0.5
      %v2480 = vmul.f32 %v2414, 0.5
      %v2481 = vmul.f32 %v2463, 0.5
      %v2482 = vmul.f32 %v2465, 0.5
      %v2483 = vmul.f32 %v2416, 0.5
      %v2484 = vmul.f32 %v2418, 0.5
      %v2485 = vmul.f32 %v2467, 0.5
      %v2486 = vmul.f32 %v2469, 0.5
      %v2487 = vmul.f32 %v2422, 0.5
      %v2488 = vmul.f32 %v2424, 0.5
      %v2489 = vmul.f32 %v2473, 0.5
      %v2490 = vmul.f32 %v2475, 0.5
      %v2491 = vmul.f32 %v2412, 0.70710677
      %v2492 = vmul.f32 %v2414, 0.70710677
      %v2493 = vmul.f32 %v2463, 0.70710677
      %v2494 = vmul.f32 %v2465, 0.70710677
      %v2495 = vmul.f32 %v2416, 0.70710677
      %v2496 = vmul.f32 %v2418, 0.70710677
      %v2497 = vmul.f32 %v2467, 0.70710677
      %v2498 = vmul.f32 %v2469, 0.70710677
      %v2499 = vmul.f32 %v2422, 0.70710677
      %v2500 = vmul.f32 %v2424, 0.70710677
      %v2501 = vmul.f32 %v2473, 0.70710677
      %v2502 = vmul.f32 %v2475, 0.70710677
      %v2503 = vand.u32 2147483647, %v2491
      %v2504 = vand.u32 2147483647, %v2492
      %v2505 = vand.u32 2147483647, %v2493
      %v2506 = vand.u32 2147483647, %v2494
      %v2507 = vand.u32 2147483647, %v2495
      %v2508 = vand.u32 2147483647, %v2496
      %v2509 = vand.u32 2147483647, %v2497
      %v2510 = vand.u32 2147483647, %v2498
      %v2511 = vand.u32 2147483647, %v2499
      %v2512 = vand.u32 2147483647, %v2500
      %v2513 = vand.u32 2147483647, %v2501
      %v2514 = vand.u32 2147483647, %v2502
      %v2515 = vmul.f32 %v2503, 0.3275911
      %v2516 = vmul.f32 %v2504, 0.3275911
      %v2517 = vmul.f32 %v2505, 0.3275911
      %v2518 = vmul.f32 %v2506, 0.3275911
      %v2519 = vmul.f32 %v2507, 0.3275911
      %v2520 = vmul.f32 %v2508, 0.3275911
      %v2521 = vmul.f32 %v2509, 0.3275911
      %v2522 = vmul.f32 %v2510, 0.3275911
      %v2523 = vmul.f32 %v2511, 0.3275911
      %v2524 = vmul.f32 %v2512, 0.3275911
      %v2525 = vmul.f32 %v2513, 0.3275911
      %v2526 = vmul.f32 %v2514, 0.3275911
      %v2527 = vadd.f32 %v2515, 1.0
      %v2528 = vadd.f32 %v2516, 1.0
      %v2529 = vadd.f32 %v2517, 1.0
      %v2530 = vadd.f32 %v2518, 1.0
      %v2531 = vadd.f32 %v2519, 1.0
      %v2532 = vadd.f32 %v2520, 1.0
      %v2533 = vadd.f32 %v2521, 1.0
      %v2534 = vadd.f32 %v2522, 1.0
      %v2535 = vadd.f32 %v2523, 1.0
      %v2536 = vadd.f32 %v2524, 1.0
      %v2537 = vadd.f32 %v2525, 1.0
      %v2538 = vadd.f32 %v2526, 1.0
      %v2539 = vrcp.pop %v2527
      %v2540 = vmul.f32 1.0, %v2539
      %v2541 = vrcp.pop %v2528
      %v2542 = vmul.f32 1.0, %v2541
      %v2543 = vrcp.pop %v2529
      %v2544 = vmul.f32 1.0, %v2543
      %v2545 = vrcp.pop %v2530
      %v2546 = vmul.f32 1.0, %v2545
      %v2547 = vrcp.pop %v2531
      %v2548 = vmul.f32 1.0, %v2547
      %v2549 = vrcp.pop %v2532
      %v2550 = vmul.f32 1.0, %v2549
      %v2551 = vrcp.pop %v2533
      %v2552 = vmul.f32 1.0, %v2551
      %v2553 = vrcp.pop %v2534
      %v2554 = vmul.f32 1.0, %v2553
      %v2555 = vrcp.pop %v2535
      %v2556 = vmul.f32 1.0, %v2555
      %v2557 = vrcp.pop %v2536
      %v2558 = vmul.f32 1.0, %v2557
      %v2559 = vrcp.pop %v2537
      %v2560 = vmul.f32 1.0, %v2559
      %v2561 = vrcp.pop %v2538
      %v2562 = vmul.f32 1.0, %v2561
      %v2563 = vmul.f32 %v2540, 1.0614054
      %v2564 = vmul.f32 %v2542, 1.0614054
      %v2565 = vmul.f32 %v2544, 1.0614054
      %v2566 = vmul.f32 %v2546, 1.0614054
      %v2567 = vmul.f32 %v2548, 1.0614054
      %v2568 = vmul.f32 %v2550, 1.0614054
      %v2569 = vmul.f32 %v2552, 1.0614054
      %v2570 = vmul.f32 %v2554, 1.0614054
      %v2571 = vmul.f32 %v2556, 1.0614054
      %v2572 = vmul.f32 %v2558, 1.0614054
      %v2573 = vmul.f32 %v2560, 1.0614054
      %v2574 = vmul.f32 %v2562, 1.0614054
      %v2575 = vadd.f32 %v2563, -1.4531521
      %v2576 = vadd.f32 %v2564, -1.4531521
      %v2577 = vadd.f32 %v2565, -1.4531521
      %v2578 = vadd.f32 %v2566, -1.4531521
      %v2579 = vadd.f32 %v2567, -1.4531521
      %v2580 = vadd.f32 %v2568, -1.4531521
      %v2581 = vadd.f32 %v2569, -1.4531521
      %v2582 = vadd.f32 %v2570, -1.4531521
      %v2583 = vadd.f32 %v2571, -1.4531521
      %v2584 = vadd.f32 %v2572, -1.4531521
      %v2585 = vadd.f32 %v2573, -1.4531521
      %v2586 = vadd.f32 %v2574, -1.4531521
      %v2587 = vmul.f32 %v2575, %v2540
      %v2588 = vmul.f32 %v2576, %v2542
      %v2589 = vmul.f32 %v2577, %v2544
      %v2590 = vmul.f32 %v2578, %v2546
      %v2591 = vmul.f32 %v2579, %v2548
      %v2592 = vmul.f32 %v2580, %v2550
      %v2593 = vmul.f32 %v2581, %v2552
      %v2594 = vmul.f32 %v2582, %v2554
      %v2595 = vmul.f32 %v2583, %v2556
      %v2596 = vmul.f32 %v2584, %v2558
      %v2597 = vmul.f32 %v2585, %v2560
      %v2598 = vmul.f32 %v2586, %v2562
      %v2599 = vadd.f32 %v2587, 1.4214138
      %v2600 = vadd.f32 %v2588, 1.4214138
      %v2601 = vadd.f32 %v2589, 1.4214138
      %v2602 = vadd.f32 %v2590, 1.4214138
      %v2603 = vadd.f32 %v2591, 1.4214138
      %v2604 = vadd.f32 %v2592, 1.4214138
      %v2605 = vadd.f32 %v2593, 1.4214138
      %v2606 = vadd.f32 %v2594, 1.4214138
      %v2607 = vadd.f32 %v2595, 1.4214138
      %v2608 = vadd.f32 %v2596, 1.4214138
      %v2609 = vadd.f32 %v2597, 1.4214138
      %v2610 = vadd.f32 %v2598, 1.4214138
      %v2611 = vmul.f32 %v2599, %v2540
      %v2612 = vmul.f32 %v2600, %v2542
      %v2613 = vmul.f32 %v2601, %v2544
      %v2614 = vmul.f32 %v2602, %v2546
      %v2615 = vmul.f32 %v2603, %v2548
      %v2616 = vmul.f32 %v2604, %v2550
      %v2617 = vmul.f32 %v2605, %v2552
      %v2618 = vmul.f32 %v2606, %v2554
      %v2619 = vmul.f32 %v2607, %v2556
      %v2620 = vmul.f32 %v2608, %v2558
      %v2621 = vmul.f32 %v2609, %v2560
      %v2622 = vmul.f32 %v2610, %v2562
      %v2623 = vadd.f32 %v2611, -0.28449672
      %v2624 = vadd.f32 %v2612, -0.28449672
      %v2625 = vadd.f32 %v2613, -0.28449672
      %v2626 = vadd.f32 %v2614, -0.28449672
      %v2627 = vadd.f32 %v2615, -0.28449672
      %v2628 = vadd.f32 %v2616, -0.28449672
      %v2629 = vadd.f32 %v2617, -0.28449672
      %v2630 = vadd.f32 %v2618, -0.28449672
      %v2631 = vadd.f32 %v2619, -0.28449672
      %v2632 = vadd.f32 %v2620, -0.28449672
      %v2633 = vadd.f32 %v2621, -0.28449672
      %v2634 = vadd.f32 %v2622, -0.28449672
      %v2635 = vmul.f32 %v2623, %v2540
      %v2636 = vmul.f32 %v2624, %v2542
      %v2637 = vmul.f32 %v2625, %v2544
      %v2638 = vmul.f32 %v2626, %v2546
      %v2639 = vmul.f32 %v2627, %v2548
      %v2640 = vmul.f32 %v2628, %v2550
      %v2641 = vmul.f32 %v2629, %v2552
      %v2642 = vmul.f32 %v2630, %v2554
      %v2643 = vmul.f32 %v2631, %v2556
      %v2644 = vmul.f32 %v2632, %v2558
      %v2645 = vmul.f32 %v2633, %v2560
      %v2646 = vmul.f32 %v2634, %v2562
      %v2647 = vadd.f32 %v2635, 0.2548296
      %v2648 = vadd.f32 %v2636, 0.2548296
      %v2649 = vadd.f32 %v2637, 0.2548296
      %v2650 = vadd.f32 %v2638, 0.2548296
      %v2651 = vadd.f32 %v2639, 0.2548296
      %v2652 = vadd.f32 %v2640, 0.2548296
      %v2653 = vadd.f32 %v2641, 0.2548296
      %v2654 = vadd.f32 %v2642, 0.2548296
      %v2655 = vadd.f32 %v2643, 0.2548296
      %v2656 = vadd.f32 %v2644, 0.2548296
      %v2657 = vadd.f32 %v2645, 0.2548296
      %v2658 = vadd.f32 %v2646, 0.2548296
      %v2659 = vmul.f32 %v2647, %v2540
      %v2660 = vmul.f32 %v2648, %v2542
      %v2661 = vmul.f32 %v2649, %v2544
      %v2662 = vmul.f32 %v2650, %v2546
      %v2663 = vmul.f32 %v2651, %v2548
      %v2664 = vmul.f32 %v2652, %v2550
      %v2665 = vmul.f32 %v2653, %v2552
      %v2666 = vmul.f32 %v2654, %v2554
      %v2667 = vmul.f32 %v2655, %v2556
      %v2668 = vmul.f32 %v2656, %v2558
      %v2669 = vmul.f32 %v2657, %v2560
      %v2670 = vmul.f32 %v2658, %v2562
      %v2671 = vsub.f32 0.0, %v2503
      %v2672 = vsub.f32 0.0, %v2504
      %v2673 = vsub.f32 0.0, %v2505
      %v2674 = vsub.f32 0.0, %v2506
      %v2675 = vsub.f32 0.0, %v2507
      %v2676 = vsub.f32 0.0, %v2508
      %v2677 = vsub.f32 0.0, %v2509
      %v2678 = vsub.f32 0.0, %v2510
      %v2679 = vsub.f32 0.0, %v2511
      %v2680 = vsub.f32 0.0, %v2512
      %v2681 = vsub.f32 0.0, %v2513
      %v2682 = vsub.f32 0.0, %v2514
      %v2683 = vmul.f32 %v2671, %v2503
      %v2684 = vmul.f32 %v2672, %v2504
      %v2685 = vmul.f32 %v2673, %v2505
      %v2686 = vmul.f32 %v2674, %v2506
      %v2687 = vmul.f32 %v2675, %v2507
      %v2688 = vmul.f32 %v2676, %v2508
      %v2689 = vmul.f32 %v2677, %v2509
      %v2690 = vmul.f32 %v2678, %v2510
      %v2691 = vmul.f32 %v2679, %v2511
      %v2692 = vmul.f32 %v2680, %v2512
      %v2693 = vmul.f32 %v2681, %v2513
      %v2694 = vmul.f32 %v2682, %v2514
      %v2695 = vmul.f32 %v2683, 1.442695
      %v2696 = vpow.pop %v2695
      %v2697 = vmul.f32 %v2684, 1.442695
      %v2698 = vpow.pop %v2697
      %v2699 = vmul.f32 %v2685, 1.442695
      %v2700 = vpow.pop %v2699
      %v2701 = vmul.f32 %v2686, 1.442695
      %v2702 = vpow.pop %v2701
      %v2703 = vmul.f32 %v2687, 1.442695
      %v2704 = vpow.pop %v2703
      %v2705 = vmul.f32 %v2688, 1.442695
      %v2706 = vpow.pop %v2705
      %v2707 = vmul.f32 %v2689, 1.442695
      %v2708 = vpow.pop %v2707
      %v2709 = vmul.f32 %v2690, 1.442695
      %v2710 = vpow.pop %v2709
      %v2711 = vmul.f32 %v2691, 1.442695
      %v2712 = vpow.pop %v2711
      %v2713 = vmul.f32 %v2692, 1.442695
      %v2714 = vpow.pop %v2713
      %v2715 = vmul.f32 %v2693, 1.442695
      %v2716 = vpow.pop %v2715
      %v2717 = vmul.f32 %v2694, 1.442695
      %v2718 = vpow.pop %v2717
      %v2719 = vmul.f32 %v2659, %v2696
      %v2720 = vmul.f32 %v2660, %v2698
      %v2721 = vmul.f32 %v2661, %v2700
      %v2722 = vmul.f32 %v2662, %v2702
      %v2723 = vmul.f32 %v2663, %v2704
      %v2724 = vmul.f32 %v2664, %v2706
      %v2725 = vmul.f32 %v2665, %v2708
      %v2726 = vmul.f32 %v2666, %v2710
      %v2727 = vmul.f32 %v2667, %v2712
      %v2728 = vmul.f32 %v2668, %v2714
      %v2729 = vmul.f32 %v2669, %v2716
      %v2730 = vmul.f32 %v2670, %v2718
      %v2731 = vsub.f32 1.0, %v2719
      %v2732 = vsub.f32 1.0, %v2720
      %v2733 = vsub.f32 1.0, %v2721
      %v2734 = vsub.f32 1.0, %v2722
      %v2735 = vsub.f32 1.0, %v2723
      %v2736 = vsub.f32 1.0, %v2724
      %v2737 = vsub.f32 1.0, %v2725
      %v2738 = vsub.f32 1.0, %v2726
      %v2739 = vsub.f32 1.0, %v2727
      %v2740 = vsub.f32 1.0, %v2728
      %v2741 = vsub.f32 1.0, %v2729
      %v2742 = vsub.f32 1.0, %v2730
      %vm2743 = vcmp.lt.f32.partialorder %v2491, 0.0
      %vm2744 = vcmp.lt.f32.partialorder %v2492, 0.0
      %vm2745 = vcmp.lt.f32.partialorder %v2493, 0.0
      %vm2746 = vcmp.lt.f32.partialorder %v2494, 0.0
      %vm2747 = vcmp.lt.f32.partialorder %v2495, 0.0
      %vm2748 = vcmp.lt.f32.partialorder %v2496, 0.0
      %vm2749 = vcmp.lt.f32.partialorder %v2497, 0.0
      %vm2750 = vcmp.lt.f32.partialorder %v2498, 0.0
      %vm2751 = vcmp.lt.f32.partialorder %v2499, 0.0
      %vm2752 = vcmp.lt.f32.partialorder %v2500, 0.0
      %vm2753 = vcmp.lt.f32.partialorder %v2501, 0.0
      %vm2754 = vcmp.lt.f32.partialorder %v2502, 0.0
      %v2755 = vsub.f32 0.0, %v2731
      %v2756 = vsub.f32 0.0, %v2732
      %v2757 = vsub.f32 0.0, %v2733
      %v2758 = vsub.f32 0.0, %v2734
      %v2759 = vsub.f32 0.0, %v2735
      %v2760 = vsub.f32 0.0, %v2736
      %v2761 = vsub.f32 0.0, %v2737
      %v2762 = vsub.f32 0.0, %v2738
      %v2763 = vsub.f32 0.0, %v2739
      %v2764 = vsub.f32 0.0, %v2740
      %v2765 = vsub.f32 0.0, %v2741
      %v2766 = vsub.f32 0.0, %v2742
      %v2767 = vsel %vm2743, %v2755, %v2731
      %v2768 = vsel %vm2744, %v2756, %v2732
      %v2769 = vsel %vm2745, %v2757, %v2733
      %v2770 = vsel %vm2746, %v2758, %v2734
      %v2771 = vsel %vm2747, %v2759, %v2735
      %v2772 = vsel %vm2748, %v2760, %v2736
      %v2773 = vsel %vm2749, %v2761, %v2737
      %v2774 = vsel %vm2750, %v2762, %v2738
      %v2775 = vsel %vm2751, %v2763, %v2739
      %v2776 = vsel %vm2752, %v2764, %v2740
      %v2777 = vsel %vm2753, %v2765, %v2741
      %v2778 = vsel %vm2754, %v2766, %v2742
      %v2779 = vadd.f32 %v2767, 1.0
      %v2780 = vadd.f32 %v2768, 1.0
      %v2781 = vadd.f32 %v2769, 1.0
      %v2782 = vadd.f32 %v2770, 1.0
      %v2783 = vadd.f32 %v2771, 1.0
      %v2784 = vadd.f32 %v2772, 1.0
      %v2785 = vadd.f32 %v2773, 1.0
      %v2786 = vadd.f32 %v2774, 1.0
      %v2787 = vadd.f32 %v2775, 1.0
      %v2788 = vadd.f32 %v2776, 1.0
      %v2789 = vadd.f32 %v2777, 1.0
      %v2790 = vadd.f32 %v2778, 1.0
      %v2791 = vmul.f32 %v2479, %v2779
      %v2792 = vmul.f32 %v2480, %v2780
      %v2793 = vmul.f32 %v2481, %v2781
      %v2794 = vmul.f32 %v2482, %v2782
      %v2795 = vmul.f32 %v2483, %v2783
      %v2796 = vmul.f32 %v2484, %v2784
      %v2797 = vmul.f32 %v2485, %v2785
      %v2798 = vmul.f32 %v2486, %v2786
      %v2799 = vmul.f32 %v2487, %v2787
      %v2800 = vmul.f32 %v2488, %v2788
      %v2801 = vmul.f32 %v2489, %v2789
      %v2802 = vmul.f32 %v2490, %v2790
      %v2803 = vpack.c.bf16 %v2795, %v2791
      %v2804 = vpack.c.bf16 %v2796, %v2792
      %v2805 = vpack.c.bf16 %v2797, %v2793
      %v2806 = vpack.c.bf16 %v2798, %v2794
      %v2807 = vpack.c.bf16 %v2799, %v2799
      %v2808 = vpack.c.bf16 %v2800, %v2800
      %v2809 = vpack.c.bf16 %v2801, %v2801
      %v2810 = vpack.c.bf16 %v2802, %v2802
      %v2811 = vld [vmem:[%s11] sm:$0xf]
      %v2812 = vld [vmem:[%s11 + $0x4] sm:$0xf]
      %v2813 = vld [vmem:[%s11 + $0x8] sm:$0xf]
      %v2814 = vld [vmem:[%s11 + $0xc] sm:$0xf]
      %v2815 = vld [vmem:[%s11 + $0x10] sm:$0xf]
      %v2816 = vld [vmem:[%s11 + $0x14] sm:$0xf]
      %v2817 = vld [vmem:[%s11 + $0x18] sm:$0xf]
      %v2818 = vld [vmem:[%s11 + $0x1c] sm:$0xf]
      %v2819 = vld [vmem:[%s11 + $0x20] sm:$0xf]
      %v2820 = vld [vmem:[%s11 + $0x24] sm:$0xf]
      %v2821 = vld [vmem:[%s11 + $0x28] sm:$0xf]
      %v2822 = vld [vmem:[%s11 + $0x2c] sm:$0xf]
      %v2823 = vld [vmem:[%s11 + $0x30] sm:$0xf]
      %v2824 = vld [vmem:[%s11 + $0x34] sm:$0xf]
      %v2825 = vld [vmem:[%s11 + $0x38] sm:$0xf]
      %v2826 = vld [vmem:[%s11 + $0x3c] sm:$0xf]
      %v2827 = vld [vmem:[%s11 + $0x40] sm:$0xf]
      %v2828 = vld [vmem:[%s11 + $0x44] sm:$0xf]
      %v2829 = vld [vmem:[%s11 + $0x48] sm:$0xf]
      %v2830 = vld [vmem:[%s11 + $0x4c] sm:$0xf]
      %v2831 = vld [vmem:[%s11 + $0x50] sm:$0xf]
      %v2832 = vld [vmem:[%s11 + $0x54] sm:$0xf]
      %v2833 = vld [vmem:[%s11 + $0x58] sm:$0xf]
      %v2834 = vld [vmem:[%s11 + $0x5c] sm:$0xf]
      %v2835 = vld [vmem:[%s11 + $0x60] sm:$0xf]
      %v2836 = vld [vmem:[%s11 + $0x64] sm:$0xf]
      %v2837 = vld [vmem:[%s11 + $0x68] sm:$0xf]
      %v2838 = vld [vmem:[%s11 + $0x6c] sm:$0xf]
      %v2839 = vld [vmem:[%s11 + $0x70] sm:$0xf]
      %v2840 = vld [vmem:[%s11 + $0x74] sm:$0xf]
      %v2841 = vld [vmem:[%s11 + $0x78] sm:$0xf]
      %v2842 = vld [vmem:[%s11 + $0x7c] sm:$0xf]
      %v2843 = vld [vmem:[%s11 + $0x80] sm:$0xf]
      %v2844 = vld [vmem:[%s11 + $0x84] sm:$0xf]
      %v2845 = vld [vmem:[%s11 + $0x88] sm:$0xf]
      %v2846 = vld [vmem:[%s11 + $0x8c] sm:$0xf]
      %v2847 = vld [vmem:[%s11 + $0x90] sm:$0xf]
      %v2848 = vld [vmem:[%s11 + $0x94] sm:$0xf]
      %v2849 = vld [vmem:[%s11 + $0x98] sm:$0xf]
      %v2850 = vld [vmem:[%s11 + $0x9c] sm:$0xf]
      %v2851 = vld [vmem:[%s11 + $0xa0] sm:$0xf]
      %v2852 = vld [vmem:[%s11 + $0xa4] sm:$0xf]
      %v2853 = vld [vmem:[%s11 + $0xa8] sm:$0xf]
      %v2854 = vld [vmem:[%s11 + $0xac] sm:$0xf]
      %v2855 = vld [vmem:[%s11 + $0xb0] sm:$0xf]
      %v2856 = vld [vmem:[%s11 + $0xb4] sm:$0xf]
      %v2857 = vld [vmem:[%s11 + $0xb8] sm:$0xf]
      %v2858 = vld [vmem:[%s11 + $0xbc] sm:$0xf]
      %v2859 = vld [vmem:[%s11 + $0xc0] sm:$0xf]
      %v2860 = vld [vmem:[%s11 + $0xc4] sm:$0xf]
      %v2861 = vld [vmem:[%s11 + $0xc8] sm:$0xf]
      %v2862 = vld [vmem:[%s11 + $0xcc] sm:$0xf]
      %v2863 = vld [vmem:[%s11 + $0xd0] sm:$0xf]
      %v2864 = vld [vmem:[%s11 + $0xd4] sm:$0xf]
      %v2865 = vld [vmem:[%s11 + $0xd8] sm:$0xf]
      %v2866 = vld [vmem:[%s11 + $0xdc] sm:$0xf]
      %v2867 = vld [vmem:[%s11 + $0xe0] sm:$0xf]
      %v2868 = vld [vmem:[%s11 + $0xe4] sm:$0xf]
      %v2869 = vld [vmem:[%s11 + $0xe8] sm:$0xf]
      %v2870 = vld [vmem:[%s11 + $0xec] sm:$0xf]
      %v2871 = vld [vmem:[%s11 + $0xf0] sm:$0xf]
      %v2872 = vld [vmem:[%s11 + $0xf4] sm:$0xf]
      %v2873 = vld [vmem:[%s11 + $0xf8] sm:$0xf]
      %v2874 = vld [vmem:[%s11 + $0xfc] sm:$0xf]
      %v2875 = vld [vmem:[%s12] sm:$0x1]
      %v2877 = vlaneseq
      %v2878 = vshrl.u32 %v2877, 7
      %v2879 = vsub.s32 0, %v2878
      %v2880 = vrot.slane %v2875, %v2879
      %v2946 = vunpack.c.l.b16 %v2811
      %v2947 = vunpack.c.l.b16 %v2812
      %v2948 = vunpack.c.l.b16 %v2813
      %v2949 = vunpack.c.l.b16 %v2814
      %v2950 = vunpack.c.l.b16 %v2815
      %v2951 = vunpack.c.l.b16 %v2816
      %v2952 = vunpack.c.l.b16 %v2817
      %v2953 = vunpack.c.l.b16 %v2818
      %v2954 = vunpack.c.l.b16 %v2819
      %v2955 = vunpack.c.l.b16 %v2820
      %v2956 = vunpack.c.l.b16 %v2821
      %v2957 = vunpack.c.l.b16 %v2822
      %v2958 = vunpack.c.l.b16 %v2823
      %v2959 = vunpack.c.l.b16 %v2824
      %v2960 = vunpack.c.l.b16 %v2825
      %v2961 = vunpack.c.l.b16 %v2826
      %v2962 = vunpack.c.l.b16 %v2827
      %v2963 = vunpack.c.l.b16 %v2828
      %v2964 = vunpack.c.l.b16 %v2829
      %v2965 = vunpack.c.l.b16 %v2830
      %v2966 = vunpack.c.l.b16 %v2831
      %v2967 = vunpack.c.l.b16 %v2832
      %v2968 = vunpack.c.l.b16 %v2833
      %v2969 = vunpack.c.l.b16 %v2834
      %v2970 = vunpack.c.l.b16 %v2835
      %v2971 = vunpack.c.l.b16 %v2836
      %v2972 = vunpack.c.l.b16 %v2837
      %v2973 = vunpack.c.l.b16 %v2838
      %v2974 = vunpack.c.l.b16 %v2839
      %v2975 = vunpack.c.l.b16 %v2840
      %v2976 = vunpack.c.l.b16 %v2841
      %v2977 = vunpack.c.l.b16 %v2842
      %v2978 = vunpack.c.l.b16 %v2843
      %v2979 = vunpack.c.l.b16 %v2844
      %v2980 = vunpack.c.l.b16 %v2845
      %v2981 = vunpack.c.l.b16 %v2846
      %v2982 = vunpack.c.l.b16 %v2847
      %v2983 = vunpack.c.l.b16 %v2848
      %v2984 = vunpack.c.l.b16 %v2849
      %v2985 = vunpack.c.l.b16 %v2850
      %v2986 = vunpack.c.l.b16 %v2851
      %v2987 = vunpack.c.l.b16 %v2852
      %v2988 = vunpack.c.l.b16 %v2853
      %v2989 = vunpack.c.l.b16 %v2854
      %v2990 = vunpack.c.l.b16 %v2855
      %v2991 = vunpack.c.l.b16 %v2856
      %v2992 = vunpack.c.l.b16 %v2857
      %v2993 = vunpack.c.l.b16 %v2858
      %v2994 = vunpack.c.l.b16 %v2859
      %v2995 = vunpack.c.l.b16 %v2860
      %v2996 = vunpack.c.l.b16 %v2861
      %v2997 = vunpack.c.l.b16 %v2862
      %v2998 = vunpack.c.l.b16 %v2863
      %v2999 = vunpack.c.l.b16 %v2864
      %v3000 = vunpack.c.l.b16 %v2865
      %v3001 = vunpack.c.l.b16 %v2866
      %v3002 = vunpack.c.l.b16 %v2867
      %v3003 = vunpack.c.l.b16 %v2868
      %v3004 = vunpack.c.l.b16 %v2869
      %v3005 = vunpack.c.l.b16 %v2870
      %v3006 = vunpack.c.l.b16 %v2871
      %v3007 = vunpack.c.l.b16 %v2872
      %v3008 = vunpack.c.l.b16 %v2873
      %v3009 = vunpack.c.l.b16 %v2874
      %v3010 = vpack.c.b16 %v2947, %v2946
      %v3011 = vpack.c.b16 %v2949, %v2948
      %v3012 = vpack.c.b16 %v2951, %v2950
      %v3013 = vpack.c.b16 %v2953, %v2952
      %v3014 = vpack.c.b16 %v2955, %v2954
      %v3015 = vpack.c.b16 %v2957, %v2956
      %v3016 = vpack.c.b16 %v2959, %v2958
      %v3017 = vpack.c.b16 %v2961, %v2960
      %v3018 = vpack.c.b16 %v2963, %v2962
      %v3019 = vpack.c.b16 %v2965, %v2964
      %v3020 = vpack.c.b16 %v2967, %v2966
      %v3021 = vpack.c.b16 %v2969, %v2968
      %v3022 = vpack.c.b16 %v2971, %v2970
      %v3023 = vpack.c.b16 %v2973, %v2972
      %v3024 = vpack.c.b16 %v2975, %v2974
      %v3025 = vpack.c.b16 %v2977, %v2976
      %v3026 = vpack.c.b16 %v2979, %v2978
      %v3027 = vpack.c.b16 %v2981, %v2980
      %v3028 = vpack.c.b16 %v2983, %v2982
      %v3029 = vpack.c.b16 %v2985, %v2984
      %v3030 = vpack.c.b16 %v2987, %v2986
      %v3031 = vpack.c.b16 %v2989, %v2988
      %v3032 = vpack.c.b16 %v2991, %v2990
      %v3033 = vpack.c.b16 %v2993, %v2992
      %v3034 = vpack.c.b16 %v2995, %v2994
      %v3035 = vpack.c.b16 %v2997, %v2996
      %v3036 = vpack.c.b16 %v2999, %v2998
      %v3037 = vpack.c.b16 %v3001, %v3000
      %v3038 = vpack.c.b16 %v3003, %v3002
      %v3039 = vpack.c.b16 %v3005, %v3004
      %v3040 = vpack.c.b16 %v3007, %v3006
      %v3041 = vpack.c.b16 %v3009, %v3008
      %3074 = vmatprep.subr.bf16.mxu0 0
      %3075 = vmatpush1.bf16.msra.mxu0 %v3017
      %3076 = vmatprep.subr.bf16.mxu0 0
      %3077 = vmatpush1.bf16.msra.mxu0 %v3016
      %3078 = vmatprep.subr.bf16.mxu0 0
      %3079 = vmatpush1.bf16.msra.mxu0 %v3015
      %3080 = vmatprep.subr.bf16.mxu0 0
      %3081 = vmatpush1.bf16.msra.mxu0 %v3014
      %3082 = vmatprep.subr.bf16.mxu0 0
      %3083 = vmatpush1.bf16.msra.mxu0 %v3013
      %3084 = vmatprep.subr.bf16.mxu0 0
      %3085 = vmatpush1.bf16.msra.mxu0 %v3012
      %3086 = vmatprep.subr.bf16.mxu0 0
      %3087 = vmatpush1.bf16.msra.mxu0 %v3011
      %3088 = vmatprep.subr.bf16.mxu0 0
      %3089 = vmatpush1.bf16.msra.mxu0 %v3010
      %3090 = vmatprep.subr.bf16.mxu0 0
      %3091 = vmatpush2.bf16.msra.mxu0 %v3025
      %3092 = vmatprep.subr.bf16.mxu0 0
      %3093 = vmatpush2.bf16.msra.mxu0 %v3024
      %3094 = vmatprep.subr.bf16.mxu0 0
      %3095 = vmatpush2.bf16.msra.mxu0 %v3023
      %3096 = vmatprep.subr.bf16.mxu0 0
      %3097 = vmatpush2.bf16.msra.mxu0 %v3022
      %3098 = vmatprep.subr.bf16.mxu0 0
      %3099 = vmatpush2.bf16.msra.mxu0 %v3021
      %3100 = vmatprep.subr.bf16.mxu0 0
      %3101 = vmatpush2.bf16.msra.mxu0 %v3020
      %3102 = vmatprep.subr.bf16.mxu0 0
      %3103 = vmatpush2.bf16.msra.mxu0 %v3019
      %3104 = vmatprep.subr.bf16.mxu0 0
      %3105 = vmatpush2.bf16.msra.mxu0 %v3018
      %3106 = vmatprep.mubr.bf16.mxu0 %v2804
      %3107 = vmatmul.mubr.bf16.gmra.mxu0 %v2803
      %v3108 = vpop.f32.mrf.mxu0
      %v3109 = vadd.f32 %v2880, %v3108
      %v3110 = vpop.f32.mrf.mxu0
      %v3111 = vpop.f32.mrf.mxu0
      %v3112 = vadd.f32 %v2880, %v3111
      %v3113 = vpop.f32.mrf.mxu0
      %3114 = vmatprep.mubr.bf16.mxu0 %v2808
      %3115 = vmatmul.mubr.bf16.gmra.mxu0 %v2807
      %v3116 = vpop.f32.mrf.mxu0
      %v3117 = vadd.f32 %v2880, %v3116
      %v3118 = vpop.f32.mrf.mxu0
      %v3119 = vpop.f32.mrf.mxu0
      %v3120 = vpop.f32.mrf.mxu0
      %3121 = vdwg.mxu0
      %3122 = vmatprep.subr.bf16.mxu0 0
      %3123 = vmatpush1.bf16.msra.mxu0 %v3033
      %3124 = vmatprep.subr.bf16.mxu0 0
      %3125 = vmatpush1.bf16.msra.mxu0 %v3032
      %3126 = vmatprep.subr.bf16.mxu0 0
      %3127 = vmatpush1.bf16.msra.mxu0 %v3031
      %3128 = vmatprep.subr.bf16.mxu0 0
      %3129 = vmatpush1.bf16.msra.mxu0 %v3030
      %3130 = vmatprep.subr.bf16.mxu0 0
      %3131 = vmatpush1.bf16.msra.mxu0 %v3029
      %3132 = vmatprep.subr.bf16.mxu0 0
      %3133 = vmatpush1.bf16.msra.mxu0 %v3028
      %3134 = vmatprep.subr.bf16.mxu0 0
      %3135 = vmatpush1.bf16.msra.mxu0 %v3027
      %3136 = vmatprep.subr.bf16.mxu0 0
      %3137 = vmatpush1.bf16.msra.mxu0 %v3026
      %3138 = vmatprep.subr.bf16.mxu0 0
      %3139 = vmatpush2.bf16.msra.mxu0 %v3041
      %3140 = vmatprep.subr.bf16.mxu0 0
      %3141 = vmatpush2.bf16.msra.mxu0 %v3040
      %3142 = vmatprep.subr.bf16.mxu0 0
      %3143 = vmatpush2.bf16.msra.mxu0 %v3039
      %3144 = vmatprep.subr.bf16.mxu0 0
      %3145 = vmatpush2.bf16.msra.mxu0 %v3038
      %3146 = vmatprep.subr.bf16.mxu0 0
      %3147 = vmatpush2.bf16.msra.mxu0 %v3037
      %3148 = vmatprep.subr.bf16.mxu0 0
      %3149 = vmatpush2.bf16.msra.mxu0 %v3036
      %3150 = vmatprep.subr.bf16.mxu0 0
      %3151 = vmatpush2.bf16.msra.mxu0 %v3035
      %3152 = vmatprep.subr.bf16.mxu0 0
      %3153 = vmatpush2.bf16.msra.mxu0 %v3034
      %3154 = vmatprep.mubr.bf16.mxu0 %v2806
      %3155 = vmatmul.mubr.bf16.gmra.mxu0 %v2805
      %v3156 = vpop.f32.mrf.mxu0
      %v3157 = vadd.f32 %v3109, %v3156
      %v3158 = vpop.f32.mrf.mxu0
      %v3159 = vpop.f32.mrf.mxu0
      %v3160 = vadd.f32 %v3112, %v3159
      %v3161 = vpop.f32.mrf.mxu0
      %3162 = vmatprep.mubr.bf16.mxu0 %v2810
      %3163 = vmatmul.mubr.bf16.gmra.mxu0 %v2809
      %v3164 = vpop.f32.mrf.mxu0
      %v3165 = vadd.f32 %v3117, %v3164
      %v3166 = vpop.f32.mrf.mxu0
      %v3167 = vpop.f32.mrf.mxu0
      %v3168 = vpop.f32.mrf.mxu0
      %3169 = vdwg.mxu0
      %v3170 = vadd.f32 %v2103, %v3157
      %v3171 = vadd.f32 %v2104, %v3160
      %v3172 = vadd.f32 %v2105, %v3165
      %3173 = vst [vmem:[%s440] sm:$0xff] %v3170
      %3174 = vst [vmem:[%s440 + $0x8] sm:$0xff] %v3171
      %3175 = vst [vmem:[%s440 + $0x10] sm:$0x1] %v3172
      %p3176 = scmp.lt.s32.totalorder %s24, 1
      %s3177 = scalar_select %p3176, %s24, 1
      %s3178 = smul.addr %s3177, 3
      %s3179 = smul.addr %s3178, 8
      %s3180 = scalar_lea.vmem %s13, %s3179
      // Predicated region
      $region73: #{anno_mae_forward.11} parent=71 // pred_check
        %p3181 = pneg %p320
      $region74: #{anno_mae_forward.11} parent=71 // pred_check_branch
        %3183 = sbr.rel (%p3181) target = $region76
      $region75: #{anno_mae_forward.11} parent=71 // pred_region
        _
      $region76: #{anno_mae_forward.11} parent=71 // pred_fallthru
        _
    $region72: #{anno_mae_forward.11} parent=5 // pred_fallthru
      _
    %p3184 = scmp.le.s32.totalorder 2, %s19
    // Predicated region
    $region77: #{anno_mae_forward.11} parent=5 // pred_check
      %p3185 = pneg %p3184
    $region78: #{anno_mae_forward.11} parent=5 // pred_check_branch
      %3187 = sbr.rel (%p3185) target = $region80
    $region79: #{anno_mae_forward.11} parent=5 // pred_region
      %s3188 = ssub.s32 %s19, 2
      // Predicated region
      $region81: #{anno_mae_forward.11} parent=79 // pred_check
        %p3189 = pneg %p326
      $region82: #{anno_mae_forward.11} parent=79 // pred_check_branch
        %3191 = sbr.rel (%p3189) target = $region84
      $region83: #{anno_mae_forward.11} parent=79 // pred_region
        %p3192 = scmp.lt.s32.totalorder %s25, 1
        %s3193 = scalar_select %p3192, %s25, 1
        %s3194 = smul.addr %s3193, 3
        %s3195 = smul.addr %s3194, 8
        %s3196 = scalar_lea.vmem %s13, %s3195
      $region84: #{anno_mae_forward.11} parent=79 // pred_fallthru
        _
    $region80: #{anno_mae_forward.11} parent=5 // pred_fallthru
      _
  $region6: #{anno_mae_forward.11} parent=0 // loop_footer
    %s23 = sadd.s32 1, %s19
  $region7: #{anno_mae_forward.11} parent=0 // loop_footer_branch
    %18 = sbr.rel target = $region3
  $region8: #{anno_mae_forward.11} parent=0 // loop_exit
    _

</llo_original>
